<compile_context>
chip_gen: v6e
topology: v6e:2x2x1
jax: 0.10.0
libtpu: 0.0.40
codegen_flags: <defaults>
</compile_context>

<pallas_src>
import functools

import jax
import jax.numpy as jnp
from jax.experimental import pallas as pl
from jax.experimental.pallas import tpu as pltpu

EPS = 1e-5                      # nn.LayerNorm default
_INV_SQRT2 = 0.7071067811865476


def _layer_norm_rows(v, g, b):
    """LayerNorm over the last dim of a (rows, C) block; g/b are (1, C)."""
    mu = jnp.mean(v, axis=-1, keepdims=True)
    var = jnp.mean((v - mu) ** 2, axis=-1, keepdims=True)
    return (v - mu) * jax.lax.rsqrt(var + EPS) * g + b


def _gelu_exact(x):
    # matches nn.GELU() default (erf form)
    return 0.5 * x * (1.0 + jax.lax.erf(x * _INV_SQRT2))


# ------------------------------ fused kernel ------------------------------- #

def _decoder_layer_kernel(x_ref, mem_ref,
                          g1_ref, b1_ref,
                          wq1_ref, wk1_ref, wv1_ref, wo1_ref, bo1_ref,
                          g2_ref, b2_ref,
                          wq2_ref, wk2_ref, wv2_ref, wo2_ref, bo2_ref,
                          g3_ref, b3_ref,
                          w1_ref, bb1_ref, w2_ref, bb2_ref,
                          o_ref, *, num_heads, scale):
    B, N, C = x_ref.shape
    M = mem_ref.shape[1]
    hd = C // num_heads

    x2 = x_ref[...].reshape(B * N, C)          # (B*N, C) activation, stays in vregs/VMEM
    mem2 = mem_ref[...].reshape(B * M, C)      # (B*M, C)

    def attention(q2, kv2, kv_len, wq_ref, wk_ref, wv_ref, wo_ref, bo_ref):
        # q2: (B*N, C) normalized queries; kv2: (B*kv_len, C) raw keys/values.
        q = jnp.dot(q2, wq_ref[...], preferred_element_type=jnp.float32)
        k = jnp.dot(kv2, wk_ref[...], preferred_element_type=jnp.float32)
        v = jnp.dot(kv2, wv_ref[...], preferred_element_type=jnp.float32)
        q3 = q.reshape(B, N, C)
        k3 = k.reshape(B, kv_len, C)
        v3 = v.reshape(B, kv_len, C)

        heads = []
        for h in range(num_heads):             # head loop; each step batched over B
            sl = slice(h * hd, (h + 1) * hd)
            s = jnp.einsum('bnd,bmd->bnm', q3[:, :, sl], k3[:, :, sl],
                           preferred_element_type=jnp.float32) * scale
            s = s - jnp.max(s, axis=-1, keepdims=True)
            e = jnp.exp(s)
            inv = pl.reciprocal(jnp.sum(e, axis=-1, keepdims=True), approx=True)
            p = e * inv
            heads.append(jnp.einsum('bnm,bmd->bnd', p, v3[:, :, sl],
                                    preferred_element_type=jnp.float32))
        ctx = jnp.concatenate(heads, axis=-1).reshape(B * N, C)   # (B*N, C)
        # single lane-dense output projection
        return jnp.dot(ctx, wo_ref[...], preferred_element_type=jnp.float32) + bo_ref[...]

    # ---- self-attention block (residual folded in) ----
    h2 = _layer_norm_rows(x2, g1_ref[...], b1_ref[...])
    x2 = x2 + attention(h2, h2, N, wq1_ref, wk1_ref, wv1_ref, wo1_ref, bo1_ref)

    # ---- cross-attention block (memory is NOT normalized, matching the module) ----
    q2 = _layer_norm_rows(x2, g2_ref[...], b2_ref[...])
    x2 = x2 + attention(q2, mem2, M, wq2_ref, wk2_ref, wv2_ref, wo2_ref, bo2_ref)

    # ---- MLP block ----
    hm = _layer_norm_rows(x2, g3_ref[...], b3_ref[...])
    hm = jnp.dot(hm, w1_ref[...], preferred_element_type=jnp.float32) + bb1_ref[...]
    hm = _gelu_exact(hm)
    x2 = x2 + jnp.dot(hm, w2_ref[...], preferred_element_type=jnp.float32) + bb2_ref[...]

    o_ref[...] = x2.reshape(B, N, C).astype(o_ref.dtype)


# ------------------------------ host wrapper ------------------------------- #

def transformer_decoder_layer(params, x, mem, *, num_heads):
    B, N, C = x.shape
    scale = float((C // num_heads) ** (-0.5))

    operands = (
        x, mem,
        params["norm1"][0], params["norm1"][1],
        *params["self_attn"],
        params["norm2"][0], params["norm2"][1],
        *params["cross_attn"],
        params["norm3"][0], params["norm3"][1],
        *params["mlp"],
    )

    def full_spec(a):
        nd = a.ndim
        return pl.BlockSpec(a.shape, lambda i, _nd=nd: (0,) * _nd)

    kernel = functools.partial(_decoder_layer_kernel, num_heads=num_heads, scale=scale)
    return pl.pallas_call(
        kernel,
        out_shape=jax.ShapeDtypeStruct((B, N, C), jnp.float32),
        grid=(1,),
        in_specs=[full_spec(a) for a in operands],
        out_specs=pl.BlockSpec((B, N, C), lambda i: (0, 0, 0)),
        compiler_params=pltpu.CompilerParams(dimension_semantics=("arbitrary",)),
    )(*operands)


# ------------------------- parameters (deterministic) ----------------------- #

def init_params(key, d_model):
    keys = iter(jax.random.split(key, 16))

    def w(din, dout):
        return 0.02 * jax.random.truncated_normal(next(keys), -2.0, 2.0,
                                                  (din, dout), jnp.float32)

    def ln(d):
        return (jnp.ones((1, d), jnp.float32), jnp.zeros((1, d), jnp.float32))

    def attn(d):
        # q/k/v projections have no bias (qkv_bias=False); out proj has a bias.
        return (w(d, d), w(d, d), w(d, d), w(d, d), jnp.zeros((1, d), jnp.float32))

    return {
        "norm1": ln(d_model),
        "self_attn": attn(d_model),
        "norm2": ln(d_model),
        "cross_attn": attn(d_model),
        "norm3": ln(d_model),
        "mlp": (w(d_model, 4 * d_model), jnp.zeros((1, 4 * d_model), jnp.float32),
                w(4 * d_model, d_model), jnp.zeros((1, d_model), jnp.float32)),
    }


# --------------------------- pure-JAX reference ----------------------------- #

def _reference(params, x, mem, *, num_heads):
    B, N, C = x.shape
    hd = C // num_heads
    scale = hd ** (-0.5)

    def ln(v, g, b):
        mu = jnp.mean(v, axis=-1, keepdims=True)
        var = jnp.mean((v - mu) ** 2, axis=-1, keepdims=True)
        return (v - mu) / jnp.sqrt(var + EPS) * g + b

    def attn(pr, q, k, v):
        wq, wk, wv, wo, bo = pr
        qp = (q @ wq).reshape(B, -1, num_heads, hd)
        kp = (k @ wk).reshape(B, -1, num_heads, hd)
        vp = (v @ wv).reshape(B, -1, num_heads, hd)
        s = jnp.einsum('bnkc,bmkc->bknm', qp, kp) * scale
        p = jax.nn.softmax(s, axis=-1)
        o = jnp.einsum('bknm,bmkc->bnkc', p, vp).reshape(B, -1, C)
        return o @ wo + bo

    h = ln(x, *params["norm1"])
    x = x + attn(params["self_attn"], h, h, h)
    q = ln(x, *params["norm2"])
    x = x + attn(params["cross_attn"], q, mem, mem)
    h = ln(x, *params["norm3"])
    w1, b1, w2, b2 = params["mlp"]
    hidden = h @ w1 + b1
    hidden = 0.5 * hidden * (1.0 + jax.lax.erf(hidden * _INV_SQRT2))
    return x + hidden @ w2 + b2


# ----------------------------------- main ----------------------------------- #

if __name__ == "__main__":
    key = jax.random.PRNGKey(0)
    kx, km, kp = jax.random.split(key, 3)

    # small shapes consistent with the module; d_model = 128 keeps channels lane-dense
    B, N, M = 2, 8, 16                 # batch, target tokens, memory tokens
    d_model, nhead = 128, 8

    x = jax.random.normal(kx, (B, N, d_model), jnp.float32)
    mem = jax.random.normal(km, (B, M, d_model), jnp.float32)
    params = init_params(kp, d_model)

    fwd = jax.jit(functools.partial(transformer_decoder_layer, num_heads=nhead))
    out = fwd(params, x, mem)
    jax.block_until_ready(out)

    ref = _reference(params, x, mem, num_heads=nhead)
    assert out.shape == (B, N, d_model) and out.dtype == jnp.float32
    assert jnp.allclose(out, ref, rtol=2e-2, atol=2e-2), float(jnp.max(jnp.abs(out - ref)))
    print("KERNEL_OK")
</pallas_src>

<mosaic_0001>
module attributes {stable_mosaic.version = 11 : i64} {
  func.func @_decoder_layer_kernel(%arg0: i32, %arg1: memref<2x8x128xf32, #tpu.memory_space<vmem>>, %arg2: memref<2x16x128xf32, #tpu.memory_space<vmem>>, %arg3: memref<1x128xf32, #tpu.memory_space<vmem>>, %arg4: memref<1x128xf32, #tpu.memory_space<vmem>>, %arg5: memref<128x128xf32, #tpu.memory_space<vmem>>, %arg6: memref<128x128xf32, #tpu.memory_space<vmem>>, %arg7: memref<128x128xf32, #tpu.memory_space<vmem>>, %arg8: memref<128x128xf32, #tpu.memory_space<vmem>>, %arg9: memref<1x128xf32, #tpu.memory_space<vmem>>, %arg10: memref<1x128xf32, #tpu.memory_space<vmem>>, %arg11: memref<1x128xf32, #tpu.memory_space<vmem>>, %arg12: memref<128x128xf32, #tpu.memory_space<vmem>>, %arg13: memref<128x128xf32, #tpu.memory_space<vmem>>, %arg14: memref<128x128xf32, #tpu.memory_space<vmem>>, %arg15: memref<128x128xf32, #tpu.memory_space<vmem>>, %arg16: memref<1x128xf32, #tpu.memory_space<vmem>>, %arg17: memref<1x128xf32, #tpu.memory_space<vmem>>, %arg18: memref<1x128xf32, #tpu.memory_space<vmem>>, %arg19: memref<128x512xf32, #tpu.memory_space<vmem>>, %arg20: memref<1x512xf32, #tpu.memory_space<vmem>>, %arg21: memref<512x128xf32, #tpu.memory_space<vmem>>, %arg22: memref<1x128xf32, #tpu.memory_space<vmem>>, %arg23: memref<2x8x128xf32, #tpu.memory_space<vmem>>) attributes {dimension_semantics = [#tpu.dimension_semantics<arbitrary>], iteration_bounds = array<i64: 1>, scalar_prefetch = 0 : i64, scratch_operands = 0 : i64, tpu.core_type = #tpu.core_type<tc>, window_params = [{pipeline_mode = #tpu.pipeline_mode<synchronous>, transform_indices = @transform_0, window_bounds = array<i64: 2, 8, 128>}, {pipeline_mode = #tpu.pipeline_mode<synchronous>, transform_indices = @transform_1, window_bounds = array<i64: 2, 16, 128>}, {pipeline_mode = #tpu.pipeline_mode<synchronous>, transform_indices = @transform_2, window_bounds = array<i64: 1, 128>}, {pipeline_mode = #tpu.pipeline_mode<synchronous>, transform_indices = @transform_3, window_bounds = array<i64: 1, 128>}, {pipeline_mode = #tpu.pipeline_mode<synchronous>, transform_indices = @transform_4, window_bounds = array<i64: 128, 128>}, {pipeline_mode = #tpu.pipeline_mode<synchronous>, transform_indices = @transform_5, window_bounds = array<i64: 128, 128>}, {pipeline_mode = #tpu.pipeline_mode<synchronous>, transform_indices = @transform_6, window_bounds = array<i64: 128, 128>}, {pipeline_mode = #tpu.pipeline_mode<synchronous>, transform_indices = @transform_7, window_bounds = array<i64: 128, 128>}, {pipeline_mode = #tpu.pipeline_mode<synchronous>, transform_indices = @transform_8, window_bounds = array<i64: 1, 128>}, {pipeline_mode = #tpu.pipeline_mode<synchronous>, transform_indices = @transform_9, window_bounds = array<i64: 1, 128>}, {pipeline_mode = #tpu.pipeline_mode<synchronous>, transform_indices = @transform_10, window_bounds = array<i64: 1, 128>}, {pipeline_mode = #tpu.pipeline_mode<synchronous>, transform_indices = @transform_11, window_bounds = array<i64: 128, 128>}, {pipeline_mode = #tpu.pipeline_mode<synchronous>, transform_indices = @transform_12, window_bounds = array<i64: 128, 128>}, {pipeline_mode = #tpu.pipeline_mode<synchronous>, transform_indices = @transform_13, window_bounds = array<i64: 128, 128>}, {pipeline_mode = #tpu.pipeline_mode<synchronous>, transform_indices = @transform_14, window_bounds = array<i64: 128, 128>}, {pipeline_mode = #tpu.pipeline_mode<synchronous>, transform_indices = @transform_15, window_bounds = array<i64: 1, 128>}, {pipeline_mode = #tpu.pipeline_mode<synchronous>, transform_indices = @transform_16, window_bounds = array<i64: 1, 128>}, {pipeline_mode = #tpu.pipeline_mode<synchronous>, transform_indices = @transform_17, window_bounds = array<i64: 1, 128>}, {pipeline_mode = #tpu.pipeline_mode<synchronous>, transform_indices = @transform_18, window_bounds = array<i64: 128, 512>}, {pipeline_mode = #tpu.pipeline_mode<synchronous>, transform_indices = @transform_19, window_bounds = array<i64: 1, 512>}, {pipeline_mode = #tpu.pipeline_mode<synchronous>, transform_indices = @transform_20, window_bounds = array<i64: 512, 128>}, {pipeline_mode = #tpu.pipeline_mode<synchronous>, transform_indices = @transform_21, window_bounds = array<i64: 1, 128>}, {pipeline_mode = #tpu.pipeline_mode<synchronous>, transform_indices = @transform_22, window_bounds = array<i64: 2, 8, 128>}]} {
    %c0 = arith.constant 0 : index
    %c0_0 = arith.constant 0 : index
    %c0_1 = arith.constant 0 : index
    %0 = vector.load %arg1[%c0, %c0_0, %c0_1] : memref<2x8x128xf32, #tpu.memory_space<vmem>>, vector<2x8x128xf32>
    %1 = vector.shape_cast %0 : vector<2x8x128xf32> to vector<16x128xf32>
    %c0_2 = arith.constant 0 : index
    %c0_3 = arith.constant 0 : index
    %c0_4 = arith.constant 0 : index
    %2 = vector.load %arg2[%c0_2, %c0_3, %c0_4] : memref<2x16x128xf32, #tpu.memory_space<vmem>>, vector<2x16x128xf32>
    %3 = vector.shape_cast %2 : vector<2x16x128xf32> to vector<32x128xf32>
    %c0_5 = arith.constant 0 : index
    %c0_6 = arith.constant 0 : index
    %4 = vector.load %arg3[%c0_5, %c0_6] : memref<1x128xf32, #tpu.memory_space<vmem>>, vector<1x128xf32>
    %c0_7 = arith.constant 0 : index
    %c0_8 = arith.constant 0 : index
    %5 = vector.load %arg4[%c0_7, %c0_8] : memref<1x128xf32, #tpu.memory_space<vmem>>, vector<1x128xf32>
    %cst = arith.constant dense<0.000000e+00> : vector<16xf32>
    %6 = vector.multi_reduction <add>, %1, %cst [1] : vector<16x128xf32> to vector<16xf32>
    %7 = vector.shape_cast %6 : vector<16xf32> to vector<16x1xf32>
    %cst_9 = arith.constant 1.280000e+02 : f32
    %8 = vector.broadcast %cst_9 : f32 to vector<16x1xf32>
    %9 = arith.divf %7, %8 : vector<16x1xf32>
    %10 = vector.broadcast %9 : vector<16x1xf32> to vector<16x128xf32>
    %11 = arith.subf %1, %10 : vector<16x128xf32>
    %12 = arith.mulf %11, %11 : vector<16x128xf32>
    %cst_10 = arith.constant dense<0.000000e+00> : vector<16xf32>
    %13 = vector.multi_reduction <add>, %12, %cst_10 [1] : vector<16x128xf32> to vector<16xf32>
    %14 = vector.shape_cast %13 : vector<16xf32> to vector<16x1xf32>
    %cst_11 = arith.constant 1.280000e+02 : f32
    %15 = vector.broadcast %cst_11 : f32 to vector<16x1xf32>
    %16 = arith.divf %14, %15 : vector<16x1xf32>
    %17 = vector.broadcast %9 : vector<16x1xf32> to vector<16x128xf32>
    %18 = arith.subf %1, %17 : vector<16x128xf32>
    %cst_12 = arith.constant 9.99999974E-6 : f32
    %19 = vector.broadcast %cst_12 : f32 to vector<16x1xf32>
    %20 = arith.addf %16, %19 : vector<16x1xf32>
    %21 = math.rsqrt %20 : vector<16x1xf32>
    %22 = vector.broadcast %21 : vector<16x1xf32> to vector<16x128xf32>
    %23 = arith.mulf %18, %22 : vector<16x128xf32>
    %24 = vector.broadcast %4 : vector<1x128xf32> to vector<16x128xf32>
    %25 = arith.mulf %23, %24 : vector<16x128xf32>
    %26 = vector.broadcast %5 : vector<1x128xf32> to vector<16x128xf32>
    %27 = arith.addf %25, %26 : vector<16x128xf32>
    %c0_13 = arith.constant 0 : index
    %c0_14 = arith.constant 0 : index
    %28 = vector.load %arg5[%c0_13, %c0_14] : memref<128x128xf32, #tpu.memory_space<vmem>>, vector<128x128xf32>
    %cst_15 = arith.constant dense<0.000000e+00> : vector<16x128xf32>
    %29 = tpu.matmul %27, %28, %cst_15 {dimension_numbers = #tpu.dot_dimension_numbers<[1], [0], [0], [1], [0, 0, 1, 1], [], []>} : vector<16x128xf32>, vector<128x128xf32>, vector<16x128xf32> -> vector<16x128xf32>
    %c0_16 = arith.constant 0 : index
    %c0_17 = arith.constant 0 : index
    %30 = vector.load %arg6[%c0_16, %c0_17] : memref<128x128xf32, #tpu.memory_space<vmem>>, vector<128x128xf32>
    %cst_18 = arith.constant dense<0.000000e+00> : vector<16x128xf32>
    %31 = tpu.matmul %27, %30, %cst_18 {dimension_numbers = #tpu.dot_dimension_numbers<[1], [0], [0], [1], [0, 0, 1, 1], [], []>} : vector<16x128xf32>, vector<128x128xf32>, vector<16x128xf32> -> vector<16x128xf32>
    %c0_19 = arith.constant 0 : index
    %c0_20 = arith.constant 0 : index
    %32 = vector.load %arg7[%c0_19, %c0_20] : memref<128x128xf32, #tpu.memory_space<vmem>>, vector<128x128xf32>
    %cst_21 = arith.constant dense<0.000000e+00> : vector<16x128xf32>
    %33 = tpu.matmul %27, %32, %cst_21 {dimension_numbers = #tpu.dot_dimension_numbers<[1], [0], [0], [1], [0, 0, 1, 1], [], []>} : vector<16x128xf32>, vector<128x128xf32>, vector<16x128xf32> -> vector<16x128xf32>
    %34 = vector.shape_cast %29 : vector<16x128xf32> to vector<2x8x128xf32>
    %35 = vector.shape_cast %31 : vector<16x128xf32> to vector<2x8x128xf32>
    %36 = vector.shape_cast %33 : vector<16x128xf32> to vector<2x8x128xf32>
    %37 = vector.extract_strided_slice %34 {offsets = [0, 0, 0], sizes = [2, 8, 16], strides = [1, 1, 1]} : vector<2x8x128xf32> to vector<2x8x16xf32>
    %38 = vector.extract_strided_slice %35 {offsets = [0, 0, 0], sizes = [2, 8, 16], strides = [1, 1, 1]} : vector<2x8x128xf32> to vector<2x8x16xf32>
    "tpu.trace_start"() <{level = 10 : i32, message = "bnd,bmd->bnm"}> : () -> ()
    %cst_22 = arith.constant dense<0.000000e+00> : vector<2x8x8xf32>
    %39 = tpu.matmul %37, %38, %cst_22 {dimension_numbers = #tpu.dot_dimension_numbers<[2], [2], [1], [1], [0, 0, 0, 1, 1, 1], [0], [0]>} : vector<2x8x16xf32>, vector<2x8x16xf32>, vector<2x8x8xf32> -> vector<2x8x8xf32>
    "tpu.trace_stop"() : () -> ()
    %cst_23 = arith.constant 2.500000e-01 : f32
    %40 = vector.broadcast %cst_23 : f32 to vector<2x8x8xf32>
    %41 = arith.mulf %39, %40 : vector<2x8x8xf32>
    %cst_24 = arith.constant dense<0xFF800000> : vector<2x8xf32>
    %42 = vector.multi_reduction <maximumf>, %41, %cst_24 [2] : vector<2x8x8xf32> to vector<2x8xf32>
    %43 = vector.shape_cast %42 : vector<2x8xf32> to vector<2x8x1xf32>
    %44 = vector.broadcast %43 : vector<2x8x1xf32> to vector<2x8x8xf32>
    %45 = arith.subf %41, %44 : vector<2x8x8xf32>
    %46 = math.exp %45 : vector<2x8x8xf32>
    %cst_25 = arith.constant dense<0.000000e+00> : vector<2x8xf32>
    %47 = vector.multi_reduction <add>, %46, %cst_25 [2] : vector<2x8x8xf32> to vector<2x8xf32>
    %48 = vector.shape_cast %47 : vector<2x8xf32> to vector<2x8x1xf32>
    %49 = tpu.reciprocal %48 {approx = true} : vector<2x8x1xf32> -> vector<2x8x1xf32>
    %50 = vector.broadcast %49 : vector<2x8x1xf32> to vector<2x8x8xf32>
    %51 = arith.mulf %46, %50 : vector<2x8x8xf32>
    %52 = vector.extract_strided_slice %36 {offsets = [0, 0, 0], sizes = [2, 8, 16], strides = [1, 1, 1]} : vector<2x8x128xf32> to vector<2x8x16xf32>
    "tpu.trace_start"() <{level = 10 : i32, message = "bnm,bmd->bnd"}> : () -> ()
    %cst_26 = arith.constant dense<0.000000e+00> : vector<2x8x16xf32>
    %53 = tpu.matmul %51, %52, %cst_26 {dimension_numbers = #tpu.dot_dimension_numbers<[2], [1], [1], [2], [0, 0, 0, 1, 1, 2], [0], [0]>} : vector<2x8x8xf32>, vector<2x8x16xf32>, vector<2x8x16xf32> -> vector<2x8x16xf32>
    "tpu.trace_stop"() : () -> ()
    %54 = vector.extract_strided_slice %34 {offsets = [0, 0, 16], sizes = [2, 8, 16], strides = [1, 1, 1]} : vector<2x8x128xf32> to vector<2x8x16xf32>
    %55 = vector.extract_strided_slice %35 {offsets = [0, 0, 16], sizes = [2, 8, 16], strides = [1, 1, 1]} : vector<2x8x128xf32> to vector<2x8x16xf32>
    "tpu.trace_start"() <{level = 10 : i32, message = "bnd,bmd->bnm"}> : () -> ()
    %cst_27 = arith.constant dense<0.000000e+00> : vector<2x8x8xf32>
    %56 = tpu.matmul %54, %55, %cst_27 {dimension_numbers = #tpu.dot_dimension_numbers<[2], [2], [1], [1], [0, 0, 0, 1, 1, 1], [0], [0]>} : vector<2x8x16xf32>, vector<2x8x16xf32>, vector<2x8x8xf32> -> vector<2x8x8xf32>
    "tpu.trace_stop"() : () -> ()
    %cst_28 = arith.constant 2.500000e-01 : f32
    %57 = vector.broadcast %cst_28 : f32 to vector<2x8x8xf32>
    %58 = arith.mulf %56, %57 : vector<2x8x8xf32>
    %cst_29 = arith.constant dense<0xFF800000> : vector<2x8xf32>
    %59 = vector.multi_reduction <maximumf>, %58, %cst_29 [2] : vector<2x8x8xf32> to vector<2x8xf32>
    %60 = vector.shape_cast %59 : vector<2x8xf32> to vector<2x8x1xf32>
    %61 = vector.broadcast %60 : vector<2x8x1xf32> to vector<2x8x8xf32>
    %62 = arith.subf %58, %61 : vector<2x8x8xf32>
    %63 = math.exp %62 : vector<2x8x8xf32>
    %cst_30 = arith.constant dense<0.000000e+00> : vector<2x8xf32>
    %64 = vector.multi_reduction <add>, %63, %cst_30 [2] : vector<2x8x8xf32> to vector<2x8xf32>
    %65 = vector.shape_cast %64 : vector<2x8xf32> to vector<2x8x1xf32>
    %66 = tpu.reciprocal %65 {approx = true} : vector<2x8x1xf32> -> vector<2x8x1xf32>
    %67 = vector.broadcast %66 : vector<2x8x1xf32> to vector<2x8x8xf32>
    %68 = arith.mulf %63, %67 : vector<2x8x8xf32>
    %69 = vector.extract_strided_slice %36 {offsets = [0, 0, 16], sizes = [2, 8, 16], strides = [1, 1, 1]} : vector<2x8x128xf32> to vector<2x8x16xf32>
    "tpu.trace_start"() <{level = 10 : i32, message = "bnm,bmd->bnd"}> : () -> ()
    %cst_31 = arith.constant dense<0.000000e+00> : vector<2x8x16xf32>
    %70 = tpu.matmul %68, %69, %cst_31 {dimension_numbers = #tpu.dot_dimension_numbers<[2], [1], [1], [2], [0, 0, 0, 1, 1, 2], [0], [0]>} : vector<2x8x8xf32>, vector<2x8x16xf32>, vector<2x8x16xf32> -> vector<2x8x16xf32>
    "tpu.trace_stop"() : () -> ()
    %71 = vector.extract_strided_slice %34 {offsets = [0, 0, 32], sizes = [2, 8, 16], strides = [1, 1, 1]} : vector<2x8x128xf32> to vector<2x8x16xf32>
    %72 = vector.extract_strided_slice %35 {offsets = [0, 0, 32], sizes = [2, 8, 16], strides = [1, 1, 1]} : vector<2x8x128xf32> to vector<2x8x16xf32>
    "tpu.trace_start"() <{level = 10 : i32, message = "bnd,bmd->bnm"}> : () -> ()
    %cst_32 = arith.constant dense<0.000000e+00> : vector<2x8x8xf32>
    %73 = tpu.matmul %71, %72, %cst_32 {dimension_numbers = #tpu.dot_dimension_numbers<[2], [2], [1], [1], [0, 0, 0, 1, 1, 1], [0], [0]>} : vector<2x8x16xf32>, vector<2x8x16xf32>, vector<2x8x8xf32> -> vector<2x8x8xf32>
    "tpu.trace_stop"() : () -> ()
    %cst_33 = arith.constant 2.500000e-01 : f32
    %74 = vector.broadcast %cst_33 : f32 to vector<2x8x8xf32>
    %75 = arith.mulf %73, %74 : vector<2x8x8xf32>
    %cst_34 = arith.constant dense<0xFF800000> : vector<2x8xf32>
    %76 = vector.multi_reduction <maximumf>, %75, %cst_34 [2] : vector<2x8x8xf32> to vector<2x8xf32>
    %77 = vector.shape_cast %76 : vector<2x8xf32> to vector<2x8x1xf32>
    %78 = vector.broadcast %77 : vector<2x8x1xf32> to vector<2x8x8xf32>
    %79 = arith.subf %75, %78 : vector<2x8x8xf32>
    %80 = math.exp %79 : vector<2x8x8xf32>
    %cst_35 = arith.constant dense<0.000000e+00> : vector<2x8xf32>
    %81 = vector.multi_reduction <add>, %80, %cst_35 [2] : vector<2x8x8xf32> to vector<2x8xf32>
    %82 = vector.shape_cast %81 : vector<2x8xf32> to vector<2x8x1xf32>
    %83 = tpu.reciprocal %82 {approx = true} : vector<2x8x1xf32> -> vector<2x8x1xf32>
    %84 = vector.broadcast %83 : vector<2x8x1xf32> to vector<2x8x8xf32>
    %85 = arith.mulf %80, %84 : vector<2x8x8xf32>
    %86 = vector.extract_strided_slice %36 {offsets = [0, 0, 32], sizes = [2, 8, 16], strides = [1, 1, 1]} : vector<2x8x128xf32> to vector<2x8x16xf32>
    "tpu.trace_start"() <{level = 10 : i32, message = "bnm,bmd->bnd"}> : () -> ()
    %cst_36 = arith.constant dense<0.000000e+00> : vector<2x8x16xf32>
    %87 = tpu.matmul %85, %86, %cst_36 {dimension_numbers = #tpu.dot_dimension_numbers<[2], [1], [1], [2], [0, 0, 0, 1, 1, 2], [0], [0]>} : vector<2x8x8xf32>, vector<2x8x16xf32>, vector<2x8x16xf32> -> vector<2x8x16xf32>
    "tpu.trace_stop"() : () -> ()
    %88 = vector.extract_strided_slice %34 {offsets = [0, 0, 48], sizes = [2, 8, 16], strides = [1, 1, 1]} : vector<2x8x128xf32> to vector<2x8x16xf32>
    %89 = vector.extract_strided_slice %35 {offsets = [0, 0, 48], sizes = [2, 8, 16], strides = [1, 1, 1]} : vector<2x8x128xf32> to vector<2x8x16xf32>
    "tpu.trace_start"() <{level = 10 : i32, message = "bnd,bmd->bnm"}> : () -> ()
    %cst_37 = arith.constant dense<0.000000e+00> : vector<2x8x8xf32>
    %90 = tpu.matmul %88, %89, %cst_37 {dimension_numbers = #tpu.dot_dimension_numbers<[2], [2], [1], [1], [0, 0, 0, 1, 1, 1], [0], [0]>} : vector<2x8x16xf32>, vector<2x8x16xf32>, vector<2x8x8xf32> -> vector<2x8x8xf32>
    "tpu.trace_stop"() : () -> ()
    %cst_38 = arith.constant 2.500000e-01 : f32
    %91 = vector.broadcast %cst_38 : f32 to vector<2x8x8xf32>
    %92 = arith.mulf %90, %91 : vector<2x8x8xf32>
    %cst_39 = arith.constant dense<0xFF800000> : vector<2x8xf32>
    %93 = vector.multi_reduction <maximumf>, %92, %cst_39 [2] : vector<2x8x8xf32> to vector<2x8xf32>
    %94 = vector.shape_cast %93 : vector<2x8xf32> to vector<2x8x1xf32>
    %95 = vector.broadcast %94 : vector<2x8x1xf32> to vector<2x8x8xf32>
    %96 = arith.subf %92, %95 : vector<2x8x8xf32>
    %97 = math.exp %96 : vector<2x8x8xf32>
    %cst_40 = arith.constant dense<0.000000e+00> : vector<2x8xf32>
    %98 = vector.multi_reduction <add>, %97, %cst_40 [2] : vector<2x8x8xf32> to vector<2x8xf32>
    %99 = vector.shape_cast %98 : vector<2x8xf32> to vector<2x8x1xf32>
    %100 = tpu.reciprocal %99 {approx = true} : vector<2x8x1xf32> -> vector<2x8x1xf32>
    %101 = vector.broadcast %100 : vector<2x8x1xf32> to vector<2x8x8xf32>
    %102 = arith.mulf %97, %101 : vector<2x8x8xf32>
    %103 = vector.extract_strided_slice %36 {offsets = [0, 0, 48], sizes = [2, 8, 16], strides = [1, 1, 1]} : vector<2x8x128xf32> to vector<2x8x16xf32>
    "tpu.trace_start"() <{level = 10 : i32, message = "bnm,bmd->bnd"}> : () -> ()
    %cst_41 = arith.constant dense<0.000000e+00> : vector<2x8x16xf32>
    %104 = tpu.matmul %102, %103, %cst_41 {dimension_numbers = #tpu.dot_dimension_numbers<[2], [1], [1], [2], [0, 0, 0, 1, 1, 2], [0], [0]>} : vector<2x8x8xf32>, vector<2x8x16xf32>, vector<2x8x16xf32> -> vector<2x8x16xf32>
    "tpu.trace_stop"() : () -> ()
    %105 = vector.extract_strided_slice %34 {offsets = [0, 0, 64], sizes = [2, 8, 16], strides = [1, 1, 1]} : vector<2x8x128xf32> to vector<2x8x16xf32>
    %106 = vector.extract_strided_slice %35 {offsets = [0, 0, 64], sizes = [2, 8, 16], strides = [1, 1, 1]} : vector<2x8x128xf32> to vector<2x8x16xf32>
    "tpu.trace_start"() <{level = 10 : i32, message = "bnd,bmd->bnm"}> : () -> ()
    %cst_42 = arith.constant dense<0.000000e+00> : vector<2x8x8xf32>
    %107 = tpu.matmul %105, %106, %cst_42 {dimension_numbers = #tpu.dot_dimension_numbers<[2], [2], [1], [1], [0, 0, 0, 1, 1, 1], [0], [0]>} : vector<2x8x16xf32>, vector<2x8x16xf32>, vector<2x8x8xf32> -> vector<2x8x8xf32>
    "tpu.trace_stop"() : () -> ()
    %cst_43 = arith.constant 2.500000e-01 : f32
    %108 = vector.broadcast %cst_43 : f32 to vector<2x8x8xf32>
    %109 = arith.mulf %107, %108 : vector<2x8x8xf32>
    %cst_44 = arith.constant dense<0xFF800000> : vector<2x8xf32>
    %110 = vector.multi_reduction <maximumf>, %109, %cst_44 [2] : vector<2x8x8xf32> to vector<2x8xf32>
    %111 = vector.shape_cast %110 : vector<2x8xf32> to vector<2x8x1xf32>
    %112 = vector.broadcast %111 : vector<2x8x1xf32> to vector<2x8x8xf32>
    %113 = arith.subf %109, %112 : vector<2x8x8xf32>
    %114 = math.exp %113 : vector<2x8x8xf32>
    %cst_45 = arith.constant dense<0.000000e+00> : vector<2x8xf32>
    %115 = vector.multi_reduction <add>, %114, %cst_45 [2] : vector<2x8x8xf32> to vector<2x8xf32>
    %116 = vector.shape_cast %115 : vector<2x8xf32> to vector<2x8x1xf32>
    %117 = tpu.reciprocal %116 {approx = true} : vector<2x8x1xf32> -> vector<2x8x1xf32>
    %118 = vector.broadcast %117 : vector<2x8x1xf32> to vector<2x8x8xf32>
    %119 = arith.mulf %114, %118 : vector<2x8x8xf32>
    %120 = vector.extract_strided_slice %36 {offsets = [0, 0, 64], sizes = [2, 8, 16], strides = [1, 1, 1]} : vector<2x8x128xf32> to vector<2x8x16xf32>
    "tpu.trace_start"() <{level = 10 : i32, message = "bnm,bmd->bnd"}> : () -> ()
    %cst_46 = arith.constant dense<0.000000e+00> : vector<2x8x16xf32>
    %121 = tpu.matmul %119, %120, %cst_46 {dimension_numbers = #tpu.dot_dimension_numbers<[2], [1], [1], [2], [0, 0, 0, 1, 1, 2], [0], [0]>} : vector<2x8x8xf32>, vector<2x8x16xf32>, vector<2x8x16xf32> -> vector<2x8x16xf32>
    "tpu.trace_stop"() : () -> ()
    %122 = vector.extract_strided_slice %34 {offsets = [0, 0, 80], sizes = [2, 8, 16], strides = [1, 1, 1]} : vector<2x8x128xf32> to vector<2x8x16xf32>
    %123 = vector.extract_strided_slice %35 {offsets = [0, 0, 80], sizes = [2, 8, 16], strides = [1, 1, 1]} : vector<2x8x128xf32> to vector<2x8x16xf32>
    "tpu.trace_start"() <{level = 10 : i32, message = "bnd,bmd->bnm"}> : () -> ()
    %cst_47 = arith.constant dense<0.000000e+00> : vector<2x8x8xf32>
    %124 = tpu.matmul %122, %123, %cst_47 {dimension_numbers = #tpu.dot_dimension_numbers<[2], [2], [1], [1], [0, 0, 0, 1, 1, 1], [0], [0]>} : vector<2x8x16xf32>, vector<2x8x16xf32>, vector<2x8x8xf32> -> vector<2x8x8xf32>
    "tpu.trace_stop"() : () -> ()
    %cst_48 = arith.constant 2.500000e-01 : f32
    %125 = vector.broadcast %cst_48 : f32 to vector<2x8x8xf32>
    %126 = arith.mulf %124, %125 : vector<2x8x8xf32>
    %cst_49 = arith.constant dense<0xFF800000> : vector<2x8xf32>
    %127 = vector.multi_reduction <maximumf>, %126, %cst_49 [2] : vector<2x8x8xf32> to vector<2x8xf32>
    %128 = vector.shape_cast %127 : vector<2x8xf32> to vector<2x8x1xf32>
    %129 = vector.broadcast %128 : vector<2x8x1xf32> to vector<2x8x8xf32>
    %130 = arith.subf %126, %129 : vector<2x8x8xf32>
    %131 = math.exp %130 : vector<2x8x8xf32>
    %cst_50 = arith.constant dense<0.000000e+00> : vector<2x8xf32>
    %132 = vector.multi_reduction <add>, %131, %cst_50 [2] : vector<2x8x8xf32> to vector<2x8xf32>
    %133 = vector.shape_cast %132 : vector<2x8xf32> to vector<2x8x1xf32>
    %134 = tpu.reciprocal %133 {approx = true} : vector<2x8x1xf32> -> vector<2x8x1xf32>
    %135 = vector.broadcast %134 : vector<2x8x1xf32> to vector<2x8x8xf32>
    %136 = arith.mulf %131, %135 : vector<2x8x8xf32>
    %137 = vector.extract_strided_slice %36 {offsets = [0, 0, 80], sizes = [2, 8, 16], strides = [1, 1, 1]} : vector<2x8x128xf32> to vector<2x8x16xf32>
    "tpu.trace_start"() <{level = 10 : i32, message = "bnm,bmd->bnd"}> : () -> ()
    %cst_51 = arith.constant dense<0.000000e+00> : vector<2x8x16xf32>
    %138 = tpu.matmul %136, %137, %cst_51 {dimension_numbers = #tpu.dot_dimension_numbers<[2], [1], [1], [2], [0, 0, 0, 1, 1, 2], [0], [0]>} : vector<2x8x8xf32>, vector<2x8x16xf32>, vector<2x8x16xf32> -> vector<2x8x16xf32>
    "tpu.trace_stop"() : () -> ()
    %139 = vector.extract_strided_slice %34 {offsets = [0, 0, 96], sizes = [2, 8, 16], strides = [1, 1, 1]} : vector<2x8x128xf32> to vector<2x8x16xf32>
    %140 = vector.extract_strided_slice %35 {offsets = [0, 0, 96], sizes = [2, 8, 16], strides = [1, 1, 1]} : vector<2x8x128xf32> to vector<2x8x16xf32>
    "tpu.trace_start"() <{level = 10 : i32, message = "bnd,bmd->bnm"}> : () -> ()
    %cst_52 = arith.constant dense<0.000000e+00> : vector<2x8x8xf32>
    %141 = tpu.matmul %139, %140, %cst_52 {dimension_numbers = #tpu.dot_dimension_numbers<[2], [2], [1], [1], [0, 0, 0, 1, 1, 1], [0], [0]>} : vector<2x8x16xf32>, vector<2x8x16xf32>, vector<2x8x8xf32> -> vector<2x8x8xf32>
    "tpu.trace_stop"() : () -> ()
    %cst_53 = arith.constant 2.500000e-01 : f32
    %142 = vector.broadcast %cst_53 : f32 to vector<2x8x8xf32>
    %143 = arith.mulf %141, %142 : vector<2x8x8xf32>
    %cst_54 = arith.constant dense<0xFF800000> : vector<2x8xf32>
    %144 = vector.multi_reduction <maximumf>, %143, %cst_54 [2] : vector<2x8x8xf32> to vector<2x8xf32>
    %145 = vector.shape_cast %144 : vector<2x8xf32> to vector<2x8x1xf32>
    %146 = vector.broadcast %145 : vector<2x8x1xf32> to vector<2x8x8xf32>
    %147 = arith.subf %143, %146 : vector<2x8x8xf32>
    %148 = math.exp %147 : vector<2x8x8xf32>
    %cst_55 = arith.constant dense<0.000000e+00> : vector<2x8xf32>
    %149 = vector.multi_reduction <add>, %148, %cst_55 [2] : vector<2x8x8xf32> to vector<2x8xf32>
    %150 = vector.shape_cast %149 : vector<2x8xf32> to vector<2x8x1xf32>
    %151 = tpu.reciprocal %150 {approx = true} : vector<2x8x1xf32> -> vector<2x8x1xf32>
    %152 = vector.broadcast %151 : vector<2x8x1xf32> to vector<2x8x8xf32>
    %153 = arith.mulf %148, %152 : vector<2x8x8xf32>
    %154 = vector.extract_strided_slice %36 {offsets = [0, 0, 96], sizes = [2, 8, 16], strides = [1, 1, 1]} : vector<2x8x128xf32> to vector<2x8x16xf32>
    "tpu.trace_start"() <{level = 10 : i32, message = "bnm,bmd->bnd"}> : () -> ()
    %cst_56 = arith.constant dense<0.000000e+00> : vector<2x8x16xf32>
    %155 = tpu.matmul %153, %154, %cst_56 {dimension_numbers = #tpu.dot_dimension_numbers<[2], [1], [1], [2], [0, 0, 0, 1, 1, 2], [0], [0]>} : vector<2x8x8xf32>, vector<2x8x16xf32>, vector<2x8x16xf32> -> vector<2x8x16xf32>
    "tpu.trace_stop"() : () -> ()
    %156 = vector.extract_strided_slice %34 {offsets = [0, 0, 112], sizes = [2, 8, 16], strides = [1, 1, 1]} : vector<2x8x128xf32> to vector<2x8x16xf32>
    %157 = vector.extract_strided_slice %35 {offsets = [0, 0, 112], sizes = [2, 8, 16], strides = [1, 1, 1]} : vector<2x8x128xf32> to vector<2x8x16xf32>
    "tpu.trace_start"() <{level = 10 : i32, message = "bnd,bmd->bnm"}> : () -> ()
    %cst_57 = arith.constant dense<0.000000e+00> : vector<2x8x8xf32>
    %158 = tpu.matmul %156, %157, %cst_57 {dimension_numbers = #tpu.dot_dimension_numbers<[2], [2], [1], [1], [0, 0, 0, 1, 1, 1], [0], [0]>} : vector<2x8x16xf32>, vector<2x8x16xf32>, vector<2x8x8xf32> -> vector<2x8x8xf32>
    "tpu.trace_stop"() : () -> ()
    %cst_58 = arith.constant 2.500000e-01 : f32
    %159 = vector.broadcast %cst_58 : f32 to vector<2x8x8xf32>
    %160 = arith.mulf %158, %159 : vector<2x8x8xf32>
    %cst_59 = arith.constant dense<0xFF800000> : vector<2x8xf32>
    %161 = vector.multi_reduction <maximumf>, %160, %cst_59 [2] : vector<2x8x8xf32> to vector<2x8xf32>
    %162 = vector.shape_cast %161 : vector<2x8xf32> to vector<2x8x1xf32>
    %163 = vector.broadcast %162 : vector<2x8x1xf32> to vector<2x8x8xf32>
    %164 = arith.subf %160, %163 : vector<2x8x8xf32>
    %165 = math.exp %164 : vector<2x8x8xf32>
    %cst_60 = arith.constant dense<0.000000e+00> : vector<2x8xf32>
    %166 = vector.multi_reduction <add>, %165, %cst_60 [2] : vector<2x8x8xf32> to vector<2x8xf32>
    %167 = vector.shape_cast %166 : vector<2x8xf32> to vector<2x8x1xf32>
    %168 = tpu.reciprocal %167 {approx = true} : vector<2x8x1xf32> -> vector<2x8x1xf32>
    %169 = vector.broadcast %168 : vector<2x8x1xf32> to vector<2x8x8xf32>
    %170 = arith.mulf %165, %169 : vector<2x8x8xf32>
    %171 = vector.extract_strided_slice %36 {offsets = [0, 0, 112], sizes = [2, 8, 16], strides = [1, 1, 1]} : vector<2x8x128xf32> to vector<2x8x16xf32>
    "tpu.trace_start"() <{level = 10 : i32, message = "bnm,bmd->bnd"}> : () -> ()
    %cst_61 = arith.constant dense<0.000000e+00> : vector<2x8x16xf32>
    %172 = tpu.matmul %170, %171, %cst_61 {dimension_numbers = #tpu.dot_dimension_numbers<[2], [1], [1], [2], [0, 0, 0, 1, 1, 2], [0], [0]>} : vector<2x8x8xf32>, vector<2x8x16xf32>, vector<2x8x16xf32> -> vector<2x8x16xf32>
    "tpu.trace_stop"() : () -> ()
    %173 = tpu.concatenate %53, %70, %87, %104, %121, %138, %155, %172 in 2 : vector<2x8x16xf32>, vector<2x8x16xf32>, vector<2x8x16xf32>, vector<2x8x16xf32>, vector<2x8x16xf32>, vector<2x8x16xf32>, vector<2x8x16xf32>, vector<2x8x16xf32> -> vector<2x8x128xf32>
    %174 = vector.shape_cast %173 : vector<2x8x128xf32> to vector<16x128xf32>
    %c0_62 = arith.constant 0 : index
    %c0_63 = arith.constant 0 : index
    %175 = vector.load %arg8[%c0_62, %c0_63] : memref<128x128xf32, #tpu.memory_space<vmem>>, vector<128x128xf32>
    %cst_64 = arith.constant dense<0.000000e+00> : vector<16x128xf32>
    %176 = tpu.matmul %174, %175, %cst_64 {dimension_numbers = #tpu.dot_dimension_numbers<[1], [0], [0], [1], [0, 0, 1, 1], [], []>} : vector<16x128xf32>, vector<128x128xf32>, vector<16x128xf32> -> vector<16x128xf32>
    %c0_65 = arith.constant 0 : index
    %c0_66 = arith.constant 0 : index
    %177 = vector.load %arg9[%c0_65, %c0_66] : memref<1x128xf32, #tpu.memory_space<vmem>>, vector<1x128xf32>
    %178 = vector.broadcast %177 : vector<1x128xf32> to vector<16x128xf32>
    %179 = arith.addf %176, %178 : vector<16x128xf32>
    %180 = arith.addf %1, %179 : vector<16x128xf32>
    %c0_67 = arith.constant 0 : index
    %c0_68 = arith.constant 0 : index
    %181 = vector.load %arg10[%c0_67, %c0_68] : memref<1x128xf32, #tpu.memory_space<vmem>>, vector<1x128xf32>
    %c0_69 = arith.constant 0 : index
    %c0_70 = arith.constant 0 : index
    %182 = vector.load %arg11[%c0_69, %c0_70] : memref<1x128xf32, #tpu.memory_space<vmem>>, vector<1x128xf32>
    %cst_71 = arith.constant dense<0.000000e+00> : vector<16xf32>
    %183 = vector.multi_reduction <add>, %180, %cst_71 [1] : vector<16x128xf32> to vector<16xf32>
    %184 = vector.shape_cast %183 : vector<16xf32> to vector<16x1xf32>
    %cst_72 = arith.constant 1.280000e+02 : f32
    %185 = vector.broadcast %cst_72 : f32 to vector<16x1xf32>
    %186 = arith.divf %184, %185 : vector<16x1xf32>
    %187 = vector.broadcast %186 : vector<16x1xf32> to vector<16x128xf32>
    %188 = arith.subf %180, %187 : vector<16x128xf32>
    %189 = arith.mulf %188, %188 : vector<16x128xf32>
    %cst_73 = arith.constant dense<0.000000e+00> : vector<16xf32>
    %190 = vector.multi_reduction <add>, %189, %cst_73 [1] : vector<16x128xf32> to vector<16xf32>
    %191 = vector.shape_cast %190 : vector<16xf32> to vector<16x1xf32>
    %cst_74 = arith.constant 1.280000e+02 : f32
    %192 = vector.broadcast %cst_74 : f32 to vector<16x1xf32>
    %193 = arith.divf %191, %192 : vector<16x1xf32>
    %194 = vector.broadcast %186 : vector<16x1xf32> to vector<16x128xf32>
    %195 = arith.subf %180, %194 : vector<16x128xf32>
    %cst_75 = arith.constant 9.99999974E-6 : f32
    %196 = vector.broadcast %cst_75 : f32 to vector<16x1xf32>
    %197 = arith.addf %193, %196 : vector<16x1xf32>
    %198 = math.rsqrt %197 : vector<16x1xf32>
    %199 = vector.broadcast %198 : vector<16x1xf32> to vector<16x128xf32>
    %200 = arith.mulf %195, %199 : vector<16x128xf32>
    %201 = vector.broadcast %181 : vector<1x128xf32> to vector<16x128xf32>
    %202 = arith.mulf %200, %201 : vector<16x128xf32>
    %203 = vector.broadcast %182 : vector<1x128xf32> to vector<16x128xf32>
    %204 = arith.addf %202, %203 : vector<16x128xf32>
    %c0_76 = arith.constant 0 : index
    %c0_77 = arith.constant 0 : index
    %205 = vector.load %arg12[%c0_76, %c0_77] : memref<128x128xf32, #tpu.memory_space<vmem>>, vector<128x128xf32>
    %cst_78 = arith.constant dense<0.000000e+00> : vector<16x128xf32>
    %206 = tpu.matmul %204, %205, %cst_78 {dimension_numbers = #tpu.dot_dimension_numbers<[1], [0], [0], [1], [0, 0, 1, 1], [], []>} : vector<16x128xf32>, vector<128x128xf32>, vector<16x128xf32> -> vector<16x128xf32>
    %c0_79 = arith.constant 0 : index
    %c0_80 = arith.constant 0 : index
    %207 = vector.load %arg13[%c0_79, %c0_80] : memref<128x128xf32, #tpu.memory_space<vmem>>, vector<128x128xf32>
    %cst_81 = arith.constant dense<0.000000e+00> : vector<32x128xf32>
    %208 = tpu.matmul %3, %207, %cst_81 {dimension_numbers = #tpu.dot_dimension_numbers<[1], [0], [0], [1], [0, 0, 1, 1], [], []>} : vector<32x128xf32>, vector<128x128xf32>, vector<32x128xf32> -> vector<32x128xf32>
    %c0_82 = arith.constant 0 : index
    %c0_83 = arith.constant 0 : index
    %209 = vector.load %arg14[%c0_82, %c0_83] : memref<128x128xf32, #tpu.memory_space<vmem>>, vector<128x128xf32>
    %cst_84 = arith.constant dense<0.000000e+00> : vector<32x128xf32>
    %210 = tpu.matmul %3, %209, %cst_84 {dimension_numbers = #tpu.dot_dimension_numbers<[1], [0], [0], [1], [0, 0, 1, 1], [], []>} : vector<32x128xf32>, vector<128x128xf32>, vector<32x128xf32> -> vector<32x128xf32>
    %211 = vector.shape_cast %206 : vector<16x128xf32> to vector<2x8x128xf32>
    %212 = vector.shape_cast %208 : vector<32x128xf32> to vector<2x16x128xf32>
    %213 = vector.shape_cast %210 : vector<32x128xf32> to vector<2x16x128xf32>
    %214 = vector.extract_strided_slice %211 {offsets = [0, 0, 0], sizes = [2, 8, 16], strides = [1, 1, 1]} : vector<2x8x128xf32> to vector<2x8x16xf32>
    %215 = vector.extract_strided_slice %212 {offsets = [0, 0, 0], sizes = [2, 16, 16], strides = [1, 1, 1]} : vector<2x16x128xf32> to vector<2x16x16xf32>
    "tpu.trace_start"() <{level = 10 : i32, message = "bnd,bmd->bnm"}> : () -> ()
    %cst_85 = arith.constant dense<0.000000e+00> : vector<2x8x16xf32>
    %216 = tpu.matmul %214, %215, %cst_85 {dimension_numbers = #tpu.dot_dimension_numbers<[2], [2], [1], [1], [0, 0, 0, 1, 1, 1], [0], [0]>} : vector<2x8x16xf32>, vector<2x16x16xf32>, vector<2x8x16xf32> -> vector<2x8x16xf32>
    "tpu.trace_stop"() : () -> ()
    %cst_86 = arith.constant 2.500000e-01 : f32
    %217 = vector.broadcast %cst_86 : f32 to vector<2x8x16xf32>
    %218 = arith.mulf %216, %217 : vector<2x8x16xf32>
    %cst_87 = arith.constant dense<0xFF800000> : vector<2x8xf32>
    %219 = vector.multi_reduction <maximumf>, %218, %cst_87 [2] : vector<2x8x16xf32> to vector<2x8xf32>
    %220 = vector.shape_cast %219 : vector<2x8xf32> to vector<2x8x1xf32>
    %221 = vector.broadcast %220 : vector<2x8x1xf32> to vector<2x8x16xf32>
    %222 = arith.subf %218, %221 : vector<2x8x16xf32>
    %223 = math.exp %222 : vector<2x8x16xf32>
    %cst_88 = arith.constant dense<0.000000e+00> : vector<2x8xf32>
    %224 = vector.multi_reduction <add>, %223, %cst_88 [2] : vector<2x8x16xf32> to vector<2x8xf32>
    %225 = vector.shape_cast %224 : vector<2x8xf32> to vector<2x8x1xf32>
    %226 = tpu.reciprocal %225 {approx = true} : vector<2x8x1xf32> -> vector<2x8x1xf32>
    %227 = vector.broadcast %226 : vector<2x8x1xf32> to vector<2x8x16xf32>
    %228 = arith.mulf %223, %227 : vector<2x8x16xf32>
    %229 = vector.extract_strided_slice %213 {offsets = [0, 0, 0], sizes = [2, 16, 16], strides = [1, 1, 1]} : vector<2x16x128xf32> to vector<2x16x16xf32>
    "tpu.trace_start"() <{level = 10 : i32, message = "bnm,bmd->bnd"}> : () -> ()
    %cst_89 = arith.constant dense<0.000000e+00> : vector<2x8x16xf32>
    %230 = tpu.matmul %228, %229, %cst_89 {dimension_numbers = #tpu.dot_dimension_numbers<[2], [1], [1], [2], [0, 0, 0, 1, 1, 2], [0], [0]>} : vector<2x8x16xf32>, vector<2x16x16xf32>, vector<2x8x16xf32> -> vector<2x8x16xf32>
    "tpu.trace_stop"() : () -> ()
    %231 = vector.extract_strided_slice %211 {offsets = [0, 0, 16], sizes = [2, 8, 16], strides = [1, 1, 1]} : vector<2x8x128xf32> to vector<2x8x16xf32>
    %232 = vector.extract_strided_slice %212 {offsets = [0, 0, 16], sizes = [2, 16, 16], strides = [1, 1, 1]} : vector<2x16x128xf32> to vector<2x16x16xf32>
    "tpu.trace_start"() <{level = 10 : i32, message = "bnd,bmd->bnm"}> : () -> ()
    %cst_90 = arith.constant dense<0.000000e+00> : vector<2x8x16xf32>
    %233 = tpu.matmul %231, %232, %cst_90 {dimension_numbers = #tpu.dot_dimension_numbers<[2], [2], [1], [1], [0, 0, 0, 1, 1, 1], [0], [0]>} : vector<2x8x16xf32>, vector<2x16x16xf32>, vector<2x8x16xf32> -> vector<2x8x16xf32>
    "tpu.trace_stop"() : () -> ()
    %cst_91 = arith.constant 2.500000e-01 : f32
    %234 = vector.broadcast %cst_91 : f32 to vector<2x8x16xf32>
    %235 = arith.mulf %233, %234 : vector<2x8x16xf32>
    %cst_92 = arith.constant dense<0xFF800000> : vector<2x8xf32>
    %236 = vector.multi_reduction <maximumf>, %235, %cst_92 [2] : vector<2x8x16xf32> to vector<2x8xf32>
    %237 = vector.shape_cast %236 : vector<2x8xf32> to vector<2x8x1xf32>
    %238 = vector.broadcast %237 : vector<2x8x1xf32> to vector<2x8x16xf32>
    %239 = arith.subf %235, %238 : vector<2x8x16xf32>
    %240 = math.exp %239 : vector<2x8x16xf32>
    %cst_93 = arith.constant dense<0.000000e+00> : vector<2x8xf32>
    %241 = vector.multi_reduction <add>, %240, %cst_93 [2] : vector<2x8x16xf32> to vector<2x8xf32>
    %242 = vector.shape_cast %241 : vector<2x8xf32> to vector<2x8x1xf32>
    %243 = tpu.reciprocal %242 {approx = true} : vector<2x8x1xf32> -> vector<2x8x1xf32>
    %244 = vector.broadcast %243 : vector<2x8x1xf32> to vector<2x8x16xf32>
    %245 = arith.mulf %240, %244 : vector<2x8x16xf32>
    %246 = vector.extract_strided_slice %213 {offsets = [0, 0, 16], sizes = [2, 16, 16], strides = [1, 1, 1]} : vector<2x16x128xf32> to vector<2x16x16xf32>
    "tpu.trace_start"() <{level = 10 : i32, message = "bnm,bmd->bnd"}> : () -> ()
    %cst_94 = arith.constant dense<0.000000e+00> : vector<2x8x16xf32>
    %247 = tpu.matmul %245, %246, %cst_94 {dimension_numbers = #tpu.dot_dimension_numbers<[2], [1], [1], [2], [0, 0, 0, 1, 1, 2], [0], [0]>} : vector<2x8x16xf32>, vector<2x16x16xf32>, vector<2x8x16xf32> -> vector<2x8x16xf32>
    "tpu.trace_stop"() : () -> ()
    %248 = vector.extract_strided_slice %211 {offsets = [0, 0, 32], sizes = [2, 8, 16], strides = [1, 1, 1]} : vector<2x8x128xf32> to vector<2x8x16xf32>
    %249 = vector.extract_strided_slice %212 {offsets = [0, 0, 32], sizes = [2, 16, 16], strides = [1, 1, 1]} : vector<2x16x128xf32> to vector<2x16x16xf32>
    "tpu.trace_start"() <{level = 10 : i32, message = "bnd,bmd->bnm"}> : () -> ()
    %cst_95 = arith.constant dense<0.000000e+00> : vector<2x8x16xf32>
    %250 = tpu.matmul %248, %249, %cst_95 {dimension_numbers = #tpu.dot_dimension_numbers<[2], [2], [1], [1], [0, 0, 0, 1, 1, 1], [0], [0]>} : vector<2x8x16xf32>, vector<2x16x16xf32>, vector<2x8x16xf32> -> vector<2x8x16xf32>
    "tpu.trace_stop"() : () -> ()
    %cst_96 = arith.constant 2.500000e-01 : f32
    %251 = vector.broadcast %cst_96 : f32 to vector<2x8x16xf32>
    %252 = arith.mulf %250, %251 : vector<2x8x16xf32>
    %cst_97 = arith.constant dense<0xFF800000> : vector<2x8xf32>
    %253 = vector.multi_reduction <maximumf>, %252, %cst_97 [2] : vector<2x8x16xf32> to vector<2x8xf32>
    %254 = vector.shape_cast %253 : vector<2x8xf32> to vector<2x8x1xf32>
    %255 = vector.broadcast %254 : vector<2x8x1xf32> to vector<2x8x16xf32>
    %256 = arith.subf %252, %255 : vector<2x8x16xf32>
    %257 = math.exp %256 : vector<2x8x16xf32>
    %cst_98 = arith.constant dense<0.000000e+00> : vector<2x8xf32>
    %258 = vector.multi_reduction <add>, %257, %cst_98 [2] : vector<2x8x16xf32> to vector<2x8xf32>
    %259 = vector.shape_cast %258 : vector<2x8xf32> to vector<2x8x1xf32>
    %260 = tpu.reciprocal %259 {approx = true} : vector<2x8x1xf32> -> vector<2x8x1xf32>
    %261 = vector.broadcast %260 : vector<2x8x1xf32> to vector<2x8x16xf32>
    %262 = arith.mulf %257, %261 : vector<2x8x16xf32>
    %263 = vector.extract_strided_slice %213 {offsets = [0, 0, 32], sizes = [2, 16, 16], strides = [1, 1, 1]} : vector<2x16x128xf32> to vector<2x16x16xf32>
    "tpu.trace_start"() <{level = 10 : i32, message = "bnm,bmd->bnd"}> : () -> ()
    %cst_99 = arith.constant dense<0.000000e+00> : vector<2x8x16xf32>
    %264 = tpu.matmul %262, %263, %cst_99 {dimension_numbers = #tpu.dot_dimension_numbers<[2], [1], [1], [2], [0, 0, 0, 1, 1, 2], [0], [0]>} : vector<2x8x16xf32>, vector<2x16x16xf32>, vector<2x8x16xf32> -> vector<2x8x16xf32>
    "tpu.trace_stop"() : () -> ()
    %265 = vector.extract_strided_slice %211 {offsets = [0, 0, 48], sizes = [2, 8, 16], strides = [1, 1, 1]} : vector<2x8x128xf32> to vector<2x8x16xf32>
    %266 = vector.extract_strided_slice %212 {offsets = [0, 0, 48], sizes = [2, 16, 16], strides = [1, 1, 1]} : vector<2x16x128xf32> to vector<2x16x16xf32>
    "tpu.trace_start"() <{level = 10 : i32, message = "bnd,bmd->bnm"}> : () -> ()
    %cst_100 = arith.constant dense<0.000000e+00> : vector<2x8x16xf32>
    %267 = tpu.matmul %265, %266, %cst_100 {dimension_numbers = #tpu.dot_dimension_numbers<[2], [2], [1], [1], [0, 0, 0, 1, 1, 1], [0], [0]>} : vector<2x8x16xf32>, vector<2x16x16xf32>, vector<2x8x16xf32> -> vector<2x8x16xf32>
    "tpu.trace_stop"() : () -> ()
    %cst_101 = arith.constant 2.500000e-01 : f32
    %268 = vector.broadcast %cst_101 : f32 to vector<2x8x16xf32>
    %269 = arith.mulf %267, %268 : vector<2x8x16xf32>
    %cst_102 = arith.constant dense<0xFF800000> : vector<2x8xf32>
    %270 = vector.multi_reduction <maximumf>, %269, %cst_102 [2] : vector<2x8x16xf32> to vector<2x8xf32>
    %271 = vector.shape_cast %270 : vector<2x8xf32> to vector<2x8x1xf32>
    %272 = vector.broadcast %271 : vector<2x8x1xf32> to vector<2x8x16xf32>
    %273 = arith.subf %269, %272 : vector<2x8x16xf32>
    %274 = math.exp %273 : vector<2x8x16xf32>
    %cst_103 = arith.constant dense<0.000000e+00> : vector<2x8xf32>
    %275 = vector.multi_reduction <add>, %274, %cst_103 [2] : vector<2x8x16xf32> to vector<2x8xf32>
    %276 = vector.shape_cast %275 : vector<2x8xf32> to vector<2x8x1xf32>
    %277 = tpu.reciprocal %276 {approx = true} : vector<2x8x1xf32> -> vector<2x8x1xf32>
    %278 = vector.broadcast %277 : vector<2x8x1xf32> to vector<2x8x16xf32>
    %279 = arith.mulf %274, %278 : vector<2x8x16xf32>
    %280 = vector.extract_strided_slice %213 {offsets = [0, 0, 48], sizes = [2, 16, 16], strides = [1, 1, 1]} : vector<2x16x128xf32> to vector<2x16x16xf32>
    "tpu.trace_start"() <{level = 10 : i32, message = "bnm,bmd->bnd"}> : () -> ()
    %cst_104 = arith.constant dense<0.000000e+00> : vector<2x8x16xf32>
    %281 = tpu.matmul %279, %280, %cst_104 {dimension_numbers = #tpu.dot_dimension_numbers<[2], [1], [1], [2], [0, 0, 0, 1, 1, 2], [0], [0]>} : vector<2x8x16xf32>, vector<2x16x16xf32>, vector<2x8x16xf32> -> vector<2x8x16xf32>
    "tpu.trace_stop"() : () -> ()
    %282 = vector.extract_strided_slice %211 {offsets = [0, 0, 64], sizes = [2, 8, 16], strides = [1, 1, 1]} : vector<2x8x128xf32> to vector<2x8x16xf32>
    %283 = vector.extract_strided_slice %212 {offsets = [0, 0, 64], sizes = [2, 16, 16], strides = [1, 1, 1]} : vector<2x16x128xf32> to vector<2x16x16xf32>
    "tpu.trace_start"() <{level = 10 : i32, message = "bnd,bmd->bnm"}> : () -> ()
    %cst_105 = arith.constant dense<0.000000e+00> : vector<2x8x16xf32>
    %284 = tpu.matmul %282, %283, %cst_105 {dimension_numbers = #tpu.dot_dimension_numbers<[2], [2], [1], [1], [0, 0, 0, 1, 1, 1], [0], [0]>} : vector<2x8x16xf32>, vector<2x16x16xf32>, vector<2x8x16xf32> -> vector<2x8x16xf32>
    "tpu.trace_stop"() : () -> ()
    %cst_106 = arith.constant 2.500000e-01 : f32
    %285 = vector.broadcast %cst_106 : f32 to vector<2x8x16xf32>
    %286 = arith.mulf %284, %285 : vector<2x8x16xf32>
    %cst_107 = arith.constant dense<0xFF800000> : vector<2x8xf32>
    %287 = vector.multi_reduction <maximumf>, %286, %cst_107 [2] : vector<2x8x16xf32> to vector<2x8xf32>
    %288 = vector.shape_cast %287 : vector<2x8xf32> to vector<2x8x1xf32>
    %289 = vector.broadcast %288 : vector<2x8x1xf32> to vector<2x8x16xf32>
    %290 = arith.subf %286, %289 : vector<2x8x16xf32>
    %291 = math.exp %290 : vector<2x8x16xf32>
    %cst_108 = arith.constant dense<0.000000e+00> : vector<2x8xf32>
    %292 = vector.multi_reduction <add>, %291, %cst_108 [2] : vector<2x8x16xf32> to vector<2x8xf32>
    %293 = vector.shape_cast %292 : vector<2x8xf32> to vector<2x8x1xf32>
    %294 = tpu.reciprocal %293 {approx = true} : vector<2x8x1xf32> -> vector<2x8x1xf32>
    %295 = vector.broadcast %294 : vector<2x8x1xf32> to vector<2x8x16xf32>
    %296 = arith.mulf %291, %295 : vector<2x8x16xf32>
    %297 = vector.extract_strided_slice %213 {offsets = [0, 0, 64], sizes = [2, 16, 16], strides = [1, 1, 1]} : vector<2x16x128xf32> to vector<2x16x16xf32>
    "tpu.trace_start"() <{level = 10 : i32, message = "bnm,bmd->bnd"}> : () -> ()
    %cst_109 = arith.constant dense<0.000000e+00> : vector<2x8x16xf32>
    %298 = tpu.matmul %296, %297, %cst_109 {dimension_numbers = #tpu.dot_dimension_numbers<[2], [1], [1], [2], [0, 0, 0, 1, 1, 2], [0], [0]>} : vector<2x8x16xf32>, vector<2x16x16xf32>, vector<2x8x16xf32> -> vector<2x8x16xf32>
    "tpu.trace_stop"() : () -> ()
    %299 = vector.extract_strided_slice %211 {offsets = [0, 0, 80], sizes = [2, 8, 16], strides = [1, 1, 1]} : vector<2x8x128xf32> to vector<2x8x16xf32>
    %300 = vector.extract_strided_slice %212 {offsets = [0, 0, 80], sizes = [2, 16, 16], strides = [1, 1, 1]} : vector<2x16x128xf32> to vector<2x16x16xf32>
    "tpu.trace_start"() <{level = 10 : i32, message = "bnd,bmd->bnm"}> : () -> ()
    %cst_110 = arith.constant dense<0.000000e+00> : vector<2x8x16xf32>
    %301 = tpu.matmul %299, %300, %cst_110 {dimension_numbers = #tpu.dot_dimension_numbers<[2], [2], [1], [1], [0, 0, 0, 1, 1, 1], [0], [0]>} : vector<2x8x16xf32>, vector<2x16x16xf32>, vector<2x8x16xf32> -> vector<2x8x16xf32>
    "tpu.trace_stop"() : () -> ()
    %cst_111 = arith.constant 2.500000e-01 : f32
    %302 = vector.broadcast %cst_111 : f32 to vector<2x8x16xf32>
    %303 = arith.mulf %301, %302 : vector<2x8x16xf32>
    %cst_112 = arith.constant dense<0xFF800000> : vector<2x8xf32>
    %304 = vector.multi_reduction <maximumf>, %303, %cst_112 [2] : vector<2x8x16xf32> to vector<2x8xf32>
    %305 = vector.shape_cast %304 : vector<2x8xf32> to vector<2x8x1xf32>
    %306 = vector.broadcast %305 : vector<2x8x1xf32> to vector<2x8x16xf32>
    %307 = arith.subf %303, %306 : vector<2x8x16xf32>
    %308 = math.exp %307 : vector<2x8x16xf32>
    %cst_113 = arith.constant dense<0.000000e+00> : vector<2x8xf32>
    %309 = vector.multi_reduction <add>, %308, %cst_113 [2] : vector<2x8x16xf32> to vector<2x8xf32>
    %310 = vector.shape_cast %309 : vector<2x8xf32> to vector<2x8x1xf32>
    %311 = tpu.reciprocal %310 {approx = true} : vector<2x8x1xf32> -> vector<2x8x1xf32>
    %312 = vector.broadcast %311 : vector<2x8x1xf32> to vector<2x8x16xf32>
    %313 = arith.mulf %308, %312 : vector<2x8x16xf32>
    %314 = vector.extract_strided_slice %213 {offsets = [0, 0, 80], sizes = [2, 16, 16], strides = [1, 1, 1]} : vector<2x16x128xf32> to vector<2x16x16xf32>
    "tpu.trace_start"() <{level = 10 : i32, message = "bnm,bmd->bnd"}> : () -> ()
    %cst_114 = arith.constant dense<0.000000e+00> : vector<2x8x16xf32>
    %315 = tpu.matmul %313, %314, %cst_114 {dimension_numbers = #tpu.dot_dimension_numbers<[2], [1], [1], [2], [0, 0, 0, 1, 1, 2], [0], [0]>} : vector<2x8x16xf32>, vector<2x16x16xf32>, vector<2x8x16xf32> -> vector<2x8x16xf32>
    "tpu.trace_stop"() : () -> ()
    %316 = vector.extract_strided_slice %211 {offsets = [0, 0, 96], sizes = [2, 8, 16], strides = [1, 1, 1]} : vector<2x8x128xf32> to vector<2x8x16xf32>
    %317 = vector.extract_strided_slice %212 {offsets = [0, 0, 96], sizes = [2, 16, 16], strides = [1, 1, 1]} : vector<2x16x128xf32> to vector<2x16x16xf32>
    "tpu.trace_start"() <{level = 10 : i32, message = "bnd,bmd->bnm"}> : () -> ()
    %cst_115 = arith.constant dense<0.000000e+00> : vector<2x8x16xf32>
    %318 = tpu.matmul %316, %317, %cst_115 {dimension_numbers = #tpu.dot_dimension_numbers<[2], [2], [1], [1], [0, 0, 0, 1, 1, 1], [0], [0]>} : vector<2x8x16xf32>, vector<2x16x16xf32>, vector<2x8x16xf32> -> vector<2x8x16xf32>
    "tpu.trace_stop"() : () -> ()
    %cst_116 = arith.constant 2.500000e-01 : f32
    %319 = vector.broadcast %cst_116 : f32 to vector<2x8x16xf32>
    %320 = arith.mulf %318, %319 : vector<2x8x16xf32>
    %cst_117 = arith.constant dense<0xFF800000> : vector<2x8xf32>
    %321 = vector.multi_reduction <maximumf>, %320, %cst_117 [2] : vector<2x8x16xf32> to vector<2x8xf32>
    %322 = vector.shape_cast %321 : vector<2x8xf32> to vector<2x8x1xf32>
    %323 = vector.broadcast %322 : vector<2x8x1xf32> to vector<2x8x16xf32>
    %324 = arith.subf %320, %323 : vector<2x8x16xf32>
    %325 = math.exp %324 : vector<2x8x16xf32>
    %cst_118 = arith.constant dense<0.000000e+00> : vector<2x8xf32>
    %326 = vector.multi_reduction <add>, %325, %cst_118 [2] : vector<2x8x16xf32> to vector<2x8xf32>
    %327 = vector.shape_cast %326 : vector<2x8xf32> to vector<2x8x1xf32>
    %328 = tpu.reciprocal %327 {approx = true} : vector<2x8x1xf32> -> vector<2x8x1xf32>
    %329 = vector.broadcast %328 : vector<2x8x1xf32> to vector<2x8x16xf32>
    %330 = arith.mulf %325, %329 : vector<2x8x16xf32>
    %331 = vector.extract_strided_slice %213 {offsets = [0, 0, 96], sizes = [2, 16, 16], strides = [1, 1, 1]} : vector<2x16x128xf32> to vector<2x16x16xf32>
    "tpu.trace_start"() <{level = 10 : i32, message = "bnm,bmd->bnd"}> : () -> ()
    %cst_119 = arith.constant dense<0.000000e+00> : vector<2x8x16xf32>
    %332 = tpu.matmul %330, %331, %cst_119 {dimension_numbers = #tpu.dot_dimension_numbers<[2], [1], [1], [2], [0, 0, 0, 1, 1, 2], [0], [0]>} : vector<2x8x16xf32>, vector<2x16x16xf32>, vector<2x8x16xf32> -> vector<2x8x16xf32>
    "tpu.trace_stop"() : () -> ()
    %333 = vector.extract_strided_slice %211 {offsets = [0, 0, 112], sizes = [2, 8, 16], strides = [1, 1, 1]} : vector<2x8x128xf32> to vector<2x8x16xf32>
    %334 = vector.extract_strided_slice %212 {offsets = [0, 0, 112], sizes = [2, 16, 16], strides = [1, 1, 1]} : vector<2x16x128xf32> to vector<2x16x16xf32>
    "tpu.trace_start"() <{level = 10 : i32, message = "bnd,bmd->bnm"}> : () -> ()
    %cst_120 = arith.constant dense<0.000000e+00> : vector<2x8x16xf32>
    %335 = tpu.matmul %333, %334, %cst_120 {dimension_numbers = #tpu.dot_dimension_numbers<[2], [2], [1], [1], [0, 0, 0, 1, 1, 1], [0], [0]>} : vector<2x8x16xf32>, vector<2x16x16xf32>, vector<2x8x16xf32> -> vector<2x8x16xf32>
    "tpu.trace_stop"() : () -> ()
    %cst_121 = arith.constant 2.500000e-01 : f32
    %336 = vector.broadcast %cst_121 : f32 to vector<2x8x16xf32>
    %337 = arith.mulf %335, %336 : vector<2x8x16xf32>
    %cst_122 = arith.constant dense<0xFF800000> : vector<2x8xf32>
    %338 = vector.multi_reduction <maximumf>, %337, %cst_122 [2] : vector<2x8x16xf32> to vector<2x8xf32>
    %339 = vector.shape_cast %338 : vector<2x8xf32> to vector<2x8x1xf32>
    %340 = vector.broadcast %339 : vector<2x8x1xf32> to vector<2x8x16xf32>
    %341 = arith.subf %337, %340 : vector<2x8x16xf32>
    %342 = math.exp %341 : vector<2x8x16xf32>
    %cst_123 = arith.constant dense<0.000000e+00> : vector<2x8xf32>
    %343 = vector.multi_reduction <add>, %342, %cst_123 [2] : vector<2x8x16xf32> to vector<2x8xf32>
    %344 = vector.shape_cast %343 : vector<2x8xf32> to vector<2x8x1xf32>
    %345 = tpu.reciprocal %344 {approx = true} : vector<2x8x1xf32> -> vector<2x8x1xf32>
    %346 = vector.broadcast %345 : vector<2x8x1xf32> to vector<2x8x16xf32>
    %347 = arith.mulf %342, %346 : vector<2x8x16xf32>
    %348 = vector.extract_strided_slice %213 {offsets = [0, 0, 112], sizes = [2, 16, 16], strides = [1, 1, 1]} : vector<2x16x128xf32> to vector<2x16x16xf32>
    "tpu.trace_start"() <{level = 10 : i32, message = "bnm,bmd->bnd"}> : () -> ()
    %cst_124 = arith.constant dense<0.000000e+00> : vector<2x8x16xf32>
    %349 = tpu.matmul %347, %348, %cst_124 {dimension_numbers = #tpu.dot_dimension_numbers<[2], [1], [1], [2], [0, 0, 0, 1, 1, 2], [0], [0]>} : vector<2x8x16xf32>, vector<2x16x16xf32>, vector<2x8x16xf32> -> vector<2x8x16xf32>
    "tpu.trace_stop"() : () -> ()
    %350 = tpu.concatenate %230, %247, %264, %281, %298, %315, %332, %349 in 2 : vector<2x8x16xf32>, vector<2x8x16xf32>, vector<2x8x16xf32>, vector<2x8x16xf32>, vector<2x8x16xf32>, vector<2x8x16xf32>, vector<2x8x16xf32>, vector<2x8x16xf32> -> vector<2x8x128xf32>
    %351 = vector.shape_cast %350 : vector<2x8x128xf32> to vector<16x128xf32>
    %c0_125 = arith.constant 0 : index
    %c0_126 = arith.constant 0 : index
    %352 = vector.load %arg15[%c0_125, %c0_126] : memref<128x128xf32, #tpu.memory_space<vmem>>, vector<128x128xf32>
    %cst_127 = arith.constant dense<0.000000e+00> : vector<16x128xf32>
    %353 = tpu.matmul %351, %352, %cst_127 {dimension_numbers = #tpu.dot_dimension_numbers<[1], [0], [0], [1], [0, 0, 1, 1], [], []>} : vector<16x128xf32>, vector<128x128xf32>, vector<16x128xf32> -> vector<16x128xf32>
    %c0_128 = arith.constant 0 : index
    %c0_129 = arith.constant 0 : index
    %354 = vector.load %arg16[%c0_128, %c0_129] : memref<1x128xf32, #tpu.memory_space<vmem>>, vector<1x128xf32>
    %355 = vector.broadcast %354 : vector<1x128xf32> to vector<16x128xf32>
    %356 = arith.addf %353, %355 : vector<16x128xf32>
    %357 = arith.addf %180, %356 : vector<16x128xf32>
    %c0_130 = arith.constant 0 : index
    %c0_131 = arith.constant 0 : index
    %358 = vector.load %arg17[%c0_130, %c0_131] : memref<1x128xf32, #tpu.memory_space<vmem>>, vector<1x128xf32>
    %c0_132 = arith.constant 0 : index
    %c0_133 = arith.constant 0 : index
    %359 = vector.load %arg18[%c0_132, %c0_133] : memref<1x128xf32, #tpu.memory_space<vmem>>, vector<1x128xf32>
    %cst_134 = arith.constant dense<0.000000e+00> : vector<16xf32>
    %360 = vector.multi_reduction <add>, %357, %cst_134 [1] : vector<16x128xf32> to vector<16xf32>
    %361 = vector.shape_cast %360 : vector<16xf32> to vector<16x1xf32>
    %cst_135 = arith.constant 1.280000e+02 : f32
    %362 = vector.broadcast %cst_135 : f32 to vector<16x1xf32>
    %363 = arith.divf %361, %362 : vector<16x1xf32>
    %364 = vector.broadcast %363 : vector<16x1xf32> to vector<16x128xf32>
    %365 = arith.subf %357, %364 : vector<16x128xf32>
    %366 = arith.mulf %365, %365 : vector<16x128xf32>
    %cst_136 = arith.constant dense<0.000000e+00> : vector<16xf32>
    %367 = vector.multi_reduction <add>, %366, %cst_136 [1] : vector<16x128xf32> to vector<16xf32>
    %368 = vector.shape_cast %367 : vector<16xf32> to vector<16x1xf32>
    %cst_137 = arith.constant 1.280000e+02 : f32
    %369 = vector.broadcast %cst_137 : f32 to vector<16x1xf32>
    %370 = arith.divf %368, %369 : vector<16x1xf32>
    %371 = vector.broadcast %363 : vector<16x1xf32> to vector<16x128xf32>
    %372 = arith.subf %357, %371 : vector<16x128xf32>
    %cst_138 = arith.constant 9.99999974E-6 : f32
    %373 = vector.broadcast %cst_138 : f32 to vector<16x1xf32>
    %374 = arith.addf %370, %373 : vector<16x1xf32>
    %375 = math.rsqrt %374 : vector<16x1xf32>
    %376 = vector.broadcast %375 : vector<16x1xf32> to vector<16x128xf32>
    %377 = arith.mulf %372, %376 : vector<16x128xf32>
    %378 = vector.broadcast %358 : vector<1x128xf32> to vector<16x128xf32>
    %379 = arith.mulf %377, %378 : vector<16x128xf32>
    %380 = vector.broadcast %359 : vector<1x128xf32> to vector<16x128xf32>
    %381 = arith.addf %379, %380 : vector<16x128xf32>
    %c0_139 = arith.constant 0 : index
    %c0_140 = arith.constant 0 : index
    %382 = vector.load %arg19[%c0_139, %c0_140] : memref<128x512xf32, #tpu.memory_space<vmem>>, vector<128x512xf32>
    %cst_141 = arith.constant dense<0.000000e+00> : vector<16x512xf32>
    %383 = tpu.matmul %381, %382, %cst_141 {dimension_numbers = #tpu.dot_dimension_numbers<[1], [0], [0], [1], [0, 0, 1, 1], [], []>} : vector<16x128xf32>, vector<128x512xf32>, vector<16x512xf32> -> vector<16x512xf32>
    %c0_142 = arith.constant 0 : index
    %c0_143 = arith.constant 0 : index
    %384 = vector.load %arg20[%c0_142, %c0_143] : memref<1x512xf32, #tpu.memory_space<vmem>>, vector<1x512xf32>
    %385 = vector.broadcast %384 : vector<1x512xf32> to vector<16x512xf32>
    %386 = arith.addf %383, %385 : vector<16x512xf32>
    %cst_144 = arith.constant 5.000000e-01 : f32
    %387 = vector.broadcast %cst_144 : f32 to vector<16x512xf32>
    %388 = arith.mulf %387, %386 : vector<16x512xf32>
    %cst_145 = arith.constant 0.707106769 : f32
    %389 = vector.broadcast %cst_145 : f32 to vector<16x512xf32>
    %390 = arith.mulf %386, %389 : vector<16x512xf32>
    %391 = math.erf %390 : vector<16x512xf32>
    %cst_146 = arith.constant 1.000000e+00 : f32
    %392 = vector.broadcast %cst_146 : f32 to vector<16x512xf32>
    %393 = arith.addf %392, %391 : vector<16x512xf32>
    %394 = arith.mulf %388, %393 : vector<16x512xf32>
    %c0_147 = arith.constant 0 : index
    %c0_148 = arith.constant 0 : index
    %395 = vector.load %arg21[%c0_147, %c0_148] : memref<512x128xf32, #tpu.memory_space<vmem>>, vector<512x128xf32>
    %cst_149 = arith.constant dense<0.000000e+00> : vector<16x128xf32>
    %396 = tpu.matmul %394, %395, %cst_149 {dimension_numbers = #tpu.dot_dimension_numbers<[1], [0], [0], [1], [0, 0, 1, 1], [], []>} : vector<16x512xf32>, vector<512x128xf32>, vector<16x128xf32> -> vector<16x128xf32>
    %397 = arith.addf %357, %396 : vector<16x128xf32>
    %c0_150 = arith.constant 0 : index
    %c0_151 = arith.constant 0 : index
    %398 = vector.load %arg22[%c0_150, %c0_151] : memref<1x128xf32, #tpu.memory_space<vmem>>, vector<1x128xf32>
    %399 = vector.broadcast %398 : vector<1x128xf32> to vector<16x128xf32>
    %400 = arith.addf %397, %399 : vector<16x128xf32>
    %401 = vector.shape_cast %400 : vector<16x128xf32> to vector<2x8x128xf32>
    %c0_152 = arith.constant 0 : index
    %c0_153 = arith.constant 0 : index
    %c0_154 = arith.constant 0 : index
    %402 = vector.load %arg23[%c0_152, %c0_153, %c0_154] : memref<2x8x128xf32, #tpu.memory_space<vmem>>, vector<2x8x128xf32>
    tpu.vector_store %arg23[%c0_152, %c0_153, %c0_154], %401 {strides = array<i32>} : memref<2x8x128xf32, #tpu.memory_space<vmem>>, vector<2x8x128xf32>,
    return
  }
  func.func @transform_0(%arg0: i32) -> (i32, i32, i32) {
    %c0_i32 = arith.constant 0 : i32
    %c0_i32_0 = arith.constant 0 : i32
    %c0_i32_1 = arith.constant 0 : i32
    %c0_i32_2 = arith.constant 0 : i32
    return %c0_i32, %c0_i32_0, %c0_i32_1 : i32, i32, i32
  }
  func.func @transform_1(%arg0: i32) -> (i32, i32, i32) {
    %c0_i32 = arith.constant 0 : i32
    %c0_i32_0 = arith.constant 0 : i32
    %c0_i32_1 = arith.constant 0 : i32
    %c0_i32_2 = arith.constant 0 : i32
    return %c0_i32, %c0_i32_0, %c0_i32_1 : i32, i32, i32
  }
  func.func @transform_2(%arg0: i32) -> (i32, i32) {
    %c0_i32 = arith.constant 0 : i32
    %c0_i32_0 = arith.constant 0 : i32
    %c0_i32_1 = arith.constant 0 : i32
    return %c0_i32, %c0_i32_0 : i32, i32
  }
  func.func @transform_3(%arg0: i32) -> (i32, i32) {
    %c0_i32 = arith.constant 0 : i32
    %c0_i32_0 = arith.constant 0 : i32
    %c0_i32_1 = arith.constant 0 : i32
    return %c0_i32, %c0_i32_0 : i32, i32
  }
  func.func @transform_4(%arg0: i32) -> (i32, i32) {
    %c0_i32 = arith.constant 0 : i32
    %c0_i32_0 = arith.constant 0 : i32
    %c0_i32_1 = arith.constant 0 : i32
    return %c0_i32, %c0_i32_0 : i32, i32
  }
  func.func @transform_5(%arg0: i32) -> (i32, i32) {
    %c0_i32 = arith.constant 0 : i32
    %c0_i32_0 = arith.constant 0 : i32
    %c0_i32_1 = arith.constant 0 : i32
    return %c0_i32, %c0_i32_0 : i32, i32
  }
  func.func @transform_6(%arg0: i32) -> (i32, i32) {
    %c0_i32 = arith.constant 0 : i32
    %c0_i32_0 = arith.constant 0 : i32
    %c0_i32_1 = arith.constant 0 : i32
    return %c0_i32, %c0_i32_0 : i32, i32
  }
  func.func @transform_7(%arg0: i32) -> (i32, i32) {
    %c0_i32 = arith.constant 0 : i32
    %c0_i32_0 = arith.constant 0 : i32
    %c0_i32_1 = arith.constant 0 : i32
    return %c0_i32, %c0_i32_0 : i32, i32
  }
  func.func @transform_8(%arg0: i32) -> (i32, i32) {
    %c0_i32 = arith.constant 0 : i32
    %c0_i32_0 = arith.constant 0 : i32
    %c0_i32_1 = arith.constant 0 : i32
    return %c0_i32, %c0_i32_0 : i32, i32
  }
  func.func @transform_9(%arg0: i32) -> (i32, i32) {
    %c0_i32 = arith.constant 0 : i32
    %c0_i32_0 = arith.constant 0 : i32
    %c0_i32_1 = arith.constant 0 : i32
    return %c0_i32, %c0_i32_0 : i32, i32
  }
  func.func @transform_10(%arg0: i32) -> (i32, i32) {
    %c0_i32 = arith.constant 0 : i32
    %c0_i32_0 = arith.constant 0 : i32
    %c0_i32_1 = arith.constant 0 : i32
    return %c0_i32, %c0_i32_0 : i32, i32
  }
  func.func @transform_11(%arg0: i32) -> (i32, i32) {
    %c0_i32 = arith.constant 0 : i32
    %c0_i32_0 = arith.constant 0 : i32
    %c0_i32_1 = arith.constant 0 : i32
    return %c0_i32, %c0_i32_0 : i32, i32
  }
  func.func @transform_12(%arg0: i32) -> (i32, i32) {
    %c0_i32 = arith.constant 0 : i32
    %c0_i32_0 = arith.constant 0 : i32
    %c0_i32_1 = arith.constant 0 : i32
    return %c0_i32, %c0_i32_0 : i32, i32
  }
  func.func @transform_13(%arg0: i32) -> (i32, i32) {
    %c0_i32 = arith.constant 0 : i32
    %c0_i32_0 = arith.constant 0 : i32
    %c0_i32_1 = arith.constant 0 : i32
    return %c0_i32, %c0_i32_0 : i32, i32
  }
  func.func @transform_14(%arg0: i32) -> (i32, i32) {
    %c0_i32 = arith.constant 0 : i32
    %c0_i32_0 = arith.constant 0 : i32
    %c0_i32_1 = arith.constant 0 : i32
    return %c0_i32, %c0_i32_0 : i32, i32
  }
  func.func @transform_15(%arg0: i32) -> (i32, i32) {
    %c0_i32 = arith.constant 0 : i32
    %c0_i32_0 = arith.constant 0 : i32
    %c0_i32_1 = arith.constant 0 : i32
    return %c0_i32, %c0_i32_0 : i32, i32
  }
  func.func @transform_16(%arg0: i32) -> (i32, i32) {
    %c0_i32 = arith.constant 0 : i32
    %c0_i32_0 = arith.constant 0 : i32
    %c0_i32_1 = arith.constant 0 : i32
    return %c0_i32, %c0_i32_0 : i32, i32
  }
  func.func @transform_17(%arg0: i32) -> (i32, i32) {
    %c0_i32 = arith.constant 0 : i32
    %c0_i32_0 = arith.constant 0 : i32
    %c0_i32_1 = arith.constant 0 : i32
    return %c0_i32, %c0_i32_0 : i32, i32
  }
  func.func @transform_18(%arg0: i32) -> (i32, i32) {
    %c0_i32 = arith.constant 0 : i32
    %c0_i32_0 = arith.constant 0 : i32
    %c0_i32_1 = arith.constant 0 : i32
    return %c0_i32, %c0_i32_0 : i32, i32
  }
  func.func @transform_19(%arg0: i32) -> (i32, i32) {
    %c0_i32 = arith.constant 0 : i32
    %c0_i32_0 = arith.constant 0 : i32
    %c0_i32_1 = arith.constant 0 : i32
    return %c0_i32, %c0_i32_0 : i32, i32
  }
  func.func @transform_20(%arg0: i32) -> (i32, i32) {
    %c0_i32 = arith.constant 0 : i32
    %c0_i32_0 = arith.constant 0 : i32
    %c0_i32_1 = arith.constant 0 : i32
    return %c0_i32, %c0_i32_0 : i32, i32
  }
  func.func @transform_21(%arg0: i32) -> (i32, i32) {
    %c0_i32 = arith.constant 0 : i32
    %c0_i32_0 = arith.constant 0 : i32
    %c0_i32_1 = arith.constant 0 : i32
    return %c0_i32, %c0_i32_0 : i32, i32
  }
  func.func @transform_22(%arg0: i32) -> (i32, i32, i32) {
    %c0_i32 = arith.constant 0 : i32
    %c0_i32_0 = arith.constant 0 : i32
    %c0_i32_1 = arith.constant 0 : i32
    %c0_i32_2 = arith.constant 0 : i32
    return %c0_i32, %c0_i32_0, %c0_i32_1 : i32, i32, i32
  }
}

</mosaic_0001>

<llo_original>
// kernel: transformer_decoder_layer.1
$region0: #{transformer_decoder_layer.1}
  #allocation0 [shape = 'u32[]', space=smem, size = 0x4, offset = 0x4, fixed_abs, tag = 'smem constant byte address 0x4 - core index']
  #allocation1 [shape = 'u32[144,128]{1,0:T(1,128)}', space=vmem, size = 0x12000, scoped, tag = 'internal scratch']
  %s0 = inlined_call_operand.hbm [shape: f32[2,8,128], index: 0, kind: input, shape index: {}]
  %s1 = inlined_call_operand.vmem [shape: f32[2,16,128], index: 1, kind: input, shape index: {}]
  %s2 = inlined_call_operand.vmem [shape: f32[1,128], index: 2, kind: input, shape index: {}]
  %s3 = inlined_call_operand.vmem [shape: f32[1,128], index: 3, kind: input, shape index: {}]
  %s4 = inlined_call_operand.hbm [shape: f32[128,128], index: 4, kind: input, shape index: {}]
  %s5 = inlined_call_operand.hbm [shape: f32[128,128], index: 5, kind: input, shape index: {}]
  %s6 = inlined_call_operand.hbm [shape: f32[128,128], index: 6, kind: input, shape index: {}]
  %s7 = inlined_call_operand.hbm [shape: f32[128,128], index: 7, kind: input, shape index: {}]
  %s8 = inlined_call_operand.hbm [shape: f32[1,128], index: 8, kind: input, shape index: {}]
  %s9 = inlined_call_operand.hbm [shape: f32[1,128], index: 9, kind: input, shape index: {}]
  %s10 = inlined_call_operand.hbm [shape: f32[1,128], index: 10, kind: input, shape index: {}]
  %s11 = inlined_call_operand.hbm [shape: f32[128,128], index: 11, kind: input, shape index: {}]
  %s12 = inlined_call_operand.hbm [shape: f32[128,128], index: 12, kind: input, shape index: {}]
  %s13 = inlined_call_operand.hbm [shape: f32[128,128], index: 13, kind: input, shape index: {}]
  %s14 = inlined_call_operand.hbm [shape: f32[128,128], index: 14, kind: input, shape index: {}]
  %s15 = inlined_call_operand.hbm [shape: f32[1,128], index: 15, kind: input, shape index: {}]
  %s16 = inlined_call_operand.hbm [shape: f32[1,128], index: 16, kind: input, shape index: {}]
  %s17 = inlined_call_operand.hbm [shape: f32[1,128], index: 17, kind: input, shape index: {}]
  %s18 = inlined_call_operand.hbm [shape: f32[128,512], index: 18, kind: input, shape index: {}]
  %s19 = inlined_call_operand.vmem [shape: f32[1,512], index: 19, kind: input, shape index: {}]
  %s20 = inlined_call_operand.hbm [shape: f32[512,128], index: 20, kind: input, shape index: {}]
  %s21 = inlined_call_operand.hbm [shape: f32[1,128], index: 21, kind: input, shape index: {}]
  %s22 = inlined_call_operand.hbm [shape: f32[2,8,128], index: 22, kind: output, shape index: {}]
  %s23 = sld [smem:[#allocation0]]
  $region170: #{transformer_decoder_layer.1} parent=0
    _
  %s25 = ssub.s32 1, %s23
  %s26 = scalar_select 0, %s25, %s23
  $region1: #{transformer_decoder_layer.1} parent=0
    #allocation2 [shape = 'u8[8192]{0}', space=vmem, size = 0x2000, scoped, tag = 'input window, operand 0, single buffered']
    #allocation3 [shape = 's32[1]{0}', space=sflag, size = 0x4, scoped, tag = 'scoped memory for transformer_decoder_layer.1']
    #allocation4 [shape = 's32[1]{0}', space=sflag, size = 0x4, scoped, tag = 'scoped memory for transformer_decoder_layer.1']
    #allocation5 [shape = 'u8[65536]{0}', space=vmem, size = 0x10000, scoped, tag = 'input window, operand 4, single buffered']
    #allocation6 [shape = 's32[1]{0}', space=sflag, size = 0x4, scoped, tag = 'scoped memory for transformer_decoder_layer.1']
    #allocation7 [shape = 'u8[65536]{0}', space=vmem, size = 0x10000, scoped, tag = 'input window, operand 5, single buffered']
    #allocation8 [shape = 'u8[65536]{0}', space=vmem, size = 0x10000, scoped, tag = 'input window, operand 6, single buffered']
    #allocation9 [shape = 's32[1]{0}', space=sflag, size = 0x4, scoped, tag = 'scoped memory for transformer_decoder_layer.1']
    #allocation10 [shape = 'u8[65536]{0}', space=vmem, size = 0x10000, scoped, tag = 'input window, operand 7, single buffered']
    #allocation11 [shape = 'u8[512]{0}', space=vmem, size = 0x400, scoped, tag = 'input window, operand 8, single buffered']
    #allocation12 [shape = 's32[1]{0}', space=sflag, size = 0x4, scoped, tag = 'scoped memory for transformer_decoder_layer.1']
    #allocation13 [shape = 'u8[512]{0}', space=vmem, size = 0x400, scoped, tag = 'input window, operand 9, single buffered']
    #allocation14 [shape = 'u8[512]{0}', space=vmem, size = 0x400, scoped, tag = 'input window, operand 10, single buffered']
    #allocation15 [shape = 's32[1]{0}', space=sflag, size = 0x4, scoped, tag = 'scoped memory for transformer_decoder_layer.1']
    #allocation16 [shape = 'u8[65536]{0}', space=vmem, size = 0x10000, scoped, tag = 'input window, operand 11, single buffered']
    #allocation17 [shape = 'u8[65536]{0}', space=vmem, size = 0x10000, scoped, tag = 'input window, operand 12, single buffered']
    #allocation18 [shape = 's32[1]{0}', space=sflag, size = 0x4, scoped, tag = 'scoped memory for transformer_decoder_layer.1']
    #allocation19 [shape = 'u8[65536]{0}', space=vmem, size = 0x10000, scoped, tag = 'input window, operand 13, single buffered']
    #allocation20 [shape = 'u8[65536]{0}', space=vmem, size = 0x10000, scoped, tag = 'input window, operand 14, single buffered']
    #allocation21 [shape = 's32[1]{0}', space=sflag, size = 0x4, scoped, tag = 'scoped memory for transformer_decoder_layer.1']
    #allocation22 [shape = 'u8[512]{0}', space=vmem, size = 0x400, scoped, tag = 'input window, operand 15, single buffered']
    #allocation23 [shape = 'u8[512]{0}', space=vmem, size = 0x400, scoped, tag = 'input window, operand 16, single buffered']
    #allocation24 [shape = 's32[1]{0}', space=sflag, size = 0x4, scoped, tag = 'scoped memory for transformer_decoder_layer.1']
    #allocation25 [shape = 'u8[512]{0}', space=vmem, size = 0x400, scoped, tag = 'input window, operand 17, single buffered']
    #allocation26 [shape = 'u8[262144]{0}', space=vmem, size = 0x40000, scoped, tag = 'input window, operand 18, single buffered']
    #allocation27 [shape = 's32[1]{0}', space=sflag, size = 0x4, scoped, tag = 'scoped memory for transformer_decoder_layer.1']
    #allocation28 [shape = 'u8[262144]{0}', space=vmem, size = 0x40000, scoped, tag = 'input window, operand 20, single buffered']
    #allocation29 [shape = 'u8[512]{0}', space=vmem, size = 0x400, scoped, tag = 'input window, operand 21, single buffered']
    #allocation30 [shape = 's32[1]{0}', space=sflag, size = 0x4, scoped, tag = 'scoped memory for transformer_decoder_layer.1']
    #allocation31 [shape = 'u8[8192]{0}', space=vmem, size = 0x2000, scoped, tag = 'output window, operand 0, single buffered']
    %27 = vsyncpa [#allocation3], 0
    %28 = vsyncpa [#allocation6], 0
    %29 = vsyncpa [#allocation9], 0
    %30 = vsyncpa [#allocation12], 0
    %31 = vsyncpa [#allocation15], 0
    %32 = vsyncpa [#allocation18], 0
    %33 = vsyncpa [#allocation21], 0
    %34 = vsyncpa [#allocation24], 0
    %35 = vsyncpa [#allocation27], 0
    %36 = vsyncpa [#allocation30], 0
    %37 = vsyncpa [#allocation4], 0
    // Predicated region
    $region2: #{transformer_decoder_layer.1} parent=1 // pred_check
      _
    $region3: #{transformer_decoder_layer.1} parent=1 // pred_check_branch
      %39 = sbr.rel (0) target = $region5
    $region4: #{transformer_decoder_layer.1} parent=1 // pred_region
      %s41 = ssub.s32 256, 256
      %42 = vsyncadd [#allocation3], %s41
      %s43 = sshll.u32 [#allocation2], 4
      %s44 = int_to_ptr.vmem [resolvable:$true] %s43
      %49 = dma.hbm_to_vmem [thread:$0]  %s0, 256, %s44, [#allocation3], 128, 128, 8
    $region5: #{transformer_decoder_layer.1} parent=1 // pred_fallthru
      _
    // Predicated region
    $region6: #{transformer_decoder_layer.1} parent=1 // pred_check
      _
    $region7: #{transformer_decoder_layer.1} parent=1 // pred_check_branch
      %51 = sbr.rel (0) target = $region9
    $region8: #{transformer_decoder_layer.1} parent=1 // pred_region
      _
    $region9: #{transformer_decoder_layer.1} parent=1 // pred_fallthru
      _
    // Predicated region
    $region10: #{transformer_decoder_layer.1} parent=1 // pred_check
      _
    $region11: #{transformer_decoder_layer.1} parent=1 // pred_check_branch
      %53 = sbr.rel (0) target = $region13
    $region12: #{transformer_decoder_layer.1} parent=1 // pred_region
      _
    $region13: #{transformer_decoder_layer.1} parent=1 // pred_fallthru
      _
    // Predicated region
    $region14: #{transformer_decoder_layer.1} parent=1 // pred_check
      _
    $region15: #{transformer_decoder_layer.1} parent=1 // pred_check_branch
      %55 = sbr.rel (0) target = $region17
    $region16: #{transformer_decoder_layer.1} parent=1 // pred_region
      _
    $region17: #{transformer_decoder_layer.1} parent=1 // pred_fallthru
      _
    // Predicated region
    $region18: #{transformer_decoder_layer.1} parent=1 // pred_check
      _
    $region19: #{transformer_decoder_layer.1} parent=1 // pred_check_branch
      %57 = sbr.rel (0) target = $region21
    $region20: #{transformer_decoder_layer.1} parent=1 // pred_region
      %s59 = ssub.s32 2048, 2048
      %60 = vsyncadd [#allocation6], %s59
      %s61 = sshll.u32 [#allocation5], 4
      %s62 = int_to_ptr.vmem [resolvable:$true] %s61
      %67 = dma.hbm_to_vmem [thread:$0]  %s4, 2048, %s62, [#allocation6], 128, 128, 8
    $region21: #{transformer_decoder_layer.1} parent=1 // pred_fallthru
      _
    // Predicated region
    $region22: #{transformer_decoder_layer.1} parent=1 // pred_check
      _
    $region23: #{transformer_decoder_layer.1} parent=1 // pred_check_branch
      %69 = sbr.rel (0) target = $region25
    $region24: #{transformer_decoder_layer.1} parent=1 // pred_region
      %s71 = ssub.s32 2048, 2048
      %72 = vsyncadd [#allocation6], %s71
      %s73 = sshll.u32 [#allocation7], 4
      %s74 = int_to_ptr.vmem [resolvable:$true] %s73
      %79 = dma.hbm_to_vmem [thread:$0]  %s5, 2048, %s74, [#allocation6], 128, 128, 8
    $region25: #{transformer_decoder_layer.1} parent=1 // pred_fallthru
      _
    // Predicated region
    $region26: #{transformer_decoder_layer.1} parent=1 // pred_check
      _
    $region27: #{transformer_decoder_layer.1} parent=1 // pred_check_branch
      %81 = sbr.rel (0) target = $region29
    $region28: #{transformer_decoder_layer.1} parent=1 // pred_region
      %s83 = ssub.s32 2048, 2048
      %84 = vsyncadd [#allocation9], %s83
      %s85 = sshll.u32 [#allocation8], 4
      %s86 = int_to_ptr.vmem [resolvable:$true] %s85
      %91 = dma.hbm_to_vmem [thread:$0]  %s6, 2048, %s86, [#allocation9], 128, 128, 8
    $region29: #{transformer_decoder_layer.1} parent=1 // pred_fallthru
      _
    // Predicated region
    $region30: #{transformer_decoder_layer.1} parent=1 // pred_check
      _
    $region31: #{transformer_decoder_layer.1} parent=1 // pred_check_branch
      %93 = sbr.rel (0) target = $region33
    $region32: #{transformer_decoder_layer.1} parent=1 // pred_region
      %s95 = ssub.s32 2048, 2048
      %96 = vsyncadd [#allocation9], %s95
      %s97 = sshll.u32 [#allocation10], 4
      %s98 = int_to_ptr.vmem [resolvable:$true] %s97
      %103 = dma.hbm_to_vmem [thread:$0]  %s7, 2048, %s98, [#allocation9], 128, 128, 8
    $region33: #{transformer_decoder_layer.1} parent=1 // pred_fallthru
      _
    // Predicated region
    $region34: #{transformer_decoder_layer.1} parent=1 // pred_check
      _
    $region35: #{transformer_decoder_layer.1} parent=1 // pred_check_branch
      %105 = sbr.rel (0) target = $region37
    $region36: #{transformer_decoder_layer.1} parent=1 // pred_region
      %s107 = ssub.s32 16, 16
      %108 = vsyncadd [#allocation12], %s107
      %s110 = sshll.u32 [#allocation11], 4
      %s111 = int_to_ptr.vmem [resolvable:$true] %s110
      %113 = dma.hbm_to_vmem [thread:$0]  %s8, 16, %s111, [#allocation12]
    $region37: #{transformer_decoder_layer.1} parent=1 // pred_fallthru
      _
    // Predicated region
    $region38: #{transformer_decoder_layer.1} parent=1 // pred_check
      _
    $region39: #{transformer_decoder_layer.1} parent=1 // pred_check_branch
      %115 = sbr.rel (0) target = $region41
    $region40: #{transformer_decoder_layer.1} parent=1 // pred_region
      %s117 = ssub.s32 16, 16
      %118 = vsyncadd [#allocation12], %s117
      %s120 = sshll.u32 [#allocation13], 4
      %s121 = int_to_ptr.vmem [resolvable:$true] %s120
      %123 = dma.hbm_to_vmem [thread:$0]  %s9, 16, %s121, [#allocation12]
    $region41: #{transformer_decoder_layer.1} parent=1 // pred_fallthru
      _
    // Predicated region
    $region42: #{transformer_decoder_layer.1} parent=1 // pred_check
      _
    $region43: #{transformer_decoder_layer.1} parent=1 // pred_check_branch
      %125 = sbr.rel (0) target = $region45
    $region44: #{transformer_decoder_layer.1} parent=1 // pred_region
      %s127 = ssub.s32 16, 16
      %128 = vsyncadd [#allocation15], %s127
      %s130 = sshll.u32 [#allocation14], 4
      %s131 = int_to_ptr.vmem [resolvable:$true] %s130
      %133 = dma.hbm_to_vmem [thread:$0]  %s10, 16, %s131, [#allocation15]
    $region45: #{transformer_decoder_layer.1} parent=1 // pred_fallthru
      _
    // Predicated region
    $region46: #{transformer_decoder_layer.1} parent=1 // pred_check
      _
    $region47: #{transformer_decoder_layer.1} parent=1 // pred_check_branch
      %135 = sbr.rel (0) target = $region49
    $region48: #{transformer_decoder_layer.1} parent=1 // pred_region
      %s137 = ssub.s32 2048, 2048
      %138 = vsyncadd [#allocation15], %s137
      %s139 = sshll.u32 [#allocation16], 4
      %s140 = int_to_ptr.vmem [resolvable:$true] %s139
      %145 = dma.hbm_to_vmem [thread:$0]  %s11, 2048, %s140, [#allocation15], 128, 128, 8
    $region49: #{transformer_decoder_layer.1} parent=1 // pred_fallthru
      _
    // Predicated region
    $region50: #{transformer_decoder_layer.1} parent=1 // pred_check
      _
    $region51: #{transformer_decoder_layer.1} parent=1 // pred_check_branch
      %147 = sbr.rel (0) target = $region53
    $region52: #{transformer_decoder_layer.1} parent=1 // pred_region
      %s149 = ssub.s32 2048, 2048
      %150 = vsyncadd [#allocation18], %s149
      %s151 = sshll.u32 [#allocation17], 4
      %s152 = int_to_ptr.vmem [resolvable:$true] %s151
      %157 = dma.hbm_to_vmem [thread:$0]  %s12, 2048, %s152, [#allocation18], 128, 128, 8
    $region53: #{transformer_decoder_layer.1} parent=1 // pred_fallthru
      _
    // Predicated region
    $region54: #{transformer_decoder_layer.1} parent=1 // pred_check
      _
    $region55: #{transformer_decoder_layer.1} parent=1 // pred_check_branch
      %159 = sbr.rel (0) target = $region57
    $region56: #{transformer_decoder_layer.1} parent=1 // pred_region
      %s161 = ssub.s32 2048, 2048
      %162 = vsyncadd [#allocation18], %s161
      %s163 = sshll.u32 [#allocation19], 4
      %s164 = int_to_ptr.vmem [resolvable:$true] %s163
      %169 = dma.hbm_to_vmem [thread:$0]  %s13, 2048, %s164, [#allocation18], 128, 128, 8
    $region57: #{transformer_decoder_layer.1} parent=1 // pred_fallthru
      _
    // Predicated region
    $region58: #{transformer_decoder_layer.1} parent=1 // pred_check
      _
    $region59: #{transformer_decoder_layer.1} parent=1 // pred_check_branch
      %171 = sbr.rel (0) target = $region61
    $region60: #{transformer_decoder_layer.1} parent=1 // pred_region
      %s173 = ssub.s32 2048, 2048
      %174 = vsyncadd [#allocation21], %s173
      %s175 = sshll.u32 [#allocation20], 4
      %s176 = int_to_ptr.vmem [resolvable:$true] %s175
      %181 = dma.hbm_to_vmem [thread:$0]  %s14, 2048, %s176, [#allocation21], 128, 128, 8
    $region61: #{transformer_decoder_layer.1} parent=1 // pred_fallthru
      _
    // Predicated region
    $region62: #{transformer_decoder_layer.1} parent=1 // pred_check
      _
    $region63: #{transformer_decoder_layer.1} parent=1 // pred_check_branch
      %183 = sbr.rel (0) target = $region65
    $region64: #{transformer_decoder_layer.1} parent=1 // pred_region
      %s185 = ssub.s32 16, 16
      %186 = vsyncadd [#allocation21], %s185
      %s188 = sshll.u32 [#allocation22], 4
      %s189 = int_to_ptr.vmem [resolvable:$true] %s188
      %191 = dma.hbm_to_vmem [thread:$0]  %s15, 16, %s189, [#allocation21]
    $region65: #{transformer_decoder_layer.1} parent=1 // pred_fallthru
      _
    // Predicated region
    $region66: #{transformer_decoder_layer.1} parent=1 // pred_check
      _
    $region67: #{transformer_decoder_layer.1} parent=1 // pred_check_branch
      %193 = sbr.rel (0) target = $region69
    $region68: #{transformer_decoder_layer.1} parent=1 // pred_region
      %s195 = ssub.s32 16, 16
      %196 = vsyncadd [#allocation24], %s195
      %s198 = sshll.u32 [#allocation23], 4
      %s199 = int_to_ptr.vmem [resolvable:$true] %s198
      %201 = dma.hbm_to_vmem [thread:$0]  %s16, 16, %s199, [#allocation24]
    $region69: #{transformer_decoder_layer.1} parent=1 // pred_fallthru
      _
    // Predicated region
    $region70: #{transformer_decoder_layer.1} parent=1 // pred_check
      _
    $region71: #{transformer_decoder_layer.1} parent=1 // pred_check_branch
      %203 = sbr.rel (0) target = $region73
    $region72: #{transformer_decoder_layer.1} parent=1 // pred_region
      %s205 = ssub.s32 16, 16
      %206 = vsyncadd [#allocation24], %s205
      %s208 = sshll.u32 [#allocation25], 4
      %s209 = int_to_ptr.vmem [resolvable:$true] %s208
      %211 = dma.hbm_to_vmem [thread:$0]  %s17, 16, %s209, [#allocation24]
    $region73: #{transformer_decoder_layer.1} parent=1 // pred_fallthru
      _
    // Predicated region
    $region74: #{transformer_decoder_layer.1} parent=1 // pred_check
      _
    $region75: #{transformer_decoder_layer.1} parent=1 // pred_check_branch
      %213 = sbr.rel (0) target = $region77
    $region76: #{transformer_decoder_layer.1} parent=1 // pred_region
      %s215 = ssub.s32 8192, 8192
      %216 = vsyncadd [#allocation27], %s215
      %s217 = sshll.u32 [#allocation26], 4
      %s218 = int_to_ptr.vmem [resolvable:$true] %s217
      %223 = dma.hbm_to_vmem [thread:$0]  %s18, 8192, %s218, [#allocation27], 512, 512, 32
    $region77: #{transformer_decoder_layer.1} parent=1 // pred_fallthru
      _
    // Predicated region
    $region78: #{transformer_decoder_layer.1} parent=1 // pred_check
      _
    $region79: #{transformer_decoder_layer.1} parent=1 // pred_check_branch
      %225 = sbr.rel (0) target = $region81
    $region80: #{transformer_decoder_layer.1} parent=1 // pred_region
      _
    $region81: #{transformer_decoder_layer.1} parent=1 // pred_fallthru
      _
    // Predicated region
    $region82: #{transformer_decoder_layer.1} parent=1 // pred_check
      _
    $region83: #{transformer_decoder_layer.1} parent=1 // pred_check_branch
      %227 = sbr.rel (0) target = $region85
    $region84: #{transformer_decoder_layer.1} parent=1 // pred_region
      %s229 = ssub.s32 8192, 8192
      %230 = vsyncadd [#allocation27], %s229
      %s231 = sshll.u32 [#allocation28], 4
      %s232 = int_to_ptr.vmem [resolvable:$true] %s231
      %237 = dma.hbm_to_vmem [thread:$0]  %s20, 8192, %s232, [#allocation27], 128, 128, 8
    $region85: #{transformer_decoder_layer.1} parent=1 // pred_fallthru
      _
    // Predicated region
    $region86: #{transformer_decoder_layer.1} parent=1 // pred_check
      _
    $region87: #{transformer_decoder_layer.1} parent=1 // pred_check_branch
      %239 = sbr.rel (0) target = $region89
    $region88: #{transformer_decoder_layer.1} parent=1 // pred_region
      %s241 = ssub.s32 16, 16
      %242 = vsyncadd [#allocation30], %s241
      %s244 = sshll.u32 [#allocation29], 4
      %s245 = int_to_ptr.vmem [resolvable:$true] %s244
      %247 = dma.hbm_to_vmem [thread:$0]  %s21, 16, %s245, [#allocation30]
    $region89: #{transformer_decoder_layer.1} parent=1 // pred_fallthru
      _
    // Predicated region
    $region90: #{transformer_decoder_layer.1} parent=1 // pred_check
      _
    $region91: #{transformer_decoder_layer.1} parent=1 // pred_check_branch
      %249 = sbr.rel (0) target = $region93
    $region92: #{transformer_decoder_layer.1} parent=1 // pred_region
      %250 = dma.done [#allocation3], 256
    $region93: #{transformer_decoder_layer.1} parent=1 // pred_fallthru
      _
    // Predicated region
    $region94: #{transformer_decoder_layer.1} parent=1 // pred_check
      _
    $region95: #{transformer_decoder_layer.1} parent=1 // pred_check_branch
      %252 = sbr.rel (0) target = $region97
    $region96: #{transformer_decoder_layer.1} parent=1 // pred_region
      %253 = dma.done [#allocation6], 2048
    $region97: #{transformer_decoder_layer.1} parent=1 // pred_fallthru
      _
    // Predicated region
    $region98: #{transformer_decoder_layer.1} parent=1 // pred_check
      _
    $region99: #{transformer_decoder_layer.1} parent=1 // pred_check_branch
      %255 = sbr.rel (0) target = $region101
    $region100: #{transformer_decoder_layer.1} parent=1 // pred_region
      %256 = dma.done [#allocation6], 2048
    $region101: #{transformer_decoder_layer.1} parent=1 // pred_fallthru
      _
    // Predicated region
    $region102: #{transformer_decoder_layer.1} parent=1 // pred_check
      _
    $region103: #{transformer_decoder_layer.1} parent=1 // pred_check_branch
      %258 = sbr.rel (0) target = $region105
    $region104: #{transformer_decoder_layer.1} parent=1 // pred_region
      %259 = dma.done [#allocation9], 2048
    $region105: #{transformer_decoder_layer.1} parent=1 // pred_fallthru
      _
    // Predicated region
    $region106: #{transformer_decoder_layer.1} parent=1 // pred_check
      _
    $region107: #{transformer_decoder_layer.1} parent=1 // pred_check_branch
      %261 = sbr.rel (0) target = $region109
    $region108: #{transformer_decoder_layer.1} parent=1 // pred_region
      %262 = dma.done [#allocation9], 2048
    $region109: #{transformer_decoder_layer.1} parent=1 // pred_fallthru
      _
    // Predicated region
    $region110: #{transformer_decoder_layer.1} parent=1 // pred_check
      _
    $region111: #{transformer_decoder_layer.1} parent=1 // pred_check_branch
      %264 = sbr.rel (0) target = $region113
    $region112: #{transformer_decoder_layer.1} parent=1 // pred_region
      %265 = dma.done [#allocation12], 16
    $region113: #{transformer_decoder_layer.1} parent=1 // pred_fallthru
      _
    // Predicated region
    $region114: #{transformer_decoder_layer.1} parent=1 // pred_check
      _
    $region115: #{transformer_decoder_layer.1} parent=1 // pred_check_branch
      %267 = sbr.rel (0) target = $region117
    $region116: #{transformer_decoder_layer.1} parent=1 // pred_region
      %268 = dma.done [#allocation12], 16
    $region117: #{transformer_decoder_layer.1} parent=1 // pred_fallthru
      _
    // Predicated region
    $region118: #{transformer_decoder_layer.1} parent=1 // pred_check
      _
    $region119: #{transformer_decoder_layer.1} parent=1 // pred_check_branch
      %270 = sbr.rel (0) target = $region121
    $region120: #{transformer_decoder_layer.1} parent=1 // pred_region
      %271 = dma.done [#allocation15], 16
    $region121: #{transformer_decoder_layer.1} parent=1 // pred_fallthru
      _
    // Predicated region
    $region122: #{transformer_decoder_layer.1} parent=1 // pred_check
      _
    $region123: #{transformer_decoder_layer.1} parent=1 // pred_check_branch
      %273 = sbr.rel (0) target = $region125
    $region124: #{transformer_decoder_layer.1} parent=1 // pred_region
      %274 = dma.done [#allocation15], 2048
    $region125: #{transformer_decoder_layer.1} parent=1 // pred_fallthru
      _
    // Predicated region
    $region126: #{transformer_decoder_layer.1} parent=1 // pred_check
      _
    $region127: #{transformer_decoder_layer.1} parent=1 // pred_check_branch
      %276 = sbr.rel (0) target = $region129
    $region128: #{transformer_decoder_layer.1} parent=1 // pred_region
      %277 = dma.done [#allocation18], 2048
    $region129: #{transformer_decoder_layer.1} parent=1 // pred_fallthru
      _
    // Predicated region
    $region130: #{transformer_decoder_layer.1} parent=1 // pred_check
      _
    $region131: #{transformer_decoder_layer.1} parent=1 // pred_check_branch
      %279 = sbr.rel (0) target = $region133
    $region132: #{transformer_decoder_layer.1} parent=1 // pred_region
      %280 = dma.done [#allocation18], 2048
    $region133: #{transformer_decoder_layer.1} parent=1 // pred_fallthru
      _
    // Predicated region
    $region134: #{transformer_decoder_layer.1} parent=1 // pred_check
      _
    $region135: #{transformer_decoder_layer.1} parent=1 // pred_check_branch
      %282 = sbr.rel (0) target = $region137
    $region136: #{transformer_decoder_layer.1} parent=1 // pred_region
      %283 = dma.done [#allocation21], 2048
    $region137: #{transformer_decoder_layer.1} parent=1 // pred_fallthru
      _
    // Predicated region
    $region138: #{transformer_decoder_layer.1} parent=1 // pred_check
      _
    $region139: #{transformer_decoder_layer.1} parent=1 // pred_check_branch
      %285 = sbr.rel (0) target = $region141
    $region140: #{transformer_decoder_layer.1} parent=1 // pred_region
      %286 = dma.done [#allocation21], 16
    $region141: #{transformer_decoder_layer.1} parent=1 // pred_fallthru
      _
    // Predicated region
    $region142: #{transformer_decoder_layer.1} parent=1 // pred_check
      _
    $region143: #{transformer_decoder_layer.1} parent=1 // pred_check_branch
      %288 = sbr.rel (0) target = $region145
    $region144: #{transformer_decoder_layer.1} parent=1 // pred_region
      %289 = dma.done [#allocation24], 16
    $region145: #{transformer_decoder_layer.1} parent=1 // pred_fallthru
      _
    // Predicated region
    $region146: #{transformer_decoder_layer.1} parent=1 // pred_check
      _
    $region147: #{transformer_decoder_layer.1} parent=1 // pred_check_branch
      %291 = sbr.rel (0) target = $region149
    $region148: #{transformer_decoder_layer.1} parent=1 // pred_region
      %292 = dma.done [#allocation24], 16
    $region149: #{transformer_decoder_layer.1} parent=1 // pred_fallthru
      _
    // Predicated region
    $region150: #{transformer_decoder_layer.1} parent=1 // pred_check
      _
    $region151: #{transformer_decoder_layer.1} parent=1 // pred_check_branch
      %294 = sbr.rel (0) target = $region153
    $region152: #{transformer_decoder_layer.1} parent=1 // pred_region
      %295 = dma.done [#allocation27], 8192
    $region153: #{transformer_decoder_layer.1} parent=1 // pred_fallthru
      _
    // Predicated region
    $region154: #{transformer_decoder_layer.1} parent=1 // pred_check
      _
    $region155: #{transformer_decoder_layer.1} parent=1 // pred_check_branch
      %297 = sbr.rel (0) target = $region157
    $region156: #{transformer_decoder_layer.1} parent=1 // pred_region
      %298 = dma.done [#allocation27], 8192
    $region157: #{transformer_decoder_layer.1} parent=1 // pred_fallthru
      _
    // Predicated region
    $region158: #{transformer_decoder_layer.1} parent=1 // pred_check
      _
    $region159: #{transformer_decoder_layer.1} parent=1 // pred_check_branch
      %300 = sbr.rel (0) target = $region161
    $region160: #{transformer_decoder_layer.1} parent=1 // pred_region
      %301 = dma.done [#allocation30], 16
    $region161: #{transformer_decoder_layer.1} parent=1 // pred_fallthru
      _
    %v302 = vld [vmem:[#allocation2] sm:$0xff]
    %v303 = vld [vmem:[#allocation2 + $0x8] sm:$0xff]
    %v304 = vld [vmem:[%s1] sm:$0xff]
    %v305 = vld [vmem:[%s1 + $0x8] sm:$0xff]
    %v306 = vld [vmem:[%s1 + $0x10] sm:$0xff]
    %v307 = vld [vmem:[%s1 + $0x18] sm:$0xff]
    %v308 = vld [vmem:[%s2] sm:$0x1]
    %v309 = vld [vmem:[%s3] sm:$0x1]
    %310 = vadd.xlane.f32.xlu0 %v302
    %v311 = vpop.xlane.xlu0 %310
    %312 = vadd.xlane.f32.xlu0 %v303
    %v313 = vpop.xlane.xlu0 %312
    %v314 = vrcp.pop 128.0
    %v315 = vmul.f32 %v311, %v314
    %v316 = vmul.f32 %v313, %v314
    %v317 = vsub.f32 %v302, %v315
    %v318 = vsub.f32 %v303, %v316
    %v319 = vmul.f32 %v317, %v317
    %v320 = vmul.f32 %v318, %v318
    %321 = vadd.xlane.f32.xlu0 %v319
    %v322 = vpop.xlane.xlu0 %321
    %323 = vadd.xlane.f32.xlu0 %v320
    %v324 = vpop.xlane.xlu0 %323
    %v325 = vmul.f32 %v322, %v314
    %v326 = vmul.f32 %v324, %v314
    %v327 = vadd.f32 %v325, 1e-05
    %v328 = vadd.f32 %v326, 1e-05
    %v329 = vrsqrt.pop %v327
    %v330 = vrsqrt.pop %v328
    %v331 = vmul.f32 %v317, %v329
    %v332 = vmul.f32 %v318, %v330
    %v334 = vlaneseq
    %v335 = vshrl.u32 %v334, 7
    %v336 = vsub.s32 0, %v335
    %v337 = vrot.slane %v308, %v336
    %v339 = vmul.f32 %v331, %v337
    %v340 = vmul.f32 %v332, %v337
    %v342 = vlaneseq
    %v343 = vshrl.u32 %v342, 7
    %v344 = vsub.s32 0, %v343
    %v345 = vrot.slane %v309, %v344
    %v347 = vadd.f32 %v339, %v345
    %v348 = vadd.f32 %v340, %v345
    %v349 = vld [vmem:[#allocation5] sm:$0xff]
    %v350 = vld [vmem:[#allocation5 + $0x8] sm:$0xff]
    %v351 = vld [vmem:[#allocation5 + $0x10] sm:$0xff]
    %v352 = vld [vmem:[#allocation5 + $0x18] sm:$0xff]
    %v353 = vld [vmem:[#allocation5 + $0x20] sm:$0xff]
    %v354 = vld [vmem:[#allocation5 + $0x28] sm:$0xff]
    %v355 = vld [vmem:[#allocation5 + $0x30] sm:$0xff]
    %v356 = vld [vmem:[#allocation5 + $0x38] sm:$0xff]
    %v357 = vld [vmem:[#allocation5 + $0x40] sm:$0xff]
    %v358 = vld [vmem:[#allocation5 + $0x48] sm:$0xff]
    %v359 = vld [vmem:[#allocation5 + $0x50] sm:$0xff]
    %v360 = vld [vmem:[#allocation5 + $0x58] sm:$0xff]
    %v361 = vld [vmem:[#allocation5 + $0x60] sm:$0xff]
    %v362 = vld [vmem:[#allocation5 + $0x68] sm:$0xff]
    %v363 = vld [vmem:[#allocation5 + $0x70] sm:$0xff]
    %v364 = vld [vmem:[#allocation5 + $0x78] sm:$0xff]
    %365 = vmatprep.subr.mxu0 0.0
    %366 = vmatpush1.msra.mxu0 %v364
    %367 = vmatprep.subr.mxu0 0.0
    %368 = vmatpush1.msra.mxu0 %v363
    %369 = vmatprep.subr.mxu0 0.0
    %370 = vmatpush1.msra.mxu0 %v362
    %371 = vmatprep.subr.mxu0 0.0
    %372 = vmatpush1.msra.mxu0 %v361
    %373 = vmatprep.subr.mxu0 0.0
    %374 = vmatpush1.msra.mxu0 %v360
    %375 = vmatprep.subr.mxu0 0.0
    %376 = vmatpush1.msra.mxu0 %v359
    %377 = vmatprep.subr.mxu0 0.0
    %378 = vmatpush1.msra.mxu0 %v358
    %379 = vmatprep.subr.mxu0 0.0
    %380 = vmatpush1.msra.mxu0 %v357
    %381 = vmatprep.subr.mxu0 0.0
    %382 = vmatpush1.msra.mxu0 %v356
    %383 = vmatprep.subr.mxu0 0.0
    %384 = vmatpush1.msra.mxu0 %v355
    %385 = vmatprep.subr.mxu0 0.0
    %386 = vmatpush1.msra.mxu0 %v354
    %387 = vmatprep.subr.mxu0 0.0
    %388 = vmatpush1.msra.mxu0 %v353
    %389 = vmatprep.subr.mxu0 0.0
    %390 = vmatpush1.msra.mxu0 %v352
    %391 = vmatprep.subr.mxu0 0.0
    %392 = vmatpush1.msra.mxu0 %v351
    %393 = vmatprep.subr.mxu0 0.0
    %394 = vmatpush1.msra.mxu0 %v350
    %395 = vmatprep.subr.mxu0 0.0
    %396 = vmatpush1.msra.mxu0 %v349
    %397 = vmatprep.subr.mxu0 0.0
    %398 = vmatpush2.msra.mxu0 0.0
    %399 = vmatprep.subr.mxu0 0.0
    %400 = vmatpush2.msra.mxu0 0.0
    %401 = vmatprep.subr.mxu0 0.0
    %402 = vmatpush2.msra.mxu0 0.0
    %403 = vmatprep.subr.mxu0 0.0
    %404 = vmatpush2.msra.mxu0 0.0
    %405 = vmatprep.subr.mxu0 0.0
    %406 = vmatpush2.msra.mxu0 0.0
    %407 = vmatprep.subr.mxu0 0.0
    %408 = vmatpush2.msra.mxu0 0.0
    %409 = vmatprep.subr.mxu0 0.0
    %410 = vmatpush2.msra.mxu0 0.0
    %411 = vmatprep.subr.mxu0 0.0
    %412 = vmatpush2.msra.mxu0 0.0
    %413 = vmatprep.subr.mxu0 0.0
    %414 = vmatpush2.msra.mxu0 0.0
    %415 = vmatprep.subr.mxu0 0.0
    %416 = vmatpush2.msra.mxu0 0.0
    %417 = vmatprep.subr.mxu0 0.0
    %418 = vmatpush2.msra.mxu0 0.0
    %419 = vmatprep.subr.mxu0 0.0
    %420 = vmatpush2.msra.mxu0 0.0
    %421 = vmatprep.subr.mxu0 0.0
    %422 = vmatpush2.msra.mxu0 0.0
    %423 = vmatprep.subr.mxu0 0.0
    %424 = vmatpush2.msra.mxu0 0.0
    %425 = vmatprep.subr.mxu0 0.0
    %426 = vmatpush2.msra.mxu0 0.0
    %427 = vmatprep.subr.mxu0 0.0
    %428 = vmatpush2.msra.mxu0 0.0
    %429 = vmatprep.mubr.f32.mxu0 0.0
    %430 = vmatmul.mubr.f32.gmra.mxu0 %v347
    %v431 = vpop.f32.mrf.mxu0
    %v432 = vadd.f32 0.0, %v431
    %v433 = vpop.f32.mrf.mxu0
    %434 = vmatprep.mubr.f32.mxu0 0.0
    %435 = vmatmul.mubr.f32.gmra.mxu0 %v348
    %v436 = vpop.f32.mrf.mxu0
    %v437 = vadd.f32 0.0, %v436
    %v438 = vpop.f32.mrf.mxu0
    %439 = vdwg.mxu0
    %v440 = vld [vmem:[#allocation7] sm:$0xff]
    %v441 = vld [vmem:[#allocation7 + $0x8] sm:$0xff]
    %v442 = vld [vmem:[#allocation7 + $0x10] sm:$0xff]
    %v443 = vld [vmem:[#allocation7 + $0x18] sm:$0xff]
    %v444 = vld [vmem:[#allocation7 + $0x20] sm:$0xff]
    %v445 = vld [vmem:[#allocation7 + $0x28] sm:$0xff]
    %v446 = vld [vmem:[#allocation7 + $0x30] sm:$0xff]
    %v447 = vld [vmem:[#allocation7 + $0x38] sm:$0xff]
    %v448 = vld [vmem:[#allocation7 + $0x40] sm:$0xff]
    %v449 = vld [vmem:[#allocation7 + $0x48] sm:$0xff]
    %v450 = vld [vmem:[#allocation7 + $0x50] sm:$0xff]
    %v451 = vld [vmem:[#allocation7 + $0x58] sm:$0xff]
    %v452 = vld [vmem:[#allocation7 + $0x60] sm:$0xff]
    %v453 = vld [vmem:[#allocation7 + $0x68] sm:$0xff]
    %v454 = vld [vmem:[#allocation7 + $0x70] sm:$0xff]
    %v455 = vld [vmem:[#allocation7 + $0x78] sm:$0xff]
    %456 = vmatprep.subr.mxu0 0.0
    %457 = vmatpush1.msra.mxu0 %v455
    %458 = vmatprep.subr.mxu0 0.0
    %459 = vmatpush1.msra.mxu0 %v454
    %460 = vmatprep.subr.mxu0 0.0
    %461 = vmatpush1.msra.mxu0 %v453
    %462 = vmatprep.subr.mxu0 0.0
    %463 = vmatpush1.msra.mxu0 %v452
    %464 = vmatprep.subr.mxu0 0.0
    %465 = vmatpush1.msra.mxu0 %v451
    %466 = vmatprep.subr.mxu0 0.0
    %467 = vmatpush1.msra.mxu0 %v450
    %468 = vmatprep.subr.mxu0 0.0
    %469 = vmatpush1.msra.mxu0 %v449
    %470 = vmatprep.subr.mxu0 0.0
    %471 = vmatpush1.msra.mxu0 %v448
    %472 = vmatprep.subr.mxu0 0.0
    %473 = vmatpush1.msra.mxu0 %v447
    %474 = vmatprep.subr.mxu0 0.0
    %475 = vmatpush1.msra.mxu0 %v446
    %476 = vmatprep.subr.mxu0 0.0
    %477 = vmatpush1.msra.mxu0 %v445
    %478 = vmatprep.subr.mxu0 0.0
    %479 = vmatpush1.msra.mxu0 %v444
    %480 = vmatprep.subr.mxu0 0.0
    %481 = vmatpush1.msra.mxu0 %v443
    %482 = vmatprep.subr.mxu0 0.0
    %483 = vmatpush1.msra.mxu0 %v442
    %484 = vmatprep.subr.mxu0 0.0
    %485 = vmatpush1.msra.mxu0 %v441
    %486 = vmatprep.subr.mxu0 0.0
    %487 = vmatpush1.msra.mxu0 %v440
    %488 = vmatprep.subr.mxu0 0.0
    %489 = vmatpush2.msra.mxu0 0.0
    %490 = vmatprep.subr.mxu0 0.0
    %491 = vmatpush2.msra.mxu0 0.0
    %492 = vmatprep.subr.mxu0 0.0
    %493 = vmatpush2.msra.mxu0 0.0
    %494 = vmatprep.subr.mxu0 0.0
    %495 = vmatpush2.msra.mxu0 0.0
    %496 = vmatprep.subr.mxu0 0.0
    %497 = vmatpush2.msra.mxu0 0.0
    %498 = vmatprep.subr.mxu0 0.0
    %499 = vmatpush2.msra.mxu0 0.0
    %500 = vmatprep.subr.mxu0 0.0
    %501 = vmatpush2.msra.mxu0 0.0
    %502 = vmatprep.subr.mxu0 0.0
    %503 = vmatpush2.msra.mxu0 0.0
    %504 = vmatprep.subr.mxu0 0.0
    %505 = vmatpush2.msra.mxu0 0.0
    %506 = vmatprep.subr.mxu0 0.0
    %507 = vmatpush2.msra.mxu0 0.0
    %508 = vmatprep.subr.mxu0 0.0
    %509 = vmatpush2.msra.mxu0 0.0
    %510 = vmatprep.subr.mxu0 0.0
    %511 = vmatpush2.msra.mxu0 0.0
    %512 = vmatprep.subr.mxu0 0.0
    %513 = vmatpush2.msra.mxu0 0.0
    %514 = vmatprep.subr.mxu0 0.0
    %515 = vmatpush2.msra.mxu0 0.0
    %516 = vmatprep.subr.mxu0 0.0
    %517 = vmatpush2.msra.mxu0 0.0
    %518 = vmatprep.subr.mxu0 0.0
    %519 = vmatpush2.msra.mxu0 0.0
    %520 = vmatprep.mubr.f32.mxu0 0.0
    %521 = vmatmul.mubr.f32.gmra.mxu0 %v347
    %v522 = vpop.f32.mrf.mxu0
    %v523 = vadd.f32 0.0, %v522
    %v524 = vpop.f32.mrf.mxu0
    %525 = vmatprep.mubr.f32.mxu0 0.0
    %526 = vmatmul.mubr.f32.gmra.mxu0 %v348
    %v527 = vpop.f32.mrf.mxu0
    %v528 = vadd.f32 0.0, %v527
    %v529 = vpop.f32.mrf.mxu0
    %530 = vdwg.mxu0
    %v531 = vld [vmem:[#allocation8] sm:$0xff]
    %v532 = vld [vmem:[#allocation8 + $0x8] sm:$0xff]
    %v533 = vld [vmem:[#allocation8 + $0x10] sm:$0xff]
    %v534 = vld [vmem:[#allocation8 + $0x18] sm:$0xff]
    %v535 = vld [vmem:[#allocation8 + $0x20] sm:$0xff]
    %v536 = vld [vmem:[#allocation8 + $0x28] sm:$0xff]
    %v537 = vld [vmem:[#allocation8 + $0x30] sm:$0xff]
    %v538 = vld [vmem:[#allocation8 + $0x38] sm:$0xff]
    %v539 = vld [vmem:[#allocation8 + $0x40] sm:$0xff]
    %v540 = vld [vmem:[#allocation8 + $0x48] sm:$0xff]
    %v541 = vld [vmem:[#allocation8 + $0x50] sm:$0xff]
    %v542 = vld [vmem:[#allocation8 + $0x58] sm:$0xff]
    %v543 = vld [vmem:[#allocation8 + $0x60] sm:$0xff]
    %v544 = vld [vmem:[#allocation8 + $0x68] sm:$0xff]
    %v545 = vld [vmem:[#allocation8 + $0x70] sm:$0xff]
    %v546 = vld [vmem:[#allocation8 + $0x78] sm:$0xff]
    %547 = vmatprep.subr.mxu0 0.0
    %548 = vmatpush1.msra.mxu0 %v546
    %549 = vmatprep.subr.mxu0 0.0
    %550 = vmatpush1.msra.mxu0 %v545
    %551 = vmatprep.subr.mxu0 0.0
    %552 = vmatpush1.msra.mxu0 %v544
    %553 = vmatprep.subr.mxu0 0.0
    %554 = vmatpush1.msra.mxu0 %v543
    %555 = vmatprep.subr.mxu0 0.0
    %556 = vmatpush1.msra.mxu0 %v542
    %557 = vmatprep.subr.mxu0 0.0
    %558 = vmatpush1.msra.mxu0 %v541
    %559 = vmatprep.subr.mxu0 0.0
    %560 = vmatpush1.msra.mxu0 %v540
    %561 = vmatprep.subr.mxu0 0.0
    %562 = vmatpush1.msra.mxu0 %v539
    %563 = vmatprep.subr.mxu0 0.0
    %564 = vmatpush1.msra.mxu0 %v538
    %565 = vmatprep.subr.mxu0 0.0
    %566 = vmatpush1.msra.mxu0 %v537
    %567 = vmatprep.subr.mxu0 0.0
    %568 = vmatpush1.msra.mxu0 %v536
    %569 = vmatprep.subr.mxu0 0.0
    %570 = vmatpush1.msra.mxu0 %v535
    %571 = vmatprep.subr.mxu0 0.0
    %572 = vmatpush1.msra.mxu0 %v534
    %573 = vmatprep.subr.mxu0 0.0
    %574 = vmatpush1.msra.mxu0 %v533
    %575 = vmatprep.subr.mxu0 0.0
    %576 = vmatpush1.msra.mxu0 %v532
    %577 = vmatprep.subr.mxu0 0.0
    %578 = vmatpush1.msra.mxu0 %v531
    %579 = vmatprep.subr.mxu0 0.0
    %580 = vmatpush2.msra.mxu0 0.0
    %581 = vmatprep.subr.mxu0 0.0
    %582 = vmatpush2.msra.mxu0 0.0
    %583 = vmatprep.subr.mxu0 0.0
    %584 = vmatpush2.msra.mxu0 0.0
    %585 = vmatprep.subr.mxu0 0.0
    %586 = vmatpush2.msra.mxu0 0.0
    %587 = vmatprep.subr.mxu0 0.0
    %588 = vmatpush2.msra.mxu0 0.0
    %589 = vmatprep.subr.mxu0 0.0
    %590 = vmatpush2.msra.mxu0 0.0
    %591 = vmatprep.subr.mxu0 0.0
    %592 = vmatpush2.msra.mxu0 0.0
    %593 = vmatprep.subr.mxu0 0.0
    %594 = vmatpush2.msra.mxu0 0.0
    %595 = vmatprep.subr.mxu0 0.0
    %596 = vmatpush2.msra.mxu0 0.0
    %597 = vmatprep.subr.mxu0 0.0
    %598 = vmatpush2.msra.mxu0 0.0
    %599 = vmatprep.subr.mxu0 0.0
    %600 = vmatpush2.msra.mxu0 0.0
    %601 = vmatprep.subr.mxu0 0.0
    %602 = vmatpush2.msra.mxu0 0.0
    %603 = vmatprep.subr.mxu0 0.0
    %604 = vmatpush2.msra.mxu0 0.0
    %605 = vmatprep.subr.mxu0 0.0
    %606 = vmatpush2.msra.mxu0 0.0
    %607 = vmatprep.subr.mxu0 0.0
    %608 = vmatpush2.msra.mxu0 0.0
    %609 = vmatprep.subr.mxu0 0.0
    %610 = vmatpush2.msra.mxu0 0.0
    %611 = vmatprep.mubr.f32.mxu0 0.0
    %612 = vmatmul.mubr.f32.gmra.mxu0 %v347
    %v613 = vpop.f32.mrf.mxu0
    %v614 = vadd.f32 0.0, %v613
    %v615 = vpop.f32.mrf.mxu0
    %616 = vmatprep.mubr.f32.mxu0 0.0
    %617 = vmatmul.mubr.f32.gmra.mxu0 %v348
    %v618 = vpop.f32.mrf.mxu0
    %v619 = vadd.f32 0.0, %v618
    %v620 = vpop.f32.mrf.mxu0
    %621 = vdwg.mxu0
    %vm622 = vcmask 130048
    %v624 = vsel %vm622, %v432, 0
    %v627 = vsel %vm622, %v523, 0
    %629 = vmatprep.subr.mxu0 0.0
    %630 = vmatpush1.xpose.msra.mxu0 0.0
    %631 = vmatprep.subr.mxu0 0.0
    %632 = vmatpush1.xpose.msra.mxu0 0.0
    %633 = vmatprep.subr.mxu0 0.0
    %634 = vmatpush1.xpose.msra.mxu0 0.0
    %635 = vmatprep.subr.mxu0 0.0
    %636 = vmatpush1.xpose.msra.mxu0 0.0
    %637 = vmatprep.subr.mxu0 0.0
    %638 = vmatpush1.xpose.msra.mxu0 0.0
    %639 = vmatprep.subr.mxu0 0.0
    %640 = vmatpush1.xpose.msra.mxu0 0.0
    %641 = vmatprep.subr.mxu0 0.0
    %642 = vmatpush1.xpose.msra.mxu0 0.0
    %643 = vmatprep.subr.mxu0 0.0
    %644 = vmatpush1.xpose.msra.mxu0 0.0
    %645 = vmatprep.subr.mxu0 0.0
    %646 = vmatpush1.xpose.msra.mxu0 0.0
    %647 = vmatprep.subr.mxu0 0.0
    %648 = vmatpush1.xpose.msra.mxu0 0.0
    %649 = vmatprep.subr.mxu0 0.0
    %650 = vmatpush1.xpose.msra.mxu0 0.0
    %651 = vmatprep.subr.mxu0 0.0
    %652 = vmatpush1.xpose.msra.mxu0 0.0
    %653 = vmatprep.subr.mxu0 0.0
    %654 = vmatpush1.xpose.msra.mxu0 0.0
    %655 = vmatprep.subr.mxu0 0.0
    %656 = vmatpush1.xpose.msra.mxu0 0.0
    %657 = vmatprep.subr.mxu0 0.0
    %658 = vmatpush1.xpose.msra.mxu0 0.0
    %659 = vmatprep.subr.mxu0 0.0
    %660 = vmatpush1.xpose.msra.mxu0 %v627
    %661 = vmatprep.subr.mxu0 0.0
    %662 = vmatpush2.xpose.msra.mxu0 0.0
    %663 = vmatprep.subr.mxu0 0.0
    %664 = vmatpush2.xpose.msra.mxu0 0.0
    %665 = vmatprep.subr.mxu0 0.0
    %666 = vmatpush2.xpose.msra.mxu0 0.0
    %667 = vmatprep.subr.mxu0 0.0
    %668 = vmatpush2.xpose.msra.mxu0 0.0
    %669 = vmatprep.subr.mxu0 0.0
    %670 = vmatpush2.xpose.msra.mxu0 0.0
    %671 = vmatprep.subr.mxu0 0.0
    %672 = vmatpush2.xpose.msra.mxu0 0.0
    %673 = vmatprep.subr.mxu0 0.0
    %674 = vmatpush2.xpose.msra.mxu0 0.0
    %675 = vmatprep.subr.mxu0 0.0
    %676 = vmatpush2.xpose.msra.mxu0 0.0
    %677 = vmatprep.subr.mxu0 0.0
    %678 = vmatpush2.xpose.msra.mxu0 0.0
    %679 = vmatprep.subr.mxu0 0.0
    %680 = vmatpush2.xpose.msra.mxu0 0.0
    %681 = vmatprep.subr.mxu0 0.0
    %682 = vmatpush2.xpose.msra.mxu0 0.0
    %683 = vmatprep.subr.mxu0 0.0
    %684 = vmatpush2.xpose.msra.mxu0 0.0
    %685 = vmatprep.subr.mxu0 0.0
    %686 = vmatpush2.xpose.msra.mxu0 0.0
    %687 = vmatprep.subr.mxu0 0.0
    %688 = vmatpush2.xpose.msra.mxu0 0.0
    %689 = vmatprep.subr.mxu0 0.0
    %690 = vmatpush2.xpose.msra.mxu0 0.0
    %691 = vmatprep.subr.mxu0 0.0
    %692 = vmatpush2.xpose.msra.mxu0 0.0
    %693 = vmatprep.mubr.f32.mxu0 0.0
    %694 = vmatmul.mubr.f32.gmra.mxu0 %v624
    %v695 = vpop.f32.mrf.mxu0
    %v696 = vadd.f32 0.0, %v695
    %v697 = vpop.f32.mrf.mxu0
    %698 = vdwg.mxu0
    %v700 = vsel %vm622, %v437, 0
    %v703 = vsel %vm622, %v528, 0
    %705 = vmatprep.subr.mxu0 0.0
    %706 = vmatpush1.xpose.msra.mxu0 0.0
    %707 = vmatprep.subr.mxu0 0.0
    %708 = vmatpush1.xpose.msra.mxu0 0.0
    %709 = vmatprep.subr.mxu0 0.0
    %710 = vmatpush1.xpose.msra.mxu0 0.0
    %711 = vmatprep.subr.mxu0 0.0
    %712 = vmatpush1.xpose.msra.mxu0 0.0
    %713 = vmatprep.subr.mxu0 0.0
    %714 = vmatpush1.xpose.msra.mxu0 0.0
    %715 = vmatprep.subr.mxu0 0.0
    %716 = vmatpush1.xpose.msra.mxu0 0.0
    %717 = vmatprep.subr.mxu0 0.0
    %718 = vmatpush1.xpose.msra.mxu0 0.0
    %719 = vmatprep.subr.mxu0 0.0
    %720 = vmatpush1.xpose.msra.mxu0 0.0
    %721 = vmatprep.subr.mxu0 0.0
    %722 = vmatpush1.xpose.msra.mxu0 0.0
    %723 = vmatprep.subr.mxu0 0.0
    %724 = vmatpush1.xpose.msra.mxu0 0.0
    %725 = vmatprep.subr.mxu0 0.0
    %726 = vmatpush1.xpose.msra.mxu0 0.0
    %727 = vmatprep.subr.mxu0 0.0
    %728 = vmatpush1.xpose.msra.mxu0 0.0
    %729 = vmatprep.subr.mxu0 0.0
    %730 = vmatpush1.xpose.msra.mxu0 0.0
    %731 = vmatprep.subr.mxu0 0.0
    %732 = vmatpush1.xpose.msra.mxu0 0.0
    %733 = vmatprep.subr.mxu0 0.0
    %734 = vmatpush1.xpose.msra.mxu0 0.0
    %735 = vmatprep.subr.mxu0 0.0
    %736 = vmatpush1.xpose.msra.mxu0 %v703
    %737 = vmatprep.subr.mxu0 0.0
    %738 = vmatpush2.xpose.msra.mxu0 0.0
    %739 = vmatprep.subr.mxu0 0.0
    %740 = vmatpush2.xpose.msra.mxu0 0.0
    %741 = vmatprep.subr.mxu0 0.0
    %742 = vmatpush2.xpose.msra.mxu0 0.0
    %743 = vmatprep.subr.mxu0 0.0
    %744 = vmatpush2.xpose.msra.mxu0 0.0
    %745 = vmatprep.subr.mxu0 0.0
    %746 = vmatpush2.xpose.msra.mxu0 0.0
    %747 = vmatprep.subr.mxu0 0.0
    %748 = vmatpush2.xpose.msra.mxu0 0.0
    %749 = vmatprep.subr.mxu0 0.0
    %750 = vmatpush2.xpose.msra.mxu0 0.0
    %751 = vmatprep.subr.mxu0 0.0
    %752 = vmatpush2.xpose.msra.mxu0 0.0
    %753 = vmatprep.subr.mxu0 0.0
    %754 = vmatpush2.xpose.msra.mxu0 0.0
    %755 = vmatprep.subr.mxu0 0.0
    %756 = vmatpush2.xpose.msra.mxu0 0.0
    %757 = vmatprep.subr.mxu0 0.0
    %758 = vmatpush2.xpose.msra.mxu0 0.0
    %759 = vmatprep.subr.mxu0 0.0
    %760 = vmatpush2.xpose.msra.mxu0 0.0
    %761 = vmatprep.subr.mxu0 0.0
    %762 = vmatpush2.xpose.msra.mxu0 0.0
    %763 = vmatprep.subr.mxu0 0.0
    %764 = vmatpush2.xpose.msra.mxu0 0.0
    %765 = vmatprep.subr.mxu0 0.0
    %766 = vmatpush2.xpose.msra.mxu0 0.0
    %767 = vmatprep.subr.mxu0 0.0
    %768 = vmatpush2.xpose.msra.mxu0 0.0
    %769 = vmatprep.mubr.f32.mxu0 0.0
    %770 = vmatmul.mubr.f32.gmra.mxu0 %v700
    %v771 = vpop.f32.mrf.mxu0
    %v772 = vadd.f32 0.0, %v771
    %v773 = vpop.f32.mrf.mxu0
    %774 = vdwg.mxu0
    %v775 = vmul.f32 %v696, 0.25
    %v776 = vmul.f32 %v772, 0.25
    %vm777 = vcmask 64512
    %v778 = vsel %vm777, %v775, -inf
    %779 = vmax.xlane.f32.xlu0 %v778
    %v780 = vpop.xlane.xlu0 %779
    %v781 = vsel %vm777, %v776, -inf
    %782 = vmax.xlane.f32.xlu0 %v781
    %v783 = vpop.xlane.xlu0 %782
    %v784 = vsub.f32 %v775, %v780
    %v785 = vsub.f32 %v776, %v783
    %v786 = vmul.f32 %v784, 1.442695
    %v787 = vpow.pop %v786
    %v788 = vmul.f32 %v785, 1.442695
    %v789 = vpow.pop %v788
    %v790 = vsel %vm777, %v787, 0.0
    %791 = vadd.xlane.f32.xlu0 %v790
    %v792 = vpop.xlane.xlu0 %791
    %v793 = vsel %vm777, %v789, 0.0
    %794 = vadd.xlane.f32.xlu0 %v793
    %v795 = vpop.xlane.xlu0 %794
    %v796 = vrcp.pop %v792
    %v797 = vrcp.pop %v795
    %v798 = vmul.f32 %v787, %v796
    %v799 = vmul.f32 %v789, %v797
    %v801 = vsel %vm777, %v798, 0
    %803 = vmatprep.subr.mxu0 0.0
    %804 = vmatpush1.msra.mxu0 0.0
    %805 = vmatprep.subr.mxu0 0.0
    %806 = vmatpush1.msra.mxu0 0.0
    %807 = vmatprep.subr.mxu0 0.0
    %808 = vmatpush1.msra.mxu0 0.0
    %809 = vmatprep.subr.mxu0 0.0
    %810 = vmatpush1.msra.mxu0 0.0
    %811 = vmatprep.subr.mxu0 0.0
    %812 = vmatpush1.msra.mxu0 0.0
    %813 = vmatprep.subr.mxu0 0.0
    %814 = vmatpush1.msra.mxu0 0.0
    %815 = vmatprep.subr.mxu0 0.0
    %816 = vmatpush1.msra.mxu0 0.0
    %817 = vmatprep.subr.mxu0 0.0
    %818 = vmatpush1.msra.mxu0 0.0
    %819 = vmatprep.subr.mxu0 0.0
    %820 = vmatpush1.msra.mxu0 0.0
    %821 = vmatprep.subr.mxu0 0.0
    %822 = vmatpush1.msra.mxu0 0.0
    %823 = vmatprep.subr.mxu0 0.0
    %824 = vmatpush1.msra.mxu0 0.0
    %825 = vmatprep.subr.mxu0 0.0
    %826 = vmatpush1.msra.mxu0 0.0
    %827 = vmatprep.subr.mxu0 0.0
    %828 = vmatpush1.msra.mxu0 0.0
    %829 = vmatprep.subr.mxu0 0.0
    %830 = vmatpush1.msra.mxu0 0.0
    %831 = vmatprep.subr.mxu0 0.0
    %832 = vmatpush1.msra.mxu0 0.0
    %833 = vmatprep.subr.mxu0 0.0
    %834 = vmatpush1.msra.mxu0 %v614
    %835 = vmatprep.subr.mxu0 0.0
    %836 = vmatpush2.msra.mxu0 0.0
    %837 = vmatprep.subr.mxu0 0.0
    %838 = vmatpush2.msra.mxu0 0.0
    %839 = vmatprep.subr.mxu0 0.0
    %840 = vmatpush2.msra.mxu0 0.0
    %841 = vmatprep.subr.mxu0 0.0
    %842 = vmatpush2.msra.mxu0 0.0
    %843 = vmatprep.subr.mxu0 0.0
    %844 = vmatpush2.msra.mxu0 0.0
    %845 = vmatprep.subr.mxu0 0.0
    %846 = vmatpush2.msra.mxu0 0.0
    %847 = vmatprep.subr.mxu0 0.0
    %848 = vmatpush2.msra.mxu0 0.0
    %849 = vmatprep.subr.mxu0 0.0
    %850 = vmatpush2.msra.mxu0 0.0
    %851 = vmatprep.subr.mxu0 0.0
    %852 = vmatpush2.msra.mxu0 0.0
    %853 = vmatprep.subr.mxu0 0.0
    %854 = vmatpush2.msra.mxu0 0.0
    %855 = vmatprep.subr.mxu0 0.0
    %856 = vmatpush2.msra.mxu0 0.0
    %857 = vmatprep.subr.mxu0 0.0
    %858 = vmatpush2.msra.mxu0 0.0
    %859 = vmatprep.subr.mxu0 0.0
    %860 = vmatpush2.msra.mxu0 0.0
    %861 = vmatprep.subr.mxu0 0.0
    %862 = vmatpush2.msra.mxu0 0.0
    %863 = vmatprep.subr.mxu0 0.0
    %864 = vmatpush2.msra.mxu0 0.0
    %865 = vmatprep.subr.mxu0 0.0
    %866 = vmatpush2.msra.mxu0 0.0
    %867 = vmatprep.mubr.f32.mxu0 0.0
    %868 = vmatmul.mubr.f32.gmra.mxu0 %v801
    %v869 = vpop.f32.mrf.mxu0
    %v870 = vadd.f32 0.0, %v869
    %v871 = vpop.f32.mrf.mxu0
    %872 = vdwg.mxu0
    %v874 = vsel %vm777, %v799, 0
    %876 = vmatprep.subr.mxu0 0.0
    %877 = vmatpush1.msra.mxu0 0.0
    %878 = vmatprep.subr.mxu0 0.0
    %879 = vmatpush1.msra.mxu0 0.0
    %880 = vmatprep.subr.mxu0 0.0
    %881 = vmatpush1.msra.mxu0 0.0
    %882 = vmatprep.subr.mxu0 0.0
    %883 = vmatpush1.msra.mxu0 0.0
    %884 = vmatprep.subr.mxu0 0.0
    %885 = vmatpush1.msra.mxu0 0.0
    %886 = vmatprep.subr.mxu0 0.0
    %887 = vmatpush1.msra.mxu0 0.0
    %888 = vmatprep.subr.mxu0 0.0
    %889 = vmatpush1.msra.mxu0 0.0
    %890 = vmatprep.subr.mxu0 0.0
    %891 = vmatpush1.msra.mxu0 0.0
    %892 = vmatprep.subr.mxu0 0.0
    %893 = vmatpush1.msra.mxu0 0.0
    %894 = vmatprep.subr.mxu0 0.0
    %895 = vmatpush1.msra.mxu0 0.0
    %896 = vmatprep.subr.mxu0 0.0
    %897 = vmatpush1.msra.mxu0 0.0
    %898 = vmatprep.subr.mxu0 0.0
    %899 = vmatpush1.msra.mxu0 0.0
    %900 = vmatprep.subr.mxu0 0.0
    %901 = vmatpush1.msra.mxu0 0.0
    %902 = vmatprep.subr.mxu0 0.0
    %903 = vmatpush1.msra.mxu0 0.0
    %904 = vmatprep.subr.mxu0 0.0
    %905 = vmatpush1.msra.mxu0 0.0
    %906 = vmatprep.subr.mxu0 0.0
    %907 = vmatpush1.msra.mxu0 %v619
    %908 = vmatprep.subr.mxu0 0.0
    %909 = vmatpush2.msra.mxu0 0.0
    %910 = vmatprep.subr.mxu0 0.0
    %911 = vmatpush2.msra.mxu0 0.0
    %912 = vmatprep.subr.mxu0 0.0
    %913 = vmatpush2.msra.mxu0 0.0
    %914 = vmatprep.subr.mxu0 0.0
    %915 = vmatpush2.msra.mxu0 0.0
    %916 = vmatprep.subr.mxu0 0.0
    %917 = vmatpush2.msra.mxu0 0.0
    %918 = vmatprep.subr.mxu0 0.0
    %919 = vmatpush2.msra.mxu0 0.0
    %920 = vmatprep.subr.mxu0 0.0
    %921 = vmatpush2.msra.mxu0 0.0
    %922 = vmatprep.subr.mxu0 0.0
    %923 = vmatpush2.msra.mxu0 0.0
    %924 = vmatprep.subr.mxu0 0.0
    %925 = vmatpush2.msra.mxu0 0.0
    %926 = vmatprep.subr.mxu0 0.0
    %927 = vmatpush2.msra.mxu0 0.0
    %928 = vmatprep.subr.mxu0 0.0
    %929 = vmatpush2.msra.mxu0 0.0
    %930 = vmatprep.subr.mxu0 0.0
    %931 = vmatpush2.msra.mxu0 0.0
    %932 = vmatprep.subr.mxu0 0.0
    %933 = vmatpush2.msra.mxu0 0.0
    %934 = vmatprep.subr.mxu0 0.0
    %935 = vmatpush2.msra.mxu0 0.0
    %936 = vmatprep.subr.mxu0 0.0
    %937 = vmatpush2.msra.mxu0 0.0
    %938 = vmatprep.subr.mxu0 0.0
    %939 = vmatpush2.msra.mxu0 0.0
    %940 = vmatprep.mubr.f32.mxu0 0.0
    %941 = vmatmul.mubr.f32.gmra.mxu0 %v874
    %v942 = vpop.f32.mrf.mxu0
    %v943 = vadd.f32 0.0, %v942
    %v944 = vpop.f32.mrf.mxu0
    %945 = vdwg.mxu0
    %946 = vrot.lane.b32.xlu0 %v432, 112
    %v947 = vpop.permute.xlu0 %946
    %948 = vrot.lane.b32.xlu0 %v523, 112
    %v949 = vpop.permute.xlu0 %948
    %v950 = vsel %vm622, %v947, 0
    %v952 = vsel %vm622, %v949, 0
    %954 = vmatprep.subr.mxu0 0.0
    %955 = vmatpush1.xpose.msra.mxu0 0.0
    %956 = vmatprep.subr.mxu0 0.0
    %957 = vmatpush1.xpose.msra.mxu0 0.0
    %958 = vmatprep.subr.mxu0 0.0
    %959 = vmatpush1.xpose.msra.mxu0 0.0
    %960 = vmatprep.subr.mxu0 0.0
    %961 = vmatpush1.xpose.msra.mxu0 0.0
    %962 = vmatprep.subr.mxu0 0.0
    %963 = vmatpush1.xpose.msra.mxu0 0.0
    %964 = vmatprep.subr.mxu0 0.0
    %965 = vmatpush1.xpose.msra.mxu0 0.0
    %966 = vmatprep.subr.mxu0 0.0
    %967 = vmatpush1.xpose.msra.mxu0 0.0
    %968 = vmatprep.subr.mxu0 0.0
    %969 = vmatpush1.xpose.msra.mxu0 0.0
    %970 = vmatprep.subr.mxu0 0.0
    %971 = vmatpush1.xpose.msra.mxu0 0.0
    %972 = vmatprep.subr.mxu0 0.0
    %973 = vmatpush1.xpose.msra.mxu0 0.0
    %974 = vmatprep.subr.mxu0 0.0
    %975 = vmatpush1.xpose.msra.mxu0 0.0
    %976 = vmatprep.subr.mxu0 0.0
    %977 = vmatpush1.xpose.msra.mxu0 0.0
    %978 = vmatprep.subr.mxu0 0.0
    %979 = vmatpush1.xpose.msra.mxu0 0.0
    %980 = vmatprep.subr.mxu0 0.0
    %981 = vmatpush1.xpose.msra.mxu0 0.0
    %982 = vmatprep.subr.mxu0 0.0
    %983 = vmatpush1.xpose.msra.mxu0 0.0
    %984 = vmatprep.subr.mxu0 0.0
    %985 = vmatpush1.xpose.msra.mxu0 %v952
    %986 = vmatprep.subr.mxu0 0.0
    %987 = vmatpush2.xpose.msra.mxu0 0.0
    %988 = vmatprep.subr.mxu0 0.0
    %989 = vmatpush2.xpose.msra.mxu0 0.0
    %990 = vmatprep.subr.mxu0 0.0
    %991 = vmatpush2.xpose.msra.mxu0 0.0
    %992 = vmatprep.subr.mxu0 0.0
    %993 = vmatpush2.xpose.msra.mxu0 0.0
    %994 = vmatprep.subr.mxu0 0.0
    %995 = vmatpush2.xpose.msra.mxu0 0.0
    %996 = vmatprep.subr.mxu0 0.0
    %997 = vmatpush2.xpose.msra.mxu0 0.0
    %998 = vmatprep.subr.mxu0 0.0
    %999 = vmatpush2.xpose.msra.mxu0 0.0
    %1000 = vmatprep.subr.mxu0 0.0
    %1001 = vmatpush2.xpose.msra.mxu0 0.0
    %1002 = vmatprep.subr.mxu0 0.0
    %1003 = vmatpush2.xpose.msra.mxu0 0.0
    %1004 = vmatprep.subr.mxu0 0.0
    %1005 = vmatpush2.xpose.msra.mxu0 0.0
    %1006 = vmatprep.subr.mxu0 0.0
    %1007 = vmatpush2.xpose.msra.mxu0 0.0
    %1008 = vmatprep.subr.mxu0 0.0
    %1009 = vmatpush2.xpose.msra.mxu0 0.0
    %1010 = vmatprep.subr.mxu0 0.0
    %1011 = vmatpush2.xpose.msra.mxu0 0.0
    %1012 = vmatprep.subr.mxu0 0.0
    %1013 = vmatpush2.xpose.msra.mxu0 0.0
    %1014 = vmatprep.subr.mxu0 0.0
    %1015 = vmatpush2.xpose.msra.mxu0 0.0
    %1016 = vmatprep.subr.mxu0 0.0
    %1017 = vmatpush2.xpose.msra.mxu0 0.0
    %1018 = vmatprep.mubr.f32.mxu0 0.0
    %1019 = vmatmul.mubr.f32.gmra.mxu0 %v950
    %v1020 = vpop.f32.mrf.mxu0
    %v1021 = vadd.f32 0.0, %v1020
    %v1022 = vpop.f32.mrf.mxu0
    %1023 = vdwg.mxu0
    %1024 = vrot.lane.b32.xlu0 %v437, 112
    %v1025 = vpop.permute.xlu0 %1024
    %1026 = vrot.lane.b32.xlu0 %v528, 112
    %v1027 = vpop.permute.xlu0 %1026
    %v1028 = vsel %vm622, %v1025, 0
    %v1030 = vsel %vm622, %v1027, 0
    %1032 = vmatprep.subr.mxu0 0.0
    %1033 = vmatpush1.xpose.msra.mxu0 0.0
    %1034 = vmatprep.subr.mxu0 0.0
    %1035 = vmatpush1.xpose.msra.mxu0 0.0
    %1036 = vmatprep.subr.mxu0 0.0
    %1037 = vmatpush1.xpose.msra.mxu0 0.0
    %1038 = vmatprep.subr.mxu0 0.0
    %1039 = vmatpush1.xpose.msra.mxu0 0.0
    %1040 = vmatprep.subr.mxu0 0.0
    %1041 = vmatpush1.xpose.msra.mxu0 0.0
    %1042 = vmatprep.subr.mxu0 0.0
    %1043 = vmatpush1.xpose.msra.mxu0 0.0
    %1044 = vmatprep.subr.mxu0 0.0
    %1045 = vmatpush1.xpose.msra.mxu0 0.0
    %1046 = vmatprep.subr.mxu0 0.0
    %1047 = vmatpush1.xpose.msra.mxu0 0.0
    %1048 = vmatprep.subr.mxu0 0.0
    %1049 = vmatpush1.xpose.msra.mxu0 0.0
    %1050 = vmatprep.subr.mxu0 0.0
    %1051 = vmatpush1.xpose.msra.mxu0 0.0
    %1052 = vmatprep.subr.mxu0 0.0
    %1053 = vmatpush1.xpose.msra.mxu0 0.0
    %1054 = vmatprep.subr.mxu0 0.0
    %1055 = vmatpush1.xpose.msra.mxu0 0.0
    %1056 = vmatprep.subr.mxu0 0.0
    %1057 = vmatpush1.xpose.msra.mxu0 0.0
    %1058 = vmatprep.subr.mxu0 0.0
    %1059 = vmatpush1.xpose.msra.mxu0 0.0
    %1060 = vmatprep.subr.mxu0 0.0
    %1061 = vmatpush1.xpose.msra.mxu0 0.0
    %1062 = vmatprep.subr.mxu0 0.0
    %1063 = vmatpush1.xpose.msra.mxu0 %v1030
    %1064 = vmatprep.subr.mxu0 0.0
    %1065 = vmatpush2.xpose.msra.mxu0 0.0
    %1066 = vmatprep.subr.mxu0 0.0
    %1067 = vmatpush2.xpose.msra.mxu0 0.0
    %1068 = vmatprep.subr.mxu0 0.0
    %1069 = vmatpush2.xpose.msra.mxu0 0.0
    %1070 = vmatprep.subr.mxu0 0.0
    %1071 = vmatpush2.xpose.msra.mxu0 0.0
    %1072 = vmatprep.subr.mxu0 0.0
    %1073 = vmatpush2.xpose.msra.mxu0 0.0
    %1074 = vmatprep.subr.mxu0 0.0
    %1075 = vmatpush2.xpose.msra.mxu0 0.0
    %1076 = vmatprep.subr.mxu0 0.0
    %1077 = vmatpush2.xpose.msra.mxu0 0.0
    %1078 = vmatprep.subr.mxu0 0.0
    %1079 = vmatpush2.xpose.msra.mxu0 0.0
    %1080 = vmatprep.subr.mxu0 0.0
    %1081 = vmatpush2.xpose.msra.mxu0 0.0
    %1082 = vmatprep.subr.mxu0 0.0
    %1083 = vmatpush2.xpose.msra.mxu0 0.0
    %1084 = vmatprep.subr.mxu0 0.0
    %1085 = vmatpush2.xpose.msra.mxu0 0.0
    %1086 = vmatprep.subr.mxu0 0.0
    %1087 = vmatpush2.xpose.msra.mxu0 0.0
    %1088 = vmatprep.subr.mxu0 0.0
    %1089 = vmatpush2.xpose.msra.mxu0 0.0
    %1090 = vmatprep.subr.mxu0 0.0
    %1091 = vmatpush2.xpose.msra.mxu0 0.0
    %1092 = vmatprep.subr.mxu0 0.0
    %1093 = vmatpush2.xpose.msra.mxu0 0.0
    %1094 = vmatprep.subr.mxu0 0.0
    %1095 = vmatpush2.xpose.msra.mxu0 0.0
    %1096 = vmatprep.mubr.f32.mxu0 0.0
    %1097 = vmatmul.mubr.f32.gmra.mxu0 %v1028
    %v1098 = vpop.f32.mrf.mxu0
    %v1099 = vadd.f32 0.0, %v1098
    %v1100 = vpop.f32.mrf.mxu0
    %1101 = vdwg.mxu0
    %v1102 = vmul.f32 %v1021, 0.25
    %v1103 = vmul.f32 %v1099, 0.25
    %v1104 = vsel %vm777, %v1102, -inf
    %1105 = vmax.xlane.f32.xlu0 %v1104
    %v1106 = vpop.xlane.xlu0 %1105
    %v1107 = vsel %vm777, %v1103, -inf
    %1108 = vmax.xlane.f32.xlu0 %v1107
    %v1109 = vpop.xlane.xlu0 %1108
    %v1110 = vsub.f32 %v1102, %v1106
    %v1111 = vsub.f32 %v1103, %v1109
    %v1112 = vmul.f32 %v1110, 1.442695
    %v1113 = vpow.pop %v1112
    %v1114 = vmul.f32 %v1111, 1.442695
    %v1115 = vpow.pop %v1114
    %v1116 = vsel %vm777, %v1113, 0.0
    %1117 = vadd.xlane.f32.xlu0 %v1116
    %v1118 = vpop.xlane.xlu0 %1117
    %v1119 = vsel %vm777, %v1115, 0.0
    %1120 = vadd.xlane.f32.xlu0 %v1119
    %v1121 = vpop.xlane.xlu0 %1120
    %v1122 = vrcp.pop %v1118
    %v1123 = vrcp.pop %v1121
    %v1124 = vmul.f32 %v1113, %v1122
    %v1125 = vmul.f32 %v1115, %v1123
    %1127 = vrot.lane.b32.xlu0 %v614, 112
    %v1128 = vpop.permute.xlu0 %1127
    %v1131 = vsel %vm777, %v1124, 0
    %1133 = vmatprep.subr.mxu0 0.0
    %1134 = vmatpush1.msra.mxu0 0.0
    %1135 = vmatprep.subr.mxu0 0.0
    %1136 = vmatpush1.msra.mxu0 0.0
    %1137 = vmatprep.subr.mxu0 0.0
    %1138 = vmatpush1.msra.mxu0 0.0
    %1139 = vmatprep.subr.mxu0 0.0
    %1140 = vmatpush1.msra.mxu0 0.0
    %1141 = vmatprep.subr.mxu0 0.0
    %1142 = vmatpush1.msra.mxu0 0.0
    %1143 = vmatprep.subr.mxu0 0.0
    %1144 = vmatpush1.msra.mxu0 0.0
    %1145 = vmatprep.subr.mxu0 0.0
    %1146 = vmatpush1.msra.mxu0 0.0
    %1147 = vmatprep.subr.mxu0 0.0
    %1148 = vmatpush1.msra.mxu0 0.0
    %1149 = vmatprep.subr.mxu0 0.0
    %1150 = vmatpush1.msra.mxu0 0.0
    %1151 = vmatprep.subr.mxu0 0.0
    %1152 = vmatpush1.msra.mxu0 0.0
    %1153 = vmatprep.subr.mxu0 0.0
    %1154 = vmatpush1.msra.mxu0 0.0
    %1155 = vmatprep.subr.mxu0 0.0
    %1156 = vmatpush1.msra.mxu0 0.0
    %1157 = vmatprep.subr.mxu0 0.0
    %1158 = vmatpush1.msra.mxu0 0.0
    %1159 = vmatprep.subr.mxu0 0.0
    %1160 = vmatpush1.msra.mxu0 0.0
    %1161 = vmatprep.subr.mxu0 0.0
    %1162 = vmatpush1.msra.mxu0 0.0
    %1163 = vmatprep.subr.mxu0 0.0
    %1164 = vmatpush1.msra.mxu0 %v1128
    %1165 = vmatprep.subr.mxu0 0.0
    %1166 = vmatpush2.msra.mxu0 0.0
    %1167 = vmatprep.subr.mxu0 0.0
    %1168 = vmatpush2.msra.mxu0 0.0
    %1169 = vmatprep.subr.mxu0 0.0
    %1170 = vmatpush2.msra.mxu0 0.0
    %1171 = vmatprep.subr.mxu0 0.0
    %1172 = vmatpush2.msra.mxu0 0.0
    %1173 = vmatprep.subr.mxu0 0.0
    %1174 = vmatpush2.msra.mxu0 0.0
    %1175 = vmatprep.subr.mxu0 0.0
    %1176 = vmatpush2.msra.mxu0 0.0
    %1177 = vmatprep.subr.mxu0 0.0
    %1178 = vmatpush2.msra.mxu0 0.0
    %1179 = vmatprep.subr.mxu0 0.0
    %1180 = vmatpush2.msra.mxu0 0.0
    %1181 = vmatprep.subr.mxu0 0.0
    %1182 = vmatpush2.msra.mxu0 0.0
    %1183 = vmatprep.subr.mxu0 0.0
    %1184 = vmatpush2.msra.mxu0 0.0
    %1185 = vmatprep.subr.mxu0 0.0
    %1186 = vmatpush2.msra.mxu0 0.0
    %1187 = vmatprep.subr.mxu0 0.0
    %1188 = vmatpush2.msra.mxu0 0.0
    %1189 = vmatprep.subr.mxu0 0.0
    %1190 = vmatpush2.msra.mxu0 0.0
    %1191 = vmatprep.subr.mxu0 0.0
    %1192 = vmatpush2.msra.mxu0 0.0
    %1193 = vmatprep.subr.mxu0 0.0
    %1194 = vmatpush2.msra.mxu0 0.0
    %1195 = vmatprep.subr.mxu0 0.0
    %1196 = vmatpush2.msra.mxu0 0.0
    %1197 = vmatprep.mubr.f32.mxu0 0.0
    %1198 = vmatmul.mubr.f32.gmra.mxu0 %v1131
    %v1199 = vpop.f32.mrf.mxu0
    %v1200 = vadd.f32 0.0, %v1199
    %v1201 = vpop.f32.mrf.mxu0
    %1202 = vdwg.mxu0
    %1204 = vrot.lane.b32.xlu0 %v619, 112
    %v1205 = vpop.permute.xlu0 %1204
    %v1208 = vsel %vm777, %v1125, 0
    %1210 = vmatprep.subr.mxu0 0.0
    %1211 = vmatpush1.msra.mxu0 0.0
    %1212 = vmatprep.subr.mxu0 0.0
    %1213 = vmatpush1.msra.mxu0 0.0
    %1214 = vmatprep.subr.mxu0 0.0
    %1215 = vmatpush1.msra.mxu0 0.0
    %1216 = vmatprep.subr.mxu0 0.0
    %1217 = vmatpush1.msra.mxu0 0.0
    %1218 = vmatprep.subr.mxu0 0.0
    %1219 = vmatpush1.msra.mxu0 0.0
    %1220 = vmatprep.subr.mxu0 0.0
    %1221 = vmatpush1.msra.mxu0 0.0
    %1222 = vmatprep.subr.mxu0 0.0
    %1223 = vmatpush1.msra.mxu0 0.0
    %1224 = vmatprep.subr.mxu0 0.0
    %1225 = vmatpush1.msra.mxu0 0.0
    %1226 = vmatprep.subr.mxu0 0.0
    %1227 = vmatpush1.msra.mxu0 0.0
    %1228 = vmatprep.subr.mxu0 0.0
    %1229 = vmatpush1.msra.mxu0 0.0
    %1230 = vmatprep.subr.mxu0 0.0
    %1231 = vmatpush1.msra.mxu0 0.0
    %1232 = vmatprep.subr.mxu0 0.0
    %1233 = vmatpush1.msra.mxu0 0.0
    %1234 = vmatprep.subr.mxu0 0.0
    %1235 = vmatpush1.msra.mxu0 0.0
    %1236 = vmatprep.subr.mxu0 0.0
    %1237 = vmatpush1.msra.mxu0 0.0
    %1238 = vmatprep.subr.mxu0 0.0
    %1239 = vmatpush1.msra.mxu0 0.0
    %1240 = vmatprep.subr.mxu0 0.0
    %1241 = vmatpush1.msra.mxu0 %v1205
    %1242 = vmatprep.subr.mxu0 0.0
    %1243 = vmatpush2.msra.mxu0 0.0
    %1244 = vmatprep.subr.mxu0 0.0
    %1245 = vmatpush2.msra.mxu0 0.0
    %1246 = vmatprep.subr.mxu0 0.0
    %1247 = vmatpush2.msra.mxu0 0.0
    %1248 = vmatprep.subr.mxu0 0.0
    %1249 = vmatpush2.msra.mxu0 0.0
    %1250 = vmatprep.subr.mxu0 0.0
    %1251 = vmatpush2.msra.mxu0 0.0
    %1252 = vmatprep.subr.mxu0 0.0
    %1253 = vmatpush2.msra.mxu0 0.0
    %1254 = vmatprep.subr.mxu0 0.0
    %1255 = vmatpush2.msra.mxu0 0.0
    %1256 = vmatprep.subr.mxu0 0.0
    %1257 = vmatpush2.msra.mxu0 0.0
    %1258 = vmatprep.subr.mxu0 0.0
    %1259 = vmatpush2.msra.mxu0 0.0
    %1260 = vmatprep.subr.mxu0 0.0
    %1261 = vmatpush2.msra.mxu0 0.0
    %1262 = vmatprep.subr.mxu0 0.0
    %1263 = vmatpush2.msra.mxu0 0.0
    %1264 = vmatprep.subr.mxu0 0.0
    %1265 = vmatpush2.msra.mxu0 0.0
    %1266 = vmatprep.subr.mxu0 0.0
    %1267 = vmatpush2.msra.mxu0 0.0
    %1268 = vmatprep.subr.mxu0 0.0
    %1269 = vmatpush2.msra.mxu0 0.0
    %1270 = vmatprep.subr.mxu0 0.0
    %1271 = vmatpush2.msra.mxu0 0.0
    %1272 = vmatprep.subr.mxu0 0.0
    %1273 = vmatpush2.msra.mxu0 0.0
    %1274 = vmatprep.mubr.f32.mxu0 0.0
    %1275 = vmatmul.mubr.f32.gmra.mxu0 %v1208
    %v1276 = vpop.f32.mrf.mxu0
    %v1277 = vadd.f32 0.0, %v1276
    %v1278 = vpop.f32.mrf.mxu0
    %1279 = vdwg.mxu0
    %1280 = vrot.lane.b32.xlu0 %v432, 96
    %v1281 = vpop.permute.xlu0 %1280
    %1282 = vrot.lane.b32.xlu0 %v523, 96
    %v1283 = vpop.permute.xlu0 %1282
    %v1284 = vsel %vm622, %v1281, 0
    %v1286 = vsel %vm622, %v1283, 0
    %1288 = vmatprep.subr.mxu0 0.0
    %1289 = vmatpush1.xpose.msra.mxu0 0.0
    %1290 = vmatprep.subr.mxu0 0.0
    %1291 = vmatpush1.xpose.msra.mxu0 0.0
    %1292 = vmatprep.subr.mxu0 0.0
    %1293 = vmatpush1.xpose.msra.mxu0 0.0
    %1294 = vmatprep.subr.mxu0 0.0
    %1295 = vmatpush1.xpose.msra.mxu0 0.0
    %1296 = vmatprep.subr.mxu0 0.0
    %1297 = vmatpush1.xpose.msra.mxu0 0.0
    %1298 = vmatprep.subr.mxu0 0.0
    %1299 = vmatpush1.xpose.msra.mxu0 0.0
    %1300 = vmatprep.subr.mxu0 0.0
    %1301 = vmatpush1.xpose.msra.mxu0 0.0
    %1302 = vmatprep.subr.mxu0 0.0
    %1303 = vmatpush1.xpose.msra.mxu0 0.0
    %1304 = vmatprep.subr.mxu0 0.0
    %1305 = vmatpush1.xpose.msra.mxu0 0.0
    %1306 = vmatprep.subr.mxu0 0.0
    %1307 = vmatpush1.xpose.msra.mxu0 0.0
    %1308 = vmatprep.subr.mxu0 0.0
    %1309 = vmatpush1.xpose.msra.mxu0 0.0
    %1310 = vmatprep.subr.mxu0 0.0
    %1311 = vmatpush1.xpose.msra.mxu0 0.0
    %1312 = vmatprep.subr.mxu0 0.0
    %1313 = vmatpush1.xpose.msra.mxu0 0.0
    %1314 = vmatprep.subr.mxu0 0.0
    %1315 = vmatpush1.xpose.msra.mxu0 0.0
    %1316 = vmatprep.subr.mxu0 0.0
    %1317 = vmatpush1.xpose.msra.mxu0 0.0
    %1318 = vmatprep.subr.mxu0 0.0
    %1319 = vmatpush1.xpose.msra.mxu0 %v1286
    %1320 = vmatprep.subr.mxu0 0.0
    %1321 = vmatpush2.xpose.msra.mxu0 0.0
    %1322 = vmatprep.subr.mxu0 0.0
    %1323 = vmatpush2.xpose.msra.mxu0 0.0
    %1324 = vmatprep.subr.mxu0 0.0
    %1325 = vmatpush2.xpose.msra.mxu0 0.0
    %1326 = vmatprep.subr.mxu0 0.0
    %1327 = vmatpush2.xpose.msra.mxu0 0.0
    %1328 = vmatprep.subr.mxu0 0.0
    %1329 = vmatpush2.xpose.msra.mxu0 0.0
    %1330 = vmatprep.subr.mxu0 0.0
    %1331 = vmatpush2.xpose.msra.mxu0 0.0
    %1332 = vmatprep.subr.mxu0 0.0
    %1333 = vmatpush2.xpose.msra.mxu0 0.0
    %1334 = vmatprep.subr.mxu0 0.0
    %1335 = vmatpush2.xpose.msra.mxu0 0.0
    %1336 = vmatprep.subr.mxu0 0.0
    %1337 = vmatpush2.xpose.msra.mxu0 0.0
    %1338 = vmatprep.subr.mxu0 0.0
    %1339 = vmatpush2.xpose.msra.mxu0 0.0
    %1340 = vmatprep.subr.mxu0 0.0
    %1341 = vmatpush2.xpose.msra.mxu0 0.0
    %1342 = vmatprep.subr.mxu0 0.0
    %1343 = vmatpush2.xpose.msra.mxu0 0.0
    %1344 = vmatprep.subr.mxu0 0.0
    %1345 = vmatpush2.xpose.msra.mxu0 0.0
    %1346 = vmatprep.subr.mxu0 0.0
    %1347 = vmatpush2.xpose.msra.mxu0 0.0
    %1348 = vmatprep.subr.mxu0 0.0
    %1349 = vmatpush2.xpose.msra.mxu0 0.0
    %1350 = vmatprep.subr.mxu0 0.0
    %1351 = vmatpush2.xpose.msra.mxu0 0.0
    %1352 = vmatprep.mubr.f32.mxu0 0.0
    %1353 = vmatmul.mubr.f32.gmra.mxu0 %v1284
    %v1354 = vpop.f32.mrf.mxu0
    %v1355 = vadd.f32 0.0, %v1354
    %v1356 = vpop.f32.mrf.mxu0
    %1357 = vdwg.mxu0
    %1358 = vrot.lane.b32.xlu0 %v437, 96
    %v1359 = vpop.permute.xlu0 %1358
    %1360 = vrot.lane.b32.xlu0 %v528, 96
    %v1361 = vpop.permute.xlu0 %1360
    %v1362 = vsel %vm622, %v1359, 0
    %v1364 = vsel %vm622, %v1361, 0
    %1366 = vmatprep.subr.mxu0 0.0
    %1367 = vmatpush1.xpose.msra.mxu0 0.0
    %1368 = vmatprep.subr.mxu0 0.0
    %1369 = vmatpush1.xpose.msra.mxu0 0.0
    %1370 = vmatprep.subr.mxu0 0.0
    %1371 = vmatpush1.xpose.msra.mxu0 0.0
    %1372 = vmatprep.subr.mxu0 0.0
    %1373 = vmatpush1.xpose.msra.mxu0 0.0
    %1374 = vmatprep.subr.mxu0 0.0
    %1375 = vmatpush1.xpose.msra.mxu0 0.0
    %1376 = vmatprep.subr.mxu0 0.0
    %1377 = vmatpush1.xpose.msra.mxu0 0.0
    %1378 = vmatprep.subr.mxu0 0.0
    %1379 = vmatpush1.xpose.msra.mxu0 0.0
    %1380 = vmatprep.subr.mxu0 0.0
    %1381 = vmatpush1.xpose.msra.mxu0 0.0
    %1382 = vmatprep.subr.mxu0 0.0
    %1383 = vmatpush1.xpose.msra.mxu0 0.0
    %1384 = vmatprep.subr.mxu0 0.0
    %1385 = vmatpush1.xpose.msra.mxu0 0.0
    %1386 = vmatprep.subr.mxu0 0.0
    %1387 = vmatpush1.xpose.msra.mxu0 0.0
    %1388 = vmatprep.subr.mxu0 0.0
    %1389 = vmatpush1.xpose.msra.mxu0 0.0
    %1390 = vmatprep.subr.mxu0 0.0
    %1391 = vmatpush1.xpose.msra.mxu0 0.0
    %1392 = vmatprep.subr.mxu0 0.0
    %1393 = vmatpush1.xpose.msra.mxu0 0.0
    %1394 = vmatprep.subr.mxu0 0.0
    %1395 = vmatpush1.xpose.msra.mxu0 0.0
    %1396 = vmatprep.subr.mxu0 0.0
    %1397 = vmatpush1.xpose.msra.mxu0 %v1364
    %1398 = vmatprep.subr.mxu0 0.0
    %1399 = vmatpush2.xpose.msra.mxu0 0.0
    %1400 = vmatprep.subr.mxu0 0.0
    %1401 = vmatpush2.xpose.msra.mxu0 0.0
    %1402 = vmatprep.subr.mxu0 0.0
    %1403 = vmatpush2.xpose.msra.mxu0 0.0
    %1404 = vmatprep.subr.mxu0 0.0
    %1405 = vmatpush2.xpose.msra.mxu0 0.0
    %1406 = vmatprep.subr.mxu0 0.0
    %1407 = vmatpush2.xpose.msra.mxu0 0.0
    %1408 = vmatprep.subr.mxu0 0.0
    %1409 = vmatpush2.xpose.msra.mxu0 0.0
    %1410 = vmatprep.subr.mxu0 0.0
    %1411 = vmatpush2.xpose.msra.mxu0 0.0
    %1412 = vmatprep.subr.mxu0 0.0
    %1413 = vmatpush2.xpose.msra.mxu0 0.0
    %1414 = vmatprep.subr.mxu0 0.0
    %1415 = vmatpush2.xpose.msra.mxu0 0.0
    %1416 = vmatprep.subr.mxu0 0.0
    %1417 = vmatpush2.xpose.msra.mxu0 0.0
    %1418 = vmatprep.subr.mxu0 0.0
    %1419 = vmatpush2.xpose.msra.mxu0 0.0
    %1420 = vmatprep.subr.mxu0 0.0
    %1421 = vmatpush2.xpose.msra.mxu0 0.0
    %1422 = vmatprep.subr.mxu0 0.0
    %1423 = vmatpush2.xpose.msra.mxu0 0.0
    %1424 = vmatprep.subr.mxu0 0.0
    %1425 = vmatpush2.xpose.msra.mxu0 0.0
    %1426 = vmatprep.subr.mxu0 0.0
    %1427 = vmatpush2.xpose.msra.mxu0 0.0
    %1428 = vmatprep.subr.mxu0 0.0
    %1429 = vmatpush2.xpose.msra.mxu0 0.0
    %1430 = vmatprep.mubr.f32.mxu0 0.0
    %1431 = vmatmul.mubr.f32.gmra.mxu0 %v1362
    %v1432 = vpop.f32.mrf.mxu0
    %v1433 = vadd.f32 0.0, %v1432
    %v1434 = vpop.f32.mrf.mxu0
    %1435 = vdwg.mxu0
    %v1436 = vmul.f32 %v1355, 0.25
    %v1437 = vmul.f32 %v1433, 0.25
    %v1438 = vsel %vm777, %v1436, -inf
    %1439 = vmax.xlane.f32.xlu0 %v1438
    %v1440 = vpop.xlane.xlu0 %1439
    %v1441 = vsel %vm777, %v1437, -inf
    %1442 = vmax.xlane.f32.xlu0 %v1441
    %v1443 = vpop.xlane.xlu0 %1442
    %v1444 = vsub.f32 %v1436, %v1440
    %v1445 = vsub.f32 %v1437, %v1443
    %v1446 = vmul.f32 %v1444, 1.442695
    %v1447 = vpow.pop %v1446
    %v1448 = vmul.f32 %v1445, 1.442695
    %v1449 = vpow.pop %v1448
    %v1450 = vsel %vm777, %v1447, 0.0
    %1451 = vadd.xlane.f32.xlu0 %v1450
    %v1452 = vpop.xlane.xlu0 %1451
    %v1453 = vsel %vm777, %v1449, 0.0
    %1454 = vadd.xlane.f32.xlu0 %v1453
    %v1455 = vpop.xlane.xlu0 %1454
    %v1456 = vrcp.pop %v1452
    %v1457 = vrcp.pop %v1455
    %v1458 = vmul.f32 %v1447, %v1456
    %v1459 = vmul.f32 %v1449, %v1457
    %1460 = vrot.lane.b32.xlu0 %v614, 96
    %v1461 = vpop.permute.xlu0 %1460
    %v1464 = vsel %vm777, %v1458, 0
    %1466 = vmatprep.subr.mxu0 0.0
    %1467 = vmatpush1.msra.mxu0 0.0
    %1468 = vmatprep.subr.mxu0 0.0
    %1469 = vmatpush1.msra.mxu0 0.0
    %1470 = vmatprep.subr.mxu0 0.0
    %1471 = vmatpush1.msra.mxu0 0.0
    %1472 = vmatprep.subr.mxu0 0.0
    %1473 = vmatpush1.msra.mxu0 0.0
    %1474 = vmatprep.subr.mxu0 0.0
    %1475 = vmatpush1.msra.mxu0 0.0
    %1476 = vmatprep.subr.mxu0 0.0
    %1477 = vmatpush1.msra.mxu0 0.0
    %1478 = vmatprep.subr.mxu0 0.0
    %1479 = vmatpush1.msra.mxu0 0.0
    %1480 = vmatprep.subr.mxu0 0.0
    %1481 = vmatpush1.msra.mxu0 0.0
    %1482 = vmatprep.subr.mxu0 0.0
    %1483 = vmatpush1.msra.mxu0 0.0
    %1484 = vmatprep.subr.mxu0 0.0
    %1485 = vmatpush1.msra.mxu0 0.0
    %1486 = vmatprep.subr.mxu0 0.0
    %1487 = vmatpush1.msra.mxu0 0.0
    %1488 = vmatprep.subr.mxu0 0.0
    %1489 = vmatpush1.msra.mxu0 0.0
    %1490 = vmatprep.subr.mxu0 0.0
    %1491 = vmatpush1.msra.mxu0 0.0
    %1492 = vmatprep.subr.mxu0 0.0
    %1493 = vmatpush1.msra.mxu0 0.0
    %1494 = vmatprep.subr.mxu0 0.0
    %1495 = vmatpush1.msra.mxu0 0.0
    %1496 = vmatprep.subr.mxu0 0.0
    %1497 = vmatpush1.msra.mxu0 %v1461
    %1498 = vmatprep.subr.mxu0 0.0
    %1499 = vmatpush2.msra.mxu0 0.0
    %1500 = vmatprep.subr.mxu0 0.0
    %1501 = vmatpush2.msra.mxu0 0.0
    %1502 = vmatprep.subr.mxu0 0.0
    %1503 = vmatpush2.msra.mxu0 0.0
    %1504 = vmatprep.subr.mxu0 0.0
    %1505 = vmatpush2.msra.mxu0 0.0
    %1506 = vmatprep.subr.mxu0 0.0
    %1507 = vmatpush2.msra.mxu0 0.0
    %1508 = vmatprep.subr.mxu0 0.0
    %1509 = vmatpush2.msra.mxu0 0.0
    %1510 = vmatprep.subr.mxu0 0.0
    %1511 = vmatpush2.msra.mxu0 0.0
    %1512 = vmatprep.subr.mxu0 0.0
    %1513 = vmatpush2.msra.mxu0 0.0
    %1514 = vmatprep.subr.mxu0 0.0
    %1515 = vmatpush2.msra.mxu0 0.0
    %1516 = vmatprep.subr.mxu0 0.0
    %1517 = vmatpush2.msra.mxu0 0.0
    %1518 = vmatprep.subr.mxu0 0.0
    %1519 = vmatpush2.msra.mxu0 0.0
    %1520 = vmatprep.subr.mxu0 0.0
    %1521 = vmatpush2.msra.mxu0 0.0
    %1522 = vmatprep.subr.mxu0 0.0
    %1523 = vmatpush2.msra.mxu0 0.0
    %1524 = vmatprep.subr.mxu0 0.0
    %1525 = vmatpush2.msra.mxu0 0.0
    %1526 = vmatprep.subr.mxu0 0.0
    %1527 = vmatpush2.msra.mxu0 0.0
    %1528 = vmatprep.subr.mxu0 0.0
    %1529 = vmatpush2.msra.mxu0 0.0
    %1530 = vmatprep.mubr.f32.mxu0 0.0
    %1531 = vmatmul.mubr.f32.gmra.mxu0 %v1464
    %v1532 = vpop.f32.mrf.mxu0
    %v1533 = vadd.f32 0.0, %v1532
    %v1534 = vpop.f32.mrf.mxu0
    %1535 = vdwg.mxu0
    %1536 = vrot.lane.b32.xlu0 %v619, 96
    %v1537 = vpop.permute.xlu0 %1536
    %v1540 = vsel %vm777, %v1459, 0
    %1542 = vmatprep.subr.mxu0 0.0
    %1543 = vmatpush1.msra.mxu0 0.0
    %1544 = vmatprep.subr.mxu0 0.0
    %1545 = vmatpush1.msra.mxu0 0.0
    %1546 = vmatprep.subr.mxu0 0.0
    %1547 = vmatpush1.msra.mxu0 0.0
    %1548 = vmatprep.subr.mxu0 0.0
    %1549 = vmatpush1.msra.mxu0 0.0
    %1550 = vmatprep.subr.mxu0 0.0
    %1551 = vmatpush1.msra.mxu0 0.0
    %1552 = vmatprep.subr.mxu0 0.0
    %1553 = vmatpush1.msra.mxu0 0.0
    %1554 = vmatprep.subr.mxu0 0.0
    %1555 = vmatpush1.msra.mxu0 0.0
    %1556 = vmatprep.subr.mxu0 0.0
    %1557 = vmatpush1.msra.mxu0 0.0
    %1558 = vmatprep.subr.mxu0 0.0
    %1559 = vmatpush1.msra.mxu0 0.0
    %1560 = vmatprep.subr.mxu0 0.0
    %1561 = vmatpush1.msra.mxu0 0.0
    %1562 = vmatprep.subr.mxu0 0.0
    %1563 = vmatpush1.msra.mxu0 0.0
    %1564 = vmatprep.subr.mxu0 0.0
    %1565 = vmatpush1.msra.mxu0 0.0
    %1566 = vmatprep.subr.mxu0 0.0
    %1567 = vmatpush1.msra.mxu0 0.0
    %1568 = vmatprep.subr.mxu0 0.0
    %1569 = vmatpush1.msra.mxu0 0.0
    %1570 = vmatprep.subr.mxu0 0.0
    %1571 = vmatpush1.msra.mxu0 0.0
    %1572 = vmatprep.subr.mxu0 0.0
    %1573 = vmatpush1.msra.mxu0 %v1537
    %1574 = vmatprep.subr.mxu0 0.0
    %1575 = vmatpush2.msra.mxu0 0.0
    %1576 = vmatprep.subr.mxu0 0.0
    %1577 = vmatpush2.msra.mxu0 0.0
    %1578 = vmatprep.subr.mxu0 0.0
    %1579 = vmatpush2.msra.mxu0 0.0
    %1580 = vmatprep.subr.mxu0 0.0
    %1581 = vmatpush2.msra.mxu0 0.0
    %1582 = vmatprep.subr.mxu0 0.0
    %1583 = vmatpush2.msra.mxu0 0.0
    %1584 = vmatprep.subr.mxu0 0.0
    %1585 = vmatpush2.msra.mxu0 0.0
    %1586 = vmatprep.subr.mxu0 0.0
    %1587 = vmatpush2.msra.mxu0 0.0
    %1588 = vmatprep.subr.mxu0 0.0
    %1589 = vmatpush2.msra.mxu0 0.0
    %1590 = vmatprep.subr.mxu0 0.0
    %1591 = vmatpush2.msra.mxu0 0.0
    %1592 = vmatprep.subr.mxu0 0.0
    %1593 = vmatpush2.msra.mxu0 0.0
    %1594 = vmatprep.subr.mxu0 0.0
    %1595 = vmatpush2.msra.mxu0 0.0
    %1596 = vmatprep.subr.mxu0 0.0
    %1597 = vmatpush2.msra.mxu0 0.0
    %1598 = vmatprep.subr.mxu0 0.0
    %1599 = vmatpush2.msra.mxu0 0.0
    %1600 = vmatprep.subr.mxu0 0.0
    %1601 = vmatpush2.msra.mxu0 0.0
    %1602 = vmatprep.subr.mxu0 0.0
    %1603 = vmatpush2.msra.mxu0 0.0
    %1604 = vmatprep.subr.mxu0 0.0
    %1605 = vmatpush2.msra.mxu0 0.0
    %1606 = vmatprep.mubr.f32.mxu0 0.0
    %1607 = vmatmul.mubr.f32.gmra.mxu0 %v1540
    %v1608 = vpop.f32.mrf.mxu0
    %v1609 = vadd.f32 0.0, %v1608
    %v1610 = vpop.f32.mrf.mxu0
    %1611 = vdwg.mxu0
    %1612 = vrot.lane.b32.xlu0 %v432, 80
    %v1613 = vpop.permute.xlu0 %1612
    %1614 = vrot.lane.b32.xlu0 %v523, 80
    %v1615 = vpop.permute.xlu0 %1614
    %v1616 = vsel %vm622, %v1613, 0
    %v1618 = vsel %vm622, %v1615, 0
    %1620 = vmatprep.subr.mxu0 0.0
    %1621 = vmatpush1.xpose.msra.mxu0 0.0
    %1622 = vmatprep.subr.mxu0 0.0
    %1623 = vmatpush1.xpose.msra.mxu0 0.0
    %1624 = vmatprep.subr.mxu0 0.0
    %1625 = vmatpush1.xpose.msra.mxu0 0.0
    %1626 = vmatprep.subr.mxu0 0.0
    %1627 = vmatpush1.xpose.msra.mxu0 0.0
    %1628 = vmatprep.subr.mxu0 0.0
    %1629 = vmatpush1.xpose.msra.mxu0 0.0
    %1630 = vmatprep.subr.mxu0 0.0
    %1631 = vmatpush1.xpose.msra.mxu0 0.0
    %1632 = vmatprep.subr.mxu0 0.0
    %1633 = vmatpush1.xpose.msra.mxu0 0.0
    %1634 = vmatprep.subr.mxu0 0.0
    %1635 = vmatpush1.xpose.msra.mxu0 0.0
    %1636 = vmatprep.subr.mxu0 0.0
    %1637 = vmatpush1.xpose.msra.mxu0 0.0
    %1638 = vmatprep.subr.mxu0 0.0
    %1639 = vmatpush1.xpose.msra.mxu0 0.0
    %1640 = vmatprep.subr.mxu0 0.0
    %1641 = vmatpush1.xpose.msra.mxu0 0.0
    %1642 = vmatprep.subr.mxu0 0.0
    %1643 = vmatpush1.xpose.msra.mxu0 0.0
    %1644 = vmatprep.subr.mxu0 0.0
    %1645 = vmatpush1.xpose.msra.mxu0 0.0
    %1646 = vmatprep.subr.mxu0 0.0
    %1647 = vmatpush1.xpose.msra.mxu0 0.0
    %1648 = vmatprep.subr.mxu0 0.0
    %1649 = vmatpush1.xpose.msra.mxu0 0.0
    %1650 = vmatprep.subr.mxu0 0.0
    %1651 = vmatpush1.xpose.msra.mxu0 %v1618
    %1652 = vmatprep.subr.mxu0 0.0
    %1653 = vmatpush2.xpose.msra.mxu0 0.0
    %1654 = vmatprep.subr.mxu0 0.0
    %1655 = vmatpush2.xpose.msra.mxu0 0.0
    %1656 = vmatprep.subr.mxu0 0.0
    %1657 = vmatpush2.xpose.msra.mxu0 0.0
    %1658 = vmatprep.subr.mxu0 0.0
    %1659 = vmatpush2.xpose.msra.mxu0 0.0
    %1660 = vmatprep.subr.mxu0 0.0
    %1661 = vmatpush2.xpose.msra.mxu0 0.0
    %1662 = vmatprep.subr.mxu0 0.0
    %1663 = vmatpush2.xpose.msra.mxu0 0.0
    %1664 = vmatprep.subr.mxu0 0.0
    %1665 = vmatpush2.xpose.msra.mxu0 0.0
    %1666 = vmatprep.subr.mxu0 0.0
    %1667 = vmatpush2.xpose.msra.mxu0 0.0
    %1668 = vmatprep.subr.mxu0 0.0
    %1669 = vmatpush2.xpose.msra.mxu0 0.0
    %1670 = vmatprep.subr.mxu0 0.0
    %1671 = vmatpush2.xpose.msra.mxu0 0.0
    %1672 = vmatprep.subr.mxu0 0.0
    %1673 = vmatpush2.xpose.msra.mxu0 0.0
    %1674 = vmatprep.subr.mxu0 0.0
    %1675 = vmatpush2.xpose.msra.mxu0 0.0
    %1676 = vmatprep.subr.mxu0 0.0
    %1677 = vmatpush2.xpose.msra.mxu0 0.0
    %1678 = vmatprep.subr.mxu0 0.0
    %1679 = vmatpush2.xpose.msra.mxu0 0.0
    %1680 = vmatprep.subr.mxu0 0.0
    %1681 = vmatpush2.xpose.msra.mxu0 0.0
    %1682 = vmatprep.subr.mxu0 0.0
    %1683 = vmatpush2.xpose.msra.mxu0 0.0
    %1684 = vmatprep.mubr.f32.mxu0 0.0
    %1685 = vmatmul.mubr.f32.gmra.mxu0 %v1616
    %v1686 = vpop.f32.mrf.mxu0
    %v1687 = vadd.f32 0.0, %v1686
    %v1688 = vpop.f32.mrf.mxu0
    %1689 = vdwg.mxu0
    %1690 = vrot.lane.b32.xlu0 %v437, 80
    %v1691 = vpop.permute.xlu0 %1690
    %1692 = vrot.lane.b32.xlu0 %v528, 80
    %v1693 = vpop.permute.xlu0 %1692
    %v1694 = vsel %vm622, %v1691, 0
    %v1696 = vsel %vm622, %v1693, 0
    %1698 = vmatprep.subr.mxu0 0.0
    %1699 = vmatpush1.xpose.msra.mxu0 0.0
    %1700 = vmatprep.subr.mxu0 0.0
    %1701 = vmatpush1.xpose.msra.mxu0 0.0
    %1702 = vmatprep.subr.mxu0 0.0
    %1703 = vmatpush1.xpose.msra.mxu0 0.0
    %1704 = vmatprep.subr.mxu0 0.0
    %1705 = vmatpush1.xpose.msra.mxu0 0.0
    %1706 = vmatprep.subr.mxu0 0.0
    %1707 = vmatpush1.xpose.msra.mxu0 0.0
    %1708 = vmatprep.subr.mxu0 0.0
    %1709 = vmatpush1.xpose.msra.mxu0 0.0
    %1710 = vmatprep.subr.mxu0 0.0
    %1711 = vmatpush1.xpose.msra.mxu0 0.0
    %1712 = vmatprep.subr.mxu0 0.0
    %1713 = vmatpush1.xpose.msra.mxu0 0.0
    %1714 = vmatprep.subr.mxu0 0.0
    %1715 = vmatpush1.xpose.msra.mxu0 0.0
    %1716 = vmatprep.subr.mxu0 0.0
    %1717 = vmatpush1.xpose.msra.mxu0 0.0
    %1718 = vmatprep.subr.mxu0 0.0
    %1719 = vmatpush1.xpose.msra.mxu0 0.0
    %1720 = vmatprep.subr.mxu0 0.0
    %1721 = vmatpush1.xpose.msra.mxu0 0.0
    %1722 = vmatprep.subr.mxu0 0.0
    %1723 = vmatpush1.xpose.msra.mxu0 0.0
    %1724 = vmatprep.subr.mxu0 0.0
    %1725 = vmatpush1.xpose.msra.mxu0 0.0
    %1726 = vmatprep.subr.mxu0 0.0
    %1727 = vmatpush1.xpose.msra.mxu0 0.0
    %1728 = vmatprep.subr.mxu0 0.0
    %1729 = vmatpush1.xpose.msra.mxu0 %v1696
    %1730 = vmatprep.subr.mxu0 0.0
    %1731 = vmatpush2.xpose.msra.mxu0 0.0
    %1732 = vmatprep.subr.mxu0 0.0
    %1733 = vmatpush2.xpose.msra.mxu0 0.0
    %1734 = vmatprep.subr.mxu0 0.0
    %1735 = vmatpush2.xpose.msra.mxu0 0.0
    %1736 = vmatprep.subr.mxu0 0.0
    %1737 = vmatpush2.xpose.msra.mxu0 0.0
    %1738 = vmatprep.subr.mxu0 0.0
    %1739 = vmatpush2.xpose.msra.mxu0 0.0
    %1740 = vmatprep.subr.mxu0 0.0
    %1741 = vmatpush2.xpose.msra.mxu0 0.0
    %1742 = vmatprep.subr.mxu0 0.0
    %1743 = vmatpush2.xpose.msra.mxu0 0.0
    %1744 = vmatprep.subr.mxu0 0.0
    %1745 = vmatpush2.xpose.msra.mxu0 0.0
    %1746 = vmatprep.subr.mxu0 0.0
    %1747 = vmatpush2.xpose.msra.mxu0 0.0
    %1748 = vmatprep.subr.mxu0 0.0
    %1749 = vmatpush2.xpose.msra.mxu0 0.0
    %1750 = vmatprep.subr.mxu0 0.0
    %1751 = vmatpush2.xpose.msra.mxu0 0.0
    %1752 = vmatprep.subr.mxu0 0.0
    %1753 = vmatpush2.xpose.msra.mxu0 0.0
    %1754 = vmatprep.subr.mxu0 0.0
    %1755 = vmatpush2.xpose.msra.mxu0 0.0
    %1756 = vmatprep.subr.mxu0 0.0
    %1757 = vmatpush2.xpose.msra.mxu0 0.0
    %1758 = vmatprep.subr.mxu0 0.0
    %1759 = vmatpush2.xpose.msra.mxu0 0.0
    %1760 = vmatprep.subr.mxu0 0.0
    %1761 = vmatpush2.xpose.msra.mxu0 0.0
    %1762 = vmatprep.mubr.f32.mxu0 0.0
    %1763 = vmatmul.mubr.f32.gmra.mxu0 %v1694
    %v1764 = vpop.f32.mrf.mxu0
    %v1765 = vadd.f32 0.0, %v1764
    %v1766 = vpop.f32.mrf.mxu0
    %1767 = vdwg.mxu0
    %v1768 = vmul.f32 %v1687, 0.25
    %v1769 = vmul.f32 %v1765, 0.25
    %v1770 = vsel %vm777, %v1768, -inf
    %1771 = vmax.xlane.f32.xlu0 %v1770
    %v1772 = vpop.xlane.xlu0 %1771
    %v1773 = vsel %vm777, %v1769, -inf
    %1774 = vmax.xlane.f32.xlu0 %v1773
    %v1775 = vpop.xlane.xlu0 %1774
    %v1776 = vsub.f32 %v1768, %v1772
    %v1777 = vsub.f32 %v1769, %v1775
    %v1778 = vmul.f32 %v1776, 1.442695
    %v1779 = vpow.pop %v1778
    %v1780 = vmul.f32 %v1777, 1.442695
    %v1781 = vpow.pop %v1780
    %v1782 = vsel %vm777, %v1779, 0.0
    %1783 = vadd.xlane.f32.xlu0 %v1782
    %v1784 = vpop.xlane.xlu0 %1783
    %v1785 = vsel %vm777, %v1781, 0.0
    %1786 = vadd.xlane.f32.xlu0 %v1785
    %v1787 = vpop.xlane.xlu0 %1786
    %v1788 = vrcp.pop %v1784
    %v1789 = vrcp.pop %v1787
    %v1790 = vmul.f32 %v1779, %v1788
    %v1791 = vmul.f32 %v1781, %v1789
    %1792 = vrot.lane.b32.xlu0 %v614, 80
    %v1793 = vpop.permute.xlu0 %1792
    %v1796 = vsel %vm777, %v1790, 0
    %1798 = vmatprep.subr.mxu0 0.0
    %1799 = vmatpush1.msra.mxu0 0.0
    %1800 = vmatprep.subr.mxu0 0.0
    %1801 = vmatpush1.msra.mxu0 0.0
    %1802 = vmatprep.subr.mxu0 0.0
    %1803 = vmatpush1.msra.mxu0 0.0
    %1804 = vmatprep.subr.mxu0 0.0
    %1805 = vmatpush1.msra.mxu0 0.0
    %1806 = vmatprep.subr.mxu0 0.0
    %1807 = vmatpush1.msra.mxu0 0.0
    %1808 = vmatprep.subr.mxu0 0.0
    %1809 = vmatpush1.msra.mxu0 0.0
    %1810 = vmatprep.subr.mxu0 0.0
    %1811 = vmatpush1.msra.mxu0 0.0
    %1812 = vmatprep.subr.mxu0 0.0
    %1813 = vmatpush1.msra.mxu0 0.0
    %1814 = vmatprep.subr.mxu0 0.0
    %1815 = vmatpush1.msra.mxu0 0.0
    %1816 = vmatprep.subr.mxu0 0.0
    %1817 = vmatpush1.msra.mxu0 0.0
    %1818 = vmatprep.subr.mxu0 0.0
    %1819 = vmatpush1.msra.mxu0 0.0
    %1820 = vmatprep.subr.mxu0 0.0
    %1821 = vmatpush1.msra.mxu0 0.0
    %1822 = vmatprep.subr.mxu0 0.0
    %1823 = vmatpush1.msra.mxu0 0.0
    %1824 = vmatprep.subr.mxu0 0.0
    %1825 = vmatpush1.msra.mxu0 0.0
    %1826 = vmatprep.subr.mxu0 0.0
    %1827 = vmatpush1.msra.mxu0 0.0
    %1828 = vmatprep.subr.mxu0 0.0
    %1829 = vmatpush1.msra.mxu0 %v1793
    %1830 = vmatprep.subr.mxu0 0.0
    %1831 = vmatpush2.msra.mxu0 0.0
    %1832 = vmatprep.subr.mxu0 0.0
    %1833 = vmatpush2.msra.mxu0 0.0
    %1834 = vmatprep.subr.mxu0 0.0
    %1835 = vmatpush2.msra.mxu0 0.0
    %1836 = vmatprep.subr.mxu0 0.0
    %1837 = vmatpush2.msra.mxu0 0.0
    %1838 = vmatprep.subr.mxu0 0.0
    %1839 = vmatpush2.msra.mxu0 0.0
    %1840 = vmatprep.subr.mxu0 0.0
    %1841 = vmatpush2.msra.mxu0 0.0
    %1842 = vmatprep.subr.mxu0 0.0
    %1843 = vmatpush2.msra.mxu0 0.0
    %1844 = vmatprep.subr.mxu0 0.0
    %1845 = vmatpush2.msra.mxu0 0.0
    %1846 = vmatprep.subr.mxu0 0.0
    %1847 = vmatpush2.msra.mxu0 0.0
    %1848 = vmatprep.subr.mxu0 0.0
    %1849 = vmatpush2.msra.mxu0 0.0
    %1850 = vmatprep.subr.mxu0 0.0
    %1851 = vmatpush2.msra.mxu0 0.0
    %1852 = vmatprep.subr.mxu0 0.0
    %1853 = vmatpush2.msra.mxu0 0.0
    %1854 = vmatprep.subr.mxu0 0.0
    %1855 = vmatpush2.msra.mxu0 0.0
    %1856 = vmatprep.subr.mxu0 0.0
    %1857 = vmatpush2.msra.mxu0 0.0
    %1858 = vmatprep.subr.mxu0 0.0
    %1859 = vmatpush2.msra.mxu0 0.0
    %1860 = vmatprep.subr.mxu0 0.0
    %1861 = vmatpush2.msra.mxu0 0.0
    %1862 = vmatprep.mubr.f32.mxu0 0.0
    %1863 = vmatmul.mubr.f32.gmra.mxu0 %v1796
    %v1864 = vpop.f32.mrf.mxu0
    %v1865 = vadd.f32 0.0, %v1864
    %v1866 = vpop.f32.mrf.mxu0
    %1867 = vdwg.mxu0
    %1868 = vrot.lane.b32.xlu0 %v619, 80
    %v1869 = vpop.permute.xlu0 %1868
    %v1872 = vsel %vm777, %v1791, 0
    %1874 = vmatprep.subr.mxu0 0.0
    %1875 = vmatpush1.msra.mxu0 0.0
    %1876 = vmatprep.subr.mxu0 0.0
    %1877 = vmatpush1.msra.mxu0 0.0
    %1878 = vmatprep.subr.mxu0 0.0
    %1879 = vmatpush1.msra.mxu0 0.0
    %1880 = vmatprep.subr.mxu0 0.0
    %1881 = vmatpush1.msra.mxu0 0.0
    %1882 = vmatprep.subr.mxu0 0.0
    %1883 = vmatpush1.msra.mxu0 0.0
    %1884 = vmatprep.subr.mxu0 0.0
    %1885 = vmatpush1.msra.mxu0 0.0
    %1886 = vmatprep.subr.mxu0 0.0
    %1887 = vmatpush1.msra.mxu0 0.0
    %1888 = vmatprep.subr.mxu0 0.0
    %1889 = vmatpush1.msra.mxu0 0.0
    %1890 = vmatprep.subr.mxu0 0.0
    %1891 = vmatpush1.msra.mxu0 0.0
    %1892 = vmatprep.subr.mxu0 0.0
    %1893 = vmatpush1.msra.mxu0 0.0
    %1894 = vmatprep.subr.mxu0 0.0
    %1895 = vmatpush1.msra.mxu0 0.0
    %1896 = vmatprep.subr.mxu0 0.0
    %1897 = vmatpush1.msra.mxu0 0.0
    %1898 = vmatprep.subr.mxu0 0.0
    %1899 = vmatpush1.msra.mxu0 0.0
    %1900 = vmatprep.subr.mxu0 0.0
    %1901 = vmatpush1.msra.mxu0 0.0
    %1902 = vmatprep.subr.mxu0 0.0
    %1903 = vmatpush1.msra.mxu0 0.0
    %1904 = vmatprep.subr.mxu0 0.0
    %1905 = vmatpush1.msra.mxu0 %v1869
    %1906 = vmatprep.subr.mxu0 0.0
    %1907 = vmatpush2.msra.mxu0 0.0
    %1908 = vmatprep.subr.mxu0 0.0
    %1909 = vmatpush2.msra.mxu0 0.0
    %1910 = vmatprep.subr.mxu0 0.0
    %1911 = vmatpush2.msra.mxu0 0.0
    %1912 = vmatprep.subr.mxu0 0.0
    %1913 = vmatpush2.msra.mxu0 0.0
    %1914 = vmatprep.subr.mxu0 0.0
    %1915 = vmatpush2.msra.mxu0 0.0
    %1916 = vmatprep.subr.mxu0 0.0
    %1917 = vmatpush2.msra.mxu0 0.0
    %1918 = vmatprep.subr.mxu0 0.0
    %1919 = vmatpush2.msra.mxu0 0.0
    %1920 = vmatprep.subr.mxu0 0.0
    %1921 = vmatpush2.msra.mxu0 0.0
    %1922 = vmatprep.subr.mxu0 0.0
    %1923 = vmatpush2.msra.mxu0 0.0
    %1924 = vmatprep.subr.mxu0 0.0
    %1925 = vmatpush2.msra.mxu0 0.0
    %1926 = vmatprep.subr.mxu0 0.0
    %1927 = vmatpush2.msra.mxu0 0.0
    %1928 = vmatprep.subr.mxu0 0.0
    %1929 = vmatpush2.msra.mxu0 0.0
    %1930 = vmatprep.subr.mxu0 0.0
    %1931 = vmatpush2.msra.mxu0 0.0
    %1932 = vmatprep.subr.mxu0 0.0
    %1933 = vmatpush2.msra.mxu0 0.0
    %1934 = vmatprep.subr.mxu0 0.0
    %1935 = vmatpush2.msra.mxu0 0.0
    %1936 = vmatprep.subr.mxu0 0.0
    %1937 = vmatpush2.msra.mxu0 0.0
    %1938 = vmatprep.mubr.f32.mxu0 0.0
    %1939 = vmatmul.mubr.f32.gmra.mxu0 %v1872
    %v1940 = vpop.f32.mrf.mxu0
    %v1941 = vadd.f32 0.0, %v1940
    %v1942 = vpop.f32.mrf.mxu0
    %1943 = vdwg.mxu0
    %1944 = vrot.lane.b32.xlu0 %v432, 64
    %v1945 = vpop.permute.xlu0 %1944
    %1946 = vrot.lane.b32.xlu0 %v523, 64
    %v1947 = vpop.permute.xlu0 %1946
    %v1948 = vsel %vm622, %v1945, 0
    %v1950 = vsel %vm622, %v1947, 0
    %1952 = vmatprep.subr.mxu0 0.0
    %1953 = vmatpush1.xpose.msra.mxu0 0.0
    %1954 = vmatprep.subr.mxu0 0.0
    %1955 = vmatpush1.xpose.msra.mxu0 0.0
    %1956 = vmatprep.subr.mxu0 0.0
    %1957 = vmatpush1.xpose.msra.mxu0 0.0
    %1958 = vmatprep.subr.mxu0 0.0
    %1959 = vmatpush1.xpose.msra.mxu0 0.0
    %1960 = vmatprep.subr.mxu0 0.0
    %1961 = vmatpush1.xpose.msra.mxu0 0.0
    %1962 = vmatprep.subr.mxu0 0.0
    %1963 = vmatpush1.xpose.msra.mxu0 0.0
    %1964 = vmatprep.subr.mxu0 0.0
    %1965 = vmatpush1.xpose.msra.mxu0 0.0
    %1966 = vmatprep.subr.mxu0 0.0
    %1967 = vmatpush1.xpose.msra.mxu0 0.0
    %1968 = vmatprep.subr.mxu0 0.0
    %1969 = vmatpush1.xpose.msra.mxu0 0.0
    %1970 = vmatprep.subr.mxu0 0.0
    %1971 = vmatpush1.xpose.msra.mxu0 0.0
    %1972 = vmatprep.subr.mxu0 0.0
    %1973 = vmatpush1.xpose.msra.mxu0 0.0
    %1974 = vmatprep.subr.mxu0 0.0
    %1975 = vmatpush1.xpose.msra.mxu0 0.0
    %1976 = vmatprep.subr.mxu0 0.0
    %1977 = vmatpush1.xpose.msra.mxu0 0.0
    %1978 = vmatprep.subr.mxu0 0.0
    %1979 = vmatpush1.xpose.msra.mxu0 0.0
    %1980 = vmatprep.subr.mxu0 0.0
    %1981 = vmatpush1.xpose.msra.mxu0 0.0
    %1982 = vmatprep.subr.mxu0 0.0
    %1983 = vmatpush1.xpose.msra.mxu0 %v1950
    %1984 = vmatprep.subr.mxu0 0.0
    %1985 = vmatpush2.xpose.msra.mxu0 0.0
    %1986 = vmatprep.subr.mxu0 0.0
    %1987 = vmatpush2.xpose.msra.mxu0 0.0
    %1988 = vmatprep.subr.mxu0 0.0
    %1989 = vmatpush2.xpose.msra.mxu0 0.0
    %1990 = vmatprep.subr.mxu0 0.0
    %1991 = vmatpush2.xpose.msra.mxu0 0.0
    %1992 = vmatprep.subr.mxu0 0.0
    %1993 = vmatpush2.xpose.msra.mxu0 0.0
    %1994 = vmatprep.subr.mxu0 0.0
    %1995 = vmatpush2.xpose.msra.mxu0 0.0
    %1996 = vmatprep.subr.mxu0 0.0
    %1997 = vmatpush2.xpose.msra.mxu0 0.0
    %1998 = vmatprep.subr.mxu0 0.0
    %1999 = vmatpush2.xpose.msra.mxu0 0.0
    %2000 = vmatprep.subr.mxu0 0.0
    %2001 = vmatpush2.xpose.msra.mxu0 0.0
    %2002 = vmatprep.subr.mxu0 0.0
    %2003 = vmatpush2.xpose.msra.mxu0 0.0
    %2004 = vmatprep.subr.mxu0 0.0
    %2005 = vmatpush2.xpose.msra.mxu0 0.0
    %2006 = vmatprep.subr.mxu0 0.0
    %2007 = vmatpush2.xpose.msra.mxu0 0.0
    %2008 = vmatprep.subr.mxu0 0.0
    %2009 = vmatpush2.xpose.msra.mxu0 0.0
    %2010 = vmatprep.subr.mxu0 0.0
    %2011 = vmatpush2.xpose.msra.mxu0 0.0
    %2012 = vmatprep.subr.mxu0 0.0
    %2013 = vmatpush2.xpose.msra.mxu0 0.0
    %2014 = vmatprep.subr.mxu0 0.0
    %2015 = vmatpush2.xpose.msra.mxu0 0.0
    %2016 = vmatprep.mubr.f32.mxu0 0.0
    %2017 = vmatmul.mubr.f32.gmra.mxu0 %v1948
    %v2018 = vpop.f32.mrf.mxu0
    %v2019 = vadd.f32 0.0, %v2018
    %v2020 = vpop.f32.mrf.mxu0
    %2021 = vdwg.mxu0
    %2022 = vrot.lane.b32.xlu0 %v437, 64
    %v2023 = vpop.permute.xlu0 %2022
    %2024 = vrot.lane.b32.xlu0 %v528, 64
    %v2025 = vpop.permute.xlu0 %2024
    %v2026 = vsel %vm622, %v2023, 0
    %v2028 = vsel %vm622, %v2025, 0
    %2030 = vmatprep.subr.mxu0 0.0
    %2031 = vmatpush1.xpose.msra.mxu0 0.0
    %2032 = vmatprep.subr.mxu0 0.0
    %2033 = vmatpush1.xpose.msra.mxu0 0.0
    %2034 = vmatprep.subr.mxu0 0.0
    %2035 = vmatpush1.xpose.msra.mxu0 0.0
    %2036 = vmatprep.subr.mxu0 0.0
    %2037 = vmatpush1.xpose.msra.mxu0 0.0
    %2038 = vmatprep.subr.mxu0 0.0
    %2039 = vmatpush1.xpose.msra.mxu0 0.0
    %2040 = vmatprep.subr.mxu0 0.0
    %2041 = vmatpush1.xpose.msra.mxu0 0.0
    %2042 = vmatprep.subr.mxu0 0.0
    %2043 = vmatpush1.xpose.msra.mxu0 0.0
    %2044 = vmatprep.subr.mxu0 0.0
    %2045 = vmatpush1.xpose.msra.mxu0 0.0
    %2046 = vmatprep.subr.mxu0 0.0
    %2047 = vmatpush1.xpose.msra.mxu0 0.0
    %2048 = vmatprep.subr.mxu0 0.0
    %2049 = vmatpush1.xpose.msra.mxu0 0.0
    %2050 = vmatprep.subr.mxu0 0.0
    %2051 = vmatpush1.xpose.msra.mxu0 0.0
    %2052 = vmatprep.subr.mxu0 0.0
    %2053 = vmatpush1.xpose.msra.mxu0 0.0
    %2054 = vmatprep.subr.mxu0 0.0
    %2055 = vmatpush1.xpose.msra.mxu0 0.0
    %2056 = vmatprep.subr.mxu0 0.0
    %2057 = vmatpush1.xpose.msra.mxu0 0.0
    %2058 = vmatprep.subr.mxu0 0.0
    %2059 = vmatpush1.xpose.msra.mxu0 0.0
    %2060 = vmatprep.subr.mxu0 0.0
    %2061 = vmatpush1.xpose.msra.mxu0 %v2028
    %2062 = vmatprep.subr.mxu0 0.0
    %2063 = vmatpush2.xpose.msra.mxu0 0.0
    %2064 = vmatprep.subr.mxu0 0.0
    %2065 = vmatpush2.xpose.msra.mxu0 0.0
    %2066 = vmatprep.subr.mxu0 0.0
    %2067 = vmatpush2.xpose.msra.mxu0 0.0
    %2068 = vmatprep.subr.mxu0 0.0
    %2069 = vmatpush2.xpose.msra.mxu0 0.0
    %2070 = vmatprep.subr.mxu0 0.0
    %2071 = vmatpush2.xpose.msra.mxu0 0.0
    %2072 = vmatprep.subr.mxu0 0.0
    %2073 = vmatpush2.xpose.msra.mxu0 0.0
    %2074 = vmatprep.subr.mxu0 0.0
    %2075 = vmatpush2.xpose.msra.mxu0 0.0
    %2076 = vmatprep.subr.mxu0 0.0
    %2077 = vmatpush2.xpose.msra.mxu0 0.0
    %2078 = vmatprep.subr.mxu0 0.0
    %2079 = vmatpush2.xpose.msra.mxu0 0.0
    %2080 = vmatprep.subr.mxu0 0.0
    %2081 = vmatpush2.xpose.msra.mxu0 0.0
    %2082 = vmatprep.subr.mxu0 0.0
    %2083 = vmatpush2.xpose.msra.mxu0 0.0
    %2084 = vmatprep.subr.mxu0 0.0
    %2085 = vmatpush2.xpose.msra.mxu0 0.0
    %2086 = vmatprep.subr.mxu0 0.0
    %2087 = vmatpush2.xpose.msra.mxu0 0.0
    %2088 = vmatprep.subr.mxu0 0.0
    %2089 = vmatpush2.xpose.msra.mxu0 0.0
    %2090 = vmatprep.subr.mxu0 0.0
    %2091 = vmatpush2.xpose.msra.mxu0 0.0
    %2092 = vmatprep.subr.mxu0 0.0
    %2093 = vmatpush2.xpose.msra.mxu0 0.0
    %2094 = vmatprep.mubr.f32.mxu0 0.0
    %2095 = vmatmul.mubr.f32.gmra.mxu0 %v2026
    %v2096 = vpop.f32.mrf.mxu0
    %v2097 = vadd.f32 0.0, %v2096
    %v2098 = vpop.f32.mrf.mxu0
    %2099 = vdwg.mxu0
    %v2100 = vmul.f32 %v2019, 0.25
    %v2101 = vmul.f32 %v2097, 0.25
    %v2102 = vsel %vm777, %v2100, -inf
    %2103 = vmax.xlane.f32.xlu0 %v2102
    %v2104 = vpop.xlane.xlu0 %2103
    %v2105 = vsel %vm777, %v2101, -inf
    %2106 = vmax.xlane.f32.xlu0 %v2105
    %v2107 = vpop.xlane.xlu0 %2106
    %v2108 = vsub.f32 %v2100, %v2104
    %v2109 = vsub.f32 %v2101, %v2107
    %v2110 = vmul.f32 %v2108, 1.442695
    %v2111 = vpow.pop %v2110
    %v2112 = vmul.f32 %v2109, 1.442695
    %v2113 = vpow.pop %v2112
    %v2114 = vsel %vm777, %v2111, 0.0
    %2115 = vadd.xlane.f32.xlu0 %v2114
    %v2116 = vpop.xlane.xlu0 %2115
    %v2117 = vsel %vm777, %v2113, 0.0
    %2118 = vadd.xlane.f32.xlu0 %v2117
    %v2119 = vpop.xlane.xlu0 %2118
    %v2120 = vrcp.pop %v2116
    %v2121 = vrcp.pop %v2119
    %v2122 = vmul.f32 %v2111, %v2120
    %v2123 = vmul.f32 %v2113, %v2121
    %2124 = vrot.lane.b32.xlu0 %v614, 64
    %v2125 = vpop.permute.xlu0 %2124
    %v2128 = vsel %vm777, %v2122, 0
    %2130 = vmatprep.subr.mxu0 0.0
    %2131 = vmatpush1.msra.mxu0 0.0
    %2132 = vmatprep.subr.mxu0 0.0
    %2133 = vmatpush1.msra.mxu0 0.0
    %2134 = vmatprep.subr.mxu0 0.0
    %2135 = vmatpush1.msra.mxu0 0.0
    %2136 = vmatprep.subr.mxu0 0.0
    %2137 = vmatpush1.msra.mxu0 0.0
    %2138 = vmatprep.subr.mxu0 0.0
    %2139 = vmatpush1.msra.mxu0 0.0
    %2140 = vmatprep.subr.mxu0 0.0
    %2141 = vmatpush1.msra.mxu0 0.0
    %2142 = vmatprep.subr.mxu0 0.0
    %2143 = vmatpush1.msra.mxu0 0.0
    %2144 = vmatprep.subr.mxu0 0.0
    %2145 = vmatpush1.msra.mxu0 0.0
    %2146 = vmatprep.subr.mxu0 0.0
    %2147 = vmatpush1.msra.mxu0 0.0
    %2148 = vmatprep.subr.mxu0 0.0
    %2149 = vmatpush1.msra.mxu0 0.0
    %2150 = vmatprep.subr.mxu0 0.0
    %2151 = vmatpush1.msra.mxu0 0.0
    %2152 = vmatprep.subr.mxu0 0.0
    %2153 = vmatpush1.msra.mxu0 0.0
    %2154 = vmatprep.subr.mxu0 0.0
    %2155 = vmatpush1.msra.mxu0 0.0
    %2156 = vmatprep.subr.mxu0 0.0
    %2157 = vmatpush1.msra.mxu0 0.0
    %2158 = vmatprep.subr.mxu0 0.0
    %2159 = vmatpush1.msra.mxu0 0.0
    %2160 = vmatprep.subr.mxu0 0.0
    %2161 = vmatpush1.msra.mxu0 %v2125
    %2162 = vmatprep.subr.mxu0 0.0
    %2163 = vmatpush2.msra.mxu0 0.0
    %2164 = vmatprep.subr.mxu0 0.0
    %2165 = vmatpush2.msra.mxu0 0.0
    %2166 = vmatprep.subr.mxu0 0.0
    %2167 = vmatpush2.msra.mxu0 0.0
    %2168 = vmatprep.subr.mxu0 0.0
    %2169 = vmatpush2.msra.mxu0 0.0
    %2170 = vmatprep.subr.mxu0 0.0
    %2171 = vmatpush2.msra.mxu0 0.0
    %2172 = vmatprep.subr.mxu0 0.0
    %2173 = vmatpush2.msra.mxu0 0.0
    %2174 = vmatprep.subr.mxu0 0.0
    %2175 = vmatpush2.msra.mxu0 0.0
    %2176 = vmatprep.subr.mxu0 0.0
    %2177 = vmatpush2.msra.mxu0 0.0
    %2178 = vmatprep.subr.mxu0 0.0
    %2179 = vmatpush2.msra.mxu0 0.0
    %2180 = vmatprep.subr.mxu0 0.0
    %2181 = vmatpush2.msra.mxu0 0.0
    %2182 = vmatprep.subr.mxu0 0.0
    %2183 = vmatpush2.msra.mxu0 0.0
    %2184 = vmatprep.subr.mxu0 0.0
    %2185 = vmatpush2.msra.mxu0 0.0
    %2186 = vmatprep.subr.mxu0 0.0
    %2187 = vmatpush2.msra.mxu0 0.0
    %2188 = vmatprep.subr.mxu0 0.0
    %2189 = vmatpush2.msra.mxu0 0.0
    %2190 = vmatprep.subr.mxu0 0.0
    %2191 = vmatpush2.msra.mxu0 0.0
    %2192 = vmatprep.subr.mxu0 0.0
    %2193 = vmatpush2.msra.mxu0 0.0
    %2194 = vmatprep.mubr.f32.mxu0 0.0
    %2195 = vmatmul.mubr.f32.gmra.mxu0 %v2128
    %v2196 = vpop.f32.mrf.mxu0
    %v2197 = vadd.f32 0.0, %v2196
    %v2198 = vpop.f32.mrf.mxu0
    %2199 = vdwg.mxu0
    %2200 = vrot.lane.b32.xlu0 %v619, 64
    %v2201 = vpop.permute.xlu0 %2200
    %v2204 = vsel %vm777, %v2123, 0
    %2206 = vmatprep.subr.mxu0 0.0
    %2207 = vmatpush1.msra.mxu0 0.0
    %2208 = vmatprep.subr.mxu0 0.0
    %2209 = vmatpush1.msra.mxu0 0.0
    %2210 = vmatprep.subr.mxu0 0.0
    %2211 = vmatpush1.msra.mxu0 0.0
    %2212 = vmatprep.subr.mxu0 0.0
    %2213 = vmatpush1.msra.mxu0 0.0
    %2214 = vmatprep.subr.mxu0 0.0
    %2215 = vmatpush1.msra.mxu0 0.0
    %2216 = vmatprep.subr.mxu0 0.0
    %2217 = vmatpush1.msra.mxu0 0.0
    %2218 = vmatprep.subr.mxu0 0.0
    %2219 = vmatpush1.msra.mxu0 0.0
    %2220 = vmatprep.subr.mxu0 0.0
    %2221 = vmatpush1.msra.mxu0 0.0
    %2222 = vmatprep.subr.mxu0 0.0
    %2223 = vmatpush1.msra.mxu0 0.0
    %2224 = vmatprep.subr.mxu0 0.0
    %2225 = vmatpush1.msra.mxu0 0.0
    %2226 = vmatprep.subr.mxu0 0.0
    %2227 = vmatpush1.msra.mxu0 0.0
    %2228 = vmatprep.subr.mxu0 0.0
    %2229 = vmatpush1.msra.mxu0 0.0
    %2230 = vmatprep.subr.mxu0 0.0
    %2231 = vmatpush1.msra.mxu0 0.0
    %2232 = vmatprep.subr.mxu0 0.0
    %2233 = vmatpush1.msra.mxu0 0.0
    %2234 = vmatprep.subr.mxu0 0.0
    %2235 = vmatpush1.msra.mxu0 0.0
    %2236 = vmatprep.subr.mxu0 0.0
    %2237 = vmatpush1.msra.mxu0 %v2201
    %2238 = vmatprep.subr.mxu0 0.0
    %2239 = vmatpush2.msra.mxu0 0.0
    %2240 = vmatprep.subr.mxu0 0.0
    %2241 = vmatpush2.msra.mxu0 0.0
    %2242 = vmatprep.subr.mxu0 0.0
    %2243 = vmatpush2.msra.mxu0 0.0
    %2244 = vmatprep.subr.mxu0 0.0
    %2245 = vmatpush2.msra.mxu0 0.0
    %2246 = vmatprep.subr.mxu0 0.0
    %2247 = vmatpush2.msra.mxu0 0.0
    %2248 = vmatprep.subr.mxu0 0.0
    %2249 = vmatpush2.msra.mxu0 0.0
    %2250 = vmatprep.subr.mxu0 0.0
    %2251 = vmatpush2.msra.mxu0 0.0
    %2252 = vmatprep.subr.mxu0 0.0
    %2253 = vmatpush2.msra.mxu0 0.0
    %2254 = vmatprep.subr.mxu0 0.0
    %2255 = vmatpush2.msra.mxu0 0.0
    %2256 = vmatprep.subr.mxu0 0.0
    %2257 = vmatpush2.msra.mxu0 0.0
    %2258 = vmatprep.subr.mxu0 0.0
    %2259 = vmatpush2.msra.mxu0 0.0
    %2260 = vmatprep.subr.mxu0 0.0
    %2261 = vmatpush2.msra.mxu0 0.0
    %2262 = vmatprep.subr.mxu0 0.0
    %2263 = vmatpush2.msra.mxu0 0.0
    %2264 = vmatprep.subr.mxu0 0.0
    %2265 = vmatpush2.msra.mxu0 0.0
    %2266 = vmatprep.subr.mxu0 0.0
    %2267 = vmatpush2.msra.mxu0 0.0
    %2268 = vmatprep.subr.mxu0 0.0
    %2269 = vmatpush2.msra.mxu0 0.0
    %2270 = vmatprep.mubr.f32.mxu0 0.0
    %2271 = vmatmul.mubr.f32.gmra.mxu0 %v2204
    %v2272 = vpop.f32.mrf.mxu0
    %v2273 = vadd.f32 0.0, %v2272
    %v2274 = vpop.f32.mrf.mxu0
    %2275 = vdwg.mxu0
    %2276 = vrot.lane.b32.xlu0 %v432, 48
    %v2277 = vpop.permute.xlu0 %2276
    %2278 = vrot.lane.b32.xlu0 %v523, 48
    %v2279 = vpop.permute.xlu0 %2278
    %v2280 = vsel %vm622, %v2277, 0
    %v2282 = vsel %vm622, %v2279, 0
    %2284 = vmatprep.subr.mxu0 0.0
    %2285 = vmatpush1.xpose.msra.mxu0 0.0
    %2286 = vmatprep.subr.mxu0 0.0
    %2287 = vmatpush1.xpose.msra.mxu0 0.0
    %2288 = vmatprep.subr.mxu0 0.0
    %2289 = vmatpush1.xpose.msra.mxu0 0.0
    %2290 = vmatprep.subr.mxu0 0.0
    %2291 = vmatpush1.xpose.msra.mxu0 0.0
    %2292 = vmatprep.subr.mxu0 0.0
    %2293 = vmatpush1.xpose.msra.mxu0 0.0
    %2294 = vmatprep.subr.mxu0 0.0
    %2295 = vmatpush1.xpose.msra.mxu0 0.0
    %2296 = vmatprep.subr.mxu0 0.0
    %2297 = vmatpush1.xpose.msra.mxu0 0.0
    %2298 = vmatprep.subr.mxu0 0.0
    %2299 = vmatpush1.xpose.msra.mxu0 0.0
    %2300 = vmatprep.subr.mxu0 0.0
    %2301 = vmatpush1.xpose.msra.mxu0 0.0
    %2302 = vmatprep.subr.mxu0 0.0
    %2303 = vmatpush1.xpose.msra.mxu0 0.0
    %2304 = vmatprep.subr.mxu0 0.0
    %2305 = vmatpush1.xpose.msra.mxu0 0.0
    %2306 = vmatprep.subr.mxu0 0.0
    %2307 = vmatpush1.xpose.msra.mxu0 0.0
    %2308 = vmatprep.subr.mxu0 0.0
    %2309 = vmatpush1.xpose.msra.mxu0 0.0
    %2310 = vmatprep.subr.mxu0 0.0
    %2311 = vmatpush1.xpose.msra.mxu0 0.0
    %2312 = vmatprep.subr.mxu0 0.0
    %2313 = vmatpush1.xpose.msra.mxu0 0.0
    %2314 = vmatprep.subr.mxu0 0.0
    %2315 = vmatpush1.xpose.msra.mxu0 %v2282
    %2316 = vmatprep.subr.mxu0 0.0
    %2317 = vmatpush2.xpose.msra.mxu0 0.0
    %2318 = vmatprep.subr.mxu0 0.0
    %2319 = vmatpush2.xpose.msra.mxu0 0.0
    %2320 = vmatprep.subr.mxu0 0.0
    %2321 = vmatpush2.xpose.msra.mxu0 0.0
    %2322 = vmatprep.subr.mxu0 0.0
    %2323 = vmatpush2.xpose.msra.mxu0 0.0
    %2324 = vmatprep.subr.mxu0 0.0
    %2325 = vmatpush2.xpose.msra.mxu0 0.0
    %2326 = vmatprep.subr.mxu0 0.0
    %2327 = vmatpush2.xpose.msra.mxu0 0.0
    %2328 = vmatprep.subr.mxu0 0.0
    %2329 = vmatpush2.xpose.msra.mxu0 0.0
    %2330 = vmatprep.subr.mxu0 0.0
    %2331 = vmatpush2.xpose.msra.mxu0 0.0
    %2332 = vmatprep.subr.mxu0 0.0
    %2333 = vmatpush2.xpose.msra.mxu0 0.0
    %2334 = vmatprep.subr.mxu0 0.0
    %2335 = vmatpush2.xpose.msra.mxu0 0.0
    %2336 = vmatprep.subr.mxu0 0.0
    %2337 = vmatpush2.xpose.msra.mxu0 0.0
    %2338 = vmatprep.subr.mxu0 0.0
    %2339 = vmatpush2.xpose.msra.mxu0 0.0
    %2340 = vmatprep.subr.mxu0 0.0
    %2341 = vmatpush2.xpose.msra.mxu0 0.0
    %2342 = vmatprep.subr.mxu0 0.0
    %2343 = vmatpush2.xpose.msra.mxu0 0.0
    %2344 = vmatprep.subr.mxu0 0.0
    %2345 = vmatpush2.xpose.msra.mxu0 0.0
    %2346 = vmatprep.subr.mxu0 0.0
    %2347 = vmatpush2.xpose.msra.mxu0 0.0
    %2348 = vmatprep.mubr.f32.mxu0 0.0
    %2349 = vmatmul.mubr.f32.gmra.mxu0 %v2280
    %v2350 = vpop.f32.mrf.mxu0
    %v2351 = vadd.f32 0.0, %v2350
    %v2352 = vpop.f32.mrf.mxu0
    %2353 = vdwg.mxu0
    %2354 = vrot.lane.b32.xlu0 %v437, 48
    %v2355 = vpop.permute.xlu0 %2354
    %2356 = vrot.lane.b32.xlu0 %v528, 48
    %v2357 = vpop.permute.xlu0 %2356
    %v2358 = vsel %vm622, %v2355, 0
    %v2360 = vsel %vm622, %v2357, 0
    %2362 = vmatprep.subr.mxu0 0.0
    %2363 = vmatpush1.xpose.msra.mxu0 0.0
    %2364 = vmatprep.subr.mxu0 0.0
    %2365 = vmatpush1.xpose.msra.mxu0 0.0
    %2366 = vmatprep.subr.mxu0 0.0
    %2367 = vmatpush1.xpose.msra.mxu0 0.0
    %2368 = vmatprep.subr.mxu0 0.0
    %2369 = vmatpush1.xpose.msra.mxu0 0.0
    %2370 = vmatprep.subr.mxu0 0.0
    %2371 = vmatpush1.xpose.msra.mxu0 0.0
    %2372 = vmatprep.subr.mxu0 0.0
    %2373 = vmatpush1.xpose.msra.mxu0 0.0
    %2374 = vmatprep.subr.mxu0 0.0
    %2375 = vmatpush1.xpose.msra.mxu0 0.0
    %2376 = vmatprep.subr.mxu0 0.0
    %2377 = vmatpush1.xpose.msra.mxu0 0.0
    %2378 = vmatprep.subr.mxu0 0.0
    %2379 = vmatpush1.xpose.msra.mxu0 0.0
    %2380 = vmatprep.subr.mxu0 0.0
    %2381 = vmatpush1.xpose.msra.mxu0 0.0
    %2382 = vmatprep.subr.mxu0 0.0
    %2383 = vmatpush1.xpose.msra.mxu0 0.0
    %2384 = vmatprep.subr.mxu0 0.0
    %2385 = vmatpush1.xpose.msra.mxu0 0.0
    %2386 = vmatprep.subr.mxu0 0.0
    %2387 = vmatpush1.xpose.msra.mxu0 0.0
    %2388 = vmatprep.subr.mxu0 0.0
    %2389 = vmatpush1.xpose.msra.mxu0 0.0
    %2390 = vmatprep.subr.mxu0 0.0
    %2391 = vmatpush1.xpose.msra.mxu0 0.0
    %2392 = vmatprep.subr.mxu0 0.0
    %2393 = vmatpush1.xpose.msra.mxu0 %v2360
    %2394 = vmatprep.subr.mxu0 0.0
    %2395 = vmatpush2.xpose.msra.mxu0 0.0
    %2396 = vmatprep.subr.mxu0 0.0
    %2397 = vmatpush2.xpose.msra.mxu0 0.0
    %2398 = vmatprep.subr.mxu0 0.0
    %2399 = vmatpush2.xpose.msra.mxu0 0.0
    %2400 = vmatprep.subr.mxu0 0.0
    %2401 = vmatpush2.xpose.msra.mxu0 0.0
    %2402 = vmatprep.subr.mxu0 0.0
    %2403 = vmatpush2.xpose.msra.mxu0 0.0
    %2404 = vmatprep.subr.mxu0 0.0
    %2405 = vmatpush2.xpose.msra.mxu0 0.0
    %2406 = vmatprep.subr.mxu0 0.0
    %2407 = vmatpush2.xpose.msra.mxu0 0.0
    %2408 = vmatprep.subr.mxu0 0.0
    %2409 = vmatpush2.xpose.msra.mxu0 0.0
    %2410 = vmatprep.subr.mxu0 0.0
    %2411 = vmatpush2.xpose.msra.mxu0 0.0
    %2412 = vmatprep.subr.mxu0 0.0
    %2413 = vmatpush2.xpose.msra.mxu0 0.0
    %2414 = vmatprep.subr.mxu0 0.0
    %2415 = vmatpush2.xpose.msra.mxu0 0.0
    %2416 = vmatprep.subr.mxu0 0.0
    %2417 = vmatpush2.xpose.msra.mxu0 0.0
    %2418 = vmatprep.subr.mxu0 0.0
    %2419 = vmatpush2.xpose.msra.mxu0 0.0
    %2420 = vmatprep.subr.mxu0 0.0
    %2421 = vmatpush2.xpose.msra.mxu0 0.0
    %2422 = vmatprep.subr.mxu0 0.0
    %2423 = vmatpush2.xpose.msra.mxu0 0.0
    %2424 = vmatprep.subr.mxu0 0.0
    %2425 = vmatpush2.xpose.msra.mxu0 0.0
    %2426 = vmatprep.mubr.f32.mxu0 0.0
    %2427 = vmatmul.mubr.f32.gmra.mxu0 %v2358
    %v2428 = vpop.f32.mrf.mxu0
    %v2429 = vadd.f32 0.0, %v2428
    %v2430 = vpop.f32.mrf.mxu0
    %2431 = vdwg.mxu0
    %v2432 = vmul.f32 %v2351, 0.25
    %v2433 = vmul.f32 %v2429, 0.25
    %v2434 = vsel %vm777, %v2432, -inf
    %2435 = vmax.xlane.f32.xlu0 %v2434
    %v2436 = vpop.xlane.xlu0 %2435
    %v2437 = vsel %vm777, %v2433, -inf
    %2438 = vmax.xlane.f32.xlu0 %v2437
    %v2439 = vpop.xlane.xlu0 %2438
    %v2440 = vsub.f32 %v2432, %v2436
    %v2441 = vsub.f32 %v2433, %v2439
    %v2442 = vmul.f32 %v2440, 1.442695
    %v2443 = vpow.pop %v2442
    %v2444 = vmul.f32 %v2441, 1.442695
    %v2445 = vpow.pop %v2444
    %v2446 = vsel %vm777, %v2443, 0.0
    %2447 = vadd.xlane.f32.xlu0 %v2446
    %v2448 = vpop.xlane.xlu0 %2447
    %v2449 = vsel %vm777, %v2445, 0.0
    %2450 = vadd.xlane.f32.xlu0 %v2449
    %v2451 = vpop.xlane.xlu0 %2450
    %v2452 = vrcp.pop %v2448
    %v2453 = vrcp.pop %v2451
    %v2454 = vmul.f32 %v2443, %v2452
    %v2455 = vmul.f32 %v2445, %v2453
    %2456 = vrot.lane.b32.xlu0 %v614, 48
    %v2457 = vpop.permute.xlu0 %2456
    %v2460 = vsel %vm777, %v2454, 0
    %2462 = vmatprep.subr.mxu0 0.0
    %2463 = vmatpush1.msra.mxu0 0.0
    %2464 = vmatprep.subr.mxu0 0.0
    %2465 = vmatpush1.msra.mxu0 0.0
    %2466 = vmatprep.subr.mxu0 0.0
    %2467 = vmatpush1.msra.mxu0 0.0
    %2468 = vmatprep.subr.mxu0 0.0
    %2469 = vmatpush1.msra.mxu0 0.0
    %2470 = vmatprep.subr.mxu0 0.0
    %2471 = vmatpush1.msra.mxu0 0.0
    %2472 = vmatprep.subr.mxu0 0.0
    %2473 = vmatpush1.msra.mxu0 0.0
    %2474 = vmatprep.subr.mxu0 0.0
    %2475 = vmatpush1.msra.mxu0 0.0
    %2476 = vmatprep.subr.mxu0 0.0
    %2477 = vmatpush1.msra.mxu0 0.0
    %2478 = vmatprep.subr.mxu0 0.0
    %2479 = vmatpush1.msra.mxu0 0.0
    %2480 = vmatprep.subr.mxu0 0.0
    %2481 = vmatpush1.msra.mxu0 0.0
    %2482 = vmatprep.subr.mxu0 0.0
    %2483 = vmatpush1.msra.mxu0 0.0
    %2484 = vmatprep.subr.mxu0 0.0
    %2485 = vmatpush1.msra.mxu0 0.0
    %2486 = vmatprep.subr.mxu0 0.0
    %2487 = vmatpush1.msra.mxu0 0.0
    %2488 = vmatprep.subr.mxu0 0.0
    %2489 = vmatpush1.msra.mxu0 0.0
    %2490 = vmatprep.subr.mxu0 0.0
    %2491 = vmatpush1.msra.mxu0 0.0
    %2492 = vmatprep.subr.mxu0 0.0
    %2493 = vmatpush1.msra.mxu0 %v2457
    %2494 = vmatprep.subr.mxu0 0.0
    %2495 = vmatpush2.msra.mxu0 0.0
    %2496 = vmatprep.subr.mxu0 0.0
    %2497 = vmatpush2.msra.mxu0 0.0
    %2498 = vmatprep.subr.mxu0 0.0
    %2499 = vmatpush2.msra.mxu0 0.0
    %2500 = vmatprep.subr.mxu0 0.0
    %2501 = vmatpush2.msra.mxu0 0.0
    %2502 = vmatprep.subr.mxu0 0.0
    %2503 = vmatpush2.msra.mxu0 0.0
    %2504 = vmatprep.subr.mxu0 0.0
    %2505 = vmatpush2.msra.mxu0 0.0
    %2506 = vmatprep.subr.mxu0 0.0
    %2507 = vmatpush2.msra.mxu0 0.0
    %2508 = vmatprep.subr.mxu0 0.0
    %2509 = vmatpush2.msra.mxu0 0.0
    %2510 = vmatprep.subr.mxu0 0.0
    %2511 = vmatpush2.msra.mxu0 0.0
    %2512 = vmatprep.subr.mxu0 0.0
    %2513 = vmatpush2.msra.mxu0 0.0
    %2514 = vmatprep.subr.mxu0 0.0
    %2515 = vmatpush2.msra.mxu0 0.0
    %2516 = vmatprep.subr.mxu0 0.0
    %2517 = vmatpush2.msra.mxu0 0.0
    %2518 = vmatprep.subr.mxu0 0.0
    %2519 = vmatpush2.msra.mxu0 0.0
    %2520 = vmatprep.subr.mxu0 0.0
    %2521 = vmatpush2.msra.mxu0 0.0
    %2522 = vmatprep.subr.mxu0 0.0
    %2523 = vmatpush2.msra.mxu0 0.0
    %2524 = vmatprep.subr.mxu0 0.0
    %2525 = vmatpush2.msra.mxu0 0.0
    %2526 = vmatprep.mubr.f32.mxu0 0.0
    %2527 = vmatmul.mubr.f32.gmra.mxu0 %v2460
    %v2528 = vpop.f32.mrf.mxu0
    %v2529 = vadd.f32 0.0, %v2528
    %v2530 = vpop.f32.mrf.mxu0
    %2531 = vdwg.mxu0
    %2532 = vrot.lane.b32.xlu0 %v619, 48
    %v2533 = vpop.permute.xlu0 %2532
    %v2536 = vsel %vm777, %v2455, 0
    %2538 = vmatprep.subr.mxu0 0.0
    %2539 = vmatpush1.msra.mxu0 0.0
    %2540 = vmatprep.subr.mxu0 0.0
    %2541 = vmatpush1.msra.mxu0 0.0
    %2542 = vmatprep.subr.mxu0 0.0
    %2543 = vmatpush1.msra.mxu0 0.0
    %2544 = vmatprep.subr.mxu0 0.0
    %2545 = vmatpush1.msra.mxu0 0.0
    %2546 = vmatprep.subr.mxu0 0.0
    %2547 = vmatpush1.msra.mxu0 0.0
    %2548 = vmatprep.subr.mxu0 0.0
    %2549 = vmatpush1.msra.mxu0 0.0
    %2550 = vmatprep.subr.mxu0 0.0
    %2551 = vmatpush1.msra.mxu0 0.0
    %2552 = vmatprep.subr.mxu0 0.0
    %2553 = vmatpush1.msra.mxu0 0.0
    %2554 = vmatprep.subr.mxu0 0.0
    %2555 = vmatpush1.msra.mxu0 0.0
    %2556 = vmatprep.subr.mxu0 0.0
    %2557 = vmatpush1.msra.mxu0 0.0
    %2558 = vmatprep.subr.mxu0 0.0
    %2559 = vmatpush1.msra.mxu0 0.0
    %2560 = vmatprep.subr.mxu0 0.0
    %2561 = vmatpush1.msra.mxu0 0.0
    %2562 = vmatprep.subr.mxu0 0.0
    %2563 = vmatpush1.msra.mxu0 0.0
    %2564 = vmatprep.subr.mxu0 0.0
    %2565 = vmatpush1.msra.mxu0 0.0
    %2566 = vmatprep.subr.mxu0 0.0
    %2567 = vmatpush1.msra.mxu0 0.0
    %2568 = vmatprep.subr.mxu0 0.0
    %2569 = vmatpush1.msra.mxu0 %v2533
    %2570 = vmatprep.subr.mxu0 0.0
    %2571 = vmatpush2.msra.mxu0 0.0
    %2572 = vmatprep.subr.mxu0 0.0
    %2573 = vmatpush2.msra.mxu0 0.0
    %2574 = vmatprep.subr.mxu0 0.0
    %2575 = vmatpush2.msra.mxu0 0.0
    %2576 = vmatprep.subr.mxu0 0.0
    %2577 = vmatpush2.msra.mxu0 0.0
    %2578 = vmatprep.subr.mxu0 0.0
    %2579 = vmatpush2.msra.mxu0 0.0
    %2580 = vmatprep.subr.mxu0 0.0
    %2581 = vmatpush2.msra.mxu0 0.0
    %2582 = vmatprep.subr.mxu0 0.0
    %2583 = vmatpush2.msra.mxu0 0.0
    %2584 = vmatprep.subr.mxu0 0.0
    %2585 = vmatpush2.msra.mxu0 0.0
    %2586 = vmatprep.subr.mxu0 0.0
    %2587 = vmatpush2.msra.mxu0 0.0
    %2588 = vmatprep.subr.mxu0 0.0
    %2589 = vmatpush2.msra.mxu0 0.0
    %2590 = vmatprep.subr.mxu0 0.0
    %2591 = vmatpush2.msra.mxu0 0.0
    %2592 = vmatprep.subr.mxu0 0.0
    %2593 = vmatpush2.msra.mxu0 0.0
    %2594 = vmatprep.subr.mxu0 0.0
    %2595 = vmatpush2.msra.mxu0 0.0
    %2596 = vmatprep.subr.mxu0 0.0
    %2597 = vmatpush2.msra.mxu0 0.0
    %2598 = vmatprep.subr.mxu0 0.0
    %2599 = vmatpush2.msra.mxu0 0.0
    %2600 = vmatprep.subr.mxu0 0.0
    %2601 = vmatpush2.msra.mxu0 0.0
    %2602 = vmatprep.mubr.f32.mxu0 0.0
    %2603 = vmatmul.mubr.f32.gmra.mxu0 %v2536
    %v2604 = vpop.f32.mrf.mxu0
    %v2605 = vadd.f32 0.0, %v2604
    %v2606 = vpop.f32.mrf.mxu0
    %2607 = vdwg.mxu0
    %2608 = vrot.lane.b32.xlu0 %v432, 32
    %v2609 = vpop.permute.xlu0 %2608
    %2610 = vrot.lane.b32.xlu0 %v523, 32
    %v2611 = vpop.permute.xlu0 %2610
    %v2612 = vsel %vm622, %v2609, 0
    %v2614 = vsel %vm622, %v2611, 0
    %2616 = vmatprep.subr.mxu0 0.0
    %2617 = vmatpush1.xpose.msra.mxu0 0.0
    %2618 = vmatprep.subr.mxu0 0.0
    %2619 = vmatpush1.xpose.msra.mxu0 0.0
    %2620 = vmatprep.subr.mxu0 0.0
    %2621 = vmatpush1.xpose.msra.mxu0 0.0
    %2622 = vmatprep.subr.mxu0 0.0
    %2623 = vmatpush1.xpose.msra.mxu0 0.0
    %2624 = vmatprep.subr.mxu0 0.0
    %2625 = vmatpush1.xpose.msra.mxu0 0.0
    %2626 = vmatprep.subr.mxu0 0.0
    %2627 = vmatpush1.xpose.msra.mxu0 0.0
    %2628 = vmatprep.subr.mxu0 0.0
    %2629 = vmatpush1.xpose.msra.mxu0 0.0
    %2630 = vmatprep.subr.mxu0 0.0
    %2631 = vmatpush1.xpose.msra.mxu0 0.0
    %2632 = vmatprep.subr.mxu0 0.0
    %2633 = vmatpush1.xpose.msra.mxu0 0.0
    %2634 = vmatprep.subr.mxu0 0.0
    %2635 = vmatpush1.xpose.msra.mxu0 0.0
    %2636 = vmatprep.subr.mxu0 0.0
    %2637 = vmatpush1.xpose.msra.mxu0 0.0
    %2638 = vmatprep.subr.mxu0 0.0
    %2639 = vmatpush1.xpose.msra.mxu0 0.0
    %2640 = vmatprep.subr.mxu0 0.0
    %2641 = vmatpush1.xpose.msra.mxu0 0.0
    %2642 = vmatprep.subr.mxu0 0.0
    %2643 = vmatpush1.xpose.msra.mxu0 0.0
    %2644 = vmatprep.subr.mxu0 0.0
    %2645 = vmatpush1.xpose.msra.mxu0 0.0
    %2646 = vmatprep.subr.mxu0 0.0
    %2647 = vmatpush1.xpose.msra.mxu0 %v2614
    %2648 = vmatprep.subr.mxu0 0.0
    %2649 = vmatpush2.xpose.msra.mxu0 0.0
    %2650 = vmatprep.subr.mxu0 0.0
    %2651 = vmatpush2.xpose.msra.mxu0 0.0
    %2652 = vmatprep.subr.mxu0 0.0
    %2653 = vmatpush2.xpose.msra.mxu0 0.0
    %2654 = vmatprep.subr.mxu0 0.0
    %2655 = vmatpush2.xpose.msra.mxu0 0.0
    %2656 = vmatprep.subr.mxu0 0.0
    %2657 = vmatpush2.xpose.msra.mxu0 0.0
    %2658 = vmatprep.subr.mxu0 0.0
    %2659 = vmatpush2.xpose.msra.mxu0 0.0
    %2660 = vmatprep.subr.mxu0 0.0
    %2661 = vmatpush2.xpose.msra.mxu0 0.0
    %2662 = vmatprep.subr.mxu0 0.0
    %2663 = vmatpush2.xpose.msra.mxu0 0.0
    %2664 = vmatprep.subr.mxu0 0.0
    %2665 = vmatpush2.xpose.msra.mxu0 0.0
    %2666 = vmatprep.subr.mxu0 0.0
    %2667 = vmatpush2.xpose.msra.mxu0 0.0
    %2668 = vmatprep.subr.mxu0 0.0
    %2669 = vmatpush2.xpose.msra.mxu0 0.0
    %2670 = vmatprep.subr.mxu0 0.0
    %2671 = vmatpush2.xpose.msra.mxu0 0.0
    %2672 = vmatprep.subr.mxu0 0.0
    %2673 = vmatpush2.xpose.msra.mxu0 0.0
    %2674 = vmatprep.subr.mxu0 0.0
    %2675 = vmatpush2.xpose.msra.mxu0 0.0
    %2676 = vmatprep.subr.mxu0 0.0
    %2677 = vmatpush2.xpose.msra.mxu0 0.0
    %2678 = vmatprep.subr.mxu0 0.0
    %2679 = vmatpush2.xpose.msra.mxu0 0.0
    %2680 = vmatprep.mubr.f32.mxu0 0.0
    %2681 = vmatmul.mubr.f32.gmra.mxu0 %v2612
    %v2682 = vpop.f32.mrf.mxu0
    %v2683 = vadd.f32 0.0, %v2682
    %v2684 = vpop.f32.mrf.mxu0
    %2685 = vdwg.mxu0
    %2686 = vrot.lane.b32.xlu0 %v437, 32
    %v2687 = vpop.permute.xlu0 %2686
    %2688 = vrot.lane.b32.xlu0 %v528, 32
    %v2689 = vpop.permute.xlu0 %2688
    %v2690 = vsel %vm622, %v2687, 0
    %v2692 = vsel %vm622, %v2689, 0
    %2694 = vmatprep.subr.mxu0 0.0
    %2695 = vmatpush1.xpose.msra.mxu0 0.0
    %2696 = vmatprep.subr.mxu0 0.0
    %2697 = vmatpush1.xpose.msra.mxu0 0.0
    %2698 = vmatprep.subr.mxu0 0.0
    %2699 = vmatpush1.xpose.msra.mxu0 0.0
    %2700 = vmatprep.subr.mxu0 0.0
    %2701 = vmatpush1.xpose.msra.mxu0 0.0
    %2702 = vmatprep.subr.mxu0 0.0
    %2703 = vmatpush1.xpose.msra.mxu0 0.0
    %2704 = vmatprep.subr.mxu0 0.0
    %2705 = vmatpush1.xpose.msra.mxu0 0.0
    %2706 = vmatprep.subr.mxu0 0.0
    %2707 = vmatpush1.xpose.msra.mxu0 0.0
    %2708 = vmatprep.subr.mxu0 0.0
    %2709 = vmatpush1.xpose.msra.mxu0 0.0
    %2710 = vmatprep.subr.mxu0 0.0
    %2711 = vmatpush1.xpose.msra.mxu0 0.0
    %2712 = vmatprep.subr.mxu0 0.0
    %2713 = vmatpush1.xpose.msra.mxu0 0.0
    %2714 = vmatprep.subr.mxu0 0.0
    %2715 = vmatpush1.xpose.msra.mxu0 0.0
    %2716 = vmatprep.subr.mxu0 0.0
    %2717 = vmatpush1.xpose.msra.mxu0 0.0
    %2718 = vmatprep.subr.mxu0 0.0
    %2719 = vmatpush1.xpose.msra.mxu0 0.0
    %2720 = vmatprep.subr.mxu0 0.0
    %2721 = vmatpush1.xpose.msra.mxu0 0.0
    %2722 = vmatprep.subr.mxu0 0.0
    %2723 = vmatpush1.xpose.msra.mxu0 0.0
    %2724 = vmatprep.subr.mxu0 0.0
    %2725 = vmatpush1.xpose.msra.mxu0 %v2692
    %2726 = vmatprep.subr.mxu0 0.0
    %2727 = vmatpush2.xpose.msra.mxu0 0.0
    %2728 = vmatprep.subr.mxu0 0.0
    %2729 = vmatpush2.xpose.msra.mxu0 0.0
    %2730 = vmatprep.subr.mxu0 0.0
    %2731 = vmatpush2.xpose.msra.mxu0 0.0
    %2732 = vmatprep.subr.mxu0 0.0
    %2733 = vmatpush2.xpose.msra.mxu0 0.0
    %2734 = vmatprep.subr.mxu0 0.0
    %2735 = vmatpush2.xpose.msra.mxu0 0.0
    %2736 = vmatprep.subr.mxu0 0.0
    %2737 = vmatpush2.xpose.msra.mxu0 0.0
    %2738 = vmatprep.subr.mxu0 0.0
    %2739 = vmatpush2.xpose.msra.mxu0 0.0
    %2740 = vmatprep.subr.mxu0 0.0
    %2741 = vmatpush2.xpose.msra.mxu0 0.0
    %2742 = vmatprep.subr.mxu0 0.0
    %2743 = vmatpush2.xpose.msra.mxu0 0.0
    %2744 = vmatprep.subr.mxu0 0.0
    %2745 = vmatpush2.xpose.msra.mxu0 0.0
    %2746 = vmatprep.subr.mxu0 0.0
    %2747 = vmatpush2.xpose.msra.mxu0 0.0
    %2748 = vmatprep.subr.mxu0 0.0
    %2749 = vmatpush2.xpose.msra.mxu0 0.0
    %2750 = vmatprep.subr.mxu0 0.0
    %2751 = vmatpush2.xpose.msra.mxu0 0.0
    %2752 = vmatprep.subr.mxu0 0.0
    %2753 = vmatpush2.xpose.msra.mxu0 0.0
    %2754 = vmatprep.subr.mxu0 0.0
    %2755 = vmatpush2.xpose.msra.mxu0 0.0
    %2756 = vmatprep.subr.mxu0 0.0
    %2757 = vmatpush2.xpose.msra.mxu0 0.0
    %2758 = vmatprep.mubr.f32.mxu0 0.0
    %2759 = vmatmul.mubr.f32.gmra.mxu0 %v2690
    %v2760 = vpop.f32.mrf.mxu0
    %v2761 = vadd.f32 0.0, %v2760
    %v2762 = vpop.f32.mrf.mxu0
    %2763 = vdwg.mxu0
    %v2764 = vmul.f32 %v2683, 0.25
    %v2765 = vmul.f32 %v2761, 0.25
    %v2766 = vsel %vm777, %v2764, -inf
    %2767 = vmax.xlane.f32.xlu0 %v2766
    %v2768 = vpop.xlane.xlu0 %2767
    %v2769 = vsel %vm777, %v2765, -inf
    %2770 = vmax.xlane.f32.xlu0 %v2769
    %v2771 = vpop.xlane.xlu0 %2770
    %v2772 = vsub.f32 %v2764, %v2768
    %v2773 = vsub.f32 %v2765, %v2771
    %v2774 = vmul.f32 %v2772, 1.442695
    %v2775 = vpow.pop %v2774
    %v2776 = vmul.f32 %v2773, 1.442695
    %v2777 = vpow.pop %v2776
    %v2778 = vsel %vm777, %v2775, 0.0
    %2779 = vadd.xlane.f32.xlu0 %v2778
    %v2780 = vpop.xlane.xlu0 %2779
    %v2781 = vsel %vm777, %v2777, 0.0
    %2782 = vadd.xlane.f32.xlu0 %v2781
    %v2783 = vpop.xlane.xlu0 %2782
    %v2784 = vrcp.pop %v2780
    %v2785 = vrcp.pop %v2783
    %v2786 = vmul.f32 %v2775, %v2784
    %v2787 = vmul.f32 %v2777, %v2785
    %2788 = vrot.lane.b32.xlu0 %v614, 32
    %v2789 = vpop.permute.xlu0 %2788
    %v2792 = vsel %vm777, %v2786, 0
    %2794 = vmatprep.subr.mxu0 0.0
    %2795 = vmatpush1.msra.mxu0 0.0
    %2796 = vmatprep.subr.mxu0 0.0
    %2797 = vmatpush1.msra.mxu0 0.0
    %2798 = vmatprep.subr.mxu0 0.0
    %2799 = vmatpush1.msra.mxu0 0.0
    %2800 = vmatprep.subr.mxu0 0.0
    %2801 = vmatpush1.msra.mxu0 0.0
    %2802 = vmatprep.subr.mxu0 0.0
    %2803 = vmatpush1.msra.mxu0 0.0
    %2804 = vmatprep.subr.mxu0 0.0
    %2805 = vmatpush1.msra.mxu0 0.0
    %2806 = vmatprep.subr.mxu0 0.0
    %2807 = vmatpush1.msra.mxu0 0.0
    %2808 = vmatprep.subr.mxu0 0.0
    %2809 = vmatpush1.msra.mxu0 0.0
    %2810 = vmatprep.subr.mxu0 0.0
    %2811 = vmatpush1.msra.mxu0 0.0
    %2812 = vmatprep.subr.mxu0 0.0
    %2813 = vmatpush1.msra.mxu0 0.0
    %2814 = vmatprep.subr.mxu0 0.0
    %2815 = vmatpush1.msra.mxu0 0.0
    %2816 = vmatprep.subr.mxu0 0.0
    %2817 = vmatpush1.msra.mxu0 0.0
    %2818 = vmatprep.subr.mxu0 0.0
    %2819 = vmatpush1.msra.mxu0 0.0
    %2820 = vmatprep.subr.mxu0 0.0
    %2821 = vmatpush1.msra.mxu0 0.0
    %2822 = vmatprep.subr.mxu0 0.0
    %2823 = vmatpush1.msra.mxu0 0.0
    %2824 = vmatprep.subr.mxu0 0.0
    %2825 = vmatpush1.msra.mxu0 %v2789
    %2826 = vmatprep.subr.mxu0 0.0
    %2827 = vmatpush2.msra.mxu0 0.0
    %2828 = vmatprep.subr.mxu0 0.0
    %2829 = vmatpush2.msra.mxu0 0.0
    %2830 = vmatprep.subr.mxu0 0.0
    %2831 = vmatpush2.msra.mxu0 0.0
    %2832 = vmatprep.subr.mxu0 0.0
    %2833 = vmatpush2.msra.mxu0 0.0
    %2834 = vmatprep.subr.mxu0 0.0
    %2835 = vmatpush2.msra.mxu0 0.0
    %2836 = vmatprep.subr.mxu0 0.0
    %2837 = vmatpush2.msra.mxu0 0.0
    %2838 = vmatprep.subr.mxu0 0.0
    %2839 = vmatpush2.msra.mxu0 0.0
    %2840 = vmatprep.subr.mxu0 0.0
    %2841 = vmatpush2.msra.mxu0 0.0
    %2842 = vmatprep.subr.mxu0 0.0
    %2843 = vmatpush2.msra.mxu0 0.0
    %2844 = vmatprep.subr.mxu0 0.0
    %2845 = vmatpush2.msra.mxu0 0.0
    %2846 = vmatprep.subr.mxu0 0.0
    %2847 = vmatpush2.msra.mxu0 0.0
    %2848 = vmatprep.subr.mxu0 0.0
    %2849 = vmatpush2.msra.mxu0 0.0
    %2850 = vmatprep.subr.mxu0 0.0
    %2851 = vmatpush2.msra.mxu0 0.0
    %2852 = vmatprep.subr.mxu0 0.0
    %2853 = vmatpush2.msra.mxu0 0.0
    %2854 = vmatprep.subr.mxu0 0.0
    %2855 = vmatpush2.msra.mxu0 0.0
    %2856 = vmatprep.subr.mxu0 0.0
    %2857 = vmatpush2.msra.mxu0 0.0
    %2858 = vmatprep.mubr.f32.mxu0 0.0
    %2859 = vmatmul.mubr.f32.gmra.mxu0 %v2792
    %v2860 = vpop.f32.mrf.mxu0
    %v2861 = vadd.f32 0.0, %v2860
    %v2862 = vpop.f32.mrf.mxu0
    %2863 = vdwg.mxu0
    %2864 = vrot.lane.b32.xlu0 %v619, 32
    %v2865 = vpop.permute.xlu0 %2864
    %v2868 = vsel %vm777, %v2787, 0
    %2870 = vmatprep.subr.mxu0 0.0
    %2871 = vmatpush1.msra.mxu0 0.0
    %2872 = vmatprep.subr.mxu0 0.0
    %2873 = vmatpush1.msra.mxu0 0.0
    %2874 = vmatprep.subr.mxu0 0.0
    %2875 = vmatpush1.msra.mxu0 0.0
    %2876 = vmatprep.subr.mxu0 0.0
    %2877 = vmatpush1.msra.mxu0 0.0
    %2878 = vmatprep.subr.mxu0 0.0
    %2879 = vmatpush1.msra.mxu0 0.0
    %2880 = vmatprep.subr.mxu0 0.0
    %2881 = vmatpush1.msra.mxu0 0.0
    %2882 = vmatprep.subr.mxu0 0.0
    %2883 = vmatpush1.msra.mxu0 0.0
    %2884 = vmatprep.subr.mxu0 0.0
    %2885 = vmatpush1.msra.mxu0 0.0
    %2886 = vmatprep.subr.mxu0 0.0
    %2887 = vmatpush1.msra.mxu0 0.0
    %2888 = vmatprep.subr.mxu0 0.0
    %2889 = vmatpush1.msra.mxu0 0.0
    %2890 = vmatprep.subr.mxu0 0.0
    %2891 = vmatpush1.msra.mxu0 0.0
    %2892 = vmatprep.subr.mxu0 0.0
    %2893 = vmatpush1.msra.mxu0 0.0
    %2894 = vmatprep.subr.mxu0 0.0
    %2895 = vmatpush1.msra.mxu0 0.0
    %2896 = vmatprep.subr.mxu0 0.0
    %2897 = vmatpush1.msra.mxu0 0.0
    %2898 = vmatprep.subr.mxu0 0.0
    %2899 = vmatpush1.msra.mxu0 0.0
    %2900 = vmatprep.subr.mxu0 0.0
    %2901 = vmatpush1.msra.mxu0 %v2865
    %2902 = vmatprep.subr.mxu0 0.0
    %2903 = vmatpush2.msra.mxu0 0.0
    %2904 = vmatprep.subr.mxu0 0.0
    %2905 = vmatpush2.msra.mxu0 0.0
    %2906 = vmatprep.subr.mxu0 0.0
    %2907 = vmatpush2.msra.mxu0 0.0
    %2908 = vmatprep.subr.mxu0 0.0
    %2909 = vmatpush2.msra.mxu0 0.0
    %2910 = vmatprep.subr.mxu0 0.0
    %2911 = vmatpush2.msra.mxu0 0.0
    %2912 = vmatprep.subr.mxu0 0.0
    %2913 = vmatpush2.msra.mxu0 0.0
    %2914 = vmatprep.subr.mxu0 0.0
    %2915 = vmatpush2.msra.mxu0 0.0
    %2916 = vmatprep.subr.mxu0 0.0
    %2917 = vmatpush2.msra.mxu0 0.0
    %2918 = vmatprep.subr.mxu0 0.0
    %2919 = vmatpush2.msra.mxu0 0.0
    %2920 = vmatprep.subr.mxu0 0.0
    %2921 = vmatpush2.msra.mxu0 0.0
    %2922 = vmatprep.subr.mxu0 0.0
    %2923 = vmatpush2.msra.mxu0 0.0
    %2924 = vmatprep.subr.mxu0 0.0
    %2925 = vmatpush2.msra.mxu0 0.0
    %2926 = vmatprep.subr.mxu0 0.0
    %2927 = vmatpush2.msra.mxu0 0.0
    %2928 = vmatprep.subr.mxu0 0.0
    %2929 = vmatpush2.msra.mxu0 0.0
    %2930 = vmatprep.subr.mxu0 0.0
    %2931 = vmatpush2.msra.mxu0 0.0
    %2932 = vmatprep.subr.mxu0 0.0
    %2933 = vmatpush2.msra.mxu0 0.0
    %2934 = vmatprep.mubr.f32.mxu0 0.0
    %2935 = vmatmul.mubr.f32.gmra.mxu0 %v2868
    %v2936 = vpop.f32.mrf.mxu0
    %v2937 = vadd.f32 0.0, %v2936
    %v2938 = vpop.f32.mrf.mxu0
    %2939 = vdwg.mxu0
    %2940 = vrot.lane.b32.xlu0 %v432, 16
    %v2941 = vpop.permute.xlu0 %2940
    %2942 = vrot.lane.b32.xlu0 %v523, 16
    %v2943 = vpop.permute.xlu0 %2942
    %v2944 = vsel %vm622, %v2941, 0
    %v2946 = vsel %vm622, %v2943, 0
    %2948 = vmatprep.subr.mxu0 0.0
    %2949 = vmatpush1.xpose.msra.mxu0 0.0
    %2950 = vmatprep.subr.mxu0 0.0
    %2951 = vmatpush1.xpose.msra.mxu0 0.0
    %2952 = vmatprep.subr.mxu0 0.0
    %2953 = vmatpush1.xpose.msra.mxu0 0.0
    %2954 = vmatprep.subr.mxu0 0.0
    %2955 = vmatpush1.xpose.msra.mxu0 0.0
    %2956 = vmatprep.subr.mxu0 0.0
    %2957 = vmatpush1.xpose.msra.mxu0 0.0
    %2958 = vmatprep.subr.mxu0 0.0
    %2959 = vmatpush1.xpose.msra.mxu0 0.0
    %2960 = vmatprep.subr.mxu0 0.0
    %2961 = vmatpush1.xpose.msra.mxu0 0.0
    %2962 = vmatprep.subr.mxu0 0.0
    %2963 = vmatpush1.xpose.msra.mxu0 0.0
    %2964 = vmatprep.subr.mxu0 0.0
    %2965 = vmatpush1.xpose.msra.mxu0 0.0
    %2966 = vmatprep.subr.mxu0 0.0
    %2967 = vmatpush1.xpose.msra.mxu0 0.0
    %2968 = vmatprep.subr.mxu0 0.0
    %2969 = vmatpush1.xpose.msra.mxu0 0.0
    %2970 = vmatprep.subr.mxu0 0.0
    %2971 = vmatpush1.xpose.msra.mxu0 0.0
    %2972 = vmatprep.subr.mxu0 0.0
    %2973 = vmatpush1.xpose.msra.mxu0 0.0
    %2974 = vmatprep.subr.mxu0 0.0
    %2975 = vmatpush1.xpose.msra.mxu0 0.0
    %2976 = vmatprep.subr.mxu0 0.0
    %2977 = vmatpush1.xpose.msra.mxu0 0.0
    %2978 = vmatprep.subr.mxu0 0.0
    %2979 = vmatpush1.xpose.msra.mxu0 %v2946
    %2980 = vmatprep.subr.mxu0 0.0
    %2981 = vmatpush2.xpose.msra.mxu0 0.0
    %2982 = vmatprep.subr.mxu0 0.0
    %2983 = vmatpush2.xpose.msra.mxu0 0.0
    %2984 = vmatprep.subr.mxu0 0.0
    %2985 = vmatpush2.xpose.msra.mxu0 0.0
    %2986 = vmatprep.subr.mxu0 0.0
    %2987 = vmatpush2.xpose.msra.mxu0 0.0
    %2988 = vmatprep.subr.mxu0 0.0
    %2989 = vmatpush2.xpose.msra.mxu0 0.0
    %2990 = vmatprep.subr.mxu0 0.0
    %2991 = vmatpush2.xpose.msra.mxu0 0.0
    %2992 = vmatprep.subr.mxu0 0.0
    %2993 = vmatpush2.xpose.msra.mxu0 0.0
    %2994 = vmatprep.subr.mxu0 0.0
    %2995 = vmatpush2.xpose.msra.mxu0 0.0
    %2996 = vmatprep.subr.mxu0 0.0
    %2997 = vmatpush2.xpose.msra.mxu0 0.0
    %2998 = vmatprep.subr.mxu0 0.0
    %2999 = vmatpush2.xpose.msra.mxu0 0.0
    %3000 = vmatprep.subr.mxu0 0.0
    %3001 = vmatpush2.xpose.msra.mxu0 0.0
    %3002 = vmatprep.subr.mxu0 0.0
    %3003 = vmatpush2.xpose.msra.mxu0 0.0
    %3004 = vmatprep.subr.mxu0 0.0
    %3005 = vmatpush2.xpose.msra.mxu0 0.0
    %3006 = vmatprep.subr.mxu0 0.0
    %3007 = vmatpush2.xpose.msra.mxu0 0.0
    %3008 = vmatprep.subr.mxu0 0.0
    %3009 = vmatpush2.xpose.msra.mxu0 0.0
    %3010 = vmatprep.subr.mxu0 0.0
    %3011 = vmatpush2.xpose.msra.mxu0 0.0
    %3012 = vmatprep.mubr.f32.mxu0 0.0
    %3013 = vmatmul.mubr.f32.gmra.mxu0 %v2944
    %v3014 = vpop.f32.mrf.mxu0
    %v3015 = vadd.f32 0.0, %v3014
    %v3016 = vpop.f32.mrf.mxu0
    %3017 = vdwg.mxu0
    %3018 = vrot.lane.b32.xlu0 %v437, 16
    %v3019 = vpop.permute.xlu0 %3018
    %3020 = vrot.lane.b32.xlu0 %v528, 16
    %v3021 = vpop.permute.xlu0 %3020
    %v3022 = vsel %vm622, %v3019, 0
    %v3024 = vsel %vm622, %v3021, 0
    %3026 = vmatprep.subr.mxu0 0.0
    %3027 = vmatpush1.xpose.msra.mxu0 0.0
    %3028 = vmatprep.subr.mxu0 0.0
    %3029 = vmatpush1.xpose.msra.mxu0 0.0
    %3030 = vmatprep.subr.mxu0 0.0
    %3031 = vmatpush1.xpose.msra.mxu0 0.0
    %3032 = vmatprep.subr.mxu0 0.0
    %3033 = vmatpush1.xpose.msra.mxu0 0.0
    %3034 = vmatprep.subr.mxu0 0.0
    %3035 = vmatpush1.xpose.msra.mxu0 0.0
    %3036 = vmatprep.subr.mxu0 0.0
    %3037 = vmatpush1.xpose.msra.mxu0 0.0
    %3038 = vmatprep.subr.mxu0 0.0
    %3039 = vmatpush1.xpose.msra.mxu0 0.0
    %3040 = vmatprep.subr.mxu0 0.0
    %3041 = vmatpush1.xpose.msra.mxu0 0.0
    %3042 = vmatprep.subr.mxu0 0.0
    %3043 = vmatpush1.xpose.msra.mxu0 0.0
    %3044 = vmatprep.subr.mxu0 0.0
    %3045 = vmatpush1.xpose.msra.mxu0 0.0
    %3046 = vmatprep.subr.mxu0 0.0
    %3047 = vmatpush1.xpose.msra.mxu0 0.0
    %3048 = vmatprep.subr.mxu0 0.0
    %3049 = vmatpush1.xpose.msra.mxu0 0.0
    %3050 = vmatprep.subr.mxu0 0.0
    %3051 = vmatpush1.xpose.msra.mxu0 0.0
    %3052 = vmatprep.subr.mxu0 0.0
    %3053 = vmatpush1.xpose.msra.mxu0 0.0
    %3054 = vmatprep.subr.mxu0 0.0
    %3055 = vmatpush1.xpose.msra.mxu0 0.0
    %3056 = vmatprep.subr.mxu0 0.0
    %3057 = vmatpush1.xpose.msra.mxu0 %v3024
    %3058 = vmatprep.subr.mxu0 0.0
    %3059 = vmatpush2.xpose.msra.mxu0 0.0
    %3060 = vmatprep.subr.mxu0 0.0
    %3061 = vmatpush2.xpose.msra.mxu0 0.0
    %3062 = vmatprep.subr.mxu0 0.0
    %3063 = vmatpush2.xpose.msra.mxu0 0.0
    %3064 = vmatprep.subr.mxu0 0.0
    %3065 = vmatpush2.xpose.msra.mxu0 0.0
    %3066 = vmatprep.subr.mxu0 0.0
    %3067 = vmatpush2.xpose.msra.mxu0 0.0
    %3068 = vmatprep.subr.mxu0 0.0
    %3069 = vmatpush2.xpose.msra.mxu0 0.0
    %3070 = vmatprep.subr.mxu0 0.0
    %3071 = vmatpush2.xpose.msra.mxu0 0.0
    %3072 = vmatprep.subr.mxu0 0.0
    %3073 = vmatpush2.xpose.msra.mxu0 0.0
    %3074 = vmatprep.subr.mxu0 0.0
    %3075 = vmatpush2.xpose.msra.mxu0 0.0
    %3076 = vmatprep.subr.mxu0 0.0
    %3077 = vmatpush2.xpose.msra.mxu0 0.0
    %3078 = vmatprep.subr.mxu0 0.0
    %3079 = vmatpush2.xpose.msra.mxu0 0.0
    %3080 = vmatprep.subr.mxu0 0.0
    %3081 = vmatpush2.xpose.msra.mxu0 0.0
    %3082 = vmatprep.subr.mxu0 0.0
    %3083 = vmatpush2.xpose.msra.mxu0 0.0
    %3084 = vmatprep.subr.mxu0 0.0
    %3085 = vmatpush2.xpose.msra.mxu0 0.0
    %3086 = vmatprep.subr.mxu0 0.0
    %3087 = vmatpush2.xpose.msra.mxu0 0.0
    %3088 = vmatprep.subr.mxu0 0.0
    %3089 = vmatpush2.xpose.msra.mxu0 0.0
    %3090 = vmatprep.mubr.f32.mxu0 0.0
    %3091 = vmatmul.mubr.f32.gmra.mxu0 %v3022
    %v3092 = vpop.f32.mrf.mxu0
    %v3093 = vadd.f32 0.0, %v3092
    %v3094 = vpop.f32.mrf.mxu0
    %3095 = vdwg.mxu0
    %v3096 = vmul.f32 %v3015, 0.25
    %v3097 = vmul.f32 %v3093, 0.25
    %v3098 = vsel %vm777, %v3096, -inf
    %3099 = vmax.xlane.f32.xlu0 %v3098
    %v3100 = vpop.xlane.xlu0 %3099
    %v3101 = vsel %vm777, %v3097, -inf
    %3102 = vmax.xlane.f32.xlu0 %v3101
    %v3103 = vpop.xlane.xlu0 %3102
    %v3104 = vsub.f32 %v3096, %v3100
    %v3105 = vsub.f32 %v3097, %v3103
    %v3106 = vmul.f32 %v3104, 1.442695
    %v3107 = vpow.pop %v3106
    %v3108 = vmul.f32 %v3105, 1.442695
    %v3109 = vpow.pop %v3108
    %v3110 = vsel %vm777, %v3107, 0.0
    %3111 = vadd.xlane.f32.xlu0 %v3110
    %v3112 = vpop.xlane.xlu0 %3111
    %v3113 = vsel %vm777, %v3109, 0.0
    %3114 = vadd.xlane.f32.xlu0 %v3113
    %v3115 = vpop.xlane.xlu0 %3114
    %v3116 = vrcp.pop %v3112
    %v3117 = vrcp.pop %v3115
    %v3118 = vmul.f32 %v3107, %v3116
    %v3119 = vmul.f32 %v3109, %v3117
    %3120 = vrot.lane.b32.xlu0 %v614, 16
    %v3121 = vpop.permute.xlu0 %3120
    %v3124 = vsel %vm777, %v3118, 0
    %3126 = vmatprep.subr.mxu0 0.0
    %3127 = vmatpush1.msra.mxu0 0.0
    %3128 = vmatprep.subr.mxu0 0.0
    %3129 = vmatpush1.msra.mxu0 0.0
    %3130 = vmatprep.subr.mxu0 0.0
    %3131 = vmatpush1.msra.mxu0 0.0
    %3132 = vmatprep.subr.mxu0 0.0
    %3133 = vmatpush1.msra.mxu0 0.0
    %3134 = vmatprep.subr.mxu0 0.0
    %3135 = vmatpush1.msra.mxu0 0.0
    %3136 = vmatprep.subr.mxu0 0.0
    %3137 = vmatpush1.msra.mxu0 0.0
    %3138 = vmatprep.subr.mxu0 0.0
    %3139 = vmatpush1.msra.mxu0 0.0
    %3140 = vmatprep.subr.mxu0 0.0
    %3141 = vmatpush1.msra.mxu0 0.0
    %3142 = vmatprep.subr.mxu0 0.0
    %3143 = vmatpush1.msra.mxu0 0.0
    %3144 = vmatprep.subr.mxu0 0.0
    %3145 = vmatpush1.msra.mxu0 0.0
    %3146 = vmatprep.subr.mxu0 0.0
    %3147 = vmatpush1.msra.mxu0 0.0
    %3148 = vmatprep.subr.mxu0 0.0
    %3149 = vmatpush1.msra.mxu0 0.0
    %3150 = vmatprep.subr.mxu0 0.0
    %3151 = vmatpush1.msra.mxu0 0.0
    %3152 = vmatprep.subr.mxu0 0.0
    %3153 = vmatpush1.msra.mxu0 0.0
    %3154 = vmatprep.subr.mxu0 0.0
    %3155 = vmatpush1.msra.mxu0 0.0
    %3156 = vmatprep.subr.mxu0 0.0
    %3157 = vmatpush1.msra.mxu0 %v3121
    %3158 = vmatprep.subr.mxu0 0.0
    %3159 = vmatpush2.msra.mxu0 0.0
    %3160 = vmatprep.subr.mxu0 0.0
    %3161 = vmatpush2.msra.mxu0 0.0
    %3162 = vmatprep.subr.mxu0 0.0
    %3163 = vmatpush2.msra.mxu0 0.0
    %3164 = vmatprep.subr.mxu0 0.0
    %3165 = vmatpush2.msra.mxu0 0.0
    %3166 = vmatprep.subr.mxu0 0.0
    %3167 = vmatpush2.msra.mxu0 0.0
    %3168 = vmatprep.subr.mxu0 0.0
    %3169 = vmatpush2.msra.mxu0 0.0
    %3170 = vmatprep.subr.mxu0 0.0
    %3171 = vmatpush2.msra.mxu0 0.0
    %3172 = vmatprep.subr.mxu0 0.0
    %3173 = vmatpush2.msra.mxu0 0.0
    %3174 = vmatprep.subr.mxu0 0.0
    %3175 = vmatpush2.msra.mxu0 0.0
    %3176 = vmatprep.subr.mxu0 0.0
    %3177 = vmatpush2.msra.mxu0 0.0
    %3178 = vmatprep.subr.mxu0 0.0
    %3179 = vmatpush2.msra.mxu0 0.0
    %3180 = vmatprep.subr.mxu0 0.0
    %3181 = vmatpush2.msra.mxu0 0.0
    %3182 = vmatprep.subr.mxu0 0.0
    %3183 = vmatpush2.msra.mxu0 0.0
    %3184 = vmatprep.subr.mxu0 0.0
    %3185 = vmatpush2.msra.mxu0 0.0
    %3186 = vmatprep.subr.mxu0 0.0
    %3187 = vmatpush2.msra.mxu0 0.0
    %3188 = vmatprep.subr.mxu0 0.0
    %3189 = vmatpush2.msra.mxu0 0.0
    %3190 = vmatprep.mubr.f32.mxu0 0.0
    %3191 = vmatmul.mubr.f32.gmra.mxu0 %v3124
    %v3192 = vpop.f32.mrf.mxu0
    %v3193 = vadd.f32 0.0, %v3192
    %v3194 = vpop.f32.mrf.mxu0
    %3195 = vdwg.mxu0
    %3196 = vrot.lane.b32.xlu0 %v619, 16
    %v3197 = vpop.permute.xlu0 %3196
    %v3200 = vsel %vm777, %v3119, 0
    %3202 = vmatprep.subr.mxu0 0.0
    %3203 = vmatpush1.msra.mxu0 0.0
    %3204 = vmatprep.subr.mxu0 0.0
    %3205 = vmatpush1.msra.mxu0 0.0
    %3206 = vmatprep.subr.mxu0 0.0
    %3207 = vmatpush1.msra.mxu0 0.0
    %3208 = vmatprep.subr.mxu0 0.0
    %3209 = vmatpush1.msra.mxu0 0.0
    %3210 = vmatprep.subr.mxu0 0.0
    %3211 = vmatpush1.msra.mxu0 0.0
    %3212 = vmatprep.subr.mxu0 0.0
    %3213 = vmatpush1.msra.mxu0 0.0
    %3214 = vmatprep.subr.mxu0 0.0
    %3215 = vmatpush1.msra.mxu0 0.0
    %3216 = vmatprep.subr.mxu0 0.0
    %3217 = vmatpush1.msra.mxu0 0.0
    %3218 = vmatprep.subr.mxu0 0.0
    %3219 = vmatpush1.msra.mxu0 0.0
    %3220 = vmatprep.subr.mxu0 0.0
    %3221 = vmatpush1.msra.mxu0 0.0
    %3222 = vmatprep.subr.mxu0 0.0
    %3223 = vmatpush1.msra.mxu0 0.0
    %3224 = vmatprep.subr.mxu0 0.0
    %3225 = vmatpush1.msra.mxu0 0.0
    %3226 = vmatprep.subr.mxu0 0.0
    %3227 = vmatpush1.msra.mxu0 0.0
    %3228 = vmatprep.subr.mxu0 0.0
    %3229 = vmatpush1.msra.mxu0 0.0
    %3230 = vmatprep.subr.mxu0 0.0
    %3231 = vmatpush1.msra.mxu0 0.0
    %3232 = vmatprep.subr.mxu0 0.0
    %3233 = vmatpush1.msra.mxu0 %v3197
    %3234 = vmatprep.subr.mxu0 0.0
    %3235 = vmatpush2.msra.mxu0 0.0
    %3236 = vmatprep.subr.mxu0 0.0
    %3237 = vmatpush2.msra.mxu0 0.0
    %3238 = vmatprep.subr.mxu0 0.0
    %3239 = vmatpush2.msra.mxu0 0.0
    %3240 = vmatprep.subr.mxu0 0.0
    %3241 = vmatpush2.msra.mxu0 0.0
    %3242 = vmatprep.subr.mxu0 0.0
    %3243 = vmatpush2.msra.mxu0 0.0
    %3244 = vmatprep.subr.mxu0 0.0
    %3245 = vmatpush2.msra.mxu0 0.0
    %3246 = vmatprep.subr.mxu0 0.0
    %3247 = vmatpush2.msra.mxu0 0.0
    %3248 = vmatprep.subr.mxu0 0.0
    %3249 = vmatpush2.msra.mxu0 0.0
    %3250 = vmatprep.subr.mxu0 0.0
    %3251 = vmatpush2.msra.mxu0 0.0
    %3252 = vmatprep.subr.mxu0 0.0
    %3253 = vmatpush2.msra.mxu0 0.0
    %3254 = vmatprep.subr.mxu0 0.0
    %3255 = vmatpush2.msra.mxu0 0.0
    %3256 = vmatprep.subr.mxu0 0.0
    %3257 = vmatpush2.msra.mxu0 0.0
    %3258 = vmatprep.subr.mxu0 0.0
    %3259 = vmatpush2.msra.mxu0 0.0
    %3260 = vmatprep.subr.mxu0 0.0
    %3261 = vmatpush2.msra.mxu0 0.0
    %3262 = vmatprep.subr.mxu0 0.0
    %3263 = vmatpush2.msra.mxu0 0.0
    %3264 = vmatprep.subr.mxu0 0.0
    %3265 = vmatpush2.msra.mxu0 0.0
    %3266 = vmatprep.mubr.f32.mxu0 0.0
    %3267 = vmatmul.mubr.f32.gmra.mxu0 %v3200
    %v3268 = vpop.f32.mrf.mxu0
    %v3269 = vadd.f32 0.0, %v3268
    %v3270 = vpop.f32.mrf.mxu0
    %3271 = vdwg.mxu0
    %3274 = vrot.lane.b32.xlu0 %v1200, 16
    %v3275 = vpop.permute.xlu0 %3274
    %3276 = vrot.lane.b32.xlu0 %v1277, 16
    %v3277 = vpop.permute.xlu0 %3276
    %3282 = vrot.lane.b32.xlu0 %v1533, 32
    %v3283 = vpop.permute.xlu0 %3282
    %3284 = vrot.lane.b32.xlu0 %v1609, 32
    %v3285 = vpop.permute.xlu0 %3284
    %3290 = vrot.lane.b32.xlu0 %v1865, 48
    %v3291 = vpop.permute.xlu0 %3290
    %3292 = vrot.lane.b32.xlu0 %v1941, 48
    %v3293 = vpop.permute.xlu0 %3292
    %3298 = vrot.lane.b32.xlu0 %v2197, 64
    %v3299 = vpop.permute.xlu0 %3298
    %3300 = vrot.lane.b32.xlu0 %v2273, 64
    %v3301 = vpop.permute.xlu0 %3300
    %3306 = vrot.lane.b32.xlu0 %v2529, 80
    %v3307 = vpop.permute.xlu0 %3306
    %3308 = vrot.lane.b32.xlu0 %v2605, 80
    %v3309 = vpop.permute.xlu0 %3308
    %3314 = vrot.lane.b32.xlu0 %v2861, 96
    %v3315 = vpop.permute.xlu0 %3314
    %3316 = vrot.lane.b32.xlu0 %v2937, 96
    %v3317 = vpop.permute.xlu0 %3316
    %3322 = vrot.lane.b32.xlu0 %v3193, 112
    %v3323 = vpop.permute.xlu0 %3322
    %3324 = vrot.lane.b32.xlu0 %v3269, 112
    %v3325 = vpop.permute.xlu0 %3324
    %v3328 = vsel %vm622, %v870, %v3275
    %v3329 = vsel %vm622, %v943, %v3277
    %vm3330 = vcmask 261120
    %v3331 = vsel %vm3330, %v3328, %v3283
    %v3332 = vsel %vm3330, %v3329, %v3285
    %vm3333 = vcmask 392192
    %v3334 = vsel %vm3333, %v3331, %v3291
    %v3335 = vsel %vm3333, %v3332, %v3293
    %vm3336 = vcmask 523264
    %v3337 = vsel %vm3336, %v3334, %v3299
    %v3338 = vsel %vm3336, %v3335, %v3301
    %vm3339 = vcmask 654336
    %v3340 = vsel %vm3339, %v3337, %v3307
    %v3341 = vsel %vm3339, %v3338, %v3309
    %vm3342 = vcmask 785408
    %v3343 = vsel %vm3342, %v3340, %v3315
    %v3344 = vsel %vm3342, %v3341, %v3317
    %vm3345 = vcmask 916480
    %v3346 = vsel %vm3345, %v3343, %v3323
    %v3347 = vsel %vm3345, %v3344, %v3325
    %v3348 = vld [vmem:[#allocation10] sm:$0xff]
    %v3349 = vld [vmem:[#allocation10 + $0x8] sm:$0xff]
    %v3350 = vld [vmem:[#allocation10 + $0x10] sm:$0xff]
    %v3351 = vld [vmem:[#allocation10 + $0x18] sm:$0xff]
    %v3352 = vld [vmem:[#allocation10 + $0x20] sm:$0xff]
    %v3353 = vld [vmem:[#allocation10 + $0x28] sm:$0xff]
    %v3354 = vld [vmem:[#allocation10 + $0x30] sm:$0xff]
    %v3355 = vld [vmem:[#allocation10 + $0x38] sm:$0xff]
    %v3356 = vld [vmem:[#allocation10 + $0x40] sm:$0xff]
    %v3357 = vld [vmem:[#allocation10 + $0x48] sm:$0xff]
    %v3358 = vld [vmem:[#allocation10 + $0x50] sm:$0xff]
    %v3359 = vld [vmem:[#allocation10 + $0x58] sm:$0xff]
    %v3360 = vld [vmem:[#allocation10 + $0x60] sm:$0xff]
    %v3361 = vld [vmem:[#allocation10 + $0x68] sm:$0xff]
    %v3362 = vld [vmem:[#allocation10 + $0x70] sm:$0xff]
    %v3363 = vld [vmem:[#allocation10 + $0x78] sm:$0xff]
    %v3364 = vld [vmem:[#allocation11] sm:$0x1]
    %v3366 = vlaneseq
    %v3367 = vshrl.u32 %v3366, 7
    %v3368 = vsub.s32 0, %v3367
    %v3369 = vrot.slane %v3364, %v3368
    %3371 = vmatprep.subr.mxu0 0.0
    %3372 = vmatpush1.msra.mxu0 %v3363
    %3373 = vmatprep.subr.mxu0 0.0
    %3374 = vmatpush1.msra.mxu0 %v3362
    %3375 = vmatprep.subr.mxu0 0.0
    %3376 = vmatpush1.msra.mxu0 %v3361
    %3377 = vmatprep.subr.mxu0 0.0
    %3378 = vmatpush1.msra.mxu0 %v3360
    %3379 = vmatprep.subr.mxu0 0.0
    %3380 = vmatpush1.msra.mxu0 %v3359
    %3381 = vmatprep.subr.mxu0 0.0
    %3382 = vmatpush1.msra.mxu0 %v3358
    %3383 = vmatprep.subr.mxu0 0.0
    %3384 = vmatpush1.msra.mxu0 %v3357
    %3385 = vmatprep.subr.mxu0 0.0
    %3386 = vmatpush1.msra.mxu0 %v3356
    %3387 = vmatprep.subr.mxu0 0.0
    %3388 = vmatpush1.msra.mxu0 %v3355
    %3389 = vmatprep.subr.mxu0 0.0
    %3390 = vmatpush1.msra.mxu0 %v3354
    %3391 = vmatprep.subr.mxu0 0.0
    %3392 = vmatpush1.msra.mxu0 %v3353
    %3393 = vmatprep.subr.mxu0 0.0
    %3394 = vmatpush1.msra.mxu0 %v3352
    %3395 = vmatprep.subr.mxu0 0.0
    %3396 = vmatpush1.msra.mxu0 %v3351
    %3397 = vmatprep.subr.mxu0 0.0
    %3398 = vmatpush1.msra.mxu0 %v3350
    %3399 = vmatprep.subr.mxu0 0.0
    %3400 = vmatpush1.msra.mxu0 %v3349
    %3401 = vmatprep.subr.mxu0 0.0
    %3402 = vmatpush1.msra.mxu0 %v3348
    %3403 = vmatprep.subr.mxu0 0.0
    %3404 = vmatpush2.msra.mxu0 0.0
    %3405 = vmatprep.subr.mxu0 0.0
    %3406 = vmatpush2.msra.mxu0 0.0
    %3407 = vmatprep.subr.mxu0 0.0
    %3408 = vmatpush2.msra.mxu0 0.0
    %3409 = vmatprep.subr.mxu0 0.0
    %3410 = vmatpush2.msra.mxu0 0.0
    %3411 = vmatprep.subr.mxu0 0.0
    %3412 = vmatpush2.msra.mxu0 0.0
    %3413 = vmatprep.subr.mxu0 0.0
    %3414 = vmatpush2.msra.mxu0 0.0
    %3415 = vmatprep.subr.mxu0 0.0
    %3416 = vmatpush2.msra.mxu0 0.0
    %3417 = vmatprep.subr.mxu0 0.0
    %3418 = vmatpush2.msra.mxu0 0.0
    %3419 = vmatprep.subr.mxu0 0.0
    %3420 = vmatpush2.msra.mxu0 0.0
    %3421 = vmatprep.subr.mxu0 0.0
    %3422 = vmatpush2.msra.mxu0 0.0
    %3423 = vmatprep.subr.mxu0 0.0
    %3424 = vmatpush2.msra.mxu0 0.0
    %3425 = vmatprep.subr.mxu0 0.0
    %3426 = vmatpush2.msra.mxu0 0.0
    %3427 = vmatprep.subr.mxu0 0.0
    %3428 = vmatpush2.msra.mxu0 0.0
    %3429 = vmatprep.subr.mxu0 0.0
    %3430 = vmatpush2.msra.mxu0 0.0
    %3431 = vmatprep.subr.mxu0 0.0
    %3432 = vmatpush2.msra.mxu0 0.0
    %3433 = vmatprep.subr.mxu0 0.0
    %3434 = vmatpush2.msra.mxu0 0.0
    %3435 = vmatprep.mubr.f32.mxu0 0.0
    %3436 = vmatmul.mubr.f32.gmra.mxu0 %v3346
    %v3437 = vpop.f32.mrf.mxu0
    %v3438 = vadd.f32 %v3369, %v3437
    %v3439 = vpop.f32.mrf.mxu0
    %3440 = vmatprep.mubr.f32.mxu0 0.0
    %3441 = vmatmul.mubr.f32.gmra.mxu0 %v3347
    %v3442 = vpop.f32.mrf.mxu0
    %v3443 = vadd.f32 %v3369, %v3442
    %v3444 = vpop.f32.mrf.mxu0
    %3445 = vdwg.mxu0
    %v3446 = vadd.f32 %v302, %v3438
    %v3447 = vadd.f32 %v303, %v3443
    %v3448 = vld [vmem:[#allocation13] sm:$0x1]
    %v3449 = vld [vmem:[#allocation14] sm:$0x1]
    %3450 = vadd.xlane.f32.xlu0 %v3446
    %v3451 = vpop.xlane.xlu0 %3450
    %3452 = vadd.xlane.f32.xlu0 %v3447
    %v3453 = vpop.xlane.xlu0 %3452
    %v3454 = vmul.f32 %v3451, %v314
    %v3455 = vmul.f32 %v3453, %v314
    %v3456 = vsub.f32 %v3446, %v3454
    %v3457 = vsub.f32 %v3447, %v3455
    %v3458 = vmul.f32 %v3456, %v3456
    %v3459 = vmul.f32 %v3457, %v3457
    %3460 = vadd.xlane.f32.xlu0 %v3458
    %v3461 = vpop.xlane.xlu0 %3460
    %3462 = vadd.xlane.f32.xlu0 %v3459
    %v3463 = vpop.xlane.xlu0 %3462
    %v3464 = vmul.f32 %v3461, %v314
    %v3465 = vmul.f32 %v3463, %v314
    %v3466 = vadd.f32 %v3464, 1e-05
    %v3467 = vadd.f32 %v3465, 1e-05
    %v3468 = vrsqrt.pop %v3466
    %v3469 = vrsqrt.pop %v3467
    %v3470 = vmul.f32 %v3456, %v3468
    %v3471 = vmul.f32 %v3457, %v3469
    %v3473 = vlaneseq
    %v3474 = vshrl.u32 %v3473, 7
    %v3475 = vsub.s32 0, %v3474
    %v3476 = vrot.slane %v3448, %v3475
    %v3478 = vmul.f32 %v3470, %v3476
    %v3479 = vmul.f32 %v3471, %v3476
    %v3481 = vlaneseq
    %v3482 = vshrl.u32 %v3481, 7
    %v3483 = vsub.s32 0, %v3482
    %v3484 = vrot.slane %v3449, %v3483
    %v3486 = vadd.f32 %v3478, %v3484
    %v3487 = vadd.f32 %v3479, %v3484
    %v3488 = vld [vmem:[#allocation16] sm:$0xff]
    %v3489 = vld [vmem:[#allocation16 + $0x8] sm:$0xff]
    %v3490 = vld [vmem:[#allocation16 + $0x10] sm:$0xff]
    %v3491 = vld [vmem:[#allocation16 + $0x18] sm:$0xff]
    %v3492 = vld [vmem:[#allocation16 + $0x20] sm:$0xff]
    %v3493 = vld [vmem:[#allocation16 + $0x28] sm:$0xff]
    %v3494 = vld [vmem:[#allocation16 + $0x30] sm:$0xff]
    %v3495 = vld [vmem:[#allocation16 + $0x38] sm:$0xff]
    %v3496 = vld [vmem:[#allocation16 + $0x40] sm:$0xff]
    %v3497 = vld [vmem:[#allocation16 + $0x48] sm:$0xff]
    %v3498 = vld [vmem:[#allocation16 + $0x50] sm:$0xff]
    %v3499 = vld [vmem:[#allocation16 + $0x58] sm:$0xff]
    %v3500 = vld [vmem:[#allocation16 + $0x60] sm:$0xff]
    %v3501 = vld [vmem:[#allocation16 + $0x68] sm:$0xff]
    %v3502 = vld [vmem:[#allocation16 + $0x70] sm:$0xff]
    %v3503 = vld [vmem:[#allocation16 + $0x78] sm:$0xff]
    %3504 = vmatprep.subr.mxu0 0.0
    %3505 = vmatpush1.msra.mxu0 %v3503
    %3506 = vmatprep.subr.mxu0 0.0
    %3507 = vmatpush1.msra.mxu0 %v3502
    %3508 = vmatprep.subr.mxu0 0.0
    %3509 = vmatpush1.msra.mxu0 %v3501
    %3510 = vmatprep.subr.mxu0 0.0
    %3511 = vmatpush1.msra.mxu0 %v3500
    %3512 = vmatprep.subr.mxu0 0.0
    %3513 = vmatpush1.msra.mxu0 %v3499
    %3514 = vmatprep.subr.mxu0 0.0
    %3515 = vmatpush1.msra.mxu0 %v3498
    %3516 = vmatprep.subr.mxu0 0.0
    %3517 = vmatpush1.msra.mxu0 %v3497
    %3518 = vmatprep.subr.mxu0 0.0
    %3519 = vmatpush1.msra.mxu0 %v3496
    %3520 = vmatprep.subr.mxu0 0.0
    %3521 = vmatpush1.msra.mxu0 %v3495
    %3522 = vmatprep.subr.mxu0 0.0
    %3523 = vmatpush1.msra.mxu0 %v3494
    %3524 = vmatprep.subr.mxu0 0.0
    %3525 = vmatpush1.msra.mxu0 %v3493
    %3526 = vmatprep.subr.mxu0 0.0
    %3527 = vmatpush1.msra.mxu0 %v3492
    %3528 = vmatprep.subr.mxu0 0.0
    %3529 = vmatpush1.msra.mxu0 %v3491
    %3530 = vmatprep.subr.mxu0 0.0
    %3531 = vmatpush1.msra.mxu0 %v3490
    %3532 = vmatprep.subr.mxu0 0.0
    %3533 = vmatpush1.msra.mxu0 %v3489
    %3534 = vmatprep.subr.mxu0 0.0
    %3535 = vmatpush1.msra.mxu0 %v3488
    %3536 = vmatprep.subr.mxu0 0.0
    %3537 = vmatpush2.msra.mxu0 0.0
    %3538 = vmatprep.subr.mxu0 0.0
    %3539 = vmatpush2.msra.mxu0 0.0
    %3540 = vmatprep.subr.mxu0 0.0
    %3541 = vmatpush2.msra.mxu0 0.0
    %3542 = vmatprep.subr.mxu0 0.0
    %3543 = vmatpush2.msra.mxu0 0.0
    %3544 = vmatprep.subr.mxu0 0.0
    %3545 = vmatpush2.msra.mxu0 0.0
    %3546 = vmatprep.subr.mxu0 0.0
    %3547 = vmatpush2.msra.mxu0 0.0
    %3548 = vmatprep.subr.mxu0 0.0
    %3549 = vmatpush2.msra.mxu0 0.0
    %3550 = vmatprep.subr.mxu0 0.0
    %3551 = vmatpush2.msra.mxu0 0.0
    %3552 = vmatprep.subr.mxu0 0.0
    %3553 = vmatpush2.msra.mxu0 0.0
    %3554 = vmatprep.subr.mxu0 0.0
    %3555 = vmatpush2.msra.mxu0 0.0
    %3556 = vmatprep.subr.mxu0 0.0
    %3557 = vmatpush2.msra.mxu0 0.0
    %3558 = vmatprep.subr.mxu0 0.0
    %3559 = vmatpush2.msra.mxu0 0.0
    %3560 = vmatprep.subr.mxu0 0.0
    %3561 = vmatpush2.msra.mxu0 0.0
    %3562 = vmatprep.subr.mxu0 0.0
    %3563 = vmatpush2.msra.mxu0 0.0
    %3564 = vmatprep.subr.mxu0 0.0
    %3565 = vmatpush2.msra.mxu0 0.0
    %3566 = vmatprep.subr.mxu0 0.0
    %3567 = vmatpush2.msra.mxu0 0.0
    %3568 = vmatprep.mubr.f32.mxu0 0.0
    %3569 = vmatmul.mubr.f32.gmra.mxu0 %v3486
    %v3570 = vpop.f32.mrf.mxu0
    %v3571 = vadd.f32 0.0, %v3570
    %v3572 = vpop.f32.mrf.mxu0
    %3573 = vmatprep.mubr.f32.mxu0 0.0
    %3574 = vmatmul.mubr.f32.gmra.mxu0 %v3487
    %v3575 = vpop.f32.mrf.mxu0
    %v3576 = vadd.f32 0.0, %v3575
    %v3577 = vpop.f32.mrf.mxu0
    %3578 = vdwg.mxu0
    %v3579 = vld [vmem:[#allocation17] sm:$0xff]
    %v3580 = vld [vmem:[#allocation17 + $0x8] sm:$0xff]
    %v3581 = vld [vmem:[#allocation17 + $0x10] sm:$0xff]
    %v3582 = vld [vmem:[#allocation17 + $0x18] sm:$0xff]
    %v3583 = vld [vmem:[#allocation17 + $0x20] sm:$0xff]
    %v3584 = vld [vmem:[#allocation17 + $0x28] sm:$0xff]
    %v3585 = vld [vmem:[#allocation17 + $0x30] sm:$0xff]
    %v3586 = vld [vmem:[#allocation17 + $0x38] sm:$0xff]
    %v3587 = vld [vmem:[#allocation17 + $0x40] sm:$0xff]
    %v3588 = vld [vmem:[#allocation17 + $0x48] sm:$0xff]
    %v3589 = vld [vmem:[#allocation17 + $0x50] sm:$0xff]
    %v3590 = vld [vmem:[#allocation17 + $0x58] sm:$0xff]
    %v3591 = vld [vmem:[#allocation17 + $0x60] sm:$0xff]
    %v3592 = vld [vmem:[#allocation17 + $0x68] sm:$0xff]
    %v3593 = vld [vmem:[#allocation17 + $0x70] sm:$0xff]
    %v3594 = vld [vmem:[#allocation17 + $0x78] sm:$0xff]
    %3595 = vmatprep.subr.mxu0 0.0
    %3596 = vmatpush1.msra.mxu0 %v3594
    %3597 = vmatprep.subr.mxu0 0.0
    %3598 = vmatpush1.msra.mxu0 %v3593
    %3599 = vmatprep.subr.mxu0 0.0
    %3600 = vmatpush1.msra.mxu0 %v3592
    %3601 = vmatprep.subr.mxu0 0.0
    %3602 = vmatpush1.msra.mxu0 %v3591
    %3603 = vmatprep.subr.mxu0 0.0
    %3604 = vmatpush1.msra.mxu0 %v3590
    %3605 = vmatprep.subr.mxu0 0.0
    %3606 = vmatpush1.msra.mxu0 %v3589
    %3607 = vmatprep.subr.mxu0 0.0
    %3608 = vmatpush1.msra.mxu0 %v3588
    %3609 = vmatprep.subr.mxu0 0.0
    %3610 = vmatpush1.msra.mxu0 %v3587
    %3611 = vmatprep.subr.mxu0 0.0
    %3612 = vmatpush1.msra.mxu0 %v3586
    %3613 = vmatprep.subr.mxu0 0.0
    %3614 = vmatpush1.msra.mxu0 %v3585
    %3615 = vmatprep.subr.mxu0 0.0
    %3616 = vmatpush1.msra.mxu0 %v3584
    %3617 = vmatprep.subr.mxu0 0.0
    %3618 = vmatpush1.msra.mxu0 %v3583
    %3619 = vmatprep.subr.mxu0 0.0
    %3620 = vmatpush1.msra.mxu0 %v3582
    %3621 = vmatprep.subr.mxu0 0.0
    %3622 = vmatpush1.msra.mxu0 %v3581
    %3623 = vmatprep.subr.mxu0 0.0
    %3624 = vmatpush1.msra.mxu0 %v3580
    %3625 = vmatprep.subr.mxu0 0.0
    %3626 = vmatpush1.msra.mxu0 %v3579
    %3627 = vmatprep.subr.mxu0 0.0
    %3628 = vmatpush2.msra.mxu0 0.0
    %3629 = vmatprep.subr.mxu0 0.0
    %3630 = vmatpush2.msra.mxu0 0.0
    %3631 = vmatprep.subr.mxu0 0.0
    %3632 = vmatpush2.msra.mxu0 0.0
    %3633 = vmatprep.subr.mxu0 0.0
    %3634 = vmatpush2.msra.mxu0 0.0
    %3635 = vmatprep.subr.mxu0 0.0
    %3636 = vmatpush2.msra.mxu0 0.0
    %3637 = vmatprep.subr.mxu0 0.0
    %3638 = vmatpush2.msra.mxu0 0.0
    %3639 = vmatprep.subr.mxu0 0.0
    %3640 = vmatpush2.msra.mxu0 0.0
    %3641 = vmatprep.subr.mxu0 0.0
    %3642 = vmatpush2.msra.mxu0 0.0
    %3643 = vmatprep.subr.mxu0 0.0
    %3644 = vmatpush2.msra.mxu0 0.0
    %3645 = vmatprep.subr.mxu0 0.0
    %3646 = vmatpush2.msra.mxu0 0.0
    %3647 = vmatprep.subr.mxu0 0.0
    %3648 = vmatpush2.msra.mxu0 0.0
    %3649 = vmatprep.subr.mxu0 0.0
    %3650 = vmatpush2.msra.mxu0 0.0
    %3651 = vmatprep.subr.mxu0 0.0
    %3652 = vmatpush2.msra.mxu0 0.0
    %3653 = vmatprep.subr.mxu0 0.0
    %3654 = vmatpush2.msra.mxu0 0.0
    %3655 = vmatprep.subr.mxu0 0.0
    %3656 = vmatpush2.msra.mxu0 0.0
    %3657 = vmatprep.subr.mxu0 0.0
    %3658 = vmatpush2.msra.mxu0 0.0
    %3659 = vmatprep.mubr.f32.mxu0 0.0
    %3660 = vmatmul.mubr.f32.gmra.mxu0 %v304
    %v3661 = vpop.f32.mrf.mxu0
    %v3662 = vadd.f32 0.0, %v3661
    %v3663 = vpop.f32.mrf.mxu0
    %3664 = vmatprep.mubr.f32.mxu0 0.0
    %3665 = vmatmul.mubr.f32.gmra.mxu0 %v305
    %v3666 = vpop.f32.mrf.mxu0
    %v3667 = vadd.f32 0.0, %v3666
    %v3668 = vpop.f32.mrf.mxu0
    %3669 = vmatprep.mubr.f32.mxu0 0.0
    %3670 = vmatmul.mubr.f32.gmra.mxu0 %v306
    %v3671 = vpop.f32.mrf.mxu0
    %v3672 = vadd.f32 0.0, %v3671
    %v3673 = vpop.f32.mrf.mxu0
    %3674 = vmatprep.mubr.f32.mxu0 0.0
    %3675 = vmatmul.mubr.f32.gmra.mxu0 %v307
    %v3676 = vpop.f32.mrf.mxu0
    %v3677 = vadd.f32 0.0, %v3676
    %v3678 = vpop.f32.mrf.mxu0
    %3679 = vdwg.mxu0
    %v3680 = vld [vmem:[#allocation19] sm:$0xff]
    %v3681 = vld [vmem:[#allocation19 + $0x8] sm:$0xff]
    %v3682 = vld [vmem:[#allocation19 + $0x10] sm:$0xff]
    %v3683 = vld [vmem:[#allocation19 + $0x18] sm:$0xff]
    %v3684 = vld [vmem:[#allocation19 + $0x20] sm:$0xff]
    %v3685 = vld [vmem:[#allocation19 + $0x28] sm:$0xff]
    %v3686 = vld [vmem:[#allocation19 + $0x30] sm:$0xff]
    %v3687 = vld [vmem:[#allocation19 + $0x38] sm:$0xff]
    %v3688 = vld [vmem:[#allocation19 + $0x40] sm:$0xff]
    %v3689 = vld [vmem:[#allocation19 + $0x48] sm:$0xff]
    %v3690 = vld [vmem:[#allocation19 + $0x50] sm:$0xff]
    %v3691 = vld [vmem:[#allocation19 + $0x58] sm:$0xff]
    %v3692 = vld [vmem:[#allocation19 + $0x60] sm:$0xff]
    %v3693 = vld [vmem:[#allocation19 + $0x68] sm:$0xff]
    %v3694 = vld [vmem:[#allocation19 + $0x70] sm:$0xff]
    %v3695 = vld [vmem:[#allocation19 + $0x78] sm:$0xff]
    %3696 = vmatprep.subr.mxu0 0.0
    %3697 = vmatpush1.msra.mxu0 %v3695
    %3698 = vmatprep.subr.mxu0 0.0
    %3699 = vmatpush1.msra.mxu0 %v3694
    %3700 = vmatprep.subr.mxu0 0.0
    %3701 = vmatpush1.msra.mxu0 %v3693
    %3702 = vmatprep.subr.mxu0 0.0
    %3703 = vmatpush1.msra.mxu0 %v3692
    %3704 = vmatprep.subr.mxu0 0.0
    %3705 = vmatpush1.msra.mxu0 %v3691
    %3706 = vmatprep.subr.mxu0 0.0
    %3707 = vmatpush1.msra.mxu0 %v3690
    %3708 = vmatprep.subr.mxu0 0.0
    %3709 = vmatpush1.msra.mxu0 %v3689
    %3710 = vmatprep.subr.mxu0 0.0
    %3711 = vmatpush1.msra.mxu0 %v3688
    %3712 = vmatprep.subr.mxu0 0.0
    %3713 = vmatpush1.msra.mxu0 %v3687
    %3714 = vmatprep.subr.mxu0 0.0
    %3715 = vmatpush1.msra.mxu0 %v3686
    %3716 = vmatprep.subr.mxu0 0.0
    %3717 = vmatpush1.msra.mxu0 %v3685
    %3718 = vmatprep.subr.mxu0 0.0
    %3719 = vmatpush1.msra.mxu0 %v3684
    %3720 = vmatprep.subr.mxu0 0.0
    %3721 = vmatpush1.msra.mxu0 %v3683
    %3722 = vmatprep.subr.mxu0 0.0
    %3723 = vmatpush1.msra.mxu0 %v3682
    %3724 = vmatprep.subr.mxu0 0.0
    %3725 = vmatpush1.msra.mxu0 %v3681
    %3726 = vmatprep.subr.mxu0 0.0
    %3727 = vmatpush1.msra.mxu0 %v3680
    %3728 = vmatprep.subr.mxu0 0.0
    %3729 = vmatpush2.msra.mxu0 0.0
    %3730 = vmatprep.subr.mxu0 0.0
    %3731 = vmatpush2.msra.mxu0 0.0
    %3732 = vmatprep.subr.mxu0 0.0
    %3733 = vmatpush2.msra.mxu0 0.0
    %3734 = vmatprep.subr.mxu0 0.0
    %3735 = vmatpush2.msra.mxu0 0.0
    %3736 = vmatprep.subr.mxu0 0.0
    %3737 = vmatpush2.msra.mxu0 0.0
    %3738 = vmatprep.subr.mxu0 0.0
    %3739 = vmatpush2.msra.mxu0 0.0
    %3740 = vmatprep.subr.mxu0 0.0
    %3741 = vmatpush2.msra.mxu0 0.0
    %3742 = vmatprep.subr.mxu0 0.0
    %3743 = vmatpush2.msra.mxu0 0.0
    %3744 = vmatprep.subr.mxu0 0.0
    %3745 = vmatpush2.msra.mxu0 0.0
    %3746 = vmatprep.subr.mxu0 0.0
    %3747 = vmatpush2.msra.mxu0 0.0
    %3748 = vmatprep.subr.mxu0 0.0
    %3749 = vmatpush2.msra.mxu0 0.0
    %3750 = vmatprep.subr.mxu0 0.0
    %3751 = vmatpush2.msra.mxu0 0.0
    %3752 = vmatprep.subr.mxu0 0.0
    %3753 = vmatpush2.msra.mxu0 0.0
    %3754 = vmatprep.subr.mxu0 0.0
    %3755 = vmatpush2.msra.mxu0 0.0
    %3756 = vmatprep.subr.mxu0 0.0
    %3757 = vmatpush2.msra.mxu0 0.0
    %3758 = vmatprep.subr.mxu0 0.0
    %3759 = vmatpush2.msra.mxu0 0.0
    %3760 = vmatprep.mubr.f32.mxu0 0.0
    %3761 = vmatmul.mubr.f32.gmra.mxu0 %v304
    %v3762 = vpop.f32.mrf.mxu0
    %v3763 = vadd.f32 0.0, %v3762
    %v3764 = vpop.f32.mrf.mxu0
    %3765 = vmatprep.mubr.f32.mxu0 0.0
    %3766 = vmatmul.mubr.f32.gmra.mxu0 %v305
    %v3767 = vpop.f32.mrf.mxu0
    %v3768 = vadd.f32 0.0, %v3767
    %v3769 = vpop.f32.mrf.mxu0
    %3770 = vmatprep.mubr.f32.mxu0 0.0
    %3771 = vmatmul.mubr.f32.gmra.mxu0 %v306
    %v3772 = vpop.f32.mrf.mxu0
    %v3773 = vadd.f32 0.0, %v3772
    %v3774 = vpop.f32.mrf.mxu0
    %3775 = vmatprep.mubr.f32.mxu0 0.0
    %3776 = vmatmul.mubr.f32.gmra.mxu0 %v307
    %v3777 = vpop.f32.mrf.mxu0
    %v3778 = vadd.f32 0.0, %v3777
    %v3779 = vpop.f32.mrf.mxu0
    %3780 = vdwg.mxu0
    %v3782 = vsel %vm622, %v3571, 0
    %v3785 = vsel %vm622, %v3662, 0
    %v3788 = vsel %vm622, %v3667, 0
    %3790 = vmatprep.subr.mxu0 0.0
    %3791 = vmatpush1.xpose.msra.mxu0 0.0
    %3792 = vmatprep.subr.mxu0 0.0
    %3793 = vmatpush1.xpose.msra.mxu0 0.0
    %3794 = vmatprep.subr.mxu0 0.0
    %3795 = vmatpush1.xpose.msra.mxu0 0.0
    %3796 = vmatprep.subr.mxu0 0.0
    %3797 = vmatpush1.xpose.msra.mxu0 0.0
    %3798 = vmatprep.subr.mxu0 0.0
    %3799 = vmatpush1.xpose.msra.mxu0 0.0
    %3800 = vmatprep.subr.mxu0 0.0
    %3801 = vmatpush1.xpose.msra.mxu0 0.0
    %3802 = vmatprep.subr.mxu0 0.0
    %3803 = vmatpush1.xpose.msra.mxu0 0.0
    %3804 = vmatprep.subr.mxu0 0.0
    %3805 = vmatpush1.xpose.msra.mxu0 0.0
    %3806 = vmatprep.subr.mxu0 0.0
    %3807 = vmatpush1.xpose.msra.mxu0 0.0
    %3808 = vmatprep.subr.mxu0 0.0
    %3809 = vmatpush1.xpose.msra.mxu0 0.0
    %3810 = vmatprep.subr.mxu0 0.0
    %3811 = vmatpush1.xpose.msra.mxu0 0.0
    %3812 = vmatprep.subr.mxu0 0.0
    %3813 = vmatpush1.xpose.msra.mxu0 0.0
    %3814 = vmatprep.subr.mxu0 0.0
    %3815 = vmatpush1.xpose.msra.mxu0 0.0
    %3816 = vmatprep.subr.mxu0 0.0
    %3817 = vmatpush1.xpose.msra.mxu0 0.0
    %3818 = vmatprep.subr.mxu0 0.0
    %3819 = vmatpush1.xpose.msra.mxu0 %v3788
    %3820 = vmatprep.subr.mxu0 0.0
    %3821 = vmatpush1.xpose.msra.mxu0 %v3785
    %3822 = vmatprep.subr.mxu0 0.0
    %3823 = vmatpush2.xpose.msra.mxu0 0.0
    %3824 = vmatprep.subr.mxu0 0.0
    %3825 = vmatpush2.xpose.msra.mxu0 0.0
    %3826 = vmatprep.subr.mxu0 0.0
    %3827 = vmatpush2.xpose.msra.mxu0 0.0
    %3828 = vmatprep.subr.mxu0 0.0
    %3829 = vmatpush2.xpose.msra.mxu0 0.0
    %3830 = vmatprep.subr.mxu0 0.0
    %3831 = vmatpush2.xpose.msra.mxu0 0.0
    %3832 = vmatprep.subr.mxu0 0.0
    %3833 = vmatpush2.xpose.msra.mxu0 0.0
    %3834 = vmatprep.subr.mxu0 0.0
    %3835 = vmatpush2.xpose.msra.mxu0 0.0
    %3836 = vmatprep.subr.mxu0 0.0
    %3837 = vmatpush2.xpose.msra.mxu0 0.0
    %3838 = vmatprep.subr.mxu0 0.0
    %3839 = vmatpush2.xpose.msra.mxu0 0.0
    %3840 = vmatprep.subr.mxu0 0.0
    %3841 = vmatpush2.xpose.msra.mxu0 0.0
    %3842 = vmatprep.subr.mxu0 0.0
    %3843 = vmatpush2.xpose.msra.mxu0 0.0
    %3844 = vmatprep.subr.mxu0 0.0
    %3845 = vmatpush2.xpose.msra.mxu0 0.0
    %3846 = vmatprep.subr.mxu0 0.0
    %3847 = vmatpush2.xpose.msra.mxu0 0.0
    %3848 = vmatprep.subr.mxu0 0.0
    %3849 = vmatpush2.xpose.msra.mxu0 0.0
    %3850 = vmatprep.subr.mxu0 0.0
    %3851 = vmatpush2.xpose.msra.mxu0 0.0
    %3852 = vmatprep.subr.mxu0 0.0
    %3853 = vmatpush2.xpose.msra.mxu0 0.0
    %3854 = vmatprep.mubr.f32.mxu0 0.0
    %3855 = vmatmul.mubr.f32.gmra.mxu0 %v3782
    %v3856 = vpop.f32.mrf.mxu0
    %v3857 = vadd.f32 0.0, %v3856
    %v3858 = vpop.f32.mrf.mxu0
    %3859 = vdwg.mxu0
    %v3861 = vsel %vm622, %v3576, 0
    %v3864 = vsel %vm622, %v3672, 0
    %v3867 = vsel %vm622, %v3677, 0
    %3869 = vmatprep.subr.mxu0 0.0
    %3870 = vmatpush1.xpose.msra.mxu0 0.0
    %3871 = vmatprep.subr.mxu0 0.0
    %3872 = vmatpush1.xpose.msra.mxu0 0.0
    %3873 = vmatprep.subr.mxu0 0.0
    %3874 = vmatpush1.xpose.msra.mxu0 0.0
    %3875 = vmatprep.subr.mxu0 0.0
    %3876 = vmatpush1.xpose.msra.mxu0 0.0
    %3877 = vmatprep.subr.mxu0 0.0
    %3878 = vmatpush1.xpose.msra.mxu0 0.0
    %3879 = vmatprep.subr.mxu0 0.0
    %3880 = vmatpush1.xpose.msra.mxu0 0.0
    %3881 = vmatprep.subr.mxu0 0.0
    %3882 = vmatpush1.xpose.msra.mxu0 0.0
    %3883 = vmatprep.subr.mxu0 0.0
    %3884 = vmatpush1.xpose.msra.mxu0 0.0
    %3885 = vmatprep.subr.mxu0 0.0
    %3886 = vmatpush1.xpose.msra.mxu0 0.0
    %3887 = vmatprep.subr.mxu0 0.0
    %3888 = vmatpush1.xpose.msra.mxu0 0.0
    %3889 = vmatprep.subr.mxu0 0.0
    %3890 = vmatpush1.xpose.msra.mxu0 0.0
    %3891 = vmatprep.subr.mxu0 0.0
    %3892 = vmatpush1.xpose.msra.mxu0 0.0
    %3893 = vmatprep.subr.mxu0 0.0
    %3894 = vmatpush1.xpose.msra.mxu0 0.0
    %3895 = vmatprep.subr.mxu0 0.0
    %3896 = vmatpush1.xpose.msra.mxu0 0.0
    %3897 = vmatprep.subr.mxu0 0.0
    %3898 = vmatpush1.xpose.msra.mxu0 %v3867
    %3899 = vmatprep.subr.mxu0 0.0
    %3900 = vmatpush1.xpose.msra.mxu0 %v3864
    %3901 = vmatprep.subr.mxu0 0.0
    %3902 = vmatpush2.xpose.msra.mxu0 0.0
    %3903 = vmatprep.subr.mxu0 0.0
    %3904 = vmatpush2.xpose.msra.mxu0 0.0
    %3905 = vmatprep.subr.mxu0 0.0
    %3906 = vmatpush2.xpose.msra.mxu0 0.0
    %3907 = vmatprep.subr.mxu0 0.0
    %3908 = vmatpush2.xpose.msra.mxu0 0.0
    %3909 = vmatprep.subr.mxu0 0.0
    %3910 = vmatpush2.xpose.msra.mxu0 0.0
    %3911 = vmatprep.subr.mxu0 0.0
    %3912 = vmatpush2.xpose.msra.mxu0 0.0
    %3913 = vmatprep.subr.mxu0 0.0
    %3914 = vmatpush2.xpose.msra.mxu0 0.0
    %3915 = vmatprep.subr.mxu0 0.0
    %3916 = vmatpush2.xpose.msra.mxu0 0.0
    %3917 = vmatprep.subr.mxu0 0.0
    %3918 = vmatpush2.xpose.msra.mxu0 0.0
    %3919 = vmatprep.subr.mxu0 0.0
    %3920 = vmatpush2.xpose.msra.mxu0 0.0
    %3921 = vmatprep.subr.mxu0 0.0
    %3922 = vmatpush2.xpose.msra.mxu0 0.0
    %3923 = vmatprep.subr.mxu0 0.0
    %3924 = vmatpush2.xpose.msra.mxu0 0.0
    %3925 = vmatprep.subr.mxu0 0.0
    %3926 = vmatpush2.xpose.msra.mxu0 0.0
    %3927 = vmatprep.subr.mxu0 0.0
    %3928 = vmatpush2.xpose.msra.mxu0 0.0
    %3929 = vmatprep.subr.mxu0 0.0
    %3930 = vmatpush2.xpose.msra.mxu0 0.0
    %3931 = vmatprep.subr.mxu0 0.0
    %3932 = vmatpush2.xpose.msra.mxu0 0.0
    %3933 = vmatprep.mubr.f32.mxu0 0.0
    %3934 = vmatmul.mubr.f32.gmra.mxu0 %v3861
    %v3935 = vpop.f32.mrf.mxu0
    %v3936 = vadd.f32 0.0, %v3935
    %v3937 = vpop.f32.mrf.mxu0
    %3938 = vdwg.mxu0
    %v3939 = vmul.f32 %v3857, 0.25
    %v3940 = vmul.f32 %v3936, 0.25
    %v3941 = vsel %vm622, %v3939, -inf
    %3942 = vmax.xlane.f32.xlu0 %v3941
    %v3943 = vpop.xlane.xlu0 %3942
    %v3944 = vsel %vm622, %v3940, -inf
    %3945 = vmax.xlane.f32.xlu0 %v3944
    %v3946 = vpop.xlane.xlu0 %3945
    %v3947 = vsub.f32 %v3939, %v3943
    %v3948 = vsub.f32 %v3940, %v3946
    %v3949 = vmul.f32 %v3947, 1.442695
    %v3950 = vpow.pop %v3949
    %v3951 = vmul.f32 %v3948, 1.442695
    %v3952 = vpow.pop %v3951
    %v3953 = vsel %vm622, %v3950, 0.0
    %3954 = vadd.xlane.f32.xlu0 %v3953
    %v3955 = vpop.xlane.xlu0 %3954
    %v3956 = vsel %vm622, %v3952, 0.0
    %3957 = vadd.xlane.f32.xlu0 %v3956
    %v3958 = vpop.xlane.xlu0 %3957
    %v3959 = vrcp.pop %v3955
    %v3960 = vrcp.pop %v3958
    %v3961 = vmul.f32 %v3950, %v3959
    %v3962 = vmul.f32 %v3952, %v3960
    %v3964 = vsel %vm622, %v3961, 0
    %3966 = vmatprep.subr.mxu0 0.0
    %3967 = vmatpush1.msra.mxu0 0.0
    %3968 = vmatprep.subr.mxu0 0.0
    %3969 = vmatpush1.msra.mxu0 0.0
    %3970 = vmatprep.subr.mxu0 0.0
    %3971 = vmatpush1.msra.mxu0 0.0
    %3972 = vmatprep.subr.mxu0 0.0
    %3973 = vmatpush1.msra.mxu0 0.0
    %3974 = vmatprep.subr.mxu0 0.0
    %3975 = vmatpush1.msra.mxu0 0.0
    %3976 = vmatprep.subr.mxu0 0.0
    %3977 = vmatpush1.msra.mxu0 0.0
    %3978 = vmatprep.subr.mxu0 0.0
    %3979 = vmatpush1.msra.mxu0 0.0
    %3980 = vmatprep.subr.mxu0 0.0
    %3981 = vmatpush1.msra.mxu0 0.0
    %3982 = vmatprep.subr.mxu0 0.0
    %3983 = vmatpush1.msra.mxu0 0.0
    %3984 = vmatprep.subr.mxu0 0.0
    %3985 = vmatpush1.msra.mxu0 0.0
    %3986 = vmatprep.subr.mxu0 0.0
    %3987 = vmatpush1.msra.mxu0 0.0
    %3988 = vmatprep.subr.mxu0 0.0
    %3989 = vmatpush1.msra.mxu0 0.0
    %3990 = vmatprep.subr.mxu0 0.0
    %3991 = vmatpush1.msra.mxu0 0.0
    %3992 = vmatprep.subr.mxu0 0.0
    %3993 = vmatpush1.msra.mxu0 0.0
    %3994 = vmatprep.subr.mxu0 0.0
    %3995 = vmatpush1.msra.mxu0 %v3768
    %3996 = vmatprep.subr.mxu0 0.0
    %3997 = vmatpush1.msra.mxu0 %v3763
    %3998 = vmatprep.subr.mxu0 0.0
    %3999 = vmatpush2.msra.mxu0 0.0
    %4000 = vmatprep.subr.mxu0 0.0
    %4001 = vmatpush2.msra.mxu0 0.0
    %4002 = vmatprep.subr.mxu0 0.0
    %4003 = vmatpush2.msra.mxu0 0.0
    %4004 = vmatprep.subr.mxu0 0.0
    %4005 = vmatpush2.msra.mxu0 0.0
    %4006 = vmatprep.subr.mxu0 0.0
    %4007 = vmatpush2.msra.mxu0 0.0
    %4008 = vmatprep.subr.mxu0 0.0
    %4009 = vmatpush2.msra.mxu0 0.0
    %4010 = vmatprep.subr.mxu0 0.0
    %4011 = vmatpush2.msra.mxu0 0.0
    %4012 = vmatprep.subr.mxu0 0.0
    %4013 = vmatpush2.msra.mxu0 0.0
    %4014 = vmatprep.subr.mxu0 0.0
    %4015 = vmatpush2.msra.mxu0 0.0
    %4016 = vmatprep.subr.mxu0 0.0
    %4017 = vmatpush2.msra.mxu0 0.0
    %4018 = vmatprep.subr.mxu0 0.0
    %4019 = vmatpush2.msra.mxu0 0.0
    %4020 = vmatprep.subr.mxu0 0.0
    %4021 = vmatpush2.msra.mxu0 0.0
    %4022 = vmatprep.subr.mxu0 0.0
    %4023 = vmatpush2.msra.mxu0 0.0
    %4024 = vmatprep.subr.mxu0 0.0
    %4025 = vmatpush2.msra.mxu0 0.0
    %4026 = vmatprep.subr.mxu0 0.0
    %4027 = vmatpush2.msra.mxu0 0.0
    %4028 = vmatprep.subr.mxu0 0.0
    %4029 = vmatpush2.msra.mxu0 0.0
    %4030 = vmatprep.mubr.f32.mxu0 0.0
    %4031 = vmatmul.mubr.f32.gmra.mxu0 %v3964
    %v4032 = vpop.f32.mrf.mxu0
    %v4033 = vadd.f32 0.0, %v4032
    %v4034 = vpop.f32.mrf.mxu0
    %4035 = vdwg.mxu0
    %v4037 = vsel %vm622, %v3962, 0
    %4039 = vmatprep.subr.mxu0 0.0
    %4040 = vmatpush1.msra.mxu0 0.0
    %4041 = vmatprep.subr.mxu0 0.0
    %4042 = vmatpush1.msra.mxu0 0.0
    %4043 = vmatprep.subr.mxu0 0.0
    %4044 = vmatpush1.msra.mxu0 0.0
    %4045 = vmatprep.subr.mxu0 0.0
    %4046 = vmatpush1.msra.mxu0 0.0
    %4047 = vmatprep.subr.mxu0 0.0
    %4048 = vmatpush1.msra.mxu0 0.0
    %4049 = vmatprep.subr.mxu0 0.0
    %4050 = vmatpush1.msra.mxu0 0.0
    %4051 = vmatprep.subr.mxu0 0.0
    %4052 = vmatpush1.msra.mxu0 0.0
    %4053 = vmatprep.subr.mxu0 0.0
    %4054 = vmatpush1.msra.mxu0 0.0
    %4055 = vmatprep.subr.mxu0 0.0
    %4056 = vmatpush1.msra.mxu0 0.0
    %4057 = vmatprep.subr.mxu0 0.0
    %4058 = vmatpush1.msra.mxu0 0.0
    %4059 = vmatprep.subr.mxu0 0.0
    %4060 = vmatpush1.msra.mxu0 0.0
    %4061 = vmatprep.subr.mxu0 0.0
    %4062 = vmatpush1.msra.mxu0 0.0
    %4063 = vmatprep.subr.mxu0 0.0
    %4064 = vmatpush1.msra.mxu0 0.0
    %4065 = vmatprep.subr.mxu0 0.0
    %4066 = vmatpush1.msra.mxu0 0.0
    %4067 = vmatprep.subr.mxu0 0.0
    %4068 = vmatpush1.msra.mxu0 %v3778
    %4069 = vmatprep.subr.mxu0 0.0
    %4070 = vmatpush1.msra.mxu0 %v3773
    %4071 = vmatprep.subr.mxu0 0.0
    %4072 = vmatpush2.msra.mxu0 0.0
    %4073 = vmatprep.subr.mxu0 0.0
    %4074 = vmatpush2.msra.mxu0 0.0
    %4075 = vmatprep.subr.mxu0 0.0
    %4076 = vmatpush2.msra.mxu0 0.0
    %4077 = vmatprep.subr.mxu0 0.0
    %4078 = vmatpush2.msra.mxu0 0.0
    %4079 = vmatprep.subr.mxu0 0.0
    %4080 = vmatpush2.msra.mxu0 0.0
    %4081 = vmatprep.subr.mxu0 0.0
    %4082 = vmatpush2.msra.mxu0 0.0
    %4083 = vmatprep.subr.mxu0 0.0
    %4084 = vmatpush2.msra.mxu0 0.0
    %4085 = vmatprep.subr.mxu0 0.0
    %4086 = vmatpush2.msra.mxu0 0.0
    %4087 = vmatprep.subr.mxu0 0.0
    %4088 = vmatpush2.msra.mxu0 0.0
    %4089 = vmatprep.subr.mxu0 0.0
    %4090 = vmatpush2.msra.mxu0 0.0
    %4091 = vmatprep.subr.mxu0 0.0
    %4092 = vmatpush2.msra.mxu0 0.0
    %4093 = vmatprep.subr.mxu0 0.0
    %4094 = vmatpush2.msra.mxu0 0.0
    %4095 = vmatprep.subr.mxu0 0.0
    %4096 = vmatpush2.msra.mxu0 0.0
    %4097 = vmatprep.subr.mxu0 0.0
    %4098 = vmatpush2.msra.mxu0 0.0
    %4099 = vmatprep.subr.mxu0 0.0
    %4100 = vmatpush2.msra.mxu0 0.0
    %4101 = vmatprep.subr.mxu0 0.0
    %4102 = vmatpush2.msra.mxu0 0.0
    %4103 = vmatprep.mubr.f32.mxu0 0.0
    %4104 = vmatmul.mubr.f32.gmra.mxu0 %v4037
    %v4105 = vpop.f32.mrf.mxu0
    %v4106 = vadd.f32 0.0, %v4105
    %v4107 = vpop.f32.mrf.mxu0
    %4108 = vdwg.mxu0
    %4109 = vrot.lane.b32.xlu0 %v3571, 112
    %v4110 = vpop.permute.xlu0 %4109
    %4111 = vrot.lane.b32.xlu0 %v3662, 112
    %v4112 = vpop.permute.xlu0 %4111
    %4113 = vrot.lane.b32.xlu0 %v3667, 112
    %v4114 = vpop.permute.xlu0 %4113
    %v4115 = vsel %vm622, %v4110, 0
    %v4117 = vsel %vm622, %v4112, 0
    %v4119 = vsel %vm622, %v4114, 0
    %4121 = vmatprep.subr.mxu0 0.0
    %4122 = vmatpush1.xpose.msra.mxu0 0.0
    %4123 = vmatprep.subr.mxu0 0.0
    %4124 = vmatpush1.xpose.msra.mxu0 0.0
    %4125 = vmatprep.subr.mxu0 0.0
    %4126 = vmatpush1.xpose.msra.mxu0 0.0
    %4127 = vmatprep.subr.mxu0 0.0
    %4128 = vmatpush1.xpose.msra.mxu0 0.0
    %4129 = vmatprep.subr.mxu0 0.0
    %4130 = vmatpush1.xpose.msra.mxu0 0.0
    %4131 = vmatprep.subr.mxu0 0.0
    %4132 = vmatpush1.xpose.msra.mxu0 0.0
    %4133 = vmatprep.subr.mxu0 0.0
    %4134 = vmatpush1.xpose.msra.mxu0 0.0
    %4135 = vmatprep.subr.mxu0 0.0
    %4136 = vmatpush1.xpose.msra.mxu0 0.0
    %4137 = vmatprep.subr.mxu0 0.0
    %4138 = vmatpush1.xpose.msra.mxu0 0.0
    %4139 = vmatprep.subr.mxu0 0.0
    %4140 = vmatpush1.xpose.msra.mxu0 0.0
    %4141 = vmatprep.subr.mxu0 0.0
    %4142 = vmatpush1.xpose.msra.mxu0 0.0
    %4143 = vmatprep.subr.mxu0 0.0
    %4144 = vmatpush1.xpose.msra.mxu0 0.0
    %4145 = vmatprep.subr.mxu0 0.0
    %4146 = vmatpush1.xpose.msra.mxu0 0.0
    %4147 = vmatprep.subr.mxu0 0.0
    %4148 = vmatpush1.xpose.msra.mxu0 0.0
    %4149 = vmatprep.subr.mxu0 0.0
    %4150 = vmatpush1.xpose.msra.mxu0 %v4119
    %4151 = vmatprep.subr.mxu0 0.0
    %4152 = vmatpush1.xpose.msra.mxu0 %v4117
    %4153 = vmatprep.subr.mxu0 0.0
    %4154 = vmatpush2.xpose.msra.mxu0 0.0
    %4155 = vmatprep.subr.mxu0 0.0
    %4156 = vmatpush2.xpose.msra.mxu0 0.0
    %4157 = vmatprep.subr.mxu0 0.0
    %4158 = vmatpush2.xpose.msra.mxu0 0.0
    %4159 = vmatprep.subr.mxu0 0.0
    %4160 = vmatpush2.xpose.msra.mxu0 0.0
    %4161 = vmatprep.subr.mxu0 0.0
    %4162 = vmatpush2.xpose.msra.mxu0 0.0
    %4163 = vmatprep.subr.mxu0 0.0
    %4164 = vmatpush2.xpose.msra.mxu0 0.0
    %4165 = vmatprep.subr.mxu0 0.0
    %4166 = vmatpush2.xpose.msra.mxu0 0.0
    %4167 = vmatprep.subr.mxu0 0.0
    %4168 = vmatpush2.xpose.msra.mxu0 0.0
    %4169 = vmatprep.subr.mxu0 0.0
    %4170 = vmatpush2.xpose.msra.mxu0 0.0
    %4171 = vmatprep.subr.mxu0 0.0
    %4172 = vmatpush2.xpose.msra.mxu0 0.0
    %4173 = vmatprep.subr.mxu0 0.0
    %4174 = vmatpush2.xpose.msra.mxu0 0.0
    %4175 = vmatprep.subr.mxu0 0.0
    %4176 = vmatpush2.xpose.msra.mxu0 0.0
    %4177 = vmatprep.subr.mxu0 0.0
    %4178 = vmatpush2.xpose.msra.mxu0 0.0
    %4179 = vmatprep.subr.mxu0 0.0
    %4180 = vmatpush2.xpose.msra.mxu0 0.0
    %4181 = vmatprep.subr.mxu0 0.0
    %4182 = vmatpush2.xpose.msra.mxu0 0.0
    %4183 = vmatprep.subr.mxu0 0.0
    %4184 = vmatpush2.xpose.msra.mxu0 0.0
    %4185 = vmatprep.mubr.f32.mxu0 0.0
    %4186 = vmatmul.mubr.f32.gmra.mxu0 %v4115
    %v4187 = vpop.f32.mrf.mxu0
    %v4188 = vadd.f32 0.0, %v4187
    %v4189 = vpop.f32.mrf.mxu0
    %4190 = vdwg.mxu0
    %4191 = vrot.lane.b32.xlu0 %v3576, 112
    %v4192 = vpop.permute.xlu0 %4191
    %4193 = vrot.lane.b32.xlu0 %v3672, 112
    %v4194 = vpop.permute.xlu0 %4193
    %4195 = vrot.lane.b32.xlu0 %v3677, 112
    %v4196 = vpop.permute.xlu0 %4195
    %v4197 = vsel %vm622, %v4192, 0
    %v4199 = vsel %vm622, %v4194, 0
    %v4201 = vsel %vm622, %v4196, 0
    %4203 = vmatprep.subr.mxu0 0.0
    %4204 = vmatpush1.xpose.msra.mxu0 0.0
    %4205 = vmatprep.subr.mxu0 0.0
    %4206 = vmatpush1.xpose.msra.mxu0 0.0
    %4207 = vmatprep.subr.mxu0 0.0
    %4208 = vmatpush1.xpose.msra.mxu0 0.0
    %4209 = vmatprep.subr.mxu0 0.0
    %4210 = vmatpush1.xpose.msra.mxu0 0.0
    %4211 = vmatprep.subr.mxu0 0.0
    %4212 = vmatpush1.xpose.msra.mxu0 0.0
    %4213 = vmatprep.subr.mxu0 0.0
    %4214 = vmatpush1.xpose.msra.mxu0 0.0
    %4215 = vmatprep.subr.mxu0 0.0
    %4216 = vmatpush1.xpose.msra.mxu0 0.0
    %4217 = vmatprep.subr.mxu0 0.0
    %4218 = vmatpush1.xpose.msra.mxu0 0.0
    %4219 = vmatprep.subr.mxu0 0.0
    %4220 = vmatpush1.xpose.msra.mxu0 0.0
    %4221 = vmatprep.subr.mxu0 0.0
    %4222 = vmatpush1.xpose.msra.mxu0 0.0
    %4223 = vmatprep.subr.mxu0 0.0
    %4224 = vmatpush1.xpose.msra.mxu0 0.0
    %4225 = vmatprep.subr.mxu0 0.0
    %4226 = vmatpush1.xpose.msra.mxu0 0.0
    %4227 = vmatprep.subr.mxu0 0.0
    %4228 = vmatpush1.xpose.msra.mxu0 0.0
    %4229 = vmatprep.subr.mxu0 0.0
    %4230 = vmatpush1.xpose.msra.mxu0 0.0
    %4231 = vmatprep.subr.mxu0 0.0
    %4232 = vmatpush1.xpose.msra.mxu0 %v4201
    %4233 = vmatprep.subr.mxu0 0.0
    %4234 = vmatpush1.xpose.msra.mxu0 %v4199
    %4235 = vmatprep.subr.mxu0 0.0
    %4236 = vmatpush2.xpose.msra.mxu0 0.0
    %4237 = vmatprep.subr.mxu0 0.0
    %4238 = vmatpush2.xpose.msra.mxu0 0.0
    %4239 = vmatprep.subr.mxu0 0.0
    %4240 = vmatpush2.xpose.msra.mxu0 0.0
    %4241 = vmatprep.subr.mxu0 0.0
    %4242 = vmatpush2.xpose.msra.mxu0 0.0
    %4243 = vmatprep.subr.mxu0 0.0
    %4244 = vmatpush2.xpose.msra.mxu0 0.0
    %4245 = vmatprep.subr.mxu0 0.0
    %4246 = vmatpush2.xpose.msra.mxu0 0.0
    %4247 = vmatprep.subr.mxu0 0.0
    %4248 = vmatpush2.xpose.msra.mxu0 0.0
    %4249 = vmatprep.subr.mxu0 0.0
    %4250 = vmatpush2.xpose.msra.mxu0 0.0
    %4251 = vmatprep.subr.mxu0 0.0
    %4252 = vmatpush2.xpose.msra.mxu0 0.0
    %4253 = vmatprep.subr.mxu0 0.0
    %4254 = vmatpush2.xpose.msra.mxu0 0.0
    %4255 = vmatprep.subr.mxu0 0.0
    %4256 = vmatpush2.xpose.msra.mxu0 0.0
    %4257 = vmatprep.subr.mxu0 0.0
    %4258 = vmatpush2.xpose.msra.mxu0 0.0
    %4259 = vmatprep.subr.mxu0 0.0
    %4260 = vmatpush2.xpose.msra.mxu0 0.0
    %4261 = vmatprep.subr.mxu0 0.0
    %4262 = vmatpush2.xpose.msra.mxu0 0.0
    %4263 = vmatprep.subr.mxu0 0.0
    %4264 = vmatpush2.xpose.msra.mxu0 0.0
    %4265 = vmatprep.subr.mxu0 0.0
    %4266 = vmatpush2.xpose.msra.mxu0 0.0
    %4267 = vmatprep.mubr.f32.mxu0 0.0
    %4268 = vmatmul.mubr.f32.gmra.mxu0 %v4197
    %v4269 = vpop.f32.mrf.mxu0
    %v4270 = vadd.f32 0.0, %v4269
    %v4271 = vpop.f32.mrf.mxu0
    %4272 = vdwg.mxu0
    %v4273 = vmul.f32 %v4188, 0.25
    %v4274 = vmul.f32 %v4270, 0.25
    %v4275 = vsel %vm622, %v4273, -inf
    %4276 = vmax.xlane.f32.xlu0 %v4275
    %v4277 = vpop.xlane.xlu0 %4276
    %v4278 = vsel %vm622, %v4274, -inf
    %4279 = vmax.xlane.f32.xlu0 %v4278
    %v4280 = vpop.xlane.xlu0 %4279
    %v4281 = vsub.f32 %v4273, %v4277
    %v4282 = vsub.f32 %v4274, %v4280
    %v4283 = vmul.f32 %v4281, 1.442695
    %v4284 = vpow.pop %v4283
    %v4285 = vmul.f32 %v4282, 1.442695
    %v4286 = vpow.pop %v4285
    %v4287 = vsel %vm622, %v4284, 0.0
    %4288 = vadd.xlane.f32.xlu0 %v4287
    %v4289 = vpop.xlane.xlu0 %4288
    %v4290 = vsel %vm622, %v4286, 0.0
    %4291 = vadd.xlane.f32.xlu0 %v4290
    %v4292 = vpop.xlane.xlu0 %4291
    %v4293 = vrcp.pop %v4289
    %v4294 = vrcp.pop %v4292
    %v4295 = vmul.f32 %v4284, %v4293
    %v4296 = vmul.f32 %v4286, %v4294
    %4299 = vrot.lane.b32.xlu0 %v3763, 112
    %v4300 = vpop.permute.xlu0 %4299
    %4301 = vrot.lane.b32.xlu0 %v3768, 112
    %v4302 = vpop.permute.xlu0 %4301
    %v4306 = vsel %vm622, %v4295, 0
    %4308 = vmatprep.subr.mxu0 0.0
    %4309 = vmatpush1.msra.mxu0 0.0
    %4310 = vmatprep.subr.mxu0 0.0
    %4311 = vmatpush1.msra.mxu0 0.0
    %4312 = vmatprep.subr.mxu0 0.0
    %4313 = vmatpush1.msra.mxu0 0.0
    %4314 = vmatprep.subr.mxu0 0.0
    %4315 = vmatpush1.msra.mxu0 0.0
    %4316 = vmatprep.subr.mxu0 0.0
    %4317 = vmatpush1.msra.mxu0 0.0
    %4318 = vmatprep.subr.mxu0 0.0
    %4319 = vmatpush1.msra.mxu0 0.0
    %4320 = vmatprep.subr.mxu0 0.0
    %4321 = vmatpush1.msra.mxu0 0.0
    %4322 = vmatprep.subr.mxu0 0.0
    %4323 = vmatpush1.msra.mxu0 0.0
    %4324 = vmatprep.subr.mxu0 0.0
    %4325 = vmatpush1.msra.mxu0 0.0
    %4326 = vmatprep.subr.mxu0 0.0
    %4327 = vmatpush1.msra.mxu0 0.0
    %4328 = vmatprep.subr.mxu0 0.0
    %4329 = vmatpush1.msra.mxu0 0.0
    %4330 = vmatprep.subr.mxu0 0.0
    %4331 = vmatpush1.msra.mxu0 0.0
    %4332 = vmatprep.subr.mxu0 0.0
    %4333 = vmatpush1.msra.mxu0 0.0
    %4334 = vmatprep.subr.mxu0 0.0
    %4335 = vmatpush1.msra.mxu0 0.0
    %4336 = vmatprep.subr.mxu0 0.0
    %4337 = vmatpush1.msra.mxu0 %v4302
    %4338 = vmatprep.subr.mxu0 0.0
    %4339 = vmatpush1.msra.mxu0 %v4300
    %4340 = vmatprep.subr.mxu0 0.0
    %4341 = vmatpush2.msra.mxu0 0.0
    %4342 = vmatprep.subr.mxu0 0.0
    %4343 = vmatpush2.msra.mxu0 0.0
    %4344 = vmatprep.subr.mxu0 0.0
    %4345 = vmatpush2.msra.mxu0 0.0
    %4346 = vmatprep.subr.mxu0 0.0
    %4347 = vmatpush2.msra.mxu0 0.0
    %4348 = vmatprep.subr.mxu0 0.0
    %4349 = vmatpush2.msra.mxu0 0.0
    %4350 = vmatprep.subr.mxu0 0.0
    %4351 = vmatpush2.msra.mxu0 0.0
    %4352 = vmatprep.subr.mxu0 0.0
    %4353 = vmatpush2.msra.mxu0 0.0
    %4354 = vmatprep.subr.mxu0 0.0
    %4355 = vmatpush2.msra.mxu0 0.0
    %4356 = vmatprep.subr.mxu0 0.0
    %4357 = vmatpush2.msra.mxu0 0.0
    %4358 = vmatprep.subr.mxu0 0.0
    %4359 = vmatpush2.msra.mxu0 0.0
    %4360 = vmatprep.subr.mxu0 0.0
    %4361 = vmatpush2.msra.mxu0 0.0
    %4362 = vmatprep.subr.mxu0 0.0
    %4363 = vmatpush2.msra.mxu0 0.0
    %4364 = vmatprep.subr.mxu0 0.0
    %4365 = vmatpush2.msra.mxu0 0.0
    %4366 = vmatprep.subr.mxu0 0.0
    %4367 = vmatpush2.msra.mxu0 0.0
    %4368 = vmatprep.subr.mxu0 0.0
    %4369 = vmatpush2.msra.mxu0 0.0
    %4370 = vmatprep.subr.mxu0 0.0
    %4371 = vmatpush2.msra.mxu0 0.0
    %4372 = vmatprep.mubr.f32.mxu0 0.0
    %4373 = vmatmul.mubr.f32.gmra.mxu0 %v4306
    %v4374 = vpop.f32.mrf.mxu0
    %v4375 = vadd.f32 0.0, %v4374
    %v4376 = vpop.f32.mrf.mxu0
    %4377 = vdwg.mxu0
    %4380 = vrot.lane.b32.xlu0 %v3773, 112
    %v4381 = vpop.permute.xlu0 %4380
    %4382 = vrot.lane.b32.xlu0 %v3778, 112
    %v4383 = vpop.permute.xlu0 %4382
    %v4387 = vsel %vm622, %v4296, 0
    %4389 = vmatprep.subr.mxu0 0.0
    %4390 = vmatpush1.msra.mxu0 0.0
    %4391 = vmatprep.subr.mxu0 0.0
    %4392 = vmatpush1.msra.mxu0 0.0
    %4393 = vmatprep.subr.mxu0 0.0
    %4394 = vmatpush1.msra.mxu0 0.0
    %4395 = vmatprep.subr.mxu0 0.0
    %4396 = vmatpush1.msra.mxu0 0.0
    %4397 = vmatprep.subr.mxu0 0.0
    %4398 = vmatpush1.msra.mxu0 0.0
    %4399 = vmatprep.subr.mxu0 0.0
    %4400 = vmatpush1.msra.mxu0 0.0
    %4401 = vmatprep.subr.mxu0 0.0
    %4402 = vmatpush1.msra.mxu0 0.0
    %4403 = vmatprep.subr.mxu0 0.0
    %4404 = vmatpush1.msra.mxu0 0.0
    %4405 = vmatprep.subr.mxu0 0.0
    %4406 = vmatpush1.msra.mxu0 0.0
    %4407 = vmatprep.subr.mxu0 0.0
    %4408 = vmatpush1.msra.mxu0 0.0
    %4409 = vmatprep.subr.mxu0 0.0
    %4410 = vmatpush1.msra.mxu0 0.0
    %4411 = vmatprep.subr.mxu0 0.0
    %4412 = vmatpush1.msra.mxu0 0.0
    %4413 = vmatprep.subr.mxu0 0.0
    %4414 = vmatpush1.msra.mxu0 0.0
    %4415 = vmatprep.subr.mxu0 0.0
    %4416 = vmatpush1.msra.mxu0 0.0
    %4417 = vmatprep.subr.mxu0 0.0
    %4418 = vmatpush1.msra.mxu0 %v4383
    %4419 = vmatprep.subr.mxu0 0.0
    %4420 = vmatpush1.msra.mxu0 %v4381
    %4421 = vmatprep.subr.mxu0 0.0
    %4422 = vmatpush2.msra.mxu0 0.0
    %4423 = vmatprep.subr.mxu0 0.0
    %4424 = vmatpush2.msra.mxu0 0.0
    %4425 = vmatprep.subr.mxu0 0.0
    %4426 = vmatpush2.msra.mxu0 0.0
    %4427 = vmatprep.subr.mxu0 0.0
    %4428 = vmatpush2.msra.mxu0 0.0
    %4429 = vmatprep.subr.mxu0 0.0
    %4430 = vmatpush2.msra.mxu0 0.0
    %4431 = vmatprep.subr.mxu0 0.0
    %4432 = vmatpush2.msra.mxu0 0.0
    %4433 = vmatprep.subr.mxu0 0.0
    %4434 = vmatpush2.msra.mxu0 0.0
    %4435 = vmatprep.subr.mxu0 0.0
    %4436 = vmatpush2.msra.mxu0 0.0
    %4437 = vmatprep.subr.mxu0 0.0
    %4438 = vmatpush2.msra.mxu0 0.0
    %4439 = vmatprep.subr.mxu0 0.0
    %4440 = vmatpush2.msra.mxu0 0.0
    %4441 = vmatprep.subr.mxu0 0.0
    %4442 = vmatpush2.msra.mxu0 0.0
    %4443 = vmatprep.subr.mxu0 0.0
    %4444 = vmatpush2.msra.mxu0 0.0
    %4445 = vmatprep.subr.mxu0 0.0
    %4446 = vmatpush2.msra.mxu0 0.0
    %4447 = vmatprep.subr.mxu0 0.0
    %4448 = vmatpush2.msra.mxu0 0.0
    %4449 = vmatprep.subr.mxu0 0.0
    %4450 = vmatpush2.msra.mxu0 0.0
    %4451 = vmatprep.subr.mxu0 0.0
    %4452 = vmatpush2.msra.mxu0 0.0
    %4453 = vmatprep.mubr.f32.mxu0 0.0
    %4454 = vmatmul.mubr.f32.gmra.mxu0 %v4387
    %v4455 = vpop.f32.mrf.mxu0
    %v4456 = vadd.f32 0.0, %v4455
    %v4457 = vpop.f32.mrf.mxu0
    %4458 = vdwg.mxu0
    %4459 = vrot.lane.b32.xlu0 %v3571, 96
    %v4460 = vpop.permute.xlu0 %4459
    %4461 = vrot.lane.b32.xlu0 %v3662, 96
    %v4462 = vpop.permute.xlu0 %4461
    %4463 = vrot.lane.b32.xlu0 %v3667, 96
    %v4464 = vpop.permute.xlu0 %4463
    %v4465 = vsel %vm622, %v4460, 0
    %v4467 = vsel %vm622, %v4462, 0
    %v4469 = vsel %vm622, %v4464, 0
    %4471 = vmatprep.subr.mxu0 0.0
    %4472 = vmatpush1.xpose.msra.mxu0 0.0
    %4473 = vmatprep.subr.mxu0 0.0
    %4474 = vmatpush1.xpose.msra.mxu0 0.0
    %4475 = vmatprep.subr.mxu0 0.0
    %4476 = vmatpush1.xpose.msra.mxu0 0.0
    %4477 = vmatprep.subr.mxu0 0.0
    %4478 = vmatpush1.xpose.msra.mxu0 0.0
    %4479 = vmatprep.subr.mxu0 0.0
    %4480 = vmatpush1.xpose.msra.mxu0 0.0
    %4481 = vmatprep.subr.mxu0 0.0
    %4482 = vmatpush1.xpose.msra.mxu0 0.0
    %4483 = vmatprep.subr.mxu0 0.0
    %4484 = vmatpush1.xpose.msra.mxu0 0.0
    %4485 = vmatprep.subr.mxu0 0.0
    %4486 = vmatpush1.xpose.msra.mxu0 0.0
    %4487 = vmatprep.subr.mxu0 0.0
    %4488 = vmatpush1.xpose.msra.mxu0 0.0
    %4489 = vmatprep.subr.mxu0 0.0
    %4490 = vmatpush1.xpose.msra.mxu0 0.0
    %4491 = vmatprep.subr.mxu0 0.0
    %4492 = vmatpush1.xpose.msra.mxu0 0.0
    %4493 = vmatprep.subr.mxu0 0.0
    %4494 = vmatpush1.xpose.msra.mxu0 0.0
    %4495 = vmatprep.subr.mxu0 0.0
    %4496 = vmatpush1.xpose.msra.mxu0 0.0
    %4497 = vmatprep.subr.mxu0 0.0
    %4498 = vmatpush1.xpose.msra.mxu0 0.0
    %4499 = vmatprep.subr.mxu0 0.0
    %4500 = vmatpush1.xpose.msra.mxu0 %v4469
    %4501 = vmatprep.subr.mxu0 0.0
    %4502 = vmatpush1.xpose.msra.mxu0 %v4467
    %4503 = vmatprep.subr.mxu0 0.0
    %4504 = vmatpush2.xpose.msra.mxu0 0.0
    %4505 = vmatprep.subr.mxu0 0.0
    %4506 = vmatpush2.xpose.msra.mxu0 0.0
    %4507 = vmatprep.subr.mxu0 0.0
    %4508 = vmatpush2.xpose.msra.mxu0 0.0
    %4509 = vmatprep.subr.mxu0 0.0
    %4510 = vmatpush2.xpose.msra.mxu0 0.0
    %4511 = vmatprep.subr.mxu0 0.0
    %4512 = vmatpush2.xpose.msra.mxu0 0.0
    %4513 = vmatprep.subr.mxu0 0.0
    %4514 = vmatpush2.xpose.msra.mxu0 0.0
    %4515 = vmatprep.subr.mxu0 0.0
    %4516 = vmatpush2.xpose.msra.mxu0 0.0
    %4517 = vmatprep.subr.mxu0 0.0
    %4518 = vmatpush2.xpose.msra.mxu0 0.0
    %4519 = vmatprep.subr.mxu0 0.0
    %4520 = vmatpush2.xpose.msra.mxu0 0.0
    %4521 = vmatprep.subr.mxu0 0.0
    %4522 = vmatpush2.xpose.msra.mxu0 0.0
    %4523 = vmatprep.subr.mxu0 0.0
    %4524 = vmatpush2.xpose.msra.mxu0 0.0
    %4525 = vmatprep.subr.mxu0 0.0
    %4526 = vmatpush2.xpose.msra.mxu0 0.0
    %4527 = vmatprep.subr.mxu0 0.0
    %4528 = vmatpush2.xpose.msra.mxu0 0.0
    %4529 = vmatprep.subr.mxu0 0.0
    %4530 = vmatpush2.xpose.msra.mxu0 0.0
    %4531 = vmatprep.subr.mxu0 0.0
    %4532 = vmatpush2.xpose.msra.mxu0 0.0
    %4533 = vmatprep.subr.mxu0 0.0
    %4534 = vmatpush2.xpose.msra.mxu0 0.0
    %4535 = vmatprep.mubr.f32.mxu0 0.0
    %4536 = vmatmul.mubr.f32.gmra.mxu0 %v4465
    %v4537 = vpop.f32.mrf.mxu0
    %v4538 = vadd.f32 0.0, %v4537
    %v4539 = vpop.f32.mrf.mxu0
    %4540 = vdwg.mxu0
    %4541 = vrot.lane.b32.xlu0 %v3576, 96
    %v4542 = vpop.permute.xlu0 %4541
    %4543 = vrot.lane.b32.xlu0 %v3672, 96
    %v4544 = vpop.permute.xlu0 %4543
    %4545 = vrot.lane.b32.xlu0 %v3677, 96
    %v4546 = vpop.permute.xlu0 %4545
    %v4547 = vsel %vm622, %v4542, 0
    %v4549 = vsel %vm622, %v4544, 0
    %v4551 = vsel %vm622, %v4546, 0
    %4553 = vmatprep.subr.mxu0 0.0
    %4554 = vmatpush1.xpose.msra.mxu0 0.0
    %4555 = vmatprep.subr.mxu0 0.0
    %4556 = vmatpush1.xpose.msra.mxu0 0.0
    %4557 = vmatprep.subr.mxu0 0.0
    %4558 = vmatpush1.xpose.msra.mxu0 0.0
    %4559 = vmatprep.subr.mxu0 0.0
    %4560 = vmatpush1.xpose.msra.mxu0 0.0
    %4561 = vmatprep.subr.mxu0 0.0
    %4562 = vmatpush1.xpose.msra.mxu0 0.0
    %4563 = vmatprep.subr.mxu0 0.0
    %4564 = vmatpush1.xpose.msra.mxu0 0.0
    %4565 = vmatprep.subr.mxu0 0.0
    %4566 = vmatpush1.xpose.msra.mxu0 0.0
    %4567 = vmatprep.subr.mxu0 0.0
    %4568 = vmatpush1.xpose.msra.mxu0 0.0
    %4569 = vmatprep.subr.mxu0 0.0
    %4570 = vmatpush1.xpose.msra.mxu0 0.0
    %4571 = vmatprep.subr.mxu0 0.0
    %4572 = vmatpush1.xpose.msra.mxu0 0.0
    %4573 = vmatprep.subr.mxu0 0.0
    %4574 = vmatpush1.xpose.msra.mxu0 0.0
    %4575 = vmatprep.subr.mxu0 0.0
    %4576 = vmatpush1.xpose.msra.mxu0 0.0
    %4577 = vmatprep.subr.mxu0 0.0
    %4578 = vmatpush1.xpose.msra.mxu0 0.0
    %4579 = vmatprep.subr.mxu0 0.0
    %4580 = vmatpush1.xpose.msra.mxu0 0.0
    %4581 = vmatprep.subr.mxu0 0.0
    %4582 = vmatpush1.xpose.msra.mxu0 %v4551
    %4583 = vmatprep.subr.mxu0 0.0
    %4584 = vmatpush1.xpose.msra.mxu0 %v4549
    %4585 = vmatprep.subr.mxu0 0.0
    %4586 = vmatpush2.xpose.msra.mxu0 0.0
    %4587 = vmatprep.subr.mxu0 0.0
    %4588 = vmatpush2.xpose.msra.mxu0 0.0
    %4589 = vmatprep.subr.mxu0 0.0
    %4590 = vmatpush2.xpose.msra.mxu0 0.0
    %4591 = vmatprep.subr.mxu0 0.0
    %4592 = vmatpush2.xpose.msra.mxu0 0.0
    %4593 = vmatprep.subr.mxu0 0.0
    %4594 = vmatpush2.xpose.msra.mxu0 0.0
    %4595 = vmatprep.subr.mxu0 0.0
    %4596 = vmatpush2.xpose.msra.mxu0 0.0
    %4597 = vmatprep.subr.mxu0 0.0
    %4598 = vmatpush2.xpose.msra.mxu0 0.0
    %4599 = vmatprep.subr.mxu0 0.0
    %4600 = vmatpush2.xpose.msra.mxu0 0.0
    %4601 = vmatprep.subr.mxu0 0.0
    %4602 = vmatpush2.xpose.msra.mxu0 0.0
    %4603 = vmatprep.subr.mxu0 0.0
    %4604 = vmatpush2.xpose.msra.mxu0 0.0
    %4605 = vmatprep.subr.mxu0 0.0
    %4606 = vmatpush2.xpose.msra.mxu0 0.0
    %4607 = vmatprep.subr.mxu0 0.0
    %4608 = vmatpush2.xpose.msra.mxu0 0.0
    %4609 = vmatprep.subr.mxu0 0.0
    %4610 = vmatpush2.xpose.msra.mxu0 0.0
    %4611 = vmatprep.subr.mxu0 0.0
    %4612 = vmatpush2.xpose.msra.mxu0 0.0
    %4613 = vmatprep.subr.mxu0 0.0
    %4614 = vmatpush2.xpose.msra.mxu0 0.0
    %4615 = vmatprep.subr.mxu0 0.0
    %4616 = vmatpush2.xpose.msra.mxu0 0.0
    %4617 = vmatprep.mubr.f32.mxu0 0.0
    %4618 = vmatmul.mubr.f32.gmra.mxu0 %v4547
    %v4619 = vpop.f32.mrf.mxu0
    %v4620 = vadd.f32 0.0, %v4619
    %v4621 = vpop.f32.mrf.mxu0
    %4622 = vdwg.mxu0
    %v4623 = vmul.f32 %v4538, 0.25
    %v4624 = vmul.f32 %v4620, 0.25
    %v4625 = vsel %vm622, %v4623, -inf
    %4626 = vmax.xlane.f32.xlu0 %v4625
    %v4627 = vpop.xlane.xlu0 %4626
    %v4628 = vsel %vm622, %v4624, -inf
    %4629 = vmax.xlane.f32.xlu0 %v4628
    %v4630 = vpop.xlane.xlu0 %4629
    %v4631 = vsub.f32 %v4623, %v4627
    %v4632 = vsub.f32 %v4624, %v4630
    %v4633 = vmul.f32 %v4631, 1.442695
    %v4634 = vpow.pop %v4633
    %v4635 = vmul.f32 %v4632, 1.442695
    %v4636 = vpow.pop %v4635
    %v4637 = vsel %vm622, %v4634, 0.0
    %4638 = vadd.xlane.f32.xlu0 %v4637
    %v4639 = vpop.xlane.xlu0 %4638
    %v4640 = vsel %vm622, %v4636, 0.0
    %4641 = vadd.xlane.f32.xlu0 %v4640
    %v4642 = vpop.xlane.xlu0 %4641
    %v4643 = vrcp.pop %v4639
    %v4644 = vrcp.pop %v4642
    %v4645 = vmul.f32 %v4634, %v4643
    %v4646 = vmul.f32 %v4636, %v4644
    %4647 = vrot.lane.b32.xlu0 %v3763, 96
    %v4648 = vpop.permute.xlu0 %4647
    %4649 = vrot.lane.b32.xlu0 %v3768, 96
    %v4650 = vpop.permute.xlu0 %4649
    %v4654 = vsel %vm622, %v4645, 0
    %4656 = vmatprep.subr.mxu0 0.0
    %4657 = vmatpush1.msra.mxu0 0.0
    %4658 = vmatprep.subr.mxu0 0.0
    %4659 = vmatpush1.msra.mxu0 0.0
    %4660 = vmatprep.subr.mxu0 0.0
    %4661 = vmatpush1.msra.mxu0 0.0
    %4662 = vmatprep.subr.mxu0 0.0
    %4663 = vmatpush1.msra.mxu0 0.0
    %4664 = vmatprep.subr.mxu0 0.0
    %4665 = vmatpush1.msra.mxu0 0.0
    %4666 = vmatprep.subr.mxu0 0.0
    %4667 = vmatpush1.msra.mxu0 0.0
    %4668 = vmatprep.subr.mxu0 0.0
    %4669 = vmatpush1.msra.mxu0 0.0
    %4670 = vmatprep.subr.mxu0 0.0
    %4671 = vmatpush1.msra.mxu0 0.0
    %4672 = vmatprep.subr.mxu0 0.0
    %4673 = vmatpush1.msra.mxu0 0.0
    %4674 = vmatprep.subr.mxu0 0.0
    %4675 = vmatpush1.msra.mxu0 0.0
    %4676 = vmatprep.subr.mxu0 0.0
    %4677 = vmatpush1.msra.mxu0 0.0
    %4678 = vmatprep.subr.mxu0 0.0
    %4679 = vmatpush1.msra.mxu0 0.0
    %4680 = vmatprep.subr.mxu0 0.0
    %4681 = vmatpush1.msra.mxu0 0.0
    %4682 = vmatprep.subr.mxu0 0.0
    %4683 = vmatpush1.msra.mxu0 0.0
    %4684 = vmatprep.subr.mxu0 0.0
    %4685 = vmatpush1.msra.mxu0 %v4650
    %4686 = vmatprep.subr.mxu0 0.0
    %4687 = vmatpush1.msra.mxu0 %v4648
    %4688 = vmatprep.subr.mxu0 0.0
    %4689 = vmatpush2.msra.mxu0 0.0
    %4690 = vmatprep.subr.mxu0 0.0
    %4691 = vmatpush2.msra.mxu0 0.0
    %4692 = vmatprep.subr.mxu0 0.0
    %4693 = vmatpush2.msra.mxu0 0.0
    %4694 = vmatprep.subr.mxu0 0.0
    %4695 = vmatpush2.msra.mxu0 0.0
    %4696 = vmatprep.subr.mxu0 0.0
    %4697 = vmatpush2.msra.mxu0 0.0
    %4698 = vmatprep.subr.mxu0 0.0
    %4699 = vmatpush2.msra.mxu0 0.0
    %4700 = vmatprep.subr.mxu0 0.0
    %4701 = vmatpush2.msra.mxu0 0.0
    %4702 = vmatprep.subr.mxu0 0.0
    %4703 = vmatpush2.msra.mxu0 0.0
    %4704 = vmatprep.subr.mxu0 0.0
    %4705 = vmatpush2.msra.mxu0 0.0
    %4706 = vmatprep.subr.mxu0 0.0
    %4707 = vmatpush2.msra.mxu0 0.0
    %4708 = vmatprep.subr.mxu0 0.0
    %4709 = vmatpush2.msra.mxu0 0.0
    %4710 = vmatprep.subr.mxu0 0.0
    %4711 = vmatpush2.msra.mxu0 0.0
    %4712 = vmatprep.subr.mxu0 0.0
    %4713 = vmatpush2.msra.mxu0 0.0
    %4714 = vmatprep.subr.mxu0 0.0
    %4715 = vmatpush2.msra.mxu0 0.0
    %4716 = vmatprep.subr.mxu0 0.0
    %4717 = vmatpush2.msra.mxu0 0.0
    %4718 = vmatprep.subr.mxu0 0.0
    %4719 = vmatpush2.msra.mxu0 0.0
    %4720 = vmatprep.mubr.f32.mxu0 0.0
    %4721 = vmatmul.mubr.f32.gmra.mxu0 %v4654
    %v4722 = vpop.f32.mrf.mxu0
    %v4723 = vadd.f32 0.0, %v4722
    %v4724 = vpop.f32.mrf.mxu0
    %4725 = vdwg.mxu0
    %4726 = vrot.lane.b32.xlu0 %v3773, 96
    %v4727 = vpop.permute.xlu0 %4726
    %4728 = vrot.lane.b32.xlu0 %v3778, 96
    %v4729 = vpop.permute.xlu0 %4728
    %v4733 = vsel %vm622, %v4646, 0
    %4735 = vmatprep.subr.mxu0 0.0
    %4736 = vmatpush1.msra.mxu0 0.0
    %4737 = vmatprep.subr.mxu0 0.0
    %4738 = vmatpush1.msra.mxu0 0.0
    %4739 = vmatprep.subr.mxu0 0.0
    %4740 = vmatpush1.msra.mxu0 0.0
    %4741 = vmatprep.subr.mxu0 0.0
    %4742 = vmatpush1.msra.mxu0 0.0
    %4743 = vmatprep.subr.mxu0 0.0
    %4744 = vmatpush1.msra.mxu0 0.0
    %4745 = vmatprep.subr.mxu0 0.0
    %4746 = vmatpush1.msra.mxu0 0.0
    %4747 = vmatprep.subr.mxu0 0.0
    %4748 = vmatpush1.msra.mxu0 0.0
    %4749 = vmatprep.subr.mxu0 0.0
    %4750 = vmatpush1.msra.mxu0 0.0
    %4751 = vmatprep.subr.mxu0 0.0
    %4752 = vmatpush1.msra.mxu0 0.0
    %4753 = vmatprep.subr.mxu0 0.0
    %4754 = vmatpush1.msra.mxu0 0.0
    %4755 = vmatprep.subr.mxu0 0.0
    %4756 = vmatpush1.msra.mxu0 0.0
    %4757 = vmatprep.subr.mxu0 0.0
    %4758 = vmatpush1.msra.mxu0 0.0
    %4759 = vmatprep.subr.mxu0 0.0
    %4760 = vmatpush1.msra.mxu0 0.0
    %4761 = vmatprep.subr.mxu0 0.0
    %4762 = vmatpush1.msra.mxu0 0.0
    %4763 = vmatprep.subr.mxu0 0.0
    %4764 = vmatpush1.msra.mxu0 %v4729
    %4765 = vmatprep.subr.mxu0 0.0
    %4766 = vmatpush1.msra.mxu0 %v4727
    %4767 = vmatprep.subr.mxu0 0.0
    %4768 = vmatpush2.msra.mxu0 0.0
    %4769 = vmatprep.subr.mxu0 0.0
    %4770 = vmatpush2.msra.mxu0 0.0
    %4771 = vmatprep.subr.mxu0 0.0
    %4772 = vmatpush2.msra.mxu0 0.0
    %4773 = vmatprep.subr.mxu0 0.0
    %4774 = vmatpush2.msra.mxu0 0.0
    %4775 = vmatprep.subr.mxu0 0.0
    %4776 = vmatpush2.msra.mxu0 0.0
    %4777 = vmatprep.subr.mxu0 0.0
    %4778 = vmatpush2.msra.mxu0 0.0
    %4779 = vmatprep.subr.mxu0 0.0
    %4780 = vmatpush2.msra.mxu0 0.0
    %4781 = vmatprep.subr.mxu0 0.0
    %4782 = vmatpush2.msra.mxu0 0.0
    %4783 = vmatprep.subr.mxu0 0.0
    %4784 = vmatpush2.msra.mxu0 0.0
    %4785 = vmatprep.subr.mxu0 0.0
    %4786 = vmatpush2.msra.mxu0 0.0
    %4787 = vmatprep.subr.mxu0 0.0
    %4788 = vmatpush2.msra.mxu0 0.0
    %4789 = vmatprep.subr.mxu0 0.0
    %4790 = vmatpush2.msra.mxu0 0.0
    %4791 = vmatprep.subr.mxu0 0.0
    %4792 = vmatpush2.msra.mxu0 0.0
    %4793 = vmatprep.subr.mxu0 0.0
    %4794 = vmatpush2.msra.mxu0 0.0
    %4795 = vmatprep.subr.mxu0 0.0
    %4796 = vmatpush2.msra.mxu0 0.0
    %4797 = vmatprep.subr.mxu0 0.0
    %4798 = vmatpush2.msra.mxu0 0.0
    %4799 = vmatprep.mubr.f32.mxu0 0.0
    %4800 = vmatmul.mubr.f32.gmra.mxu0 %v4733
    %v4801 = vpop.f32.mrf.mxu0
    %v4802 = vadd.f32 0.0, %v4801
    %v4803 = vpop.f32.mrf.mxu0
    %4804 = vdwg.mxu0
    %4805 = vrot.lane.b32.xlu0 %v3571, 80
    %v4806 = vpop.permute.xlu0 %4805
    %4807 = vrot.lane.b32.xlu0 %v3662, 80
    %v4808 = vpop.permute.xlu0 %4807
    %4809 = vrot.lane.b32.xlu0 %v3667, 80
    %v4810 = vpop.permute.xlu0 %4809
    %v4811 = vsel %vm622, %v4806, 0
    %v4813 = vsel %vm622, %v4808, 0
    %v4815 = vsel %vm622, %v4810, 0
    %4817 = vmatprep.subr.mxu0 0.0
    %4818 = vmatpush1.xpose.msra.mxu0 0.0
    %4819 = vmatprep.subr.mxu0 0.0
    %4820 = vmatpush1.xpose.msra.mxu0 0.0
    %4821 = vmatprep.subr.mxu0 0.0
    %4822 = vmatpush1.xpose.msra.mxu0 0.0
    %4823 = vmatprep.subr.mxu0 0.0
    %4824 = vmatpush1.xpose.msra.mxu0 0.0
    %4825 = vmatprep.subr.mxu0 0.0
    %4826 = vmatpush1.xpose.msra.mxu0 0.0
    %4827 = vmatprep.subr.mxu0 0.0
    %4828 = vmatpush1.xpose.msra.mxu0 0.0
    %4829 = vmatprep.subr.mxu0 0.0
    %4830 = vmatpush1.xpose.msra.mxu0 0.0
    %4831 = vmatprep.subr.mxu0 0.0
    %4832 = vmatpush1.xpose.msra.mxu0 0.0
    %4833 = vmatprep.subr.mxu0 0.0
    %4834 = vmatpush1.xpose.msra.mxu0 0.0
    %4835 = vmatprep.subr.mxu0 0.0
    %4836 = vmatpush1.xpose.msra.mxu0 0.0
    %4837 = vmatprep.subr.mxu0 0.0
    %4838 = vmatpush1.xpose.msra.mxu0 0.0
    %4839 = vmatprep.subr.mxu0 0.0
    %4840 = vmatpush1.xpose.msra.mxu0 0.0
    %4841 = vmatprep.subr.mxu0 0.0
    %4842 = vmatpush1.xpose.msra.mxu0 0.0
    %4843 = vmatprep.subr.mxu0 0.0
    %4844 = vmatpush1.xpose.msra.mxu0 0.0
    %4845 = vmatprep.subr.mxu0 0.0
    %4846 = vmatpush1.xpose.msra.mxu0 %v4815
    %4847 = vmatprep.subr.mxu0 0.0
    %4848 = vmatpush1.xpose.msra.mxu0 %v4813
    %4849 = vmatprep.subr.mxu0 0.0
    %4850 = vmatpush2.xpose.msra.mxu0 0.0
    %4851 = vmatprep.subr.mxu0 0.0
    %4852 = vmatpush2.xpose.msra.mxu0 0.0
    %4853 = vmatprep.subr.mxu0 0.0
    %4854 = vmatpush2.xpose.msra.mxu0 0.0
    %4855 = vmatprep.subr.mxu0 0.0
    %4856 = vmatpush2.xpose.msra.mxu0 0.0
    %4857 = vmatprep.subr.mxu0 0.0
    %4858 = vmatpush2.xpose.msra.mxu0 0.0
    %4859 = vmatprep.subr.mxu0 0.0
    %4860 = vmatpush2.xpose.msra.mxu0 0.0
    %4861 = vmatprep.subr.mxu0 0.0
    %4862 = vmatpush2.xpose.msra.mxu0 0.0
    %4863 = vmatprep.subr.mxu0 0.0
    %4864 = vmatpush2.xpose.msra.mxu0 0.0
    %4865 = vmatprep.subr.mxu0 0.0
    %4866 = vmatpush2.xpose.msra.mxu0 0.0
    %4867 = vmatprep.subr.mxu0 0.0
    %4868 = vmatpush2.xpose.msra.mxu0 0.0
    %4869 = vmatprep.subr.mxu0 0.0
    %4870 = vmatpush2.xpose.msra.mxu0 0.0
    %4871 = vmatprep.subr.mxu0 0.0
    %4872 = vmatpush2.xpose.msra.mxu0 0.0
    %4873 = vmatprep.subr.mxu0 0.0
    %4874 = vmatpush2.xpose.msra.mxu0 0.0
    %4875 = vmatprep.subr.mxu0 0.0
    %4876 = vmatpush2.xpose.msra.mxu0 0.0
    %4877 = vmatprep.subr.mxu0 0.0
    %4878 = vmatpush2.xpose.msra.mxu0 0.0
    %4879 = vmatprep.subr.mxu0 0.0
    %4880 = vmatpush2.xpose.msra.mxu0 0.0
    %4881 = vmatprep.mubr.f32.mxu0 0.0
    %4882 = vmatmul.mubr.f32.gmra.mxu0 %v4811
    %v4883 = vpop.f32.mrf.mxu0
    %v4884 = vadd.f32 0.0, %v4883
    %v4885 = vpop.f32.mrf.mxu0
    %4886 = vdwg.mxu0
    %4887 = vrot.lane.b32.xlu0 %v3576, 80
    %v4888 = vpop.permute.xlu0 %4887
    %4889 = vrot.lane.b32.xlu0 %v3672, 80
    %v4890 = vpop.permute.xlu0 %4889
    %4891 = vrot.lane.b32.xlu0 %v3677, 80
    %v4892 = vpop.permute.xlu0 %4891
    %v4893 = vsel %vm622, %v4888, 0
    %v4895 = vsel %vm622, %v4890, 0
    %v4897 = vsel %vm622, %v4892, 0
    %4899 = vmatprep.subr.mxu0 0.0
    %4900 = vmatpush1.xpose.msra.mxu0 0.0
    %4901 = vmatprep.subr.mxu0 0.0
    %4902 = vmatpush1.xpose.msra.mxu0 0.0
    %4903 = vmatprep.subr.mxu0 0.0
    %4904 = vmatpush1.xpose.msra.mxu0 0.0
    %4905 = vmatprep.subr.mxu0 0.0
    %4906 = vmatpush1.xpose.msra.mxu0 0.0
    %4907 = vmatprep.subr.mxu0 0.0
    %4908 = vmatpush1.xpose.msra.mxu0 0.0
    %4909 = vmatprep.subr.mxu0 0.0
    %4910 = vmatpush1.xpose.msra.mxu0 0.0
    %4911 = vmatprep.subr.mxu0 0.0
    %4912 = vmatpush1.xpose.msra.mxu0 0.0
    %4913 = vmatprep.subr.mxu0 0.0
    %4914 = vmatpush1.xpose.msra.mxu0 0.0
    %4915 = vmatprep.subr.mxu0 0.0
    %4916 = vmatpush1.xpose.msra.mxu0 0.0
    %4917 = vmatprep.subr.mxu0 0.0
    %4918 = vmatpush1.xpose.msra.mxu0 0.0
    %4919 = vmatprep.subr.mxu0 0.0
    %4920 = vmatpush1.xpose.msra.mxu0 0.0
    %4921 = vmatprep.subr.mxu0 0.0
    %4922 = vmatpush1.xpose.msra.mxu0 0.0
    %4923 = vmatprep.subr.mxu0 0.0
    %4924 = vmatpush1.xpose.msra.mxu0 0.0
    %4925 = vmatprep.subr.mxu0 0.0
    %4926 = vmatpush1.xpose.msra.mxu0 0.0
    %4927 = vmatprep.subr.mxu0 0.0
    %4928 = vmatpush1.xpose.msra.mxu0 %v4897
    %4929 = vmatprep.subr.mxu0 0.0
    %4930 = vmatpush1.xpose.msra.mxu0 %v4895
    %4931 = vmatprep.subr.mxu0 0.0
    %4932 = vmatpush2.xpose.msra.mxu0 0.0
    %4933 = vmatprep.subr.mxu0 0.0
    %4934 = vmatpush2.xpose.msra.mxu0 0.0
    %4935 = vmatprep.subr.mxu0 0.0
    %4936 = vmatpush2.xpose.msra.mxu0 0.0
    %4937 = vmatprep.subr.mxu0 0.0
    %4938 = vmatpush2.xpose.msra.mxu0 0.0
    %4939 = vmatprep.subr.mxu0 0.0
    %4940 = vmatpush2.xpose.msra.mxu0 0.0
    %4941 = vmatprep.subr.mxu0 0.0
    %4942 = vmatpush2.xpose.msra.mxu0 0.0
    %4943 = vmatprep.subr.mxu0 0.0
    %4944 = vmatpush2.xpose.msra.mxu0 0.0
    %4945 = vmatprep.subr.mxu0 0.0
    %4946 = vmatpush2.xpose.msra.mxu0 0.0
    %4947 = vmatprep.subr.mxu0 0.0
    %4948 = vmatpush2.xpose.msra.mxu0 0.0
    %4949 = vmatprep.subr.mxu0 0.0
    %4950 = vmatpush2.xpose.msra.mxu0 0.0
    %4951 = vmatprep.subr.mxu0 0.0
    %4952 = vmatpush2.xpose.msra.mxu0 0.0
    %4953 = vmatprep.subr.mxu0 0.0
    %4954 = vmatpush2.xpose.msra.mxu0 0.0
    %4955 = vmatprep.subr.mxu0 0.0
    %4956 = vmatpush2.xpose.msra.mxu0 0.0
    %4957 = vmatprep.subr.mxu0 0.0
    %4958 = vmatpush2.xpose.msra.mxu0 0.0
    %4959 = vmatprep.subr.mxu0 0.0
    %4960 = vmatpush2.xpose.msra.mxu0 0.0
    %4961 = vmatprep.subr.mxu0 0.0
    %4962 = vmatpush2.xpose.msra.mxu0 0.0
    %4963 = vmatprep.mubr.f32.mxu0 0.0
    %4964 = vmatmul.mubr.f32.gmra.mxu0 %v4893
    %v4965 = vpop.f32.mrf.mxu0
    %v4966 = vadd.f32 0.0, %v4965
    %v4967 = vpop.f32.mrf.mxu0
    %4968 = vdwg.mxu0
    %v4969 = vmul.f32 %v4884, 0.25
    %v4970 = vmul.f32 %v4966, 0.25
    %v4971 = vsel %vm622, %v4969, -inf
    %4972 = vmax.xlane.f32.xlu0 %v4971
    %v4973 = vpop.xlane.xlu0 %4972
    %v4974 = vsel %vm622, %v4970, -inf
    %4975 = vmax.xlane.f32.xlu0 %v4974
    %v4976 = vpop.xlane.xlu0 %4975
    %v4977 = vsub.f32 %v4969, %v4973
    %v4978 = vsub.f32 %v4970, %v4976
    %v4979 = vmul.f32 %v4977, 1.442695
    %v4980 = vpow.pop %v4979
    %v4981 = vmul.f32 %v4978, 1.442695
    %v4982 = vpow.pop %v4981
    %v4983 = vsel %vm622, %v4980, 0.0
    %4984 = vadd.xlane.f32.xlu0 %v4983
    %v4985 = vpop.xlane.xlu0 %4984
    %v4986 = vsel %vm622, %v4982, 0.0
    %4987 = vadd.xlane.f32.xlu0 %v4986
    %v4988 = vpop.xlane.xlu0 %4987
    %v4989 = vrcp.pop %v4985
    %v4990 = vrcp.pop %v4988
    %v4991 = vmul.f32 %v4980, %v4989
    %v4992 = vmul.f32 %v4982, %v4990
    %4993 = vrot.lane.b32.xlu0 %v3763, 80
    %v4994 = vpop.permute.xlu0 %4993
    %4995 = vrot.lane.b32.xlu0 %v3768, 80
    %v4996 = vpop.permute.xlu0 %4995
    %v5000 = vsel %vm622, %v4991, 0
    %5002 = vmatprep.subr.mxu0 0.0
    %5003 = vmatpush1.msra.mxu0 0.0
    %5004 = vmatprep.subr.mxu0 0.0
    %5005 = vmatpush1.msra.mxu0 0.0
    %5006 = vmatprep.subr.mxu0 0.0
    %5007 = vmatpush1.msra.mxu0 0.0
    %5008 = vmatprep.subr.mxu0 0.0
    %5009 = vmatpush1.msra.mxu0 0.0
    %5010 = vmatprep.subr.mxu0 0.0
    %5011 = vmatpush1.msra.mxu0 0.0
    %5012 = vmatprep.subr.mxu0 0.0
    %5013 = vmatpush1.msra.mxu0 0.0
    %5014 = vmatprep.subr.mxu0 0.0
    %5015 = vmatpush1.msra.mxu0 0.0
    %5016 = vmatprep.subr.mxu0 0.0
    %5017 = vmatpush1.msra.mxu0 0.0
    %5018 = vmatprep.subr.mxu0 0.0
    %5019 = vmatpush1.msra.mxu0 0.0
    %5020 = vmatprep.subr.mxu0 0.0
    %5021 = vmatpush1.msra.mxu0 0.0
    %5022 = vmatprep.subr.mxu0 0.0
    %5023 = vmatpush1.msra.mxu0 0.0
    %5024 = vmatprep.subr.mxu0 0.0
    %5025 = vmatpush1.msra.mxu0 0.0
    %5026 = vmatprep.subr.mxu0 0.0
    %5027 = vmatpush1.msra.mxu0 0.0
    %5028 = vmatprep.subr.mxu0 0.0
    %5029 = vmatpush1.msra.mxu0 0.0
    %5030 = vmatprep.subr.mxu0 0.0
    %5031 = vmatpush1.msra.mxu0 %v4996
    %5032 = vmatprep.subr.mxu0 0.0
    %5033 = vmatpush1.msra.mxu0 %v4994
    %5034 = vmatprep.subr.mxu0 0.0
    %5035 = vmatpush2.msra.mxu0 0.0
    %5036 = vmatprep.subr.mxu0 0.0
    %5037 = vmatpush2.msra.mxu0 0.0
    %5038 = vmatprep.subr.mxu0 0.0
    %5039 = vmatpush2.msra.mxu0 0.0
    %5040 = vmatprep.subr.mxu0 0.0
    %5041 = vmatpush2.msra.mxu0 0.0
    %5042 = vmatprep.subr.mxu0 0.0
    %5043 = vmatpush2.msra.mxu0 0.0
    %5044 = vmatprep.subr.mxu0 0.0
    %5045 = vmatpush2.msra.mxu0 0.0
    %5046 = vmatprep.subr.mxu0 0.0
    %5047 = vmatpush2.msra.mxu0 0.0
    %5048 = vmatprep.subr.mxu0 0.0
    %5049 = vmatpush2.msra.mxu0 0.0
    %5050 = vmatprep.subr.mxu0 0.0
    %5051 = vmatpush2.msra.mxu0 0.0
    %5052 = vmatprep.subr.mxu0 0.0
    %5053 = vmatpush2.msra.mxu0 0.0
    %5054 = vmatprep.subr.mxu0 0.0
    %5055 = vmatpush2.msra.mxu0 0.0
    %5056 = vmatprep.subr.mxu0 0.0
    %5057 = vmatpush2.msra.mxu0 0.0
    %5058 = vmatprep.subr.mxu0 0.0
    %5059 = vmatpush2.msra.mxu0 0.0
    %5060 = vmatprep.subr.mxu0 0.0
    %5061 = vmatpush2.msra.mxu0 0.0
    %5062 = vmatprep.subr.mxu0 0.0
    %5063 = vmatpush2.msra.mxu0 0.0
    %5064 = vmatprep.subr.mxu0 0.0
    %5065 = vmatpush2.msra.mxu0 0.0
    %5066 = vmatprep.mubr.f32.mxu0 0.0
    %5067 = vmatmul.mubr.f32.gmra.mxu0 %v5000
    %v5068 = vpop.f32.mrf.mxu0
    %v5069 = vadd.f32 0.0, %v5068
    %v5070 = vpop.f32.mrf.mxu0
    %5071 = vdwg.mxu0
    %5072 = vrot.lane.b32.xlu0 %v3773, 80
    %v5073 = vpop.permute.xlu0 %5072
    %5074 = vrot.lane.b32.xlu0 %v3778, 80
    %v5075 = vpop.permute.xlu0 %5074
    %v5079 = vsel %vm622, %v4992, 0
    %5081 = vmatprep.subr.mxu0 0.0
    %5082 = vmatpush1.msra.mxu0 0.0
    %5083 = vmatprep.subr.mxu0 0.0
    %5084 = vmatpush1.msra.mxu0 0.0
    %5085 = vmatprep.subr.mxu0 0.0
    %5086 = vmatpush1.msra.mxu0 0.0
    %5087 = vmatprep.subr.mxu0 0.0
    %5088 = vmatpush1.msra.mxu0 0.0
    %5089 = vmatprep.subr.mxu0 0.0
    %5090 = vmatpush1.msra.mxu0 0.0
    %5091 = vmatprep.subr.mxu0 0.0
    %5092 = vmatpush1.msra.mxu0 0.0
    %5093 = vmatprep.subr.mxu0 0.0
    %5094 = vmatpush1.msra.mxu0 0.0
    %5095 = vmatprep.subr.mxu0 0.0
    %5096 = vmatpush1.msra.mxu0 0.0
    %5097 = vmatprep.subr.mxu0 0.0
    %5098 = vmatpush1.msra.mxu0 0.0
    %5099 = vmatprep.subr.mxu0 0.0
    %5100 = vmatpush1.msra.mxu0 0.0
    %5101 = vmatprep.subr.mxu0 0.0
    %5102 = vmatpush1.msra.mxu0 0.0
    %5103 = vmatprep.subr.mxu0 0.0
    %5104 = vmatpush1.msra.mxu0 0.0
    %5105 = vmatprep.subr.mxu0 0.0
    %5106 = vmatpush1.msra.mxu0 0.0
    %5107 = vmatprep.subr.mxu0 0.0
    %5108 = vmatpush1.msra.mxu0 0.0
    %5109 = vmatprep.subr.mxu0 0.0
    %5110 = vmatpush1.msra.mxu0 %v5075
    %5111 = vmatprep.subr.mxu0 0.0
    %5112 = vmatpush1.msra.mxu0 %v5073
    %5113 = vmatprep.subr.mxu0 0.0
    %5114 = vmatpush2.msra.mxu0 0.0
    %5115 = vmatprep.subr.mxu0 0.0
    %5116 = vmatpush2.msra.mxu0 0.0
    %5117 = vmatprep.subr.mxu0 0.0
    %5118 = vmatpush2.msra.mxu0 0.0
    %5119 = vmatprep.subr.mxu0 0.0
    %5120 = vmatpush2.msra.mxu0 0.0
    %5121 = vmatprep.subr.mxu0 0.0
    %5122 = vmatpush2.msra.mxu0 0.0
    %5123 = vmatprep.subr.mxu0 0.0
    %5124 = vmatpush2.msra.mxu0 0.0
    %5125 = vmatprep.subr.mxu0 0.0
    %5126 = vmatpush2.msra.mxu0 0.0
    %5127 = vmatprep.subr.mxu0 0.0
    %5128 = vmatpush2.msra.mxu0 0.0
    %5129 = vmatprep.subr.mxu0 0.0
    %5130 = vmatpush2.msra.mxu0 0.0
    %5131 = vmatprep.subr.mxu0 0.0
    %5132 = vmatpush2.msra.mxu0 0.0
    %5133 = vmatprep.subr.mxu0 0.0
    %5134 = vmatpush2.msra.mxu0 0.0
    %5135 = vmatprep.subr.mxu0 0.0
    %5136 = vmatpush2.msra.mxu0 0.0
    %5137 = vmatprep.subr.mxu0 0.0
    %5138 = vmatpush2.msra.mxu0 0.0
    %5139 = vmatprep.subr.mxu0 0.0
    %5140 = vmatpush2.msra.mxu0 0.0
    %5141 = vmatprep.subr.mxu0 0.0
    %5142 = vmatpush2.msra.mxu0 0.0
    %5143 = vmatprep.subr.mxu0 0.0
    %5144 = vmatpush2.msra.mxu0 0.0
    %5145 = vmatprep.mubr.f32.mxu0 0.0
    %5146 = vmatmul.mubr.f32.gmra.mxu0 %v5079
    %v5147 = vpop.f32.mrf.mxu0
    %v5148 = vadd.f32 0.0, %v5147
    %v5149 = vpop.f32.mrf.mxu0
    %5150 = vdwg.mxu0
    %5151 = vrot.lane.b32.xlu0 %v3571, 64
    %v5152 = vpop.permute.xlu0 %5151
    %5153 = vrot.lane.b32.xlu0 %v3662, 64
    %v5154 = vpop.permute.xlu0 %5153
    %5155 = vrot.lane.b32.xlu0 %v3667, 64
    %v5156 = vpop.permute.xlu0 %5155
    %v5157 = vsel %vm622, %v5152, 0
    %v5159 = vsel %vm622, %v5154, 0
    %v5161 = vsel %vm622, %v5156, 0
    %5163 = vmatprep.subr.mxu0 0.0
    %5164 = vmatpush1.xpose.msra.mxu0 0.0
    %5165 = vmatprep.subr.mxu0 0.0
    %5166 = vmatpush1.xpose.msra.mxu0 0.0
    %5167 = vmatprep.subr.mxu0 0.0
    %5168 = vmatpush1.xpose.msra.mxu0 0.0
    %5169 = vmatprep.subr.mxu0 0.0
    %5170 = vmatpush1.xpose.msra.mxu0 0.0
    %5171 = vmatprep.subr.mxu0 0.0
    %5172 = vmatpush1.xpose.msra.mxu0 0.0
    %5173 = vmatprep.subr.mxu0 0.0
    %5174 = vmatpush1.xpose.msra.mxu0 0.0
    %5175 = vmatprep.subr.mxu0 0.0
    %5176 = vmatpush1.xpose.msra.mxu0 0.0
    %5177 = vmatprep.subr.mxu0 0.0
    %5178 = vmatpush1.xpose.msra.mxu0 0.0
    %5179 = vmatprep.subr.mxu0 0.0
    %5180 = vmatpush1.xpose.msra.mxu0 0.0
    %5181 = vmatprep.subr.mxu0 0.0
    %5182 = vmatpush1.xpose.msra.mxu0 0.0
    %5183 = vmatprep.subr.mxu0 0.0
    %5184 = vmatpush1.xpose.msra.mxu0 0.0
    %5185 = vmatprep.subr.mxu0 0.0
    %5186 = vmatpush1.xpose.msra.mxu0 0.0
    %5187 = vmatprep.subr.mxu0 0.0
    %5188 = vmatpush1.xpose.msra.mxu0 0.0
    %5189 = vmatprep.subr.mxu0 0.0
    %5190 = vmatpush1.xpose.msra.mxu0 0.0
    %5191 = vmatprep.subr.mxu0 0.0
    %5192 = vmatpush1.xpose.msra.mxu0 %v5161
    %5193 = vmatprep.subr.mxu0 0.0
    %5194 = vmatpush1.xpose.msra.mxu0 %v5159
    %5195 = vmatprep.subr.mxu0 0.0
    %5196 = vmatpush2.xpose.msra.mxu0 0.0
    %5197 = vmatprep.subr.mxu0 0.0
    %5198 = vmatpush2.xpose.msra.mxu0 0.0
    %5199 = vmatprep.subr.mxu0 0.0
    %5200 = vmatpush2.xpose.msra.mxu0 0.0
    %5201 = vmatprep.subr.mxu0 0.0
    %5202 = vmatpush2.xpose.msra.mxu0 0.0
    %5203 = vmatprep.subr.mxu0 0.0
    %5204 = vmatpush2.xpose.msra.mxu0 0.0
    %5205 = vmatprep.subr.mxu0 0.0
    %5206 = vmatpush2.xpose.msra.mxu0 0.0
    %5207 = vmatprep.subr.mxu0 0.0
    %5208 = vmatpush2.xpose.msra.mxu0 0.0
    %5209 = vmatprep.subr.mxu0 0.0
    %5210 = vmatpush2.xpose.msra.mxu0 0.0
    %5211 = vmatprep.subr.mxu0 0.0
    %5212 = vmatpush2.xpose.msra.mxu0 0.0
    %5213 = vmatprep.subr.mxu0 0.0
    %5214 = vmatpush2.xpose.msra.mxu0 0.0
    %5215 = vmatprep.subr.mxu0 0.0
    %5216 = vmatpush2.xpose.msra.mxu0 0.0
    %5217 = vmatprep.subr.mxu0 0.0
    %5218 = vmatpush2.xpose.msra.mxu0 0.0
    %5219 = vmatprep.subr.mxu0 0.0
    %5220 = vmatpush2.xpose.msra.mxu0 0.0
    %5221 = vmatprep.subr.mxu0 0.0
    %5222 = vmatpush2.xpose.msra.mxu0 0.0
    %5223 = vmatprep.subr.mxu0 0.0
    %5224 = vmatpush2.xpose.msra.mxu0 0.0
    %5225 = vmatprep.subr.mxu0 0.0
    %5226 = vmatpush2.xpose.msra.mxu0 0.0
    %5227 = vmatprep.mubr.f32.mxu0 0.0
    %5228 = vmatmul.mubr.f32.gmra.mxu0 %v5157
    %v5229 = vpop.f32.mrf.mxu0
    %v5230 = vadd.f32 0.0, %v5229
    %v5231 = vpop.f32.mrf.mxu0
    %5232 = vdwg.mxu0
    %5233 = vrot.lane.b32.xlu0 %v3576, 64
    %v5234 = vpop.permute.xlu0 %5233
    %5235 = vrot.lane.b32.xlu0 %v3672, 64
    %v5236 = vpop.permute.xlu0 %5235
    %5237 = vrot.lane.b32.xlu0 %v3677, 64
    %v5238 = vpop.permute.xlu0 %5237
    %v5239 = vsel %vm622, %v5234, 0
    %v5241 = vsel %vm622, %v5236, 0
    %v5243 = vsel %vm622, %v5238, 0
    %5245 = vmatprep.subr.mxu0 0.0
    %5246 = vmatpush1.xpose.msra.mxu0 0.0
    %5247 = vmatprep.subr.mxu0 0.0
    %5248 = vmatpush1.xpose.msra.mxu0 0.0
    %5249 = vmatprep.subr.mxu0 0.0
    %5250 = vmatpush1.xpose.msra.mxu0 0.0
    %5251 = vmatprep.subr.mxu0 0.0
    %5252 = vmatpush1.xpose.msra.mxu0 0.0
    %5253 = vmatprep.subr.mxu0 0.0
    %5254 = vmatpush1.xpose.msra.mxu0 0.0
    %5255 = vmatprep.subr.mxu0 0.0
    %5256 = vmatpush1.xpose.msra.mxu0 0.0
    %5257 = vmatprep.subr.mxu0 0.0
    %5258 = vmatpush1.xpose.msra.mxu0 0.0
    %5259 = vmatprep.subr.mxu0 0.0
    %5260 = vmatpush1.xpose.msra.mxu0 0.0
    %5261 = vmatprep.subr.mxu0 0.0
    %5262 = vmatpush1.xpose.msra.mxu0 0.0
    %5263 = vmatprep.subr.mxu0 0.0
    %5264 = vmatpush1.xpose.msra.mxu0 0.0
    %5265 = vmatprep.subr.mxu0 0.0
    %5266 = vmatpush1.xpose.msra.mxu0 0.0
    %5267 = vmatprep.subr.mxu0 0.0
    %5268 = vmatpush1.xpose.msra.mxu0 0.0
    %5269 = vmatprep.subr.mxu0 0.0
    %5270 = vmatpush1.xpose.msra.mxu0 0.0
    %5271 = vmatprep.subr.mxu0 0.0
    %5272 = vmatpush1.xpose.msra.mxu0 0.0
    %5273 = vmatprep.subr.mxu0 0.0
    %5274 = vmatpush1.xpose.msra.mxu0 %v5243
    %5275 = vmatprep.subr.mxu0 0.0
    %5276 = vmatpush1.xpose.msra.mxu0 %v5241
    %5277 = vmatprep.subr.mxu0 0.0
    %5278 = vmatpush2.xpose.msra.mxu0 0.0
    %5279 = vmatprep.subr.mxu0 0.0
    %5280 = vmatpush2.xpose.msra.mxu0 0.0
    %5281 = vmatprep.subr.mxu0 0.0
    %5282 = vmatpush2.xpose.msra.mxu0 0.0
    %5283 = vmatprep.subr.mxu0 0.0
    %5284 = vmatpush2.xpose.msra.mxu0 0.0
    %5285 = vmatprep.subr.mxu0 0.0
    %5286 = vmatpush2.xpose.msra.mxu0 0.0
    %5287 = vmatprep.subr.mxu0 0.0
    %5288 = vmatpush2.xpose.msra.mxu0 0.0
    %5289 = vmatprep.subr.mxu0 0.0
    %5290 = vmatpush2.xpose.msra.mxu0 0.0
    %5291 = vmatprep.subr.mxu0 0.0
    %5292 = vmatpush2.xpose.msra.mxu0 0.0
    %5293 = vmatprep.subr.mxu0 0.0
    %5294 = vmatpush2.xpose.msra.mxu0 0.0
    %5295 = vmatprep.subr.mxu0 0.0
    %5296 = vmatpush2.xpose.msra.mxu0 0.0
    %5297 = vmatprep.subr.mxu0 0.0
    %5298 = vmatpush2.xpose.msra.mxu0 0.0
    %5299 = vmatprep.subr.mxu0 0.0
    %5300 = vmatpush2.xpose.msra.mxu0 0.0
    %5301 = vmatprep.subr.mxu0 0.0
    %5302 = vmatpush2.xpose.msra.mxu0 0.0
    %5303 = vmatprep.subr.mxu0 0.0
    %5304 = vmatpush2.xpose.msra.mxu0 0.0
    %5305 = vmatprep.subr.mxu0 0.0
    %5306 = vmatpush2.xpose.msra.mxu0 0.0
    %5307 = vmatprep.subr.mxu0 0.0
    %5308 = vmatpush2.xpose.msra.mxu0 0.0
    %5309 = vmatprep.mubr.f32.mxu0 0.0
    %5310 = vmatmul.mubr.f32.gmra.mxu0 %v5239
    %v5311 = vpop.f32.mrf.mxu0
    %v5312 = vadd.f32 0.0, %v5311
    %v5313 = vpop.f32.mrf.mxu0
    %5314 = vdwg.mxu0
    %v5315 = vmul.f32 %v5230, 0.25
    %v5316 = vmul.f32 %v5312, 0.25
    %v5317 = vsel %vm622, %v5315, -inf
    %5318 = vmax.xlane.f32.xlu0 %v5317
    %v5319 = vpop.xlane.xlu0 %5318
    %v5320 = vsel %vm622, %v5316, -inf
    %5321 = vmax.xlane.f32.xlu0 %v5320
    %v5322 = vpop.xlane.xlu0 %5321
    %v5323 = vsub.f32 %v5315, %v5319
    %v5324 = vsub.f32 %v5316, %v5322
    %v5325 = vmul.f32 %v5323, 1.442695
    %v5326 = vpow.pop %v5325
    %v5327 = vmul.f32 %v5324, 1.442695
    %v5328 = vpow.pop %v5327
    %v5329 = vsel %vm622, %v5326, 0.0
    %5330 = vadd.xlane.f32.xlu0 %v5329
    %v5331 = vpop.xlane.xlu0 %5330
    %v5332 = vsel %vm622, %v5328, 0.0
    %5333 = vadd.xlane.f32.xlu0 %v5332
    %v5334 = vpop.xlane.xlu0 %5333
    %v5335 = vrcp.pop %v5331
    %v5336 = vrcp.pop %v5334
    %v5337 = vmul.f32 %v5326, %v5335
    %v5338 = vmul.f32 %v5328, %v5336
    %5339 = vrot.lane.b32.xlu0 %v3763, 64
    %v5340 = vpop.permute.xlu0 %5339
    %5341 = vrot.lane.b32.xlu0 %v3768, 64
    %v5342 = vpop.permute.xlu0 %5341
    %v5346 = vsel %vm622, %v5337, 0
    %5348 = vmatprep.subr.mxu0 0.0
    %5349 = vmatpush1.msra.mxu0 0.0
    %5350 = vmatprep.subr.mxu0 0.0
    %5351 = vmatpush1.msra.mxu0 0.0
    %5352 = vmatprep.subr.mxu0 0.0
    %5353 = vmatpush1.msra.mxu0 0.0
    %5354 = vmatprep.subr.mxu0 0.0
    %5355 = vmatpush1.msra.mxu0 0.0
    %5356 = vmatprep.subr.mxu0 0.0
    %5357 = vmatpush1.msra.mxu0 0.0
    %5358 = vmatprep.subr.mxu0 0.0
    %5359 = vmatpush1.msra.mxu0 0.0
    %5360 = vmatprep.subr.mxu0 0.0
    %5361 = vmatpush1.msra.mxu0 0.0
    %5362 = vmatprep.subr.mxu0 0.0
    %5363 = vmatpush1.msra.mxu0 0.0
    %5364 = vmatprep.subr.mxu0 0.0
    %5365 = vmatpush1.msra.mxu0 0.0
    %5366 = vmatprep.subr.mxu0 0.0
    %5367 = vmatpush1.msra.mxu0 0.0
    %5368 = vmatprep.subr.mxu0 0.0
    %5369 = vmatpush1.msra.mxu0 0.0
    %5370 = vmatprep.subr.mxu0 0.0
    %5371 = vmatpush1.msra.mxu0 0.0
    %5372 = vmatprep.subr.mxu0 0.0
    %5373 = vmatpush1.msra.mxu0 0.0
    %5374 = vmatprep.subr.mxu0 0.0
    %5375 = vmatpush1.msra.mxu0 0.0
    %5376 = vmatprep.subr.mxu0 0.0
    %5377 = vmatpush1.msra.mxu0 %v5342
    %5378 = vmatprep.subr.mxu0 0.0
    %5379 = vmatpush1.msra.mxu0 %v5340
    %5380 = vmatprep.subr.mxu0 0.0
    %5381 = vmatpush2.msra.mxu0 0.0
    %5382 = vmatprep.subr.mxu0 0.0
    %5383 = vmatpush2.msra.mxu0 0.0
    %5384 = vmatprep.subr.mxu0 0.0
    %5385 = vmatpush2.msra.mxu0 0.0
    %5386 = vmatprep.subr.mxu0 0.0
    %5387 = vmatpush2.msra.mxu0 0.0
    %5388 = vmatprep.subr.mxu0 0.0
    %5389 = vmatpush2.msra.mxu0 0.0
    %5390 = vmatprep.subr.mxu0 0.0
    %5391 = vmatpush2.msra.mxu0 0.0
    %5392 = vmatprep.subr.mxu0 0.0
    %5393 = vmatpush2.msra.mxu0 0.0
    %5394 = vmatprep.subr.mxu0 0.0
    %5395 = vmatpush2.msra.mxu0 0.0
    %5396 = vmatprep.subr.mxu0 0.0
    %5397 = vmatpush2.msra.mxu0 0.0
    %5398 = vmatprep.subr.mxu0 0.0
    %5399 = vmatpush2.msra.mxu0 0.0
    %5400 = vmatprep.subr.mxu0 0.0
    %5401 = vmatpush2.msra.mxu0 0.0
    %5402 = vmatprep.subr.mxu0 0.0
    %5403 = vmatpush2.msra.mxu0 0.0
    %5404 = vmatprep.subr.mxu0 0.0
    %5405 = vmatpush2.msra.mxu0 0.0
    %5406 = vmatprep.subr.mxu0 0.0
    %5407 = vmatpush2.msra.mxu0 0.0
    %5408 = vmatprep.subr.mxu0 0.0
    %5409 = vmatpush2.msra.mxu0 0.0
    %5410 = vmatprep.subr.mxu0 0.0
    %5411 = vmatpush2.msra.mxu0 0.0
    %5412 = vmatprep.mubr.f32.mxu0 0.0
    %5413 = vmatmul.mubr.f32.gmra.mxu0 %v5346
    %v5414 = vpop.f32.mrf.mxu0
    %v5415 = vadd.f32 0.0, %v5414
    %v5416 = vpop.f32.mrf.mxu0
    %5417 = vdwg.mxu0
    %5418 = vrot.lane.b32.xlu0 %v3773, 64
    %v5419 = vpop.permute.xlu0 %5418
    %5420 = vrot.lane.b32.xlu0 %v3778, 64
    %v5421 = vpop.permute.xlu0 %5420
    %v5425 = vsel %vm622, %v5338, 0
    %5427 = vmatprep.subr.mxu0 0.0
    %5428 = vmatpush1.msra.mxu0 0.0
    %5429 = vmatprep.subr.mxu0 0.0
    %5430 = vmatpush1.msra.mxu0 0.0
    %5431 = vmatprep.subr.mxu0 0.0
    %5432 = vmatpush1.msra.mxu0 0.0
    %5433 = vmatprep.subr.mxu0 0.0
    %5434 = vmatpush1.msra.mxu0 0.0
    %5435 = vmatprep.subr.mxu0 0.0
    %5436 = vmatpush1.msra.mxu0 0.0
    %5437 = vmatprep.subr.mxu0 0.0
    %5438 = vmatpush1.msra.mxu0 0.0
    %5439 = vmatprep.subr.mxu0 0.0
    %5440 = vmatpush1.msra.mxu0 0.0
    %5441 = vmatprep.subr.mxu0 0.0
    %5442 = vmatpush1.msra.mxu0 0.0
    %5443 = vmatprep.subr.mxu0 0.0
    %5444 = vmatpush1.msra.mxu0 0.0
    %5445 = vmatprep.subr.mxu0 0.0
    %5446 = vmatpush1.msra.mxu0 0.0
    %5447 = vmatprep.subr.mxu0 0.0
    %5448 = vmatpush1.msra.mxu0 0.0
    %5449 = vmatprep.subr.mxu0 0.0
    %5450 = vmatpush1.msra.mxu0 0.0
    %5451 = vmatprep.subr.mxu0 0.0
    %5452 = vmatpush1.msra.mxu0 0.0
    %5453 = vmatprep.subr.mxu0 0.0
    %5454 = vmatpush1.msra.mxu0 0.0
    %5455 = vmatprep.subr.mxu0 0.0
    %5456 = vmatpush1.msra.mxu0 %v5421
    %5457 = vmatprep.subr.mxu0 0.0
    %5458 = vmatpush1.msra.mxu0 %v5419
    %5459 = vmatprep.subr.mxu0 0.0
    %5460 = vmatpush2.msra.mxu0 0.0
    %5461 = vmatprep.subr.mxu0 0.0
    %5462 = vmatpush2.msra.mxu0 0.0
    %5463 = vmatprep.subr.mxu0 0.0
    %5464 = vmatpush2.msra.mxu0 0.0
    %5465 = vmatprep.subr.mxu0 0.0
    %5466 = vmatpush2.msra.mxu0 0.0
    %5467 = vmatprep.subr.mxu0 0.0
    %5468 = vmatpush2.msra.mxu0 0.0
    %5469 = vmatprep.subr.mxu0 0.0
    %5470 = vmatpush2.msra.mxu0 0.0
    %5471 = vmatprep.subr.mxu0 0.0
    %5472 = vmatpush2.msra.mxu0 0.0
    %5473 = vmatprep.subr.mxu0 0.0
    %5474 = vmatpush2.msra.mxu0 0.0
    %5475 = vmatprep.subr.mxu0 0.0
    %5476 = vmatpush2.msra.mxu0 0.0
    %5477 = vmatprep.subr.mxu0 0.0
    %5478 = vmatpush2.msra.mxu0 0.0
    %5479 = vmatprep.subr.mxu0 0.0
    %5480 = vmatpush2.msra.mxu0 0.0
    %5481 = vmatprep.subr.mxu0 0.0
    %5482 = vmatpush2.msra.mxu0 0.0
    %5483 = vmatprep.subr.mxu0 0.0
    %5484 = vmatpush2.msra.mxu0 0.0
    %5485 = vmatprep.subr.mxu0 0.0
    %5486 = vmatpush2.msra.mxu0 0.0
    %5487 = vmatprep.subr.mxu0 0.0
    %5488 = vmatpush2.msra.mxu0 0.0
    %5489 = vmatprep.subr.mxu0 0.0
    %5490 = vmatpush2.msra.mxu0 0.0
    %5491 = vmatprep.mubr.f32.mxu0 0.0
    %5492 = vmatmul.mubr.f32.gmra.mxu0 %v5425
    %v5493 = vpop.f32.mrf.mxu0
    %v5494 = vadd.f32 0.0, %v5493
    %v5495 = vpop.f32.mrf.mxu0
    %5496 = vdwg.mxu0
    %5497 = vrot.lane.b32.xlu0 %v3571, 48
    %v5498 = vpop.permute.xlu0 %5497
    %5499 = vrot.lane.b32.xlu0 %v3662, 48
    %v5500 = vpop.permute.xlu0 %5499
    %5501 = vrot.lane.b32.xlu0 %v3667, 48
    %v5502 = vpop.permute.xlu0 %5501
    %v5503 = vsel %vm622, %v5498, 0
    %v5505 = vsel %vm622, %v5500, 0
    %v5507 = vsel %vm622, %v5502, 0
    %5509 = vmatprep.subr.mxu0 0.0
    %5510 = vmatpush1.xpose.msra.mxu0 0.0
    %5511 = vmatprep.subr.mxu0 0.0
    %5512 = vmatpush1.xpose.msra.mxu0 0.0
    %5513 = vmatprep.subr.mxu0 0.0
    %5514 = vmatpush1.xpose.msra.mxu0 0.0
    %5515 = vmatprep.subr.mxu0 0.0
    %5516 = vmatpush1.xpose.msra.mxu0 0.0
    %5517 = vmatprep.subr.mxu0 0.0
    %5518 = vmatpush1.xpose.msra.mxu0 0.0
    %5519 = vmatprep.subr.mxu0 0.0
    %5520 = vmatpush1.xpose.msra.mxu0 0.0
    %5521 = vmatprep.subr.mxu0 0.0
    %5522 = vmatpush1.xpose.msra.mxu0 0.0
    %5523 = vmatprep.subr.mxu0 0.0
    %5524 = vmatpush1.xpose.msra.mxu0 0.0
    %5525 = vmatprep.subr.mxu0 0.0
    %5526 = vmatpush1.xpose.msra.mxu0 0.0
    %5527 = vmatprep.subr.mxu0 0.0
    %5528 = vmatpush1.xpose.msra.mxu0 0.0
    %5529 = vmatprep.subr.mxu0 0.0
    %5530 = vmatpush1.xpose.msra.mxu0 0.0
    %5531 = vmatprep.subr.mxu0 0.0
    %5532 = vmatpush1.xpose.msra.mxu0 0.0
    %5533 = vmatprep.subr.mxu0 0.0
    %5534 = vmatpush1.xpose.msra.mxu0 0.0
    %5535 = vmatprep.subr.mxu0 0.0
    %5536 = vmatpush1.xpose.msra.mxu0 0.0
    %5537 = vmatprep.subr.mxu0 0.0
    %5538 = vmatpush1.xpose.msra.mxu0 %v5507
    %5539 = vmatprep.subr.mxu0 0.0
    %5540 = vmatpush1.xpose.msra.mxu0 %v5505
    %5541 = vmatprep.subr.mxu0 0.0
    %5542 = vmatpush2.xpose.msra.mxu0 0.0
    %5543 = vmatprep.subr.mxu0 0.0
    %5544 = vmatpush2.xpose.msra.mxu0 0.0
    %5545 = vmatprep.subr.mxu0 0.0
    %5546 = vmatpush2.xpose.msra.mxu0 0.0
    %5547 = vmatprep.subr.mxu0 0.0
    %5548 = vmatpush2.xpose.msra.mxu0 0.0
    %5549 = vmatprep.subr.mxu0 0.0
    %5550 = vmatpush2.xpose.msra.mxu0 0.0
    %5551 = vmatprep.subr.mxu0 0.0
    %5552 = vmatpush2.xpose.msra.mxu0 0.0
    %5553 = vmatprep.subr.mxu0 0.0
    %5554 = vmatpush2.xpose.msra.mxu0 0.0
    %5555 = vmatprep.subr.mxu0 0.0
    %5556 = vmatpush2.xpose.msra.mxu0 0.0
    %5557 = vmatprep.subr.mxu0 0.0
    %5558 = vmatpush2.xpose.msra.mxu0 0.0
    %5559 = vmatprep.subr.mxu0 0.0
    %5560 = vmatpush2.xpose.msra.mxu0 0.0
    %5561 = vmatprep.subr.mxu0 0.0
    %5562 = vmatpush2.xpose.msra.mxu0 0.0
    %5563 = vmatprep.subr.mxu0 0.0
    %5564 = vmatpush2.xpose.msra.mxu0 0.0
    %5565 = vmatprep.subr.mxu0 0.0
    %5566 = vmatpush2.xpose.msra.mxu0 0.0
    %5567 = vmatprep.subr.mxu0 0.0
    %5568 = vmatpush2.xpose.msra.mxu0 0.0
    %5569 = vmatprep.subr.mxu0 0.0
    %5570 = vmatpush2.xpose.msra.mxu0 0.0
    %5571 = vmatprep.subr.mxu0 0.0
    %5572 = vmatpush2.xpose.msra.mxu0 0.0
    %5573 = vmatprep.mubr.f32.mxu0 0.0
    %5574 = vmatmul.mubr.f32.gmra.mxu0 %v5503
    %v5575 = vpop.f32.mrf.mxu0
    %v5576 = vadd.f32 0.0, %v5575
    %v5577 = vpop.f32.mrf.mxu0
    %5578 = vdwg.mxu0
    %5579 = vrot.lane.b32.xlu0 %v3576, 48
    %v5580 = vpop.permute.xlu0 %5579
    %5581 = vrot.lane.b32.xlu0 %v3672, 48
    %v5582 = vpop.permute.xlu0 %5581
    %5583 = vrot.lane.b32.xlu0 %v3677, 48
    %v5584 = vpop.permute.xlu0 %5583
    %v5585 = vsel %vm622, %v5580, 0
    %v5587 = vsel %vm622, %v5582, 0
    %v5589 = vsel %vm622, %v5584, 0
    %5591 = vmatprep.subr.mxu0 0.0
    %5592 = vmatpush1.xpose.msra.mxu0 0.0
    %5593 = vmatprep.subr.mxu0 0.0
    %5594 = vmatpush1.xpose.msra.mxu0 0.0
    %5595 = vmatprep.subr.mxu0 0.0
    %5596 = vmatpush1.xpose.msra.mxu0 0.0
    %5597 = vmatprep.subr.mxu0 0.0
    %5598 = vmatpush1.xpose.msra.mxu0 0.0
    %5599 = vmatprep.subr.mxu0 0.0
    %5600 = vmatpush1.xpose.msra.mxu0 0.0
    %5601 = vmatprep.subr.mxu0 0.0
    %5602 = vmatpush1.xpose.msra.mxu0 0.0
    %5603 = vmatprep.subr.mxu0 0.0
    %5604 = vmatpush1.xpose.msra.mxu0 0.0
    %5605 = vmatprep.subr.mxu0 0.0
    %5606 = vmatpush1.xpose.msra.mxu0 0.0
    %5607 = vmatprep.subr.mxu0 0.0
    %5608 = vmatpush1.xpose.msra.mxu0 0.0
    %5609 = vmatprep.subr.mxu0 0.0
    %5610 = vmatpush1.xpose.msra.mxu0 0.0
    %5611 = vmatprep.subr.mxu0 0.0
    %5612 = vmatpush1.xpose.msra.mxu0 0.0
    %5613 = vmatprep.subr.mxu0 0.0
    %5614 = vmatpush1.xpose.msra.mxu0 0.0
    %5615 = vmatprep.subr.mxu0 0.0
    %5616 = vmatpush1.xpose.msra.mxu0 0.0
    %5617 = vmatprep.subr.mxu0 0.0
    %5618 = vmatpush1.xpose.msra.mxu0 0.0
    %5619 = vmatprep.subr.mxu0 0.0
    %5620 = vmatpush1.xpose.msra.mxu0 %v5589
    %5621 = vmatprep.subr.mxu0 0.0
    %5622 = vmatpush1.xpose.msra.mxu0 %v5587
    %5623 = vmatprep.subr.mxu0 0.0
    %5624 = vmatpush2.xpose.msra.mxu0 0.0
    %5625 = vmatprep.subr.mxu0 0.0
    %5626 = vmatpush2.xpose.msra.mxu0 0.0
    %5627 = vmatprep.subr.mxu0 0.0
    %5628 = vmatpush2.xpose.msra.mxu0 0.0
    %5629 = vmatprep.subr.mxu0 0.0
    %5630 = vmatpush2.xpose.msra.mxu0 0.0
    %5631 = vmatprep.subr.mxu0 0.0
    %5632 = vmatpush2.xpose.msra.mxu0 0.0
    %5633 = vmatprep.subr.mxu0 0.0
    %5634 = vmatpush2.xpose.msra.mxu0 0.0
    %5635 = vmatprep.subr.mxu0 0.0
    %5636 = vmatpush2.xpose.msra.mxu0 0.0
    %5637 = vmatprep.subr.mxu0 0.0
    %5638 = vmatpush2.xpose.msra.mxu0 0.0
    %5639 = vmatprep.subr.mxu0 0.0
    %5640 = vmatpush2.xpose.msra.mxu0 0.0
    %5641 = vmatprep.subr.mxu0 0.0
    %5642 = vmatpush2.xpose.msra.mxu0 0.0
    %5643 = vmatprep.subr.mxu0 0.0
    %5644 = vmatpush2.xpose.msra.mxu0 0.0
    %5645 = vmatprep.subr.mxu0 0.0
    %5646 = vmatpush2.xpose.msra.mxu0 0.0
    %5647 = vmatprep.subr.mxu0 0.0
    %5648 = vmatpush2.xpose.msra.mxu0 0.0
    %5649 = vmatprep.subr.mxu0 0.0
    %5650 = vmatpush2.xpose.msra.mxu0 0.0
    %5651 = vmatprep.subr.mxu0 0.0
    %5652 = vmatpush2.xpose.msra.mxu0 0.0
    %5653 = vmatprep.subr.mxu0 0.0
    %5654 = vmatpush2.xpose.msra.mxu0 0.0
    %5655 = vmatprep.mubr.f32.mxu0 0.0
    %5656 = vmatmul.mubr.f32.gmra.mxu0 %v5585
    %v5657 = vpop.f32.mrf.mxu0
    %v5658 = vadd.f32 0.0, %v5657
    %v5659 = vpop.f32.mrf.mxu0
    %5660 = vdwg.mxu0
    %v5661 = vmul.f32 %v5576, 0.25
    %v5662 = vmul.f32 %v5658, 0.25
    %v5663 = vsel %vm622, %v5661, -inf
    %5664 = vmax.xlane.f32.xlu0 %v5663
    %v5665 = vpop.xlane.xlu0 %5664
    %v5666 = vsel %vm622, %v5662, -inf
    %5667 = vmax.xlane.f32.xlu0 %v5666
    %v5668 = vpop.xlane.xlu0 %5667
    %v5669 = vsub.f32 %v5661, %v5665
    %v5670 = vsub.f32 %v5662, %v5668
    %v5671 = vmul.f32 %v5669, 1.442695
    %v5672 = vpow.pop %v5671
    %v5673 = vmul.f32 %v5670, 1.442695
    %v5674 = vpow.pop %v5673
    %v5675 = vsel %vm622, %v5672, 0.0
    %5676 = vadd.xlane.f32.xlu0 %v5675
    %v5677 = vpop.xlane.xlu0 %5676
    %v5678 = vsel %vm622, %v5674, 0.0
    %5679 = vadd.xlane.f32.xlu0 %v5678
    %v5680 = vpop.xlane.xlu0 %5679
    %v5681 = vrcp.pop %v5677
    %v5682 = vrcp.pop %v5680
    %v5683 = vmul.f32 %v5672, %v5681
    %v5684 = vmul.f32 %v5674, %v5682
    %5685 = vrot.lane.b32.xlu0 %v3763, 48
    %v5686 = vpop.permute.xlu0 %5685
    %5687 = vrot.lane.b32.xlu0 %v3768, 48
    %v5688 = vpop.permute.xlu0 %5687
    %v5692 = vsel %vm622, %v5683, 0
    %5694 = vmatprep.subr.mxu0 0.0
    %5695 = vmatpush1.msra.mxu0 0.0
    %5696 = vmatprep.subr.mxu0 0.0
    %5697 = vmatpush1.msra.mxu0 0.0
    %5698 = vmatprep.subr.mxu0 0.0
    %5699 = vmatpush1.msra.mxu0 0.0
    %5700 = vmatprep.subr.mxu0 0.0
    %5701 = vmatpush1.msra.mxu0 0.0
    %5702 = vmatprep.subr.mxu0 0.0
    %5703 = vmatpush1.msra.mxu0 0.0
    %5704 = vmatprep.subr.mxu0 0.0
    %5705 = vmatpush1.msra.mxu0 0.0
    %5706 = vmatprep.subr.mxu0 0.0
    %5707 = vmatpush1.msra.mxu0 0.0
    %5708 = vmatprep.subr.mxu0 0.0
    %5709 = vmatpush1.msra.mxu0 0.0
    %5710 = vmatprep.subr.mxu0 0.0
    %5711 = vmatpush1.msra.mxu0 0.0
    %5712 = vmatprep.subr.mxu0 0.0
    %5713 = vmatpush1.msra.mxu0 0.0
    %5714 = vmatprep.subr.mxu0 0.0
    %5715 = vmatpush1.msra.mxu0 0.0
    %5716 = vmatprep.subr.mxu0 0.0
    %5717 = vmatpush1.msra.mxu0 0.0
    %5718 = vmatprep.subr.mxu0 0.0
    %5719 = vmatpush1.msra.mxu0 0.0
    %5720 = vmatprep.subr.mxu0 0.0
    %5721 = vmatpush1.msra.mxu0 0.0
    %5722 = vmatprep.subr.mxu0 0.0
    %5723 = vmatpush1.msra.mxu0 %v5688
    %5724 = vmatprep.subr.mxu0 0.0
    %5725 = vmatpush1.msra.mxu0 %v5686
    %5726 = vmatprep.subr.mxu0 0.0
    %5727 = vmatpush2.msra.mxu0 0.0
    %5728 = vmatprep.subr.mxu0 0.0
    %5729 = vmatpush2.msra.mxu0 0.0
    %5730 = vmatprep.subr.mxu0 0.0
    %5731 = vmatpush2.msra.mxu0 0.0
    %5732 = vmatprep.subr.mxu0 0.0
    %5733 = vmatpush2.msra.mxu0 0.0
    %5734 = vmatprep.subr.mxu0 0.0
    %5735 = vmatpush2.msra.mxu0 0.0
    %5736 = vmatprep.subr.mxu0 0.0
    %5737 = vmatpush2.msra.mxu0 0.0
    %5738 = vmatprep.subr.mxu0 0.0
    %5739 = vmatpush2.msra.mxu0 0.0
    %5740 = vmatprep.subr.mxu0 0.0
    %5741 = vmatpush2.msra.mxu0 0.0
    %5742 = vmatprep.subr.mxu0 0.0
    %5743 = vmatpush2.msra.mxu0 0.0
    %5744 = vmatprep.subr.mxu0 0.0
    %5745 = vmatpush2.msra.mxu0 0.0
    %5746 = vmatprep.subr.mxu0 0.0
    %5747 = vmatpush2.msra.mxu0 0.0
    %5748 = vmatprep.subr.mxu0 0.0
    %5749 = vmatpush2.msra.mxu0 0.0
    %5750 = vmatprep.subr.mxu0 0.0
    %5751 = vmatpush2.msra.mxu0 0.0
    %5752 = vmatprep.subr.mxu0 0.0
    %5753 = vmatpush2.msra.mxu0 0.0
    %5754 = vmatprep.subr.mxu0 0.0
    %5755 = vmatpush2.msra.mxu0 0.0
    %5756 = vmatprep.subr.mxu0 0.0
    %5757 = vmatpush2.msra.mxu0 0.0
    %5758 = vmatprep.mubr.f32.mxu0 0.0
    %5759 = vmatmul.mubr.f32.gmra.mxu0 %v5692
    %v5760 = vpop.f32.mrf.mxu0
    %v5761 = vadd.f32 0.0, %v5760
    %v5762 = vpop.f32.mrf.mxu0
    %5763 = vdwg.mxu0
    %5764 = vrot.lane.b32.xlu0 %v3773, 48
    %v5765 = vpop.permute.xlu0 %5764
    %5766 = vrot.lane.b32.xlu0 %v3778, 48
    %v5767 = vpop.permute.xlu0 %5766
    %v5771 = vsel %vm622, %v5684, 0
    %5773 = vmatprep.subr.mxu0 0.0
    %5774 = vmatpush1.msra.mxu0 0.0
    %5775 = vmatprep.subr.mxu0 0.0
    %5776 = vmatpush1.msra.mxu0 0.0
    %5777 = vmatprep.subr.mxu0 0.0
    %5778 = vmatpush1.msra.mxu0 0.0
    %5779 = vmatprep.subr.mxu0 0.0
    %5780 = vmatpush1.msra.mxu0 0.0
    %5781 = vmatprep.subr.mxu0 0.0
    %5782 = vmatpush1.msra.mxu0 0.0
    %5783 = vmatprep.subr.mxu0 0.0
    %5784 = vmatpush1.msra.mxu0 0.0
    %5785 = vmatprep.subr.mxu0 0.0
    %5786 = vmatpush1.msra.mxu0 0.0
    %5787 = vmatprep.subr.mxu0 0.0
    %5788 = vmatpush1.msra.mxu0 0.0
    %5789 = vmatprep.subr.mxu0 0.0
    %5790 = vmatpush1.msra.mxu0 0.0
    %5791 = vmatprep.subr.mxu0 0.0
    %5792 = vmatpush1.msra.mxu0 0.0
    %5793 = vmatprep.subr.mxu0 0.0
    %5794 = vmatpush1.msra.mxu0 0.0
    %5795 = vmatprep.subr.mxu0 0.0
    %5796 = vmatpush1.msra.mxu0 0.0
    %5797 = vmatprep.subr.mxu0 0.0
    %5798 = vmatpush1.msra.mxu0 0.0
    %5799 = vmatprep.subr.mxu0 0.0
    %5800 = vmatpush1.msra.mxu0 0.0
    %5801 = vmatprep.subr.mxu0 0.0
    %5802 = vmatpush1.msra.mxu0 %v5767
    %5803 = vmatprep.subr.mxu0 0.0
    %5804 = vmatpush1.msra.mxu0 %v5765
    %5805 = vmatprep.subr.mxu0 0.0
    %5806 = vmatpush2.msra.mxu0 0.0
    %5807 = vmatprep.subr.mxu0 0.0
    %5808 = vmatpush2.msra.mxu0 0.0
    %5809 = vmatprep.subr.mxu0 0.0
    %5810 = vmatpush2.msra.mxu0 0.0
    %5811 = vmatprep.subr.mxu0 0.0
    %5812 = vmatpush2.msra.mxu0 0.0
    %5813 = vmatprep.subr.mxu0 0.0
    %5814 = vmatpush2.msra.mxu0 0.0
    %5815 = vmatprep.subr.mxu0 0.0
    %5816 = vmatpush2.msra.mxu0 0.0
    %5817 = vmatprep.subr.mxu0 0.0
    %5818 = vmatpush2.msra.mxu0 0.0
    %5819 = vmatprep.subr.mxu0 0.0
    %5820 = vmatpush2.msra.mxu0 0.0
    %5821 = vmatprep.subr.mxu0 0.0
    %5822 = vmatpush2.msra.mxu0 0.0
    %5823 = vmatprep.subr.mxu0 0.0
    %5824 = vmatpush2.msra.mxu0 0.0
    %5825 = vmatprep.subr.mxu0 0.0
    %5826 = vmatpush2.msra.mxu0 0.0
    %5827 = vmatprep.subr.mxu0 0.0
    %5828 = vmatpush2.msra.mxu0 0.0
    %5829 = vmatprep.subr.mxu0 0.0
    %5830 = vmatpush2.msra.mxu0 0.0
    %5831 = vmatprep.subr.mxu0 0.0
    %5832 = vmatpush2.msra.mxu0 0.0
    %5833 = vmatprep.subr.mxu0 0.0
    %5834 = vmatpush2.msra.mxu0 0.0
    %5835 = vmatprep.subr.mxu0 0.0
    %5836 = vmatpush2.msra.mxu0 0.0
    %5837 = vmatprep.mubr.f32.mxu0 0.0
    %5838 = vmatmul.mubr.f32.gmra.mxu0 %v5771
    %v5839 = vpop.f32.mrf.mxu0
    %v5840 = vadd.f32 0.0, %v5839
    %v5841 = vpop.f32.mrf.mxu0
    %5842 = vdwg.mxu0
    %5843 = vrot.lane.b32.xlu0 %v3571, 32
    %v5844 = vpop.permute.xlu0 %5843
    %5845 = vrot.lane.b32.xlu0 %v3662, 32
    %v5846 = vpop.permute.xlu0 %5845
    %5847 = vrot.lane.b32.xlu0 %v3667, 32
    %v5848 = vpop.permute.xlu0 %5847
    %v5849 = vsel %vm622, %v5844, 0
    %v5851 = vsel %vm622, %v5846, 0
    %v5853 = vsel %vm622, %v5848, 0
    %5855 = vmatprep.subr.mxu0 0.0
    %5856 = vmatpush1.xpose.msra.mxu0 0.0
    %5857 = vmatprep.subr.mxu0 0.0
    %5858 = vmatpush1.xpose.msra.mxu0 0.0
    %5859 = vmatprep.subr.mxu0 0.0
    %5860 = vmatpush1.xpose.msra.mxu0 0.0
    %5861 = vmatprep.subr.mxu0 0.0
    %5862 = vmatpush1.xpose.msra.mxu0 0.0
    %5863 = vmatprep.subr.mxu0 0.0
    %5864 = vmatpush1.xpose.msra.mxu0 0.0
    %5865 = vmatprep.subr.mxu0 0.0
    %5866 = vmatpush1.xpose.msra.mxu0 0.0
    %5867 = vmatprep.subr.mxu0 0.0
    %5868 = vmatpush1.xpose.msra.mxu0 0.0
    %5869 = vmatprep.subr.mxu0 0.0
    %5870 = vmatpush1.xpose.msra.mxu0 0.0
    %5871 = vmatprep.subr.mxu0 0.0
    %5872 = vmatpush1.xpose.msra.mxu0 0.0
    %5873 = vmatprep.subr.mxu0 0.0
    %5874 = vmatpush1.xpose.msra.mxu0 0.0
    %5875 = vmatprep.subr.mxu0 0.0
    %5876 = vmatpush1.xpose.msra.mxu0 0.0
    %5877 = vmatprep.subr.mxu0 0.0
    %5878 = vmatpush1.xpose.msra.mxu0 0.0
    %5879 = vmatprep.subr.mxu0 0.0
    %5880 = vmatpush1.xpose.msra.mxu0 0.0
    %5881 = vmatprep.subr.mxu0 0.0
    %5882 = vmatpush1.xpose.msra.mxu0 0.0
    %5883 = vmatprep.subr.mxu0 0.0
    %5884 = vmatpush1.xpose.msra.mxu0 %v5853
    %5885 = vmatprep.subr.mxu0 0.0
    %5886 = vmatpush1.xpose.msra.mxu0 %v5851
    %5887 = vmatprep.subr.mxu0 0.0
    %5888 = vmatpush2.xpose.msra.mxu0 0.0
    %5889 = vmatprep.subr.mxu0 0.0
    %5890 = vmatpush2.xpose.msra.mxu0 0.0
    %5891 = vmatprep.subr.mxu0 0.0
    %5892 = vmatpush2.xpose.msra.mxu0 0.0
    %5893 = vmatprep.subr.mxu0 0.0
    %5894 = vmatpush2.xpose.msra.mxu0 0.0
    %5895 = vmatprep.subr.mxu0 0.0
    %5896 = vmatpush2.xpose.msra.mxu0 0.0
    %5897 = vmatprep.subr.mxu0 0.0
    %5898 = vmatpush2.xpose.msra.mxu0 0.0
    %5899 = vmatprep.subr.mxu0 0.0
    %5900 = vmatpush2.xpose.msra.mxu0 0.0
    %5901 = vmatprep.subr.mxu0 0.0
    %5902 = vmatpush2.xpose.msra.mxu0 0.0
    %5903 = vmatprep.subr.mxu0 0.0
    %5904 = vmatpush2.xpose.msra.mxu0 0.0
    %5905 = vmatprep.subr.mxu0 0.0
    %5906 = vmatpush2.xpose.msra.mxu0 0.0
    %5907 = vmatprep.subr.mxu0 0.0
    %5908 = vmatpush2.xpose.msra.mxu0 0.0
    %5909 = vmatprep.subr.mxu0 0.0
    %5910 = vmatpush2.xpose.msra.mxu0 0.0
    %5911 = vmatprep.subr.mxu0 0.0
    %5912 = vmatpush2.xpose.msra.mxu0 0.0
    %5913 = vmatprep.subr.mxu0 0.0
    %5914 = vmatpush2.xpose.msra.mxu0 0.0
    %5915 = vmatprep.subr.mxu0 0.0
    %5916 = vmatpush2.xpose.msra.mxu0 0.0
    %5917 = vmatprep.subr.mxu0 0.0
    %5918 = vmatpush2.xpose.msra.mxu0 0.0
    %5919 = vmatprep.mubr.f32.mxu0 0.0
    %5920 = vmatmul.mubr.f32.gmra.mxu0 %v5849
    %v5921 = vpop.f32.mrf.mxu0
    %v5922 = vadd.f32 0.0, %v5921
    %v5923 = vpop.f32.mrf.mxu0
    %5924 = vdwg.mxu0
    %5925 = vrot.lane.b32.xlu0 %v3576, 32
    %v5926 = vpop.permute.xlu0 %5925
    %5927 = vrot.lane.b32.xlu0 %v3672, 32
    %v5928 = vpop.permute.xlu0 %5927
    %5929 = vrot.lane.b32.xlu0 %v3677, 32
    %v5930 = vpop.permute.xlu0 %5929
    %v5931 = vsel %vm622, %v5926, 0
    %v5933 = vsel %vm622, %v5928, 0
    %v5935 = vsel %vm622, %v5930, 0
    %5937 = vmatprep.subr.mxu0 0.0
    %5938 = vmatpush1.xpose.msra.mxu0 0.0
    %5939 = vmatprep.subr.mxu0 0.0
    %5940 = vmatpush1.xpose.msra.mxu0 0.0
    %5941 = vmatprep.subr.mxu0 0.0
    %5942 = vmatpush1.xpose.msra.mxu0 0.0
    %5943 = vmatprep.subr.mxu0 0.0
    %5944 = vmatpush1.xpose.msra.mxu0 0.0
    %5945 = vmatprep.subr.mxu0 0.0
    %5946 = vmatpush1.xpose.msra.mxu0 0.0
    %5947 = vmatprep.subr.mxu0 0.0
    %5948 = vmatpush1.xpose.msra.mxu0 0.0
    %5949 = vmatprep.subr.mxu0 0.0
    %5950 = vmatpush1.xpose.msra.mxu0 0.0
    %5951 = vmatprep.subr.mxu0 0.0
    %5952 = vmatpush1.xpose.msra.mxu0 0.0
    %5953 = vmatprep.subr.mxu0 0.0
    %5954 = vmatpush1.xpose.msra.mxu0 0.0
    %5955 = vmatprep.subr.mxu0 0.0
    %5956 = vmatpush1.xpose.msra.mxu0 0.0
    %5957 = vmatprep.subr.mxu0 0.0
    %5958 = vmatpush1.xpose.msra.mxu0 0.0
    %5959 = vmatprep.subr.mxu0 0.0
    %5960 = vmatpush1.xpose.msra.mxu0 0.0
    %5961 = vmatprep.subr.mxu0 0.0
    %5962 = vmatpush1.xpose.msra.mxu0 0.0
    %5963 = vmatprep.subr.mxu0 0.0
    %5964 = vmatpush1.xpose.msra.mxu0 0.0
    %5965 = vmatprep.subr.mxu0 0.0
    %5966 = vmatpush1.xpose.msra.mxu0 %v5935
    %5967 = vmatprep.subr.mxu0 0.0
    %5968 = vmatpush1.xpose.msra.mxu0 %v5933
    %5969 = vmatprep.subr.mxu0 0.0
    %5970 = vmatpush2.xpose.msra.mxu0 0.0
    %5971 = vmatprep.subr.mxu0 0.0
    %5972 = vmatpush2.xpose.msra.mxu0 0.0
    %5973 = vmatprep.subr.mxu0 0.0
    %5974 = vmatpush2.xpose.msra.mxu0 0.0
    %5975 = vmatprep.subr.mxu0 0.0
    %5976 = vmatpush2.xpose.msra.mxu0 0.0
    %5977 = vmatprep.subr.mxu0 0.0
    %5978 = vmatpush2.xpose.msra.mxu0 0.0
    %5979 = vmatprep.subr.mxu0 0.0
    %5980 = vmatpush2.xpose.msra.mxu0 0.0
    %5981 = vmatprep.subr.mxu0 0.0
    %5982 = vmatpush2.xpose.msra.mxu0 0.0
    %5983 = vmatprep.subr.mxu0 0.0
    %5984 = vmatpush2.xpose.msra.mxu0 0.0
    %5985 = vmatprep.subr.mxu0 0.0
    %5986 = vmatpush2.xpose.msra.mxu0 0.0
    %5987 = vmatprep.subr.mxu0 0.0
    %5988 = vmatpush2.xpose.msra.mxu0 0.0
    %5989 = vmatprep.subr.mxu0 0.0
    %5990 = vmatpush2.xpose.msra.mxu0 0.0
    %5991 = vmatprep.subr.mxu0 0.0
    %5992 = vmatpush2.xpose.msra.mxu0 0.0
    %5993 = vmatprep.subr.mxu0 0.0
    %5994 = vmatpush2.xpose.msra.mxu0 0.0
    %5995 = vmatprep.subr.mxu0 0.0
    %5996 = vmatpush2.xpose.msra.mxu0 0.0
    %5997 = vmatprep.subr.mxu0 0.0
    %5998 = vmatpush2.xpose.msra.mxu0 0.0
    %5999 = vmatprep.subr.mxu0 0.0
    %6000 = vmatpush2.xpose.msra.mxu0 0.0
    %6001 = vmatprep.mubr.f32.mxu0 0.0
    %6002 = vmatmul.mubr.f32.gmra.mxu0 %v5931
    %v6003 = vpop.f32.mrf.mxu0
    %v6004 = vadd.f32 0.0, %v6003
    %v6005 = vpop.f32.mrf.mxu0
    %6006 = vdwg.mxu0
    %v6007 = vmul.f32 %v5922, 0.25
    %v6008 = vmul.f32 %v6004, 0.25
    %v6009 = vsel %vm622, %v6007, -inf
    %6010 = vmax.xlane.f32.xlu0 %v6009
    %v6011 = vpop.xlane.xlu0 %6010
    %v6012 = vsel %vm622, %v6008, -inf
    %6013 = vmax.xlane.f32.xlu0 %v6012
    %v6014 = vpop.xlane.xlu0 %6013
    %v6015 = vsub.f32 %v6007, %v6011
    %v6016 = vsub.f32 %v6008, %v6014
    %v6017 = vmul.f32 %v6015, 1.442695
    %v6018 = vpow.pop %v6017
    %v6019 = vmul.f32 %v6016, 1.442695
    %v6020 = vpow.pop %v6019
    %v6021 = vsel %vm622, %v6018, 0.0
    %6022 = vadd.xlane.f32.xlu0 %v6021
    %v6023 = vpop.xlane.xlu0 %6022
    %v6024 = vsel %vm622, %v6020, 0.0
    %6025 = vadd.xlane.f32.xlu0 %v6024
    %v6026 = vpop.xlane.xlu0 %6025
    %v6027 = vrcp.pop %v6023
    %v6028 = vrcp.pop %v6026
    %v6029 = vmul.f32 %v6018, %v6027
    %v6030 = vmul.f32 %v6020, %v6028
    %6031 = vrot.lane.b32.xlu0 %v3763, 32
    %v6032 = vpop.permute.xlu0 %6031
    %6033 = vrot.lane.b32.xlu0 %v3768, 32
    %v6034 = vpop.permute.xlu0 %6033
    %v6038 = vsel %vm622, %v6029, 0
    %6040 = vmatprep.subr.mxu0 0.0
    %6041 = vmatpush1.msra.mxu0 0.0
    %6042 = vmatprep.subr.mxu0 0.0
    %6043 = vmatpush1.msra.mxu0 0.0
    %6044 = vmatprep.subr.mxu0 0.0
    %6045 = vmatpush1.msra.mxu0 0.0
    %6046 = vmatprep.subr.mxu0 0.0
    %6047 = vmatpush1.msra.mxu0 0.0
    %6048 = vmatprep.subr.mxu0 0.0
    %6049 = vmatpush1.msra.mxu0 0.0
    %6050 = vmatprep.subr.mxu0 0.0
    %6051 = vmatpush1.msra.mxu0 0.0
    %6052 = vmatprep.subr.mxu0 0.0
    %6053 = vmatpush1.msra.mxu0 0.0
    %6054 = vmatprep.subr.mxu0 0.0
    %6055 = vmatpush1.msra.mxu0 0.0
    %6056 = vmatprep.subr.mxu0 0.0
    %6057 = vmatpush1.msra.mxu0 0.0
    %6058 = vmatprep.subr.mxu0 0.0
    %6059 = vmatpush1.msra.mxu0 0.0
    %6060 = vmatprep.subr.mxu0 0.0
    %6061 = vmatpush1.msra.mxu0 0.0
    %6062 = vmatprep.subr.mxu0 0.0
    %6063 = vmatpush1.msra.mxu0 0.0
    %6064 = vmatprep.subr.mxu0 0.0
    %6065 = vmatpush1.msra.mxu0 0.0
    %6066 = vmatprep.subr.mxu0 0.0
    %6067 = vmatpush1.msra.mxu0 0.0
    %6068 = vmatprep.subr.mxu0 0.0
    %6069 = vmatpush1.msra.mxu0 %v6034
    %6070 = vmatprep.subr.mxu0 0.0
    %6071 = vmatpush1.msra.mxu0 %v6032
    %6072 = vmatprep.subr.mxu0 0.0
    %6073 = vmatpush2.msra.mxu0 0.0
    %6074 = vmatprep.subr.mxu0 0.0
    %6075 = vmatpush2.msra.mxu0 0.0
    %6076 = vmatprep.subr.mxu0 0.0
    %6077 = vmatpush2.msra.mxu0 0.0
    %6078 = vmatprep.subr.mxu0 0.0
    %6079 = vmatpush2.msra.mxu0 0.0
    %6080 = vmatprep.subr.mxu0 0.0
    %6081 = vmatpush2.msra.mxu0 0.0
    %6082 = vmatprep.subr.mxu0 0.0
    %6083 = vmatpush2.msra.mxu0 0.0
    %6084 = vmatprep.subr.mxu0 0.0
    %6085 = vmatpush2.msra.mxu0 0.0
    %6086 = vmatprep.subr.mxu0 0.0
    %6087 = vmatpush2.msra.mxu0 0.0
    %6088 = vmatprep.subr.mxu0 0.0
    %6089 = vmatpush2.msra.mxu0 0.0
    %6090 = vmatprep.subr.mxu0 0.0
    %6091 = vmatpush2.msra.mxu0 0.0
    %6092 = vmatprep.subr.mxu0 0.0
    %6093 = vmatpush2.msra.mxu0 0.0
    %6094 = vmatprep.subr.mxu0 0.0
    %6095 = vmatpush2.msra.mxu0 0.0
    %6096 = vmatprep.subr.mxu0 0.0
    %6097 = vmatpush2.msra.mxu0 0.0
    %6098 = vmatprep.subr.mxu0 0.0
    %6099 = vmatpush2.msra.mxu0 0.0
    %6100 = vmatprep.subr.mxu0 0.0
    %6101 = vmatpush2.msra.mxu0 0.0
    %6102 = vmatprep.subr.mxu0 0.0
    %6103 = vmatpush2.msra.mxu0 0.0
    %6104 = vmatprep.mubr.f32.mxu0 0.0
    %6105 = vmatmul.mubr.f32.gmra.mxu0 %v6038
    %v6106 = vpop.f32.mrf.mxu0
    %v6107 = vadd.f32 0.0, %v6106
    %v6108 = vpop.f32.mrf.mxu0
    %6109 = vdwg.mxu0
    %6110 = vrot.lane.b32.xlu0 %v3773, 32
    %v6111 = vpop.permute.xlu0 %6110
    %6112 = vrot.lane.b32.xlu0 %v3778, 32
    %v6113 = vpop.permute.xlu0 %6112
    %v6117 = vsel %vm622, %v6030, 0
    %6119 = vmatprep.subr.mxu0 0.0
    %6120 = vmatpush1.msra.mxu0 0.0
    %6121 = vmatprep.subr.mxu0 0.0
    %6122 = vmatpush1.msra.mxu0 0.0
    %6123 = vmatprep.subr.mxu0 0.0
    %6124 = vmatpush1.msra.mxu0 0.0
    %6125 = vmatprep.subr.mxu0 0.0
    %6126 = vmatpush1.msra.mxu0 0.0
    %6127 = vmatprep.subr.mxu0 0.0
    %6128 = vmatpush1.msra.mxu0 0.0
    %6129 = vmatprep.subr.mxu0 0.0
    %6130 = vmatpush1.msra.mxu0 0.0
    %6131 = vmatprep.subr.mxu0 0.0
    %6132 = vmatpush1.msra.mxu0 0.0
    %6133 = vmatprep.subr.mxu0 0.0
    %6134 = vmatpush1.msra.mxu0 0.0
    %6135 = vmatprep.subr.mxu0 0.0
    %6136 = vmatpush1.msra.mxu0 0.0
    %6137 = vmatprep.subr.mxu0 0.0
    %6138 = vmatpush1.msra.mxu0 0.0
    %6139 = vmatprep.subr.mxu0 0.0
    %6140 = vmatpush1.msra.mxu0 0.0
    %6141 = vmatprep.subr.mxu0 0.0
    %6142 = vmatpush1.msra.mxu0 0.0
    %6143 = vmatprep.subr.mxu0 0.0
    %6144 = vmatpush1.msra.mxu0 0.0
    %6145 = vmatprep.subr.mxu0 0.0
    %6146 = vmatpush1.msra.mxu0 0.0
    %6147 = vmatprep.subr.mxu0 0.0
    %6148 = vmatpush1.msra.mxu0 %v6113
    %6149 = vmatprep.subr.mxu0 0.0
    %6150 = vmatpush1.msra.mxu0 %v6111
    %6151 = vmatprep.subr.mxu0 0.0
    %6152 = vmatpush2.msra.mxu0 0.0
    %6153 = vmatprep.subr.mxu0 0.0
    %6154 = vmatpush2.msra.mxu0 0.0
    %6155 = vmatprep.subr.mxu0 0.0
    %6156 = vmatpush2.msra.mxu0 0.0
    %6157 = vmatprep.subr.mxu0 0.0
    %6158 = vmatpush2.msra.mxu0 0.0
    %6159 = vmatprep.subr.mxu0 0.0
    %6160 = vmatpush2.msra.mxu0 0.0
    %6161 = vmatprep.subr.mxu0 0.0
    %6162 = vmatpush2.msra.mxu0 0.0
    %6163 = vmatprep.subr.mxu0 0.0
    %6164 = vmatpush2.msra.mxu0 0.0
    %6165 = vmatprep.subr.mxu0 0.0
    %6166 = vmatpush2.msra.mxu0 0.0
    %6167 = vmatprep.subr.mxu0 0.0
    %6168 = vmatpush2.msra.mxu0 0.0
    %6169 = vmatprep.subr.mxu0 0.0
    %6170 = vmatpush2.msra.mxu0 0.0
    %6171 = vmatprep.subr.mxu0 0.0
    %6172 = vmatpush2.msra.mxu0 0.0
    %6173 = vmatprep.subr.mxu0 0.0
    %6174 = vmatpush2.msra.mxu0 0.0
    %6175 = vmatprep.subr.mxu0 0.0
    %6176 = vmatpush2.msra.mxu0 0.0
    %6177 = vmatprep.subr.mxu0 0.0
    %6178 = vmatpush2.msra.mxu0 0.0
    %6179 = vmatprep.subr.mxu0 0.0
    %6180 = vmatpush2.msra.mxu0 0.0
    %6181 = vmatprep.subr.mxu0 0.0
    %6182 = vmatpush2.msra.mxu0 0.0
    %6183 = vmatprep.mubr.f32.mxu0 0.0
    %6184 = vmatmul.mubr.f32.gmra.mxu0 %v6117
    %v6185 = vpop.f32.mrf.mxu0
    %v6186 = vadd.f32 0.0, %v6185
    %v6187 = vpop.f32.mrf.mxu0
    %6188 = vdwg.mxu0
    %6189 = vrot.lane.b32.xlu0 %v3571, 16
    %v6190 = vpop.permute.xlu0 %6189
    %6191 = vrot.lane.b32.xlu0 %v3662, 16
    %v6192 = vpop.permute.xlu0 %6191
    %6193 = vrot.lane.b32.xlu0 %v3667, 16
    %v6194 = vpop.permute.xlu0 %6193
    %v6195 = vsel %vm622, %v6190, 0
    %v6197 = vsel %vm622, %v6192, 0
    %v6199 = vsel %vm622, %v6194, 0
    %6201 = vmatprep.subr.mxu0 0.0
    %6202 = vmatpush1.xpose.msra.mxu0 0.0
    %6203 = vmatprep.subr.mxu0 0.0
    %6204 = vmatpush1.xpose.msra.mxu0 0.0
    %6205 = vmatprep.subr.mxu0 0.0
    %6206 = vmatpush1.xpose.msra.mxu0 0.0
    %6207 = vmatprep.subr.mxu0 0.0
    %6208 = vmatpush1.xpose.msra.mxu0 0.0
    %6209 = vmatprep.subr.mxu0 0.0
    %6210 = vmatpush1.xpose.msra.mxu0 0.0
    %6211 = vmatprep.subr.mxu0 0.0
    %6212 = vmatpush1.xpose.msra.mxu0 0.0
    %6213 = vmatprep.subr.mxu0 0.0
    %6214 = vmatpush1.xpose.msra.mxu0 0.0
    %6215 = vmatprep.subr.mxu0 0.0
    %6216 = vmatpush1.xpose.msra.mxu0 0.0
    %6217 = vmatprep.subr.mxu0 0.0
    %6218 = vmatpush1.xpose.msra.mxu0 0.0
    %6219 = vmatprep.subr.mxu0 0.0
    %6220 = vmatpush1.xpose.msra.mxu0 0.0
    %6221 = vmatprep.subr.mxu0 0.0
    %6222 = vmatpush1.xpose.msra.mxu0 0.0
    %6223 = vmatprep.subr.mxu0 0.0
    %6224 = vmatpush1.xpose.msra.mxu0 0.0
    %6225 = vmatprep.subr.mxu0 0.0
    %6226 = vmatpush1.xpose.msra.mxu0 0.0
    %6227 = vmatprep.subr.mxu0 0.0
    %6228 = vmatpush1.xpose.msra.mxu0 0.0
    %6229 = vmatprep.subr.mxu0 0.0
    %6230 = vmatpush1.xpose.msra.mxu0 %v6199
    %6231 = vmatprep.subr.mxu0 0.0
    %6232 = vmatpush1.xpose.msra.mxu0 %v6197
    %6233 = vmatprep.subr.mxu0 0.0
    %6234 = vmatpush2.xpose.msra.mxu0 0.0
    %6235 = vmatprep.subr.mxu0 0.0
    %6236 = vmatpush2.xpose.msra.mxu0 0.0
    %6237 = vmatprep.subr.mxu0 0.0
    %6238 = vmatpush2.xpose.msra.mxu0 0.0
    %6239 = vmatprep.subr.mxu0 0.0
    %6240 = vmatpush2.xpose.msra.mxu0 0.0
    %6241 = vmatprep.subr.mxu0 0.0
    %6242 = vmatpush2.xpose.msra.mxu0 0.0
    %6243 = vmatprep.subr.mxu0 0.0
    %6244 = vmatpush2.xpose.msra.mxu0 0.0
    %6245 = vmatprep.subr.mxu0 0.0
    %6246 = vmatpush2.xpose.msra.mxu0 0.0
    %6247 = vmatprep.subr.mxu0 0.0
    %6248 = vmatpush2.xpose.msra.mxu0 0.0
    %6249 = vmatprep.subr.mxu0 0.0
    %6250 = vmatpush2.xpose.msra.mxu0 0.0
    %6251 = vmatprep.subr.mxu0 0.0
    %6252 = vmatpush2.xpose.msra.mxu0 0.0
    %6253 = vmatprep.subr.mxu0 0.0
    %6254 = vmatpush2.xpose.msra.mxu0 0.0
    %6255 = vmatprep.subr.mxu0 0.0
    %6256 = vmatpush2.xpose.msra.mxu0 0.0
    %6257 = vmatprep.subr.mxu0 0.0
    %6258 = vmatpush2.xpose.msra.mxu0 0.0
    %6259 = vmatprep.subr.mxu0 0.0
    %6260 = vmatpush2.xpose.msra.mxu0 0.0
    %6261 = vmatprep.subr.mxu0 0.0
    %6262 = vmatpush2.xpose.msra.mxu0 0.0
    %6263 = vmatprep.subr.mxu0 0.0
    %6264 = vmatpush2.xpose.msra.mxu0 0.0
    %6265 = vmatprep.mubr.f32.mxu0 0.0
    %6266 = vmatmul.mubr.f32.gmra.mxu0 %v6195
    %v6267 = vpop.f32.mrf.mxu0
    %v6268 = vadd.f32 0.0, %v6267
    %v6269 = vpop.f32.mrf.mxu0
    %6270 = vdwg.mxu0
    %6271 = vrot.lane.b32.xlu0 %v3576, 16
    %v6272 = vpop.permute.xlu0 %6271
    %6273 = vrot.lane.b32.xlu0 %v3672, 16
    %v6274 = vpop.permute.xlu0 %6273
    %6275 = vrot.lane.b32.xlu0 %v3677, 16
    %v6276 = vpop.permute.xlu0 %6275
    %v6277 = vsel %vm622, %v6272, 0
    %v6279 = vsel %vm622, %v6274, 0
    %v6281 = vsel %vm622, %v6276, 0
    %6283 = vmatprep.subr.mxu0 0.0
    %6284 = vmatpush1.xpose.msra.mxu0 0.0
    %6285 = vmatprep.subr.mxu0 0.0
    %6286 = vmatpush1.xpose.msra.mxu0 0.0
    %6287 = vmatprep.subr.mxu0 0.0
    %6288 = vmatpush1.xpose.msra.mxu0 0.0
    %6289 = vmatprep.subr.mxu0 0.0
    %6290 = vmatpush1.xpose.msra.mxu0 0.0
    %6291 = vmatprep.subr.mxu0 0.0
    %6292 = vmatpush1.xpose.msra.mxu0 0.0
    %6293 = vmatprep.subr.mxu0 0.0
    %6294 = vmatpush1.xpose.msra.mxu0 0.0
    %6295 = vmatprep.subr.mxu0 0.0
    %6296 = vmatpush1.xpose.msra.mxu0 0.0
    %6297 = vmatprep.subr.mxu0 0.0
    %6298 = vmatpush1.xpose.msra.mxu0 0.0
    %6299 = vmatprep.subr.mxu0 0.0
    %6300 = vmatpush1.xpose.msra.mxu0 0.0
    %6301 = vmatprep.subr.mxu0 0.0
    %6302 = vmatpush1.xpose.msra.mxu0 0.0
    %6303 = vmatprep.subr.mxu0 0.0
    %6304 = vmatpush1.xpose.msra.mxu0 0.0
    %6305 = vmatprep.subr.mxu0 0.0
    %6306 = vmatpush1.xpose.msra.mxu0 0.0
    %6307 = vmatprep.subr.mxu0 0.0
    %6308 = vmatpush1.xpose.msra.mxu0 0.0
    %6309 = vmatprep.subr.mxu0 0.0
    %6310 = vmatpush1.xpose.msra.mxu0 0.0
    %6311 = vmatprep.subr.mxu0 0.0
    %6312 = vmatpush1.xpose.msra.mxu0 %v6281
    %6313 = vmatprep.subr.mxu0 0.0
    %6314 = vmatpush1.xpose.msra.mxu0 %v6279
    %6315 = vmatprep.subr.mxu0 0.0
    %6316 = vmatpush2.xpose.msra.mxu0 0.0
    %6317 = vmatprep.subr.mxu0 0.0
    %6318 = vmatpush2.xpose.msra.mxu0 0.0
    %6319 = vmatprep.subr.mxu0 0.0
    %6320 = vmatpush2.xpose.msra.mxu0 0.0
    %6321 = vmatprep.subr.mxu0 0.0
    %6322 = vmatpush2.xpose.msra.mxu0 0.0
    %6323 = vmatprep.subr.mxu0 0.0
    %6324 = vmatpush2.xpose.msra.mxu0 0.0
    %6325 = vmatprep.subr.mxu0 0.0
    %6326 = vmatpush2.xpose.msra.mxu0 0.0
    %6327 = vmatprep.subr.mxu0 0.0
    %6328 = vmatpush2.xpose.msra.mxu0 0.0
    %6329 = vmatprep.subr.mxu0 0.0
    %6330 = vmatpush2.xpose.msra.mxu0 0.0
    %6331 = vmatprep.subr.mxu0 0.0
    %6332 = vmatpush2.xpose.msra.mxu0 0.0
    %6333 = vmatprep.subr.mxu0 0.0
    %6334 = vmatpush2.xpose.msra.mxu0 0.0
    %6335 = vmatprep.subr.mxu0 0.0
    %6336 = vmatpush2.xpose.msra.mxu0 0.0
    %6337 = vmatprep.subr.mxu0 0.0
    %6338 = vmatpush2.xpose.msra.mxu0 0.0
    %6339 = vmatprep.subr.mxu0 0.0
    %6340 = vmatpush2.xpose.msra.mxu0 0.0
    %6341 = vmatprep.subr.mxu0 0.0
    %6342 = vmatpush2.xpose.msra.mxu0 0.0
    %6343 = vmatprep.subr.mxu0 0.0
    %6344 = vmatpush2.xpose.msra.mxu0 0.0
    %6345 = vmatprep.subr.mxu0 0.0
    %6346 = vmatpush2.xpose.msra.mxu0 0.0
    %6347 = vmatprep.mubr.f32.mxu0 0.0
    %6348 = vmatmul.mubr.f32.gmra.mxu0 %v6277
    %v6349 = vpop.f32.mrf.mxu0
    %v6350 = vadd.f32 0.0, %v6349
    %v6351 = vpop.f32.mrf.mxu0
    %6352 = vdwg.mxu0
    %v6353 = vmul.f32 %v6268, 0.25
    %v6354 = vmul.f32 %v6350, 0.25
    %v6355 = vsel %vm622, %v6353, -inf
    %6356 = vmax.xlane.f32.xlu0 %v6355
    %v6357 = vpop.xlane.xlu0 %6356
    %v6358 = vsel %vm622, %v6354, -inf
    %6359 = vmax.xlane.f32.xlu0 %v6358
    %v6360 = vpop.xlane.xlu0 %6359
    %v6361 = vsub.f32 %v6353, %v6357
    %v6362 = vsub.f32 %v6354, %v6360
    %v6363 = vmul.f32 %v6361, 1.442695
    %v6364 = vpow.pop %v6363
    %v6365 = vmul.f32 %v6362, 1.442695
    %v6366 = vpow.pop %v6365
    %v6367 = vsel %vm622, %v6364, 0.0
    %6368 = vadd.xlane.f32.xlu0 %v6367
    %v6369 = vpop.xlane.xlu0 %6368
    %v6370 = vsel %vm622, %v6366, 0.0
    %6371 = vadd.xlane.f32.xlu0 %v6370
    %v6372 = vpop.xlane.xlu0 %6371
    %v6373 = vrcp.pop %v6369
    %v6374 = vrcp.pop %v6372
    %v6375 = vmul.f32 %v6364, %v6373
    %v6376 = vmul.f32 %v6366, %v6374
    %6377 = vrot.lane.b32.xlu0 %v3763, 16
    %v6378 = vpop.permute.xlu0 %6377
    %6379 = vrot.lane.b32.xlu0 %v3768, 16
    %v6380 = vpop.permute.xlu0 %6379
    %v6384 = vsel %vm622, %v6375, 0
    %6386 = vmatprep.subr.mxu0 0.0
    %6387 = vmatpush1.msra.mxu0 0.0
    %6388 = vmatprep.subr.mxu0 0.0
    %6389 = vmatpush1.msra.mxu0 0.0
    %6390 = vmatprep.subr.mxu0 0.0
    %6391 = vmatpush1.msra.mxu0 0.0
    %6392 = vmatprep.subr.mxu0 0.0
    %6393 = vmatpush1.msra.mxu0 0.0
    %6394 = vmatprep.subr.mxu0 0.0
    %6395 = vmatpush1.msra.mxu0 0.0
    %6396 = vmatprep.subr.mxu0 0.0
    %6397 = vmatpush1.msra.mxu0 0.0
    %6398 = vmatprep.subr.mxu0 0.0
    %6399 = vmatpush1.msra.mxu0 0.0
    %6400 = vmatprep.subr.mxu0 0.0
    %6401 = vmatpush1.msra.mxu0 0.0
    %6402 = vmatprep.subr.mxu0 0.0
    %6403 = vmatpush1.msra.mxu0 0.0
    %6404 = vmatprep.subr.mxu0 0.0
    %6405 = vmatpush1.msra.mxu0 0.0
    %6406 = vmatprep.subr.mxu0 0.0
    %6407 = vmatpush1.msra.mxu0 0.0
    %6408 = vmatprep.subr.mxu0 0.0
    %6409 = vmatpush1.msra.mxu0 0.0
    %6410 = vmatprep.subr.mxu0 0.0
    %6411 = vmatpush1.msra.mxu0 0.0
    %6412 = vmatprep.subr.mxu0 0.0
    %6413 = vmatpush1.msra.mxu0 0.0
    %6414 = vmatprep.subr.mxu0 0.0
    %6415 = vmatpush1.msra.mxu0 %v6380
    %6416 = vmatprep.subr.mxu0 0.0
    %6417 = vmatpush1.msra.mxu0 %v6378
    %6418 = vmatprep.subr.mxu0 0.0
    %6419 = vmatpush2.msra.mxu0 0.0
    %6420 = vmatprep.subr.mxu0 0.0
    %6421 = vmatpush2.msra.mxu0 0.0
    %6422 = vmatprep.subr.mxu0 0.0
    %6423 = vmatpush2.msra.mxu0 0.0
    %6424 = vmatprep.subr.mxu0 0.0
    %6425 = vmatpush2.msra.mxu0 0.0
    %6426 = vmatprep.subr.mxu0 0.0
    %6427 = vmatpush2.msra.mxu0 0.0
    %6428 = vmatprep.subr.mxu0 0.0
    %6429 = vmatpush2.msra.mxu0 0.0
    %6430 = vmatprep.subr.mxu0 0.0
    %6431 = vmatpush2.msra.mxu0 0.0
    %6432 = vmatprep.subr.mxu0 0.0
    %6433 = vmatpush2.msra.mxu0 0.0
    %6434 = vmatprep.subr.mxu0 0.0
    %6435 = vmatpush2.msra.mxu0 0.0
    %6436 = vmatprep.subr.mxu0 0.0
    %6437 = vmatpush2.msra.mxu0 0.0
    %6438 = vmatprep.subr.mxu0 0.0
    %6439 = vmatpush2.msra.mxu0 0.0
    %6440 = vmatprep.subr.mxu0 0.0
    %6441 = vmatpush2.msra.mxu0 0.0
    %6442 = vmatprep.subr.mxu0 0.0
    %6443 = vmatpush2.msra.mxu0 0.0
    %6444 = vmatprep.subr.mxu0 0.0
    %6445 = vmatpush2.msra.mxu0 0.0
    %6446 = vmatprep.subr.mxu0 0.0
    %6447 = vmatpush2.msra.mxu0 0.0
    %6448 = vmatprep.subr.mxu0 0.0
    %6449 = vmatpush2.msra.mxu0 0.0
    %6450 = vmatprep.mubr.f32.mxu0 0.0
    %6451 = vmatmul.mubr.f32.gmra.mxu0 %v6384
    %v6452 = vpop.f32.mrf.mxu0
    %v6453 = vadd.f32 0.0, %v6452
    %v6454 = vpop.f32.mrf.mxu0
    %6455 = vdwg.mxu0
    %6456 = vrot.lane.b32.xlu0 %v3773, 16
    %v6457 = vpop.permute.xlu0 %6456
    %6458 = vrot.lane.b32.xlu0 %v3778, 16
    %v6459 = vpop.permute.xlu0 %6458
    %v6463 = vsel %vm622, %v6376, 0
    %6465 = vmatprep.subr.mxu0 0.0
    %6466 = vmatpush1.msra.mxu0 0.0
    %6467 = vmatprep.subr.mxu0 0.0
    %6468 = vmatpush1.msra.mxu0 0.0
    %6469 = vmatprep.subr.mxu0 0.0
    %6470 = vmatpush1.msra.mxu0 0.0
    %6471 = vmatprep.subr.mxu0 0.0
    %6472 = vmatpush1.msra.mxu0 0.0
    %6473 = vmatprep.subr.mxu0 0.0
    %6474 = vmatpush1.msra.mxu0 0.0
    %6475 = vmatprep.subr.mxu0 0.0
    %6476 = vmatpush1.msra.mxu0 0.0
    %6477 = vmatprep.subr.mxu0 0.0
    %6478 = vmatpush1.msra.mxu0 0.0
    %6479 = vmatprep.subr.mxu0 0.0
    %6480 = vmatpush1.msra.mxu0 0.0
    %6481 = vmatprep.subr.mxu0 0.0
    %6482 = vmatpush1.msra.mxu0 0.0
    %6483 = vmatprep.subr.mxu0 0.0
    %6484 = vmatpush1.msra.mxu0 0.0
    %6485 = vmatprep.subr.mxu0 0.0
    %6486 = vmatpush1.msra.mxu0 0.0
    %6487 = vmatprep.subr.mxu0 0.0
    %6488 = vmatpush1.msra.mxu0 0.0
    %6489 = vmatprep.subr.mxu0 0.0
    %6490 = vmatpush1.msra.mxu0 0.0
    %6491 = vmatprep.subr.mxu0 0.0
    %6492 = vmatpush1.msra.mxu0 0.0
    %6493 = vmatprep.subr.mxu0 0.0
    %6494 = vmatpush1.msra.mxu0 %v6459
    %6495 = vmatprep.subr.mxu0 0.0
    %6496 = vmatpush1.msra.mxu0 %v6457
    %6497 = vmatprep.subr.mxu0 0.0
    %6498 = vmatpush2.msra.mxu0 0.0
    %6499 = vmatprep.subr.mxu0 0.0
    %6500 = vmatpush2.msra.mxu0 0.0
    %6501 = vmatprep.subr.mxu0 0.0
    %6502 = vmatpush2.msra.mxu0 0.0
    %6503 = vmatprep.subr.mxu0 0.0
    %6504 = vmatpush2.msra.mxu0 0.0
    %6505 = vmatprep.subr.mxu0 0.0
    %6506 = vmatpush2.msra.mxu0 0.0
    %6507 = vmatprep.subr.mxu0 0.0
    %6508 = vmatpush2.msra.mxu0 0.0
    %6509 = vmatprep.subr.mxu0 0.0
    %6510 = vmatpush2.msra.mxu0 0.0
    %6511 = vmatprep.subr.mxu0 0.0
    %6512 = vmatpush2.msra.mxu0 0.0
    %6513 = vmatprep.subr.mxu0 0.0
    %6514 = vmatpush2.msra.mxu0 0.0
    %6515 = vmatprep.subr.mxu0 0.0
    %6516 = vmatpush2.msra.mxu0 0.0
    %6517 = vmatprep.subr.mxu0 0.0
    %6518 = vmatpush2.msra.mxu0 0.0
    %6519 = vmatprep.subr.mxu0 0.0
    %6520 = vmatpush2.msra.mxu0 0.0
    %6521 = vmatprep.subr.mxu0 0.0
    %6522 = vmatpush2.msra.mxu0 0.0
    %6523 = vmatprep.subr.mxu0 0.0
    %6524 = vmatpush2.msra.mxu0 0.0
    %6525 = vmatprep.subr.mxu0 0.0
    %6526 = vmatpush2.msra.mxu0 0.0
    %6527 = vmatprep.subr.mxu0 0.0
    %6528 = vmatpush2.msra.mxu0 0.0
    %6529 = vmatprep.mubr.f32.mxu0 0.0
    %6530 = vmatmul.mubr.f32.gmra.mxu0 %v6463
    %v6531 = vpop.f32.mrf.mxu0
    %v6532 = vadd.f32 0.0, %v6531
    %v6533 = vpop.f32.mrf.mxu0
    %6534 = vdwg.mxu0
    %6537 = vrot.lane.b32.xlu0 %v4375, 16
    %v6538 = vpop.permute.xlu0 %6537
    %6539 = vrot.lane.b32.xlu0 %v4456, 16
    %v6540 = vpop.permute.xlu0 %6539
    %6545 = vrot.lane.b32.xlu0 %v4723, 32
    %v6546 = vpop.permute.xlu0 %6545
    %6547 = vrot.lane.b32.xlu0 %v4802, 32
    %v6548 = vpop.permute.xlu0 %6547
    %6553 = vrot.lane.b32.xlu0 %v5069, 48
    %v6554 = vpop.permute.xlu0 %6553
    %6555 = vrot.lane.b32.xlu0 %v5148, 48
    %v6556 = vpop.permute.xlu0 %6555
    %6561 = vrot.lane.b32.xlu0 %v5415, 64
    %v6562 = vpop.permute.xlu0 %6561
    %6563 = vrot.lane.b32.xlu0 %v5494, 64
    %v6564 = vpop.permute.xlu0 %6563
    %6569 = vrot.lane.b32.xlu0 %v5761, 80
    %v6570 = vpop.permute.xlu0 %6569
    %6571 = vrot.lane.b32.xlu0 %v5840, 80
    %v6572 = vpop.permute.xlu0 %6571
    %6577 = vrot.lane.b32.xlu0 %v6107, 96
    %v6578 = vpop.permute.xlu0 %6577
    %6579 = vrot.lane.b32.xlu0 %v6186, 96
    %v6580 = vpop.permute.xlu0 %6579
    %6585 = vrot.lane.b32.xlu0 %v6453, 112
    %v6586 = vpop.permute.xlu0 %6585
    %6587 = vrot.lane.b32.xlu0 %v6532, 112
    %v6588 = vpop.permute.xlu0 %6587
    %v6591 = vsel %vm622, %v4033, %v6538
    %v6592 = vsel %vm622, %v4106, %v6540
    %v6593 = vsel %vm3330, %v6591, %v6546
    %v6594 = vsel %vm3330, %v6592, %v6548
    %v6595 = vsel %vm3333, %v6593, %v6554
    %v6596 = vsel %vm3333, %v6594, %v6556
    %v6597 = vsel %vm3336, %v6595, %v6562
    %v6598 = vsel %vm3336, %v6596, %v6564
    %v6599 = vsel %vm3339, %v6597, %v6570
    %v6600 = vsel %vm3339, %v6598, %v6572
    %v6601 = vsel %vm3342, %v6599, %v6578
    %v6602 = vsel %vm3342, %v6600, %v6580
    %v6603 = vsel %vm3345, %v6601, %v6586
    %v6604 = vsel %vm3345, %v6602, %v6588
    %v6605 = vld [vmem:[#allocation20] sm:$0xff]
    %v6606 = vld [vmem:[#allocation20 + $0x8] sm:$0xff]
    %v6607 = vld [vmem:[#allocation20 + $0x10] sm:$0xff]
    %v6608 = vld [vmem:[#allocation20 + $0x18] sm:$0xff]
    %v6609 = vld [vmem:[#allocation20 + $0x20] sm:$0xff]
    %v6610 = vld [vmem:[#allocation20 + $0x28] sm:$0xff]
    %v6611 = vld [vmem:[#allocation20 + $0x30] sm:$0xff]
    %v6612 = vld [vmem:[#allocation20 + $0x38] sm:$0xff]
    %v6613 = vld [vmem:[#allocation20 + $0x40] sm:$0xff]
    %v6614 = vld [vmem:[#allocation20 + $0x48] sm:$0xff]
    %v6615 = vld [vmem:[#allocation20 + $0x50] sm:$0xff]
    %v6616 = vld [vmem:[#allocation20 + $0x58] sm:$0xff]
    %v6617 = vld [vmem:[#allocation20 + $0x60] sm:$0xff]
    %v6618 = vld [vmem:[#allocation20 + $0x68] sm:$0xff]
    %v6619 = vld [vmem:[#allocation20 + $0x70] sm:$0xff]
    %v6620 = vld [vmem:[#allocation20 + $0x78] sm:$0xff]
    %v6621 = vld [vmem:[#allocation22] sm:$0x1]
    %v6623 = vlaneseq
    %v6624 = vshrl.u32 %v6623, 7
    %v6625 = vsub.s32 0, %v6624
    %v6626 = vrot.slane %v6621, %v6625
    %6628 = vmatprep.subr.mxu0 0.0
    %6629 = vmatpush1.msra.mxu0 %v6620
    %6630 = vmatprep.subr.mxu0 0.0
    %6631 = vmatpush1.msra.mxu0 %v6619
    %6632 = vmatprep.subr.mxu0 0.0
    %6633 = vmatpush1.msra.mxu0 %v6618
    %6634 = vmatprep.subr.mxu0 0.0
    %6635 = vmatpush1.msra.mxu0 %v6617
    %6636 = vmatprep.subr.mxu0 0.0
    %6637 = vmatpush1.msra.mxu0 %v6616
    %6638 = vmatprep.subr.mxu0 0.0
    %6639 = vmatpush1.msra.mxu0 %v6615
    %6640 = vmatprep.subr.mxu0 0.0
    %6641 = vmatpush1.msra.mxu0 %v6614
    %6642 = vmatprep.subr.mxu0 0.0
    %6643 = vmatpush1.msra.mxu0 %v6613
    %6644 = vmatprep.subr.mxu0 0.0
    %6645 = vmatpush1.msra.mxu0 %v6612
    %6646 = vmatprep.subr.mxu0 0.0
    %6647 = vmatpush1.msra.mxu0 %v6611
    %6648 = vmatprep.subr.mxu0 0.0
    %6649 = vmatpush1.msra.mxu0 %v6610
    %6650 = vmatprep.subr.mxu0 0.0
    %6651 = vmatpush1.msra.mxu0 %v6609
    %6652 = vmatprep.subr.mxu0 0.0
    %6653 = vmatpush1.msra.mxu0 %v6608
    %6654 = vmatprep.subr.mxu0 0.0
    %6655 = vmatpush1.msra.mxu0 %v6607
    %6656 = vmatprep.subr.mxu0 0.0
    %6657 = vmatpush1.msra.mxu0 %v6606
    %6658 = vmatprep.subr.mxu0 0.0
    %6659 = vmatpush1.msra.mxu0 %v6605
    %6660 = vmatprep.subr.mxu0 0.0
    %6661 = vmatpush2.msra.mxu0 0.0
    %6662 = vmatprep.subr.mxu0 0.0
    %6663 = vmatpush2.msra.mxu0 0.0
    %6664 = vmatprep.subr.mxu0 0.0
    %6665 = vmatpush2.msra.mxu0 0.0
    %6666 = vmatprep.subr.mxu0 0.0
    %6667 = vmatpush2.msra.mxu0 0.0
    %6668 = vmatprep.subr.mxu0 0.0
    %6669 = vmatpush2.msra.mxu0 0.0
    %6670 = vmatprep.subr.mxu0 0.0
    %6671 = vmatpush2.msra.mxu0 0.0
    %6672 = vmatprep.subr.mxu0 0.0
    %6673 = vmatpush2.msra.mxu0 0.0
    %6674 = vmatprep.subr.mxu0 0.0
    %6675 = vmatpush2.msra.mxu0 0.0
    %6676 = vmatprep.subr.mxu0 0.0
    %6677 = vmatpush2.msra.mxu0 0.0
    %6678 = vmatprep.subr.mxu0 0.0
    %6679 = vmatpush2.msra.mxu0 0.0
    %6680 = vmatprep.subr.mxu0 0.0
    %6681 = vmatpush2.msra.mxu0 0.0
    %6682 = vmatprep.subr.mxu0 0.0
    %6683 = vmatpush2.msra.mxu0 0.0
    %6684 = vmatprep.subr.mxu0 0.0
    %6685 = vmatpush2.msra.mxu0 0.0
    %6686 = vmatprep.subr.mxu0 0.0
    %6687 = vmatpush2.msra.mxu0 0.0
    %6688 = vmatprep.subr.mxu0 0.0
    %6689 = vmatpush2.msra.mxu0 0.0
    %6690 = vmatprep.subr.mxu0 0.0
    %6691 = vmatpush2.msra.mxu0 0.0
    %6692 = vmatprep.mubr.f32.mxu0 0.0
    %6693 = vmatmul.mubr.f32.gmra.mxu0 %v6603
    %v6694 = vpop.f32.mrf.mxu0
    %v6695 = vadd.f32 %v6626, %v6694
    %v6696 = vpop.f32.mrf.mxu0
    %6697 = vmatprep.mubr.f32.mxu0 0.0
    %6698 = vmatmul.mubr.f32.gmra.mxu0 %v6604
    %v6699 = vpop.f32.mrf.mxu0
    %v6700 = vadd.f32 %v6626, %v6699
    %v6701 = vpop.f32.mrf.mxu0
    %6702 = vdwg.mxu0
    %v6703 = vadd.f32 %v3446, %v6695
    %v6704 = vadd.f32 %v3447, %v6700
    %v6705 = vld [vmem:[#allocation23] sm:$0x1]
    %v6706 = vld [vmem:[#allocation25] sm:$0x1]
    %6707 = vadd.xlane.f32.xlu0 %v6703
    %v6708 = vpop.xlane.xlu0 %6707
    %6709 = vadd.xlane.f32.xlu0 %v6704
    %v6710 = vpop.xlane.xlu0 %6709
    %v6711 = vmul.f32 %v6708, %v314
    %v6712 = vmul.f32 %v6710, %v314
    %v6713 = vsub.f32 %v6703, %v6711
    %v6714 = vsub.f32 %v6704, %v6712
    %v6715 = vmul.f32 %v6713, %v6713
    %v6716 = vmul.f32 %v6714, %v6714
    %6717 = vadd.xlane.f32.xlu0 %v6715
    %v6718 = vpop.xlane.xlu0 %6717
    %6719 = vadd.xlane.f32.xlu0 %v6716
    %v6720 = vpop.xlane.xlu0 %6719
    %v6721 = vmul.f32 %v6718, %v314
    %v6722 = vmul.f32 %v6720, %v314
    %v6723 = vadd.f32 %v6721, 1e-05
    %v6724 = vadd.f32 %v6722, 1e-05
    %v6725 = vrsqrt.pop %v6723
    %v6726 = vrsqrt.pop %v6724
    %v6727 = vmul.f32 %v6713, %v6725
    %v6728 = vmul.f32 %v6714, %v6726
    %v6730 = vlaneseq
    %v6731 = vshrl.u32 %v6730, 7
    %v6732 = vsub.s32 0, %v6731
    %v6733 = vrot.slane %v6705, %v6732
    %v6735 = vmul.f32 %v6727, %v6733
    %v6736 = vmul.f32 %v6728, %v6733
    %v6738 = vlaneseq
    %v6739 = vshrl.u32 %v6738, 7
    %v6740 = vsub.s32 0, %v6739
    %v6741 = vrot.slane %v6706, %v6740
    %v6743 = vadd.f32 %v6735, %v6741
    %v6744 = vadd.f32 %v6736, %v6741
    %v6745 = vld [vmem:[#allocation26] sm:$0xff]
    %v6746 = vld [vmem:[#allocation26 + $0x8] sm:$0xff]
    %v6747 = vld [vmem:[#allocation26 + $0x10] sm:$0xff]
    %v6748 = vld [vmem:[#allocation26 + $0x18] sm:$0xff]
    %v6749 = vld [vmem:[#allocation26 + $0x20] sm:$0xff]
    %v6750 = vld [vmem:[#allocation26 + $0x28] sm:$0xff]
    %v6751 = vld [vmem:[#allocation26 + $0x30] sm:$0xff]
    %v6752 = vld [vmem:[#allocation26 + $0x38] sm:$0xff]
    %v6753 = vld [vmem:[#allocation26 + $0x40] sm:$0xff]
    %v6754 = vld [vmem:[#allocation26 + $0x48] sm:$0xff]
    %v6755 = vld [vmem:[#allocation26 + $0x50] sm:$0xff]
    %v6756 = vld [vmem:[#allocation26 + $0x58] sm:$0xff]
    %v6757 = vld [vmem:[#allocation26 + $0x60] sm:$0xff]
    %v6758 = vld [vmem:[#allocation26 + $0x68] sm:$0xff]
    %v6759 = vld [vmem:[#allocation26 + $0x70] sm:$0xff]
    %v6760 = vld [vmem:[#allocation26 + $0x78] sm:$0xff]
    %v6761 = vld [vmem:[#allocation26 + $0x80] sm:$0xff]
    %v6762 = vld [vmem:[#allocation26 + $0x88] sm:$0xff]
    %v6763 = vld [vmem:[#allocation26 + $0x90] sm:$0xff]
    %v6764 = vld [vmem:[#allocation26 + $0x98] sm:$0xff]
    %v6765 = vld [vmem:[#allocation26 + $0xa0] sm:$0xff]
    %v6766 = vld [vmem:[#allocation26 + $0xa8] sm:$0xff]
    %v6767 = vld [vmem:[#allocation26 + $0xb0] sm:$0xff]
    %v6768 = vld [vmem:[#allocation26 + $0xb8] sm:$0xff]
    %v6769 = vld [vmem:[#allocation26 + $0xc0] sm:$0xff]
    %v6770 = vld [vmem:[#allocation26 + $0xc8] sm:$0xff]
    %v6771 = vld [vmem:[#allocation26 + $0xd0] sm:$0xff]
    %v6772 = vld [vmem:[#allocation26 + $0xd8] sm:$0xff]
    %v6773 = vld [vmem:[#allocation26 + $0xe0] sm:$0xff]
    %v6774 = vld [vmem:[#allocation26 + $0xe8] sm:$0xff]
    %v6775 = vld [vmem:[#allocation26 + $0xf0] sm:$0xff]
    %v6776 = vld [vmem:[#allocation26 + $0xf8] sm:$0xff]
    %v6777 = vld [vmem:[#allocation26 + $0x100] sm:$0xff]
    %v6778 = vld [vmem:[#allocation26 + $0x108] sm:$0xff]
    %v6779 = vld [vmem:[#allocation26 + $0x110] sm:$0xff]
    %v6780 = vld [vmem:[#allocation26 + $0x118] sm:$0xff]
    %v6781 = vld [vmem:[#allocation26 + $0x120] sm:$0xff]
    %v6782 = vld [vmem:[#allocation26 + $0x128] sm:$0xff]
    %v6783 = vld [vmem:[#allocation26 + $0x130] sm:$0xff]
    %v6784 = vld [vmem:[#allocation26 + $0x138] sm:$0xff]
    %v6785 = vld [vmem:[#allocation26 + $0x140] sm:$0xff]
    %v6786 = vld [vmem:[#allocation26 + $0x148] sm:$0xff]
    %v6787 = vld [vmem:[#allocation26 + $0x150] sm:$0xff]
    %v6788 = vld [vmem:[#allocation26 + $0x158] sm:$0xff]
    %v6789 = vld [vmem:[#allocation26 + $0x160] sm:$0xff]
    %v6790 = vld [vmem:[#allocation26 + $0x168] sm:$0xff]
    %v6791 = vld [vmem:[#allocation26 + $0x170] sm:$0xff]
    %v6792 = vld [vmem:[#allocation26 + $0x178] sm:$0xff]
    %v6793 = vld [vmem:[#allocation26 + $0x180] sm:$0xff]
    %v6794 = vld [vmem:[#allocation26 + $0x188] sm:$0xff]
    %v6795 = vld [vmem:[#allocation26 + $0x190] sm:$0xff]
    %v6796 = vld [vmem:[#allocation26 + $0x198] sm:$0xff]
    %v6797 = vld [vmem:[#allocation26 + $0x1a0] sm:$0xff]
    %v6798 = vld [vmem:[#allocation26 + $0x1a8] sm:$0xff]
    %v6799 = vld [vmem:[#allocation26 + $0x1b0] sm:$0xff]
    %v6800 = vld [vmem:[#allocation26 + $0x1b8] sm:$0xff]
    %v6801 = vld [vmem:[#allocation26 + $0x1c0] sm:$0xff]
    %v6802 = vld [vmem:[#allocation26 + $0x1c8] sm:$0xff]
    %v6803 = vld [vmem:[#allocation26 + $0x1d0] sm:$0xff]
    %v6804 = vld [vmem:[#allocation26 + $0x1d8] sm:$0xff]
    %v6805 = vld [vmem:[#allocation26 + $0x1e0] sm:$0xff]
    %v6806 = vld [vmem:[#allocation26 + $0x1e8] sm:$0xff]
    %v6807 = vld [vmem:[#allocation26 + $0x1f0] sm:$0xff]
    %v6808 = vld [vmem:[#allocation26 + $0x1f8] sm:$0xff]
    %v6809 = vld [vmem:[%s19] sm:$0xf]
    %v6811 = vlaneseq
    %v6812 = vshrl.u32 %v6811, 7
    %v6813 = vsub.s32 0, %v6812
    %v6814 = vrot.slane %v6809, %v6813
    %v6815 = vlaneseq
    %v6816 = vshrl.u32 %v6815, 7
    %v6817 = vsub.s32 1, %v6816
    %v6818 = vrot.slane %v6809, %v6817
    %v6819 = vlaneseq
    %v6820 = vshrl.u32 %v6819, 7
    %v6821 = vsub.s32 2, %v6820
    %v6822 = vrot.slane %v6809, %v6821
    %v6823 = vlaneseq
    %v6824 = vshrl.u32 %v6823, 7
    %v6825 = vsub.s32 3, %v6824
    %v6826 = vrot.slane %v6809, %v6825
    %6831 = vmatprep.subr.mxu0 %v6806
    %6832 = vmatpush1.msra.mxu0 %v6805
    %6833 = vmatprep.subr.mxu0 %v6802
    %6834 = vmatpush1.msra.mxu0 %v6801
    %6835 = vmatprep.subr.mxu0 %v6798
    %6836 = vmatpush1.msra.mxu0 %v6797
    %6837 = vmatprep.subr.mxu0 %v6794
    %6838 = vmatpush1.msra.mxu0 %v6793
    %6839 = vmatprep.subr.mxu0 %v6790
    %6840 = vmatpush1.msra.mxu0 %v6789
    %6841 = vmatprep.subr.mxu0 %v6786
    %6842 = vmatpush1.msra.mxu0 %v6785
    %6843 = vmatprep.subr.mxu0 %v6782
    %6844 = vmatpush1.msra.mxu0 %v6781
    %6845 = vmatprep.subr.mxu0 %v6778
    %6846 = vmatpush1.msra.mxu0 %v6777
    %6847 = vmatprep.subr.mxu0 %v6774
    %6848 = vmatpush1.msra.mxu0 %v6773
    %6849 = vmatprep.subr.mxu0 %v6770
    %6850 = vmatpush1.msra.mxu0 %v6769
    %6851 = vmatprep.subr.mxu0 %v6766
    %6852 = vmatpush1.msra.mxu0 %v6765
    %6853 = vmatprep.subr.mxu0 %v6762
    %6854 = vmatpush1.msra.mxu0 %v6761
    %6855 = vmatprep.subr.mxu0 %v6758
    %6856 = vmatpush1.msra.mxu0 %v6757
    %6857 = vmatprep.subr.mxu0 %v6754
    %6858 = vmatpush1.msra.mxu0 %v6753
    %6859 = vmatprep.subr.mxu0 %v6750
    %6860 = vmatpush1.msra.mxu0 %v6749
    %6861 = vmatprep.subr.mxu0 %v6746
    %6862 = vmatpush1.msra.mxu0 %v6745
    %6863 = vmatprep.subr.mxu0 0.0
    %6864 = vmatpush2.msra.mxu0 0.0
    %6865 = vmatprep.subr.mxu0 0.0
    %6866 = vmatpush2.msra.mxu0 0.0
    %6867 = vmatprep.subr.mxu0 0.0
    %6868 = vmatpush2.msra.mxu0 0.0
    %6869 = vmatprep.subr.mxu0 0.0
    %6870 = vmatpush2.msra.mxu0 0.0
    %6871 = vmatprep.subr.mxu0 0.0
    %6872 = vmatpush2.msra.mxu0 0.0
    %6873 = vmatprep.subr.mxu0 0.0
    %6874 = vmatpush2.msra.mxu0 0.0
    %6875 = vmatprep.subr.mxu0 0.0
    %6876 = vmatpush2.msra.mxu0 0.0
    %6877 = vmatprep.subr.mxu0 0.0
    %6878 = vmatpush2.msra.mxu0 0.0
    %6879 = vmatprep.subr.mxu0 0.0
    %6880 = vmatpush2.msra.mxu0 0.0
    %6881 = vmatprep.subr.mxu0 0.0
    %6882 = vmatpush2.msra.mxu0 0.0
    %6883 = vmatprep.subr.mxu0 0.0
    %6884 = vmatpush2.msra.mxu0 0.0
    %6885 = vmatprep.subr.mxu0 0.0
    %6886 = vmatpush2.msra.mxu0 0.0
    %6887 = vmatprep.subr.mxu0 0.0
    %6888 = vmatpush2.msra.mxu0 0.0
    %6889 = vmatprep.subr.mxu0 0.0
    %6890 = vmatpush2.msra.mxu0 0.0
    %6891 = vmatprep.subr.mxu0 0.0
    %6892 = vmatpush2.msra.mxu0 0.0
    %6893 = vmatprep.subr.mxu0 0.0
    %6894 = vmatpush2.msra.mxu0 0.0
    %6895 = vmatprep.mubr.f32.mxu0 0.0
    %6896 = vmatmul.mubr.f32.gmra.mxu0 %v6743
    %v6897 = vpop.f32.mrf.mxu0
    %v6898 = vadd.f32 %v6814, %v6897
    %v6899 = vpop.f32.mrf.mxu0
    %v6900 = vadd.f32 %v6818, %v6899
    %6901 = vmatprep.mubr.f32.mxu0 0.0
    %6902 = vmatmul.mubr.f32.gmra.mxu0 %v6744
    %v6903 = vpop.f32.mrf.mxu0
    %v6904 = vadd.f32 %v6814, %v6903
    %v6905 = vpop.f32.mrf.mxu0
    %v6906 = vadd.f32 %v6818, %v6905
    %6907 = vdwg.mxu0
    %6908 = vmatprep.subr.mxu0 %v6808
    %6909 = vmatpush1.msra.mxu0 %v6807
    %6910 = vmatprep.subr.mxu0 %v6804
    %6911 = vmatpush1.msra.mxu0 %v6803
    %6912 = vmatprep.subr.mxu0 %v6800
    %6913 = vmatpush1.msra.mxu0 %v6799
    %6914 = vmatprep.subr.mxu0 %v6796
    %6915 = vmatpush1.msra.mxu0 %v6795
    %6916 = vmatprep.subr.mxu0 %v6792
    %6917 = vmatpush1.msra.mxu0 %v6791
    %6918 = vmatprep.subr.mxu0 %v6788
    %6919 = vmatpush1.msra.mxu0 %v6787
    %6920 = vmatprep.subr.mxu0 %v6784
    %6921 = vmatpush1.msra.mxu0 %v6783
    %6922 = vmatprep.subr.mxu0 %v6780
    %6923 = vmatpush1.msra.mxu0 %v6779
    %6924 = vmatprep.subr.mxu0 %v6776
    %6925 = vmatpush1.msra.mxu0 %v6775
    %6926 = vmatprep.subr.mxu0 %v6772
    %6927 = vmatpush1.msra.mxu0 %v6771
    %6928 = vmatprep.subr.mxu0 %v6768
    %6929 = vmatpush1.msra.mxu0 %v6767
    %6930 = vmatprep.subr.mxu0 %v6764
    %6931 = vmatpush1.msra.mxu0 %v6763
    %6932 = vmatprep.subr.mxu0 %v6760
    %6933 = vmatpush1.msra.mxu0 %v6759
    %6934 = vmatprep.subr.mxu0 %v6756
    %6935 = vmatpush1.msra.mxu0 %v6755
    %6936 = vmatprep.subr.mxu0 %v6752
    %6937 = vmatpush1.msra.mxu0 %v6751
    %6938 = vmatprep.subr.mxu0 %v6748
    %6939 = vmatpush1.msra.mxu0 %v6747
    %6940 = vmatprep.subr.mxu0 0.0
    %6941 = vmatpush2.msra.mxu0 0.0
    %6942 = vmatprep.subr.mxu0 0.0
    %6943 = vmatpush2.msra.mxu0 0.0
    %6944 = vmatprep.subr.mxu0 0.0
    %6945 = vmatpush2.msra.mxu0 0.0
    %6946 = vmatprep.subr.mxu0 0.0
    %6947 = vmatpush2.msra.mxu0 0.0
    %6948 = vmatprep.subr.mxu0 0.0
    %6949 = vmatpush2.msra.mxu0 0.0
    %6950 = vmatprep.subr.mxu0 0.0
    %6951 = vmatpush2.msra.mxu0 0.0
    %6952 = vmatprep.subr.mxu0 0.0
    %6953 = vmatpush2.msra.mxu0 0.0
    %6954 = vmatprep.subr.mxu0 0.0
    %6955 = vmatpush2.msra.mxu0 0.0
    %6956 = vmatprep.subr.mxu0 0.0
    %6957 = vmatpush2.msra.mxu0 0.0
    %6958 = vmatprep.subr.mxu0 0.0
    %6959 = vmatpush2.msra.mxu0 0.0
    %6960 = vmatprep.subr.mxu0 0.0
    %6961 = vmatpush2.msra.mxu0 0.0
    %6962 = vmatprep.subr.mxu0 0.0
    %6963 = vmatpush2.msra.mxu0 0.0
    %6964 = vmatprep.subr.mxu0 0.0
    %6965 = vmatpush2.msra.mxu0 0.0
    %6966 = vmatprep.subr.mxu0 0.0
    %6967 = vmatpush2.msra.mxu0 0.0
    %6968 = vmatprep.subr.mxu0 0.0
    %6969 = vmatpush2.msra.mxu0 0.0
    %6970 = vmatprep.subr.mxu0 0.0
    %6971 = vmatpush2.msra.mxu0 0.0
    %6972 = vmatprep.mubr.f32.mxu0 0.0
    %6973 = vmatmul.mubr.f32.gmra.mxu0 %v6743
    %v6974 = vpop.f32.mrf.mxu0
    %v6975 = vadd.f32 %v6822, %v6974
    %v6976 = vpop.f32.mrf.mxu0
    %v6977 = vadd.f32 %v6826, %v6976
    %6978 = vmatprep.mubr.f32.mxu0 0.0
    %6979 = vmatmul.mubr.f32.gmra.mxu0 %v6744
    %v6980 = vpop.f32.mrf.mxu0
    %v6981 = vadd.f32 %v6822, %v6980
    %v6982 = vpop.f32.mrf.mxu0
    %v6983 = vadd.f32 %v6826, %v6982
    %6984 = vdwg.mxu0
    %v6985 = vmul.f32 %v6898, 0.5
    %v6986 = vmul.f32 %v6900, 0.5
    %v6987 = vmul.f32 %v6975, 0.5
    %v6988 = vmul.f32 %v6977, 0.5
    %v6989 = vmul.f32 %v6904, 0.5
    %v6990 = vmul.f32 %v6906, 0.5
    %v6991 = vmul.f32 %v6981, 0.5
    %v6992 = vmul.f32 %v6983, 0.5
    %v6993 = vmul.f32 %v6898, 0.70710677
    %v6994 = vmul.f32 %v6900, 0.70710677
    %v6995 = vmul.f32 %v6975, 0.70710677
    %v6996 = vmul.f32 %v6977, 0.70710677
    %v6997 = vmul.f32 %v6904, 0.70710677
    %v6998 = vmul.f32 %v6906, 0.70710677
    %v6999 = vmul.f32 %v6981, 0.70710677
    %v7000 = vmul.f32 %v6983, 0.70710677
    %v7001 = verf.f32.pop %v6993
    %v7002 = verf.f32.pop %v6994
    %v7003 = verf.f32.pop %v6995
    %v7004 = verf.f32.pop %v6996
    %v7005 = verf.f32.pop %v6997
    %v7006 = verf.f32.pop %v6998
    %v7007 = verf.f32.pop %v6999
    %v7008 = verf.f32.pop %v7000
    %v7009 = vadd.f32 %v7001, 1.0
    %v7010 = vadd.f32 %v7002, 1.0
    %v7011 = vadd.f32 %v7003, 1.0
    %v7012 = vadd.f32 %v7004, 1.0
    %v7013 = vadd.f32 %v7005, 1.0
    %v7014 = vadd.f32 %v7006, 1.0
    %v7015 = vadd.f32 %v7007, 1.0
    %v7016 = vadd.f32 %v7008, 1.0
    %v7017 = vmul.f32 %v6985, %v7009
    %v7018 = vmul.f32 %v6986, %v7010
    %v7019 = vmul.f32 %v6987, %v7011
    %v7020 = vmul.f32 %v6988, %v7012
    %v7021 = vmul.f32 %v6989, %v7013
    %v7022 = vmul.f32 %v6990, %v7014
    %v7023 = vmul.f32 %v6991, %v7015
    %v7024 = vmul.f32 %v6992, %v7016
    %v7025 = vld [vmem:[#allocation28] sm:$0xff]
    %v7026 = vld [vmem:[#allocation28 + $0x8] sm:$0xff]
    %v7027 = vld [vmem:[#allocation28 + $0x10] sm:$0xff]
    %v7028 = vld [vmem:[#allocation28 + $0x18] sm:$0xff]
    %v7029 = vld [vmem:[#allocation28 + $0x20] sm:$0xff]
    %v7030 = vld [vmem:[#allocation28 + $0x28] sm:$0xff]
    %v7031 = vld [vmem:[#allocation28 + $0x30] sm:$0xff]
    %v7032 = vld [vmem:[#allocation28 + $0x38] sm:$0xff]
    %v7033 = vld [vmem:[#allocation28 + $0x40] sm:$0xff]
    %v7034 = vld [vmem:[#allocation28 + $0x48] sm:$0xff]
    %v7035 = vld [vmem:[#allocation28 + $0x50] sm:$0xff]
    %v7036 = vld [vmem:[#allocation28 + $0x58] sm:$0xff]
    %v7037 = vld [vmem:[#allocation28 + $0x60] sm:$0xff]
    %v7038 = vld [vmem:[#allocation28 + $0x68] sm:$0xff]
    %v7039 = vld [vmem:[#allocation28 + $0x70] sm:$0xff]
    %v7040 = vld [vmem:[#allocation28 + $0x78] sm:$0xff]
    %v7041 = vld [vmem:[#allocation28 + $0x80] sm:$0xff]
    %v7042 = vld [vmem:[#allocation28 + $0x88] sm:$0xff]
    %v7043 = vld [vmem:[#allocation28 + $0x90] sm:$0xff]
    %v7044 = vld [vmem:[#allocation28 + $0x98] sm:$0xff]
    %v7045 = vld [vmem:[#allocation28 + $0xa0] sm:$0xff]
    %v7046 = vld [vmem:[#allocation28 + $0xa8] sm:$0xff]
    %v7047 = vld [vmem:[#allocation28 + $0xb0] sm:$0xff]
    %v7048 = vld [vmem:[#allocation28 + $0xb8] sm:$0xff]
    %v7049 = vld [vmem:[#allocation28 + $0xc0] sm:$0xff]
    %v7050 = vld [vmem:[#allocation28 + $0xc8] sm:$0xff]
    %v7051 = vld [vmem:[#allocation28 + $0xd0] sm:$0xff]
    %v7052 = vld [vmem:[#allocation28 + $0xd8] sm:$0xff]
    %v7053 = vld [vmem:[#allocation28 + $0xe0] sm:$0xff]
    %v7054 = vld [vmem:[#allocation28 + $0xe8] sm:$0xff]
    %v7055 = vld [vmem:[#allocation28 + $0xf0] sm:$0xff]
    %v7056 = vld [vmem:[#allocation28 + $0xf8] sm:$0xff]
    %v7057 = vld [vmem:[#allocation28 + $0x100] sm:$0xff]
    %v7058 = vld [vmem:[#allocation28 + $0x108] sm:$0xff]
    %v7059 = vld [vmem:[#allocation28 + $0x110] sm:$0xff]
    %v7060 = vld [vmem:[#allocation28 + $0x118] sm:$0xff]
    %v7061 = vld [vmem:[#allocation28 + $0x120] sm:$0xff]
    %v7062 = vld [vmem:[#allocation28 + $0x128] sm:$0xff]
    %v7063 = vld [vmem:[#allocation28 + $0x130] sm:$0xff]
    %v7064 = vld [vmem:[#allocation28 + $0x138] sm:$0xff]
    %v7065 = vld [vmem:[#allocation28 + $0x140] sm:$0xff]
    %v7066 = vld [vmem:[#allocation28 + $0x148] sm:$0xff]
    %v7067 = vld [vmem:[#allocation28 + $0x150] sm:$0xff]
    %v7068 = vld [vmem:[#allocation28 + $0x158] sm:$0xff]
    %v7069 = vld [vmem:[#allocation28 + $0x160] sm:$0xff]
    %v7070 = vld [vmem:[#allocation28 + $0x168] sm:$0xff]
    %v7071 = vld [vmem:[#allocation28 + $0x170] sm:$0xff]
    %v7072 = vld [vmem:[#allocation28 + $0x178] sm:$0xff]
    %v7073 = vld [vmem:[#allocation28 + $0x180] sm:$0xff]
    %v7074 = vld [vmem:[#allocation28 + $0x188] sm:$0xff]
    %v7075 = vld [vmem:[#allocation28 + $0x190] sm:$0xff]
    %v7076 = vld [vmem:[#allocation28 + $0x198] sm:$0xff]
    %v7077 = vld [vmem:[#allocation28 + $0x1a0] sm:$0xff]
    %v7078 = vld [vmem:[#allocation28 + $0x1a8] sm:$0xff]
    %v7079 = vld [vmem:[#allocation28 + $0x1b0] sm:$0xff]
    %v7080 = vld [vmem:[#allocation28 + $0x1b8] sm:$0xff]
    %v7081 = vld [vmem:[#allocation28 + $0x1c0] sm:$0xff]
    %v7082 = vld [vmem:[#allocation28 + $0x1c8] sm:$0xff]
    %v7083 = vld [vmem:[#allocation28 + $0x1d0] sm:$0xff]
    %v7084 = vld [vmem:[#allocation28 + $0x1d8] sm:$0xff]
    %v7085 = vld [vmem:[#allocation28 + $0x1e0] sm:$0xff]
    %v7086 = vld [vmem:[#allocation28 + $0x1e8] sm:$0xff]
    %v7087 = vld [vmem:[#allocation28 + $0x1f0] sm:$0xff]
    %v7088 = vld [vmem:[#allocation28 + $0x1f8] sm:$0xff]
    %7089 = vmatprep.subr.mxu0 0.0
    %7090 = vmatpush1.msra.mxu0 %v7040
    %7091 = vmatprep.subr.mxu0 0.0
    %7092 = vmatpush1.msra.mxu0 %v7039
    %7093 = vmatprep.subr.mxu0 0.0
    %7094 = vmatpush1.msra.mxu0 %v7038
    %7095 = vmatprep.subr.mxu0 0.0
    %7096 = vmatpush1.msra.mxu0 %v7037
    %7097 = vmatprep.subr.mxu0 0.0
    %7098 = vmatpush1.msra.mxu0 %v7036
    %7099 = vmatprep.subr.mxu0 0.0
    %7100 = vmatpush1.msra.mxu0 %v7035
    %7101 = vmatprep.subr.mxu0 0.0
    %7102 = vmatpush1.msra.mxu0 %v7034
    %7103 = vmatprep.subr.mxu0 0.0
    %7104 = vmatpush1.msra.mxu0 %v7033
    %7105 = vmatprep.subr.mxu0 0.0
    %7106 = vmatpush1.msra.mxu0 %v7032
    %7107 = vmatprep.subr.mxu0 0.0
    %7108 = vmatpush1.msra.mxu0 %v7031
    %7109 = vmatprep.subr.mxu0 0.0
    %7110 = vmatpush1.msra.mxu0 %v7030
    %7111 = vmatprep.subr.mxu0 0.0
    %7112 = vmatpush1.msra.mxu0 %v7029
    %7113 = vmatprep.subr.mxu0 0.0
    %7114 = vmatpush1.msra.mxu0 %v7028
    %7115 = vmatprep.subr.mxu0 0.0
    %7116 = vmatpush1.msra.mxu0 %v7027
    %7117 = vmatprep.subr.mxu0 0.0
    %7118 = vmatpush1.msra.mxu0 %v7026
    %7119 = vmatprep.subr.mxu0 0.0
    %7120 = vmatpush1.msra.mxu0 %v7025
    %7121 = vmatprep.subr.mxu0 0.0
    %7122 = vmatpush2.msra.mxu0 %v7056
    %7123 = vmatprep.subr.mxu0 0.0
    %7124 = vmatpush2.msra.mxu0 %v7055
    %7125 = vmatprep.subr.mxu0 0.0
    %7126 = vmatpush2.msra.mxu0 %v7054
    %7127 = vmatprep.subr.mxu0 0.0
    %7128 = vmatpush2.msra.mxu0 %v7053
    %7129 = vmatprep.subr.mxu0 0.0
    %7130 = vmatpush2.msra.mxu0 %v7052
    %7131 = vmatprep.subr.mxu0 0.0
    %7132 = vmatpush2.msra.mxu0 %v7051
    %7133 = vmatprep.subr.mxu0 0.0
    %7134 = vmatpush2.msra.mxu0 %v7050
    %7135 = vmatprep.subr.mxu0 0.0
    %7136 = vmatpush2.msra.mxu0 %v7049
    %7137 = vmatprep.subr.mxu0 0.0
    %7138 = vmatpush2.msra.mxu0 %v7048
    %7139 = vmatprep.subr.mxu0 0.0
    %7140 = vmatpush2.msra.mxu0 %v7047
    %7141 = vmatprep.subr.mxu0 0.0
    %7142 = vmatpush2.msra.mxu0 %v7046
    %7143 = vmatprep.subr.mxu0 0.0
    %7144 = vmatpush2.msra.mxu0 %v7045
    %7145 = vmatprep.subr.mxu0 0.0
    %7146 = vmatpush2.msra.mxu0 %v7044
    %7147 = vmatprep.subr.mxu0 0.0
    %7148 = vmatpush2.msra.mxu0 %v7043
    %7149 = vmatprep.subr.mxu0 0.0
    %7150 = vmatpush2.msra.mxu0 %v7042
    %7151 = vmatprep.subr.mxu0 0.0
    %7152 = vmatpush2.msra.mxu0 %v7041
    %7153 = vmatprep.mubr.f32.mxu0 %v7018
    %7154 = vmatmul.mubr.f32.gmra.mxu0 %v7017
    %v7155 = vpop.f32.mrf.mxu0
    %v7156 = vadd.f32 0.0, %v7155
    %v7157 = vpop.f32.mrf.mxu0
    %7158 = vmatprep.mubr.f32.mxu0 %v7022
    %7159 = vmatmul.mubr.f32.gmra.mxu0 %v7021
    %v7160 = vpop.f32.mrf.mxu0
    %v7161 = vadd.f32 0.0, %v7160
    %v7162 = vpop.f32.mrf.mxu0
    %7163 = vdwg.mxu0
    %7164 = vmatprep.subr.mxu0 0.0
    %7165 = vmatpush1.msra.mxu0 %v7072
    %7166 = vmatprep.subr.mxu0 0.0
    %7167 = vmatpush1.msra.mxu0 %v7071
    %7168 = vmatprep.subr.mxu0 0.0
    %7169 = vmatpush1.msra.mxu0 %v7070
    %7170 = vmatprep.subr.mxu0 0.0
    %7171 = vmatpush1.msra.mxu0 %v7069
    %7172 = vmatprep.subr.mxu0 0.0
    %7173 = vmatpush1.msra.mxu0 %v7068
    %7174 = vmatprep.subr.mxu0 0.0
    %7175 = vmatpush1.msra.mxu0 %v7067
    %7176 = vmatprep.subr.mxu0 0.0
    %7177 = vmatpush1.msra.mxu0 %v7066
    %7178 = vmatprep.subr.mxu0 0.0
    %7179 = vmatpush1.msra.mxu0 %v7065
    %7180 = vmatprep.subr.mxu0 0.0
    %7181 = vmatpush1.msra.mxu0 %v7064
    %7182 = vmatprep.subr.mxu0 0.0
    %7183 = vmatpush1.msra.mxu0 %v7063
    %7184 = vmatprep.subr.mxu0 0.0
    %7185 = vmatpush1.msra.mxu0 %v7062
    %7186 = vmatprep.subr.mxu0 0.0
    %7187 = vmatpush1.msra.mxu0 %v7061
    %7188 = vmatprep.subr.mxu0 0.0
    %7189 = vmatpush1.msra.mxu0 %v7060
    %7190 = vmatprep.subr.mxu0 0.0
    %7191 = vmatpush1.msra.mxu0 %v7059
    %7192 = vmatprep.subr.mxu0 0.0
    %7193 = vmatpush1.msra.mxu0 %v7058
    %7194 = vmatprep.subr.mxu0 0.0
    %7195 = vmatpush1.msra.mxu0 %v7057
    %7196 = vmatprep.subr.mxu0 0.0
    %7197 = vmatpush2.msra.mxu0 %v7088
    %7198 = vmatprep.subr.mxu0 0.0
    %7199 = vmatpush2.msra.mxu0 %v7087
    %7200 = vmatprep.subr.mxu0 0.0
    %7201 = vmatpush2.msra.mxu0 %v7086
    %7202 = vmatprep.subr.mxu0 0.0
    %7203 = vmatpush2.msra.mxu0 %v7085
    %7204 = vmatprep.subr.mxu0 0.0
    %7205 = vmatpush2.msra.mxu0 %v7084
    %7206 = vmatprep.subr.mxu0 0.0
    %7207 = vmatpush2.msra.mxu0 %v7083
    %7208 = vmatprep.subr.mxu0 0.0
    %7209 = vmatpush2.msra.mxu0 %v7082
    %7210 = vmatprep.subr.mxu0 0.0
    %7211 = vmatpush2.msra.mxu0 %v7081
    %7212 = vmatprep.subr.mxu0 0.0
    %7213 = vmatpush2.msra.mxu0 %v7080
    %7214 = vmatprep.subr.mxu0 0.0
    %7215 = vmatpush2.msra.mxu0 %v7079
    %7216 = vmatprep.subr.mxu0 0.0
    %7217 = vmatpush2.msra.mxu0 %v7078
    %7218 = vmatprep.subr.mxu0 0.0
    %7219 = vmatpush2.msra.mxu0 %v7077
    %7220 = vmatprep.subr.mxu0 0.0
    %7221 = vmatpush2.msra.mxu0 %v7076
    %7222 = vmatprep.subr.mxu0 0.0
    %7223 = vmatpush2.msra.mxu0 %v7075
    %7224 = vmatprep.subr.mxu0 0.0
    %7225 = vmatpush2.msra.mxu0 %v7074
    %7226 = vmatprep.subr.mxu0 0.0
    %7227 = vmatpush2.msra.mxu0 %v7073
    %7228 = vmatprep.mubr.f32.mxu0 %v7020
    %7229 = vmatmul.mubr.f32.gmra.mxu0 %v7019
    %v7230 = vpop.f32.mrf.mxu0
    %v7231 = vadd.f32 %v7156, %v7230
    %v7232 = vpop.f32.mrf.mxu0
    %7233 = vmatprep.mubr.f32.mxu0 %v7024
    %7234 = vmatmul.mubr.f32.gmra.mxu0 %v7023
    %v7235 = vpop.f32.mrf.mxu0
    %v7236 = vadd.f32 %v7161, %v7235
    %v7237 = vpop.f32.mrf.mxu0
    %7238 = vdwg.mxu0
    %v7239 = vadd.f32 %v6703, %v7231
    %v7240 = vadd.f32 %v6704, %v7236
    %v7241 = vld [vmem:[#allocation29] sm:$0x1]
    %v7243 = vlaneseq
    %v7244 = vshrl.u32 %v7243, 7
    %v7245 = vsub.s32 0, %v7244
    %v7246 = vrot.slane %v7241, %v7245
    %v7248 = vadd.f32 %v7239, %v7246
    %v7249 = vadd.f32 %v7240, %v7246
    %7250 = vst [vmem:[#allocation31] sm:$0xff] %v7248
    %7251 = vst [vmem:[#allocation31 + $0x8] sm:$0xff] %v7249
    // Predicated region
    $region162: #{transformer_decoder_layer.1} parent=1 // pred_check
      _
    $region163: #{transformer_decoder_layer.1} parent=1 // pred_check_branch
      %7253 = sbr.rel (0) target = $region165
    $region164: #{transformer_decoder_layer.1} parent=1 // pred_region
      %s7255 = ssub.s32 256, 256
      %7256 = vsyncadd [#allocation4], %s7255
      %s7257 = sshll.u32 [#allocation31], 4
      %s7258 = int_to_ptr.vmem [resolvable:$true] %s7257
      %7263 = dma.vmem_to_hbm [thread:$0]  %s7258, 256, %s22, [#allocation4], 128, 128, 8
    $region165: #{transformer_decoder_layer.1} parent=1 // pred_fallthru
      _
    // Predicated region
    $region166: #{transformer_decoder_layer.1} parent=1 // pred_check
      _
    $region167: #{transformer_decoder_layer.1} parent=1 // pred_check_branch
      %7265 = sbr.rel (0) target = $region169
    $region168: #{transformer_decoder_layer.1} parent=1 // pred_region
      %7266 = dma.done [#allocation4], 256
    $region169: #{transformer_decoder_layer.1} parent=1 // pred_fallthru
      _
    %7267 = vsyncpa [#allocation3], 1
    %7268 = vsyncpa [#allocation6], 1
    %7269 = vsyncpa [#allocation9], 1
    %7270 = vsyncpa [#allocation12], 1
    %7271 = vsyncpa [#allocation15], 1
    %7272 = vsyncpa [#allocation18], 1
    %7273 = vsyncpa [#allocation21], 1
    %7274 = vsyncpa [#allocation24], 1
    %7275 = vsyncpa [#allocation27], 1
    %7276 = vsyncpa [#allocation30], 1
    %7277 = vsyncpa [#allocation4], 1

</llo_original>
